<compile_context>
chip_gen: v7x
topology: tpu7x:2x2x1
jax: 0.10.0
libtpu: 0.0.40
codegen_flags: <defaults>
</compile_context>

<pallas_src>
import jax
import jax.numpy as jnp
from jax.experimental import pallas as pl
from jax.experimental.pallas import tpu as pltpu

# Logical layer sizes of the PyTorch module (fc1..fc4).
DIMS = [(669, 2048), (2048, 1024), (1024, 256), (256, 2)]
K_PAD = 768    # first-layer input features padded (multiple of 128 lanes & 32 sublane pack)
N_PAD = 128    # final-layer output features padded to a lane-dense width

# Streaming chunk sizes (along the contraction dim) for the two big weights.
CK1 = 256
NCHUNK1 = K_PAD // CK1          # fc1: 3 chunks of (256, 2048) int8 = 512 KiB each
CK2 = 512
NCHUNK2 = DIMS[1][0] // CK2     # fc2: 4 chunks of (512, 1024) int8 = 512 KiB each


def _mlp_kernel(x_ref,
                w1_hbm, s1_ref, b1_ref,
                w2_hbm, s2_ref, b2_ref,
                w3_ref, s3_ref, b3_ref,
                w4_ref, s4_ref, b4_ref,
                o_ref,
                w1_buf, w2_buf, sem1, sem2):
    """Fused 4-layer MLP.

    fc1/fc2 int8 weights are streamed from HBM in double-buffered K-chunks so the
    dequant + MXU work overlaps the weight DMA; fc3/fc4 weights, scales and biases
    are VMEM-resident.  Matmuls are bf16 with f32 accumulation; per-output-channel
    scales, bias-add and ReLU run on the VPU in f32."""
    tm = x_ref.shape[0]

    def dequant(w_int8):
        # int8 -> f32 -> bf16 (exact for |v| <= 127); channel scale applied post-MXU.
        return w_int8.astype(jnp.float32).astype(jnp.bfloat16)

    def w1_copy(j, slot):
        return pltpu.make_async_copy(
            w1_hbm.at[pl.ds(j * CK1, CK1), :], w1_buf.at[slot], sem1.at[slot])

    def w2_copy(j, slot):
        return pltpu.make_async_copy(
            w2_hbm.at[pl.ds(j * CK2, CK2), :], w2_buf.at[slot], sem2.at[slot])

    # ---- fc1: stream int8 weight K-chunks; compute(j) overlaps DMA(j+1) ----
    w1_copy(0, 0).start()
    x_bf = x_ref[...].astype(jnp.bfloat16)                     # (tm, K_PAD)
    h = jnp.zeros((tm, DIMS[0][1]), jnp.float32)
    for j in range(NCHUNK1):                                   # static unroll
        slot = j & 1
        w1_copy(j, slot).wait()
        if j + 1 < NCHUNK1:
            w1_copy(j + 1, 1 - slot).start()
        else:
            w2_copy(0, 0).start()                              # prefetch fc2's first chunk
        wq = dequant(w1_buf[slot])                             # (CK1, 2048) bf16
        h = h + jnp.dot(x_bf[:, j * CK1:(j + 1) * CK1], wq,
                        preferred_element_type=jnp.float32)
    h = jnp.maximum(h * s1_ref[...] + b1_ref[...], 0.0).astype(jnp.bfloat16)

    # ---- fc2: same streaming pattern ----
    h2 = jnp.zeros((tm, DIMS[1][1]), jnp.float32)
    for j in range(NCHUNK2):                                   # static unroll
        slot = j & 1
        w2_copy(j, slot).wait()
        if j + 1 < NCHUNK2:
            w2_copy(j + 1, 1 - slot).start()
        wq = dequant(w2_buf[slot])                             # (CK2, 1024) bf16
        h2 = h2 + jnp.dot(h[:, j * CK2:(j + 1) * CK2], wq,
                          preferred_element_type=jnp.float32)
    h2 = jnp.maximum(h2 * s2_ref[...] + b2_ref[...], 0.0).astype(jnp.bfloat16)

    # ---- fc3 (small, weight fully VMEM-resident) ----
    h3 = jnp.dot(h2, dequant(w3_ref[...]), preferred_element_type=jnp.float32)
    h3 = jnp.maximum(h3 * s3_ref[...] + b3_ref[...], 0.0).astype(jnp.bfloat16)

    # ---- fc4 (logits, lane-padded 2 -> 128, f32 epilogue) ----
    h4 = jnp.dot(h3, dequant(w4_ref[...]), preferred_element_type=jnp.float32)
    o_ref[...] = (h4 * s4_ref[...] + b4_ref[...]).astype(o_ref.dtype)


def _mlp_forward_padded(x_pad, params, tm):
    """x_pad: (B_pad, K_PAD) f32 -> (B_pad, N_PAD) f32, one fused pallas_call."""
    (w1, s1, b1), (w2, s2, b2), (w3, s3, b3), (w4, s4, b4) = params
    b_pad = x_pad.shape[0]
    n_tiles = b_pad // tm

    vmem = pl.BlockSpec(memory_space=pltpu.MemorySpace.VMEM)   # resident, loaded once
    hbm = pl.BlockSpec(memory_space=pl.ANY)                    # stays in HBM, manual DMA
    in_specs = [
        pl.BlockSpec((tm, K_PAD), lambda i: (i, 0)),           # x: batch-tiled, pipelined
        hbm, vmem, vmem,                                       # w1 (streamed), s1, b1
        hbm, vmem, vmem,                                       # w2 (streamed), s2, b2
        vmem, vmem, vmem,                                      # w3, s3, b3
        vmem, vmem, vmem,                                      # w4, s4, b4
    ]
    out_specs = pl.BlockSpec((tm, N_PAD), lambda i: (i, 0))

    nbytes = lambda a: int(a.size) * a.dtype.itemsize
    streamed = nbytes(w1) + nbytes(w2)                         # re-streamed per batch tile
    resident = sum(nbytes(a) for a in (w3, w4, s1, b1, s2, b2, s3, b3, s4, b4))
    bytes_accessed = n_tiles * streamed + resident + nbytes(x_pad) + b_pad * N_PAD * 4
    flops = 2 * b_pad * (K_PAD * 2048 + 2048 * 1024 + 1024 * 256 + 256 * N_PAD)

    return pl.pallas_call(
        _mlp_kernel,
        out_shape=jax.ShapeDtypeStruct((b_pad, N_PAD), jnp.float32),
        grid=(n_tiles,),
        in_specs=in_specs,
        out_specs=out_specs,
        scratch_shapes=[
            pltpu.VMEM((2, CK1, DIMS[0][1]), jnp.int8),        # fc1 weight chunk double-buffer
            pltpu.VMEM((2, CK2, DIMS[1][1]), jnp.int8),        # fc2 weight chunk double-buffer
            pltpu.SemaphoreType.DMA((2,)),
            pltpu.SemaphoreType.DMA((2,)),
        ],
        compiler_params=pltpu.CompilerParams(
            dimension_semantics=("parallel",),
            vmem_limit_bytes=(16 << 20) if tm <= 128 else (32 << 20)),
        cost_estimate=pl.CostEstimate(flops=flops, transcendentals=0,
                                      bytes_accessed=bytes_accessed),
    )(x_pad, w1, s1, b1, w2, s2, b2, w3, s3, b3, w4, s4, b4)


@jax.jit
def net_forward(x, params):
    """x: (B, 669) f32 -> logits (B, 2) f32 (matches Net.forward)."""
    B, K = x.shape
    assert K == DIMS[0][0]
    # Batch tiling: one tile up to 256 rows; larger batches pad to a multiple of 256.
    if B <= 256:
        b_pad = max(8, ((B + 7) // 8) * 8)
        tm = b_pad
    else:
        tm = 256
        b_pad = ((B + tm - 1) // tm) * tm
    # TODO(synk): pad x inside the kernel (full-array BlockSpec) to skip this copy.
    x_pad = jnp.zeros((b_pad, K_PAD), jnp.float32).at[:B, :K].set(x.astype(jnp.float32))
    out_pad = _mlp_forward_padded(x_pad, params, tm)
    return out_pad[:B, :DIMS[-1][1]]


def init_params(key):
    """Deterministic init mirroring nn.Linear's U(-1/sqrt(fan_in), 1/sqrt(fan_in)).

    Weights are stored (in_features, out_features) (transposed vs. PyTorch),
    zero-padded to TPU-friendly shapes (fc1 K: 669->768, fc4 N: 2->128) and
    quantized to symmetric per-output-channel int8; f32 scales and biases stay
    at shape (1, out_padded)."""
    params = []
    for li, (fan_in, fan_out) in enumerate(DIMS):
        key, kw, kb = jax.random.split(key, 3)
        bound = 1.0 / (fan_in ** 0.5)
        w = jax.random.uniform(kw, (fan_in, fan_out), jnp.float32, -bound, bound)
        b = jax.random.uniform(kb, (1, fan_out), jnp.float32, -bound, bound)
        in_pad = K_PAD if li == 0 else fan_in
        out_pad = N_PAD if li == len(DIMS) - 1 else fan_out
        w_p = jnp.zeros((in_pad, out_pad), jnp.float32).at[:fan_in, :fan_out].set(w)
        b_p = jnp.zeros((1, out_pad), jnp.float32).at[:, :fan_out].set(b)
        # Symmetric per-output-channel int8 quantization (padded zero columns -> scale 1).
        maxabs = jnp.max(jnp.abs(w_p), axis=0, keepdims=True)
        scale = jnp.where(maxabs > 0.0, maxabs / 127.0, 1.0).astype(jnp.float32)
        w_q = jnp.clip(jnp.round(w_p / scale), -127, 127).astype(jnp.int8)
        params.append((w_q, scale, b_p))
    return params


def reference_forward(x, params):
    """Plain-JAX reference using the exact same int8 weights / f32 scale math."""
    B, K = x.shape
    h = jnp.zeros((B, K_PAD), jnp.float32).at[:, :K].set(x)
    for i, (w_q, s, b) in enumerate(params):
        y = jnp.dot(h.astype(jnp.bfloat16), w_q.astype(jnp.bfloat16),
                    preferred_element_type=jnp.float32)
        h = y * s + b
        if i < len(params) - 1:
            h = jnp.maximum(h, 0.0)
    return h[:, :DIMS[-1][1]]


if __name__ == "__main__":
    key = jax.random.PRNGKey(0)
    key, kx = jax.random.split(key)

    batch_size = 8
    x = jax.random.normal(kx, (batch_size, DIMS[0][0]), dtype=jnp.float32)

    params = init_params(key)

    out = net_forward(x, params)
    jax.block_until_ready(out)

    assert out.shape == (batch_size, 2), out.shape
    assert out.dtype == jnp.float32, out.dtype

    ref = reference_forward(x, params)
    max_err = float(jnp.max(jnp.abs(out - ref)))
    assert jnp.allclose(out, ref, atol=2e-3, rtol=2e-3), max_err

    print("KERNEL_OK")
</pallas_src>

<mosaic_0001>
module attributes {stable_mosaic.version = 11 : i64} {
  func.func @_mlp_kernel(%arg0: i32, %arg1: memref<8x768xf32, #tpu.memory_space<vmem>>, %arg2: memref<768x2048xi8, #tpu.memory_space<any>>, %arg3: memref<1x2048xf32, #tpu.memory_space<vmem>>, %arg4: memref<1x2048xf32, #tpu.memory_space<vmem>>, %arg5: memref<2048x1024xi8, #tpu.memory_space<any>>, %arg6: memref<1x1024xf32, #tpu.memory_space<vmem>>, %arg7: memref<1x1024xf32, #tpu.memory_space<vmem>>, %arg8: memref<1024x256xi8, #tpu.memory_space<vmem>>, %arg9: memref<1x256xf32, #tpu.memory_space<vmem>>, %arg10: memref<1x256xf32, #tpu.memory_space<vmem>>, %arg11: memref<256x128xi8, #tpu.memory_space<vmem>>, %arg12: memref<1x128xf32, #tpu.memory_space<vmem>>, %arg13: memref<1x128xf32, #tpu.memory_space<vmem>>, %arg14: memref<8x128xf32, #tpu.memory_space<vmem>>, %arg15: memref<2x256x2048xi8, #tpu.memory_space<vmem>>, %arg16: memref<2x512x1024xi8, #tpu.memory_space<vmem>>, %arg17: memref<2x!tpu.dma_semaphore, #tpu.memory_space<semaphore_mem>>, %arg18: memref<2x!tpu.dma_semaphore, #tpu.memory_space<semaphore_mem>>) attributes {dimension_semantics = [#tpu.dimension_semantics<parallel>], iteration_bounds = array<i64: 1>, scalar_prefetch = 0 : i64, scratch_operands = 4 : i64, tpu.core_type = #tpu.core_type<tc>, window_params = [{transform_indices = @transform_0, window_bounds = array<i64: 8, 768>}, {}, {pipeline_mode = #tpu.pipeline_mode<synchronous>, transform_indices = @transform_2, window_bounds = array<i64: 1, 2048>}, {pipeline_mode = #tpu.pipeline_mode<synchronous>, transform_indices = @transform_3, window_bounds = array<i64: 1, 2048>}, {}, {pipeline_mode = #tpu.pipeline_mode<synchronous>, transform_indices = @transform_5, window_bounds = array<i64: 1, 1024>}, {pipeline_mode = #tpu.pipeline_mode<synchronous>, transform_indices = @transform_6, window_bounds = array<i64: 1, 1024>}, {pipeline_mode = #tpu.pipeline_mode<synchronous>, transform_indices = @transform_7, window_bounds = array<i64: 1024, 256>}, {pipeline_mode = #tpu.pipeline_mode<synchronous>, transform_indices = @transform_8, window_bounds = array<i64: 1, 256>}, {pipeline_mode = #tpu.pipeline_mode<synchronous>, transform_indices = @transform_9, window_bounds = array<i64: 1, 256>}, {pipeline_mode = #tpu.pipeline_mode<synchronous>, transform_indices = @transform_10, window_bounds = array<i64: 256, 128>}, {pipeline_mode = #tpu.pipeline_mode<synchronous>, transform_indices = @transform_11, window_bounds = array<i64: 1, 128>}, {pipeline_mode = #tpu.pipeline_mode<synchronous>, transform_indices = @transform_12, window_bounds = array<i64: 1, 128>}, {transform_indices = @transform_13, window_bounds = array<i64: 8, 128>}]} {
    %c0_i32 = arith.constant 0 : i32
    %c0_i32_0 = arith.constant 0 : i32
    %c0_i32_1 = arith.constant 0 : i32
    %c0_i32_2 = arith.constant 0 : i32
    %0 = tpu.memref_slice %arg2[%c0_i32_1, %c0_i32_2] : memref<768x2048xi8, #tpu.memory_space<any>> -> memref<256x2048xi8, #tpu.memory_space<any>>
    %c0_i32_3 = arith.constant 0 : i32
    %c0_i32_4 = arith.constant 0 : i32
    %1 = tpu.memref_slice %arg15[%c0_i32, %c0_i32_3, %c0_i32_4] : memref<2x256x2048xi8, #tpu.memory_space<vmem>> -> memref<1x256x2048xi8, #tpu.memory_space<vmem>>
    %2 = tpu.memref_squeeze %1 : memref<1x256x2048xi8, #tpu.memory_space<vmem>> -> memref<256x2048xi8, #tpu.memory_space<vmem>>
    %3 = tpu.memref_slice %arg17[%c0_i32_0] : memref<2x!tpu.dma_semaphore, #tpu.memory_space<semaphore_mem>> -> memref<1x!tpu.dma_semaphore, #tpu.memory_space<semaphore_mem>>
    %4 = tpu.memref_squeeze %3 : memref<1x!tpu.dma_semaphore, #tpu.memory_space<semaphore_mem>> -> memref<!tpu.dma_semaphore, #tpu.memory_space<semaphore_mem>>
    tpu.enqueue_dma source(%0 : memref<256x2048xi8, #tpu.memory_space<any>>) target(%2 : memref<256x2048xi8, #tpu.memory_space<vmem>>) target_semaphore(%4 : memref<!tpu.dma_semaphore, #tpu.memory_space<semaphore_mem>>)
    %c0 = arith.constant 0 : index
    %c0_5 = arith.constant 0 : index
    %5 = vector.load %arg1[%c0, %c0_5] : memref<8x768xf32, #tpu.memory_space<vmem>>, vector<8x768xf32>
    %6 = arith.truncf %5 : vector<8x768xf32> to vector<8x768xbf16>
    %cst = arith.constant 0.000000e+00 : f32
    %7 = vector.broadcast %cst : f32 to vector<8x2048xf32>
    %c0_i32_6 = arith.constant 0 : i32
    %c0_i32_7 = arith.constant 0 : i32
    %c0_i32_8 = arith.constant 0 : i32
    %c0_i32_9 = arith.constant 0 : i32
    %8 = tpu.memref_slice %arg2[%c0_i32_8, %c0_i32_9] : memref<768x2048xi8, #tpu.memory_space<any>> -> memref<256x2048xi8, #tpu.memory_space<any>>
    %c0_i32_10 = arith.constant 0 : i32
    %c0_i32_11 = arith.constant 0 : i32
    %9 = tpu.memref_slice %arg15[%c0_i32_6, %c0_i32_10, %c0_i32_11] : memref<2x256x2048xi8, #tpu.memory_space<vmem>> -> memref<1x256x2048xi8, #tpu.memory_space<vmem>>
    %10 = tpu.memref_squeeze %9 : memref<1x256x2048xi8, #tpu.memory_space<vmem>> -> memref<256x2048xi8, #tpu.memory_space<vmem>>
    %11 = tpu.memref_slice %arg17[%c0_i32_7] : memref<2x!tpu.dma_semaphore, #tpu.memory_space<semaphore_mem>> -> memref<1x!tpu.dma_semaphore, #tpu.memory_space<semaphore_mem>>
    %12 = tpu.memref_squeeze %11 : memref<1x!tpu.dma_semaphore, #tpu.memory_space<semaphore_mem>> -> memref<!tpu.dma_semaphore, #tpu.memory_space<semaphore_mem>>
    tpu.wait_dma2 semaphore(%12 : memref<!tpu.dma_semaphore, #tpu.memory_space<semaphore_mem>>) src(%8 : memref<256x2048xi8, #tpu.memory_space<any>>) dst(%10 : memref<256x2048xi8, #tpu.memory_space<vmem>>)
    %c1_i32 = arith.constant 1 : i32
    %c1_i32_12 = arith.constant 1 : i32
    %c256_i32 = arith.constant 256 : i32
    %c0_i32_13 = arith.constant 0 : i32
    %13 = tpu.memref_slice %arg2[%c256_i32, %c0_i32_13] : memref<768x2048xi8, #tpu.memory_space<any>> -> memref<256x2048xi8, #tpu.memory_space<any>>
    %c0_i32_14 = arith.constant 0 : i32
    %c0_i32_15 = arith.constant 0 : i32
    %14 = tpu.memref_slice %arg15[%c1_i32, %c0_i32_14, %c0_i32_15] : memref<2x256x2048xi8, #tpu.memory_space<vmem>> -> memref<1x256x2048xi8, #tpu.memory_space<vmem>>
    %15 = tpu.memref_squeeze %14 : memref<1x256x2048xi8, #tpu.memory_space<vmem>> -> memref<256x2048xi8, #tpu.memory_space<vmem>>
    %16 = tpu.memref_slice %arg17[%c1_i32_12] : memref<2x!tpu.dma_semaphore, #tpu.memory_space<semaphore_mem>> -> memref<1x!tpu.dma_semaphore, #tpu.memory_space<semaphore_mem>>
    %17 = tpu.memref_squeeze %16 : memref<1x!tpu.dma_semaphore, #tpu.memory_space<semaphore_mem>> -> memref<!tpu.dma_semaphore, #tpu.memory_space<semaphore_mem>>
    tpu.enqueue_dma source(%13 : memref<256x2048xi8, #tpu.memory_space<any>>) target(%15 : memref<256x2048xi8, #tpu.memory_space<vmem>>) target_semaphore(%17 : memref<!tpu.dma_semaphore, #tpu.memory_space<semaphore_mem>>)
    %c0_16 = arith.constant 0 : index
    %c0_17 = arith.constant 0 : index
    %c0_18 = arith.constant 0 : index
    %18 = vector.load %arg15[%c0_16, %c0_17, %c0_18] : memref<2x256x2048xi8, #tpu.memory_space<vmem>>, vector<1x256x2048xi8>
    %19 = vector.shape_cast %18 : vector<1x256x2048xi8> to vector<256x2048xi8>
    %20 = arith.sitofp %19 : vector<256x2048xi8> to vector<256x2048xf32>
    %21 = arith.truncf %20 : vector<256x2048xf32> to vector<256x2048xbf16>
    %22 = vector.extract_strided_slice %6 {offsets = [0, 0], sizes = [8, 256], strides = [1, 1]} : vector<8x768xbf16> to vector<8x256xbf16>
    %cst_19 = arith.constant dense<0.000000e+00> : vector<8x2048xf32>
    %23 = tpu.matmul %22, %21, %cst_19 {dimension_numbers = #tpu.dot_dimension_numbers<[1], [0], [0], [1], [0, 0, 1, 1], [], []>} : vector<8x256xbf16>, vector<256x2048xbf16>, vector<8x2048xf32> -> vector<8x2048xf32>
    %24 = arith.addf %7, %23 : vector<8x2048xf32>
    %c1_i32_20 = arith.constant 1 : i32
    %c1_i32_21 = arith.constant 1 : i32
    %c256_i32_22 = arith.constant 256 : i32
    %c0_i32_23 = arith.constant 0 : i32
    %25 = tpu.memref_slice %arg2[%c256_i32_22, %c0_i32_23] : memref<768x2048xi8, #tpu.memory_space<any>> -> memref<256x2048xi8, #tpu.memory_space<any>>
    %c0_i32_24 = arith.constant 0 : i32
    %c0_i32_25 = arith.constant 0 : i32
    %26 = tpu.memref_slice %arg15[%c1_i32_20, %c0_i32_24, %c0_i32_25] : memref<2x256x2048xi8, #tpu.memory_space<vmem>> -> memref<1x256x2048xi8, #tpu.memory_space<vmem>>
    %27 = tpu.memref_squeeze %26 : memref<1x256x2048xi8, #tpu.memory_space<vmem>> -> memref<256x2048xi8, #tpu.memory_space<vmem>>
    %28 = tpu.memref_slice %arg17[%c1_i32_21] : memref<2x!tpu.dma_semaphore, #tpu.memory_space<semaphore_mem>> -> memref<1x!tpu.dma_semaphore, #tpu.memory_space<semaphore_mem>>
    %29 = tpu.memref_squeeze %28 : memref<1x!tpu.dma_semaphore, #tpu.memory_space<semaphore_mem>> -> memref<!tpu.dma_semaphore, #tpu.memory_space<semaphore_mem>>
    tpu.wait_dma2 semaphore(%29 : memref<!tpu.dma_semaphore, #tpu.memory_space<semaphore_mem>>) src(%25 : memref<256x2048xi8, #tpu.memory_space<any>>) dst(%27 : memref<256x2048xi8, #tpu.memory_space<vmem>>)
    %c0_i32_26 = arith.constant 0 : i32
    %c0_i32_27 = arith.constant 0 : i32
    %c512_i32 = arith.constant 512 : i32
    %c0_i32_28 = arith.constant 0 : i32
    %30 = tpu.memref_slice %arg2[%c512_i32, %c0_i32_28] : memref<768x2048xi8, #tpu.memory_space<any>> -> memref<256x2048xi8, #tpu.memory_space<any>>
    %c0_i32_29 = arith.constant 0 : i32
    %c0_i32_30 = arith.constant 0 : i32
    %31 = tpu.memref_slice %arg15[%c0_i32_26, %c0_i32_29, %c0_i32_30] : memref<2x256x2048xi8, #tpu.memory_space<vmem>> -> memref<1x256x2048xi8, #tpu.memory_space<vmem>>
    %32 = tpu.memref_squeeze %31 : memref<1x256x2048xi8, #tpu.memory_space<vmem>> -> memref<256x2048xi8, #tpu.memory_space<vmem>>
    %33 = tpu.memref_slice %arg17[%c0_i32_27] : memref<2x!tpu.dma_semaphore, #tpu.memory_space<semaphore_mem>> -> memref<1x!tpu.dma_semaphore, #tpu.memory_space<semaphore_mem>>
    %34 = tpu.memref_squeeze %33 : memref<1x!tpu.dma_semaphore, #tpu.memory_space<semaphore_mem>> -> memref<!tpu.dma_semaphore, #tpu.memory_space<semaphore_mem>>
    tpu.enqueue_dma source(%30 : memref<256x2048xi8, #tpu.memory_space<any>>) target(%32 : memref<256x2048xi8, #tpu.memory_space<vmem>>) target_semaphore(%34 : memref<!tpu.dma_semaphore, #tpu.memory_space<semaphore_mem>>)
    %c1 = arith.constant 1 : index
    %c0_31 = arith.constant 0 : index
    %c0_32 = arith.constant 0 : index
    %35 = vector.load %arg15[%c1, %c0_31, %c0_32] : memref<2x256x2048xi8, #tpu.memory_space<vmem>>, vector<1x256x2048xi8>
    %36 = vector.shape_cast %35 : vector<1x256x2048xi8> to vector<256x2048xi8>
    %37 = arith.sitofp %36 : vector<256x2048xi8> to vector<256x2048xf32>
    %38 = arith.truncf %37 : vector<256x2048xf32> to vector<256x2048xbf16>
    %39 = vector.extract_strided_slice %6 {offsets = [0, 256], sizes = [8, 256], strides = [1, 1]} : vector<8x768xbf16> to vector<8x256xbf16>
    %cst_33 = arith.constant dense<0.000000e+00> : vector<8x2048xf32>
    %40 = tpu.matmul %39, %38, %cst_33 {dimension_numbers = #tpu.dot_dimension_numbers<[1], [0], [0], [1], [0, 0, 1, 1], [], []>} : vector<8x256xbf16>, vector<256x2048xbf16>, vector<8x2048xf32> -> vector<8x2048xf32>
    %41 = arith.addf %24, %40 : vector<8x2048xf32>
    %c0_i32_34 = arith.constant 0 : i32
    %c0_i32_35 = arith.constant 0 : i32
    %c512_i32_36 = arith.constant 512 : i32
    %c0_i32_37 = arith.constant 0 : i32
    %42 = tpu.memref_slice %arg2[%c512_i32_36, %c0_i32_37] : memref<768x2048xi8, #tpu.memory_space<any>> -> memref<256x2048xi8, #tpu.memory_space<any>>
    %c0_i32_38 = arith.constant 0 : i32
    %c0_i32_39 = arith.constant 0 : i32
    %43 = tpu.memref_slice %arg15[%c0_i32_34, %c0_i32_38, %c0_i32_39] : memref<2x256x2048xi8, #tpu.memory_space<vmem>> -> memref<1x256x2048xi8, #tpu.memory_space<vmem>>
    %44 = tpu.memref_squeeze %43 : memref<1x256x2048xi8, #tpu.memory_space<vmem>> -> memref<256x2048xi8, #tpu.memory_space<vmem>>
    %45 = tpu.memref_slice %arg17[%c0_i32_35] : memref<2x!tpu.dma_semaphore, #tpu.memory_space<semaphore_mem>> -> memref<1x!tpu.dma_semaphore, #tpu.memory_space<semaphore_mem>>
    %46 = tpu.memref_squeeze %45 : memref<1x!tpu.dma_semaphore, #tpu.memory_space<semaphore_mem>> -> memref<!tpu.dma_semaphore, #tpu.memory_space<semaphore_mem>>
    tpu.wait_dma2 semaphore(%46 : memref<!tpu.dma_semaphore, #tpu.memory_space<semaphore_mem>>) src(%42 : memref<256x2048xi8, #tpu.memory_space<any>>) dst(%44 : memref<256x2048xi8, #tpu.memory_space<vmem>>)
    %c0_i32_40 = arith.constant 0 : i32
    %c0_i32_41 = arith.constant 0 : i32
    %c0_i32_42 = arith.constant 0 : i32
    %c0_i32_43 = arith.constant 0 : i32
    %47 = tpu.memref_slice %arg5[%c0_i32_42, %c0_i32_43] : memref<2048x1024xi8, #tpu.memory_space<any>> -> memref<512x1024xi8, #tpu.memory_space<any>>
    %c0_i32_44 = arith.constant 0 : i32
    %c0_i32_45 = arith.constant 0 : i32
    %48 = tpu.memref_slice %arg16[%c0_i32_40, %c0_i32_44, %c0_i32_45] : memref<2x512x1024xi8, #tpu.memory_space<vmem>> -> memref<1x512x1024xi8, #tpu.memory_space<vmem>>
    %49 = tpu.memref_squeeze %48 : memref<1x512x1024xi8, #tpu.memory_space<vmem>> -> memref<512x1024xi8, #tpu.memory_space<vmem>>
    %50 = tpu.memref_slice %arg18[%c0_i32_41] : memref<2x!tpu.dma_semaphore, #tpu.memory_space<semaphore_mem>> -> memref<1x!tpu.dma_semaphore, #tpu.memory_space<semaphore_mem>>
    %51 = tpu.memref_squeeze %50 : memref<1x!tpu.dma_semaphore, #tpu.memory_space<semaphore_mem>> -> memref<!tpu.dma_semaphore, #tpu.memory_space<semaphore_mem>>
    tpu.enqueue_dma source(%47 : memref<512x1024xi8, #tpu.memory_space<any>>) target(%49 : memref<512x1024xi8, #tpu.memory_space<vmem>>) target_semaphore(%51 : memref<!tpu.dma_semaphore, #tpu.memory_space<semaphore_mem>>)
    %c0_46 = arith.constant 0 : index
    %c0_47 = arith.constant 0 : index
    %c0_48 = arith.constant 0 : index
    %52 = vector.load %arg15[%c0_46, %c0_47, %c0_48] : memref<2x256x2048xi8, #tpu.memory_space<vmem>>, vector<1x256x2048xi8>
    %53 = vector.shape_cast %52 : vector<1x256x2048xi8> to vector<256x2048xi8>
    %54 = arith.sitofp %53 : vector<256x2048xi8> to vector<256x2048xf32>
    %55 = arith.truncf %54 : vector<256x2048xf32> to vector<256x2048xbf16>
    %56 = vector.extract_strided_slice %6 {offsets = [0, 512], sizes = [8, 256], strides = [1, 1]} : vector<8x768xbf16> to vector<8x256xbf16>
    %cst_49 = arith.constant dense<0.000000e+00> : vector<8x2048xf32>
    %57 = tpu.matmul %56, %55, %cst_49 {dimension_numbers = #tpu.dot_dimension_numbers<[1], [0], [0], [1], [0, 0, 1, 1], [], []>} : vector<8x256xbf16>, vector<256x2048xbf16>, vector<8x2048xf32> -> vector<8x2048xf32>
    %58 = arith.addf %41, %57 : vector<8x2048xf32>
    %c0_50 = arith.constant 0 : index
    %c0_51 = arith.constant 0 : index
    %59 = vector.load %arg3[%c0_50, %c0_51] : memref<1x2048xf32, #tpu.memory_space<vmem>>, vector<1x2048xf32>
    %60 = vector.broadcast %59 : vector<1x2048xf32> to vector<8x2048xf32>
    %61 = arith.mulf %58, %60 : vector<8x2048xf32>
    %c0_52 = arith.constant 0 : index
    %c0_53 = arith.constant 0 : index
    %62 = vector.load %arg4[%c0_52, %c0_53] : memref<1x2048xf32, #tpu.memory_space<vmem>>, vector<1x2048xf32>
    %63 = vector.broadcast %62 : vector<1x2048xf32> to vector<8x2048xf32>
    %64 = arith.addf %61, %63 : vector<8x2048xf32>
    %cst_54 = arith.constant 0.000000e+00 : f32
    %65 = vector.broadcast %cst_54 : f32 to vector<8x2048xf32>
    %66 = arith.maximumf %64, %65 : vector<8x2048xf32>
    %67 = arith.truncf %66 : vector<8x2048xf32> to vector<8x2048xbf16>
    %cst_55 = arith.constant 0.000000e+00 : f32
    %68 = vector.broadcast %cst_55 : f32 to vector<8x1024xf32>
    %c0_i32_56 = arith.constant 0 : i32
    %c0_i32_57 = arith.constant 0 : i32
    %c0_i32_58 = arith.constant 0 : i32
    %c0_i32_59 = arith.constant 0 : i32
    %69 = tpu.memref_slice %arg5[%c0_i32_58, %c0_i32_59] : memref<2048x1024xi8, #tpu.memory_space<any>> -> memref<512x1024xi8, #tpu.memory_space<any>>
    %c0_i32_60 = arith.constant 0 : i32
    %c0_i32_61 = arith.constant 0 : i32
    %70 = tpu.memref_slice %arg16[%c0_i32_56, %c0_i32_60, %c0_i32_61] : memref<2x512x1024xi8, #tpu.memory_space<vmem>> -> memref<1x512x1024xi8, #tpu.memory_space<vmem>>
    %71 = tpu.memref_squeeze %70 : memref<1x512x1024xi8, #tpu.memory_space<vmem>> -> memref<512x1024xi8, #tpu.memory_space<vmem>>
    %72 = tpu.memref_slice %arg18[%c0_i32_57] : memref<2x!tpu.dma_semaphore, #tpu.memory_space<semaphore_mem>> -> memref<1x!tpu.dma_semaphore, #tpu.memory_space<semaphore_mem>>
    %73 = tpu.memref_squeeze %72 : memref<1x!tpu.dma_semaphore, #tpu.memory_space<semaphore_mem>> -> memref<!tpu.dma_semaphore, #tpu.memory_space<semaphore_mem>>
    tpu.wait_dma2 semaphore(%73 : memref<!tpu.dma_semaphore, #tpu.memory_space<semaphore_mem>>) src(%69 : memref<512x1024xi8, #tpu.memory_space<any>>) dst(%71 : memref<512x1024xi8, #tpu.memory_space<vmem>>)
    %c1_i32_62 = arith.constant 1 : i32
    %c1_i32_63 = arith.constant 1 : i32
    %c512_i32_64 = arith.constant 512 : i32
    %c0_i32_65 = arith.constant 0 : i32
    %74 = tpu.memref_slice %arg5[%c512_i32_64, %c0_i32_65] : memref<2048x1024xi8, #tpu.memory_space<any>> -> memref<512x1024xi8, #tpu.memory_space<any>>
    %c0_i32_66 = arith.constant 0 : i32
    %c0_i32_67 = arith.constant 0 : i32
    %75 = tpu.memref_slice %arg16[%c1_i32_62, %c0_i32_66, %c0_i32_67] : memref<2x512x1024xi8, #tpu.memory_space<vmem>> -> memref<1x512x1024xi8, #tpu.memory_space<vmem>>
    %76 = tpu.memref_squeeze %75 : memref<1x512x1024xi8, #tpu.memory_space<vmem>> -> memref<512x1024xi8, #tpu.memory_space<vmem>>
    %77 = tpu.memref_slice %arg18[%c1_i32_63] : memref<2x!tpu.dma_semaphore, #tpu.memory_space<semaphore_mem>> -> memref<1x!tpu.dma_semaphore, #tpu.memory_space<semaphore_mem>>
    %78 = tpu.memref_squeeze %77 : memref<1x!tpu.dma_semaphore, #tpu.memory_space<semaphore_mem>> -> memref<!tpu.dma_semaphore, #tpu.memory_space<semaphore_mem>>
    tpu.enqueue_dma source(%74 : memref<512x1024xi8, #tpu.memory_space<any>>) target(%76 : memref<512x1024xi8, #tpu.memory_space<vmem>>) target_semaphore(%78 : memref<!tpu.dma_semaphore, #tpu.memory_space<semaphore_mem>>)
    %c0_68 = arith.constant 0 : index
    %c0_69 = arith.constant 0 : index
    %c0_70 = arith.constant 0 : index
    %79 = vector.load %arg16[%c0_68, %c0_69, %c0_70] : memref<2x512x1024xi8, #tpu.memory_space<vmem>>, vector<1x512x1024xi8>
    %80 = vector.shape_cast %79 : vector<1x512x1024xi8> to vector<512x1024xi8>
    %81 = arith.sitofp %80 : vector<512x1024xi8> to vector<512x1024xf32>
    %82 = arith.truncf %81 : vector<512x1024xf32> to vector<512x1024xbf16>
    %83 = vector.extract_strided_slice %67 {offsets = [0, 0], sizes = [8, 512], strides = [1, 1]} : vector<8x2048xbf16> to vector<8x512xbf16>
    %cst_71 = arith.constant dense<0.000000e+00> : vector<8x1024xf32>
    %84 = tpu.matmul %83, %82, %cst_71 {dimension_numbers = #tpu.dot_dimension_numbers<[1], [0], [0], [1], [0, 0, 1, 1], [], []>} : vector<8x512xbf16>, vector<512x1024xbf16>, vector<8x1024xf32> -> vector<8x1024xf32>
    %85 = arith.addf %68, %84 : vector<8x1024xf32>
    %c1_i32_72 = arith.constant 1 : i32
    %c1_i32_73 = arith.constant 1 : i32
    %c512_i32_74 = arith.constant 512 : i32
    %c0_i32_75 = arith.constant 0 : i32
    %86 = tpu.memref_slice %arg5[%c512_i32_74, %c0_i32_75] : memref<2048x1024xi8, #tpu.memory_space<any>> -> memref<512x1024xi8, #tpu.memory_space<any>>
    %c0_i32_76 = arith.constant 0 : i32
    %c0_i32_77 = arith.constant 0 : i32
    %87 = tpu.memref_slice %arg16[%c1_i32_72, %c0_i32_76, %c0_i32_77] : memref<2x512x1024xi8, #tpu.memory_space<vmem>> -> memref<1x512x1024xi8, #tpu.memory_space<vmem>>
    %88 = tpu.memref_squeeze %87 : memref<1x512x1024xi8, #tpu.memory_space<vmem>> -> memref<512x1024xi8, #tpu.memory_space<vmem>>
    %89 = tpu.memref_slice %arg18[%c1_i32_73] : memref<2x!tpu.dma_semaphore, #tpu.memory_space<semaphore_mem>> -> memref<1x!tpu.dma_semaphore, #tpu.memory_space<semaphore_mem>>
    %90 = tpu.memref_squeeze %89 : memref<1x!tpu.dma_semaphore, #tpu.memory_space<semaphore_mem>> -> memref<!tpu.dma_semaphore, #tpu.memory_space<semaphore_mem>>
    tpu.wait_dma2 semaphore(%90 : memref<!tpu.dma_semaphore, #tpu.memory_space<semaphore_mem>>) src(%86 : memref<512x1024xi8, #tpu.memory_space<any>>) dst(%88 : memref<512x1024xi8, #tpu.memory_space<vmem>>)
    %c0_i32_78 = arith.constant 0 : i32
    %c0_i32_79 = arith.constant 0 : i32
    %c1024_i32 = arith.constant 1024 : i32
    %c0_i32_80 = arith.constant 0 : i32
    %91 = tpu.memref_slice %arg5[%c1024_i32, %c0_i32_80] : memref<2048x1024xi8, #tpu.memory_space<any>> -> memref<512x1024xi8, #tpu.memory_space<any>>
    %c0_i32_81 = arith.constant 0 : i32
    %c0_i32_82 = arith.constant 0 : i32
    %92 = tpu.memref_slice %arg16[%c0_i32_78, %c0_i32_81, %c0_i32_82] : memref<2x512x1024xi8, #tpu.memory_space<vmem>> -> memref<1x512x1024xi8, #tpu.memory_space<vmem>>
    %93 = tpu.memref_squeeze %92 : memref<1x512x1024xi8, #tpu.memory_space<vmem>> -> memref<512x1024xi8, #tpu.memory_space<vmem>>
    %94 = tpu.memref_slice %arg18[%c0_i32_79] : memref<2x!tpu.dma_semaphore, #tpu.memory_space<semaphore_mem>> -> memref<1x!tpu.dma_semaphore, #tpu.memory_space<semaphore_mem>>
    %95 = tpu.memref_squeeze %94 : memref<1x!tpu.dma_semaphore, #tpu.memory_space<semaphore_mem>> -> memref<!tpu.dma_semaphore, #tpu.memory_space<semaphore_mem>>
    tpu.enqueue_dma source(%91 : memref<512x1024xi8, #tpu.memory_space<any>>) target(%93 : memref<512x1024xi8, #tpu.memory_space<vmem>>) target_semaphore(%95 : memref<!tpu.dma_semaphore, #tpu.memory_space<semaphore_mem>>)
    %c1_83 = arith.constant 1 : index
    %c0_84 = arith.constant 0 : index
    %c0_85 = arith.constant 0 : index
    %96 = vector.load %arg16[%c1_83, %c0_84, %c0_85] : memref<2x512x1024xi8, #tpu.memory_space<vmem>>, vector<1x512x1024xi8>
    %97 = vector.shape_cast %96 : vector<1x512x1024xi8> to vector<512x1024xi8>
    %98 = arith.sitofp %97 : vector<512x1024xi8> to vector<512x1024xf32>
    %99 = arith.truncf %98 : vector<512x1024xf32> to vector<512x1024xbf16>
    %100 = vector.extract_strided_slice %67 {offsets = [0, 512], sizes = [8, 512], strides = [1, 1]} : vector<8x2048xbf16> to vector<8x512xbf16>
    %cst_86 = arith.constant dense<0.000000e+00> : vector<8x1024xf32>
    %101 = tpu.matmul %100, %99, %cst_86 {dimension_numbers = #tpu.dot_dimension_numbers<[1], [0], [0], [1], [0, 0, 1, 1], [], []>} : vector<8x512xbf16>, vector<512x1024xbf16>, vector<8x1024xf32> -> vector<8x1024xf32>
    %102 = arith.addf %85, %101 : vector<8x1024xf32>
    %c0_i32_87 = arith.constant 0 : i32
    %c0_i32_88 = arith.constant 0 : i32
    %c1024_i32_89 = arith.constant 1024 : i32
    %c0_i32_90 = arith.constant 0 : i32
    %103 = tpu.memref_slice %arg5[%c1024_i32_89, %c0_i32_90] : memref<2048x1024xi8, #tpu.memory_space<any>> -> memref<512x1024xi8, #tpu.memory_space<any>>
    %c0_i32_91 = arith.constant 0 : i32
    %c0_i32_92 = arith.constant 0 : i32
    %104 = tpu.memref_slice %arg16[%c0_i32_87, %c0_i32_91, %c0_i32_92] : memref<2x512x1024xi8, #tpu.memory_space<vmem>> -> memref<1x512x1024xi8, #tpu.memory_space<vmem>>
    %105 = tpu.memref_squeeze %104 : memref<1x512x1024xi8, #tpu.memory_space<vmem>> -> memref<512x1024xi8, #tpu.memory_space<vmem>>
    %106 = tpu.memref_slice %arg18[%c0_i32_88] : memref<2x!tpu.dma_semaphore, #tpu.memory_space<semaphore_mem>> -> memref<1x!tpu.dma_semaphore, #tpu.memory_space<semaphore_mem>>
    %107 = tpu.memref_squeeze %106 : memref<1x!tpu.dma_semaphore, #tpu.memory_space<semaphore_mem>> -> memref<!tpu.dma_semaphore, #tpu.memory_space<semaphore_mem>>
    tpu.wait_dma2 semaphore(%107 : memref<!tpu.dma_semaphore, #tpu.memory_space<semaphore_mem>>) src(%103 : memref<512x1024xi8, #tpu.memory_space<any>>) dst(%105 : memref<512x1024xi8, #tpu.memory_space<vmem>>)
    %c1_i32_93 = arith.constant 1 : i32
    %c1_i32_94 = arith.constant 1 : i32
    %c1536_i32 = arith.constant 1536 : i32
    %c0_i32_95 = arith.constant 0 : i32
    %108 = tpu.memref_slice %arg5[%c1536_i32, %c0_i32_95] : memref<2048x1024xi8, #tpu.memory_space<any>> -> memref<512x1024xi8, #tpu.memory_space<any>>
    %c0_i32_96 = arith.constant 0 : i32
    %c0_i32_97 = arith.constant 0 : i32
    %109 = tpu.memref_slice %arg16[%c1_i32_93, %c0_i32_96, %c0_i32_97] : memref<2x512x1024xi8, #tpu.memory_space<vmem>> -> memref<1x512x1024xi8, #tpu.memory_space<vmem>>
    %110 = tpu.memref_squeeze %109 : memref<1x512x1024xi8, #tpu.memory_space<vmem>> -> memref<512x1024xi8, #tpu.memory_space<vmem>>
    %111 = tpu.memref_slice %arg18[%c1_i32_94] : memref<2x!tpu.dma_semaphore, #tpu.memory_space<semaphore_mem>> -> memref<1x!tpu.dma_semaphore, #tpu.memory_space<semaphore_mem>>
    %112 = tpu.memref_squeeze %111 : memref<1x!tpu.dma_semaphore, #tpu.memory_space<semaphore_mem>> -> memref<!tpu.dma_semaphore, #tpu.memory_space<semaphore_mem>>
    tpu.enqueue_dma source(%108 : memref<512x1024xi8, #tpu.memory_space<any>>) target(%110 : memref<512x1024xi8, #tpu.memory_space<vmem>>) target_semaphore(%112 : memref<!tpu.dma_semaphore, #tpu.memory_space<semaphore_mem>>)
    %c0_98 = arith.constant 0 : index
    %c0_99 = arith.constant 0 : index
    %c0_100 = arith.constant 0 : index
    %113 = vector.load %arg16[%c0_98, %c0_99, %c0_100] : memref<2x512x1024xi8, #tpu.memory_space<vmem>>, vector<1x512x1024xi8>
    %114 = vector.shape_cast %113 : vector<1x512x1024xi8> to vector<512x1024xi8>
    %115 = arith.sitofp %114 : vector<512x1024xi8> to vector<512x1024xf32>
    %116 = arith.truncf %115 : vector<512x1024xf32> to vector<512x1024xbf16>
    %117 = vector.extract_strided_slice %67 {offsets = [0, 1024], sizes = [8, 512], strides = [1, 1]} : vector<8x2048xbf16> to vector<8x512xbf16>
    %cst_101 = arith.constant dense<0.000000e+00> : vector<8x1024xf32>
    %118 = tpu.matmul %117, %116, %cst_101 {dimension_numbers = #tpu.dot_dimension_numbers<[1], [0], [0], [1], [0, 0, 1, 1], [], []>} : vector<8x512xbf16>, vector<512x1024xbf16>, vector<8x1024xf32> -> vector<8x1024xf32>
    %119 = arith.addf %102, %118 : vector<8x1024xf32>
    %c1_i32_102 = arith.constant 1 : i32
    %c1_i32_103 = arith.constant 1 : i32
    %c1536_i32_104 = arith.constant 1536 : i32
    %c0_i32_105 = arith.constant 0 : i32
    %120 = tpu.memref_slice %arg5[%c1536_i32_104, %c0_i32_105] : memref<2048x1024xi8, #tpu.memory_space<any>> -> memref<512x1024xi8, #tpu.memory_space<any>>
    %c0_i32_106 = arith.constant 0 : i32
    %c0_i32_107 = arith.constant 0 : i32
    %121 = tpu.memref_slice %arg16[%c1_i32_102, %c0_i32_106, %c0_i32_107] : memref<2x512x1024xi8, #tpu.memory_space<vmem>> -> memref<1x512x1024xi8, #tpu.memory_space<vmem>>
    %122 = tpu.memref_squeeze %121 : memref<1x512x1024xi8, #tpu.memory_space<vmem>> -> memref<512x1024xi8, #tpu.memory_space<vmem>>
    %123 = tpu.memref_slice %arg18[%c1_i32_103] : memref<2x!tpu.dma_semaphore, #tpu.memory_space<semaphore_mem>> -> memref<1x!tpu.dma_semaphore, #tpu.memory_space<semaphore_mem>>
    %124 = tpu.memref_squeeze %123 : memref<1x!tpu.dma_semaphore, #tpu.memory_space<semaphore_mem>> -> memref<!tpu.dma_semaphore, #tpu.memory_space<semaphore_mem>>
    tpu.wait_dma2 semaphore(%124 : memref<!tpu.dma_semaphore, #tpu.memory_space<semaphore_mem>>) src(%120 : memref<512x1024xi8, #tpu.memory_space<any>>) dst(%122 : memref<512x1024xi8, #tpu.memory_space<vmem>>)
    %c1_108 = arith.constant 1 : index
    %c0_109 = arith.constant 0 : index
    %c0_110 = arith.constant 0 : index
    %125 = vector.load %arg16[%c1_108, %c0_109, %c0_110] : memref<2x512x1024xi8, #tpu.memory_space<vmem>>, vector<1x512x1024xi8>
    %126 = vector.shape_cast %125 : vector<1x512x1024xi8> to vector<512x1024xi8>
    %127 = arith.sitofp %126 : vector<512x1024xi8> to vector<512x1024xf32>
    %128 = arith.truncf %127 : vector<512x1024xf32> to vector<512x1024xbf16>
    %129 = vector.extract_strided_slice %67 {offsets = [0, 1536], sizes = [8, 512], strides = [1, 1]} : vector<8x2048xbf16> to vector<8x512xbf16>
    %cst_111 = arith.constant dense<0.000000e+00> : vector<8x1024xf32>
    %130 = tpu.matmul %129, %128, %cst_111 {dimension_numbers = #tpu.dot_dimension_numbers<[1], [0], [0], [1], [0, 0, 1, 1], [], []>} : vector<8x512xbf16>, vector<512x1024xbf16>, vector<8x1024xf32> -> vector<8x1024xf32>
    %131 = arith.addf %119, %130 : vector<8x1024xf32>
    %c0_112 = arith.constant 0 : index
    %c0_113 = arith.constant 0 : index
    %132 = vector.load %arg6[%c0_112, %c0_113] : memref<1x1024xf32, #tpu.memory_space<vmem>>, vector<1x1024xf32>
    %133 = vector.broadcast %132 : vector<1x1024xf32> to vector<8x1024xf32>
    %134 = arith.mulf %131, %133 : vector<8x1024xf32>
    %c0_114 = arith.constant 0 : index
    %c0_115 = arith.constant 0 : index
    %135 = vector.load %arg7[%c0_114, %c0_115] : memref<1x1024xf32, #tpu.memory_space<vmem>>, vector<1x1024xf32>
    %136 = vector.broadcast %135 : vector<1x1024xf32> to vector<8x1024xf32>
    %137 = arith.addf %134, %136 : vector<8x1024xf32>
    %cst_116 = arith.constant 0.000000e+00 : f32
    %138 = vector.broadcast %cst_116 : f32 to vector<8x1024xf32>
    %139 = arith.maximumf %137, %138 : vector<8x1024xf32>
    %140 = arith.truncf %139 : vector<8x1024xf32> to vector<8x1024xbf16>
    %c0_117 = arith.constant 0 : index
    %c0_118 = arith.constant 0 : index
    %141 = vector.load %arg8[%c0_117, %c0_118] : memref<1024x256xi8, #tpu.memory_space<vmem>>, vector<1024x256xi8>
    %142 = arith.sitofp %141 : vector<1024x256xi8> to vector<1024x256xf32>
    %143 = arith.truncf %142 : vector<1024x256xf32> to vector<1024x256xbf16>
    %cst_119 = arith.constant dense<0.000000e+00> : vector<8x256xf32>
    %144 = tpu.matmul %140, %143, %cst_119 {dimension_numbers = #tpu.dot_dimension_numbers<[1], [0], [0], [1], [0, 0, 1, 1], [], []>} : vector<8x1024xbf16>, vector<1024x256xbf16>, vector<8x256xf32> -> vector<8x256xf32>
    %c0_120 = arith.constant 0 : index
    %c0_121 = arith.constant 0 : index
    %145 = vector.load %arg9[%c0_120, %c0_121] : memref<1x256xf32, #tpu.memory_space<vmem>>, vector<1x256xf32>
    %146 = vector.broadcast %145 : vector<1x256xf32> to vector<8x256xf32>
    %147 = arith.mulf %144, %146 : vector<8x256xf32>
    %c0_122 = arith.constant 0 : index
    %c0_123 = arith.constant 0 : index
    %148 = vector.load %arg10[%c0_122, %c0_123] : memref<1x256xf32, #tpu.memory_space<vmem>>, vector<1x256xf32>
    %149 = vector.broadcast %148 : vector<1x256xf32> to vector<8x256xf32>
    %150 = arith.addf %147, %149 : vector<8x256xf32>
    %cst_124 = arith.constant 0.000000e+00 : f32
    %151 = vector.broadcast %cst_124 : f32 to vector<8x256xf32>
    %152 = arith.maximumf %150, %151 : vector<8x256xf32>
    %153 = arith.truncf %152 : vector<8x256xf32> to vector<8x256xbf16>
    %c0_125 = arith.constant 0 : index
    %c0_126 = arith.constant 0 : index
    %154 = vector.load %arg11[%c0_125, %c0_126] : memref<256x128xi8, #tpu.memory_space<vmem>>, vector<256x128xi8>
    %155 = arith.sitofp %154 : vector<256x128xi8> to vector<256x128xf32>
    %156 = arith.truncf %155 : vector<256x128xf32> to vector<256x128xbf16>
    %cst_127 = arith.constant dense<0.000000e+00> : vector<8x128xf32>
    %157 = tpu.matmul %153, %156, %cst_127 {dimension_numbers = #tpu.dot_dimension_numbers<[1], [0], [0], [1], [0, 0, 1, 1], [], []>} : vector<8x256xbf16>, vector<256x128xbf16>, vector<8x128xf32> -> vector<8x128xf32>
    %c0_128 = arith.constant 0 : index
    %c0_129 = arith.constant 0 : index
    %158 = vector.load %arg12[%c0_128, %c0_129] : memref<1x128xf32, #tpu.memory_space<vmem>>, vector<1x128xf32>
    %159 = vector.broadcast %158 : vector<1x128xf32> to vector<8x128xf32>
    %160 = arith.mulf %157, %159 : vector<8x128xf32>
    %c0_130 = arith.constant 0 : index
    %c0_131 = arith.constant 0 : index
    %161 = vector.load %arg13[%c0_130, %c0_131] : memref<1x128xf32, #tpu.memory_space<vmem>>, vector<1x128xf32>
    %162 = vector.broadcast %161 : vector<1x128xf32> to vector<8x128xf32>
    %163 = arith.addf %160, %162 : vector<8x128xf32>
    %c0_132 = arith.constant 0 : index
    %c0_133 = arith.constant 0 : index
    %164 = vector.load %arg14[%c0_132, %c0_133] : memref<8x128xf32, #tpu.memory_space<vmem>>, vector<8x128xf32>
    tpu.vector_store %arg14[%c0_132, %c0_133], %163 {strides = array<i32>} : memref<8x128xf32, #tpu.memory_space<vmem>>, vector<8x128xf32>,
    return
  }
  func.func @transform_0(%arg0: i32) -> (i32, i32) {
    %c0_i32 = arith.constant 0 : i32
    %c0_i32_0 = arith.constant 0 : i32
    return %arg0, %c0_i32 : i32, i32
  }
  func.func @transform_2(%arg0: i32) -> (i32, i32) {
    %c0_i32 = arith.constant 0 : i32
    %c0_i32_0 = arith.constant 0 : i32
    %c0_i32_1 = arith.constant 0 : i32
    return %c0_i32, %c0_i32_0 : i32, i32
  }
  func.func @transform_3(%arg0: i32) -> (i32, i32) {
    %c0_i32 = arith.constant 0 : i32
    %c0_i32_0 = arith.constant 0 : i32
    %c0_i32_1 = arith.constant 0 : i32
    return %c0_i32, %c0_i32_0 : i32, i32
  }
  func.func @transform_5(%arg0: i32) -> (i32, i32) {
    %c0_i32 = arith.constant 0 : i32
    %c0_i32_0 = arith.constant 0 : i32
    %c0_i32_1 = arith.constant 0 : i32
    return %c0_i32, %c0_i32_0 : i32, i32
  }
  func.func @transform_6(%arg0: i32) -> (i32, i32) {
    %c0_i32 = arith.constant 0 : i32
    %c0_i32_0 = arith.constant 0 : i32
    %c0_i32_1 = arith.constant 0 : i32
    return %c0_i32, %c0_i32_0 : i32, i32
  }
  func.func @transform_7(%arg0: i32) -> (i32, i32) {
    %c0_i32 = arith.constant 0 : i32
    %c0_i32_0 = arith.constant 0 : i32
    %c0_i32_1 = arith.constant 0 : i32
    return %c0_i32, %c0_i32_0 : i32, i32
  }
  func.func @transform_8(%arg0: i32) -> (i32, i32) {
    %c0_i32 = arith.constant 0 : i32
    %c0_i32_0 = arith.constant 0 : i32
    %c0_i32_1 = arith.constant 0 : i32
    return %c0_i32, %c0_i32_0 : i32, i32
  }
  func.func @transform_9(%arg0: i32) -> (i32, i32) {
    %c0_i32 = arith.constant 0 : i32
    %c0_i32_0 = arith.constant 0 : i32
    %c0_i32_1 = arith.constant 0 : i32
    return %c0_i32, %c0_i32_0 : i32, i32
  }
  func.func @transform_10(%arg0: i32) -> (i32, i32) {
    %c0_i32 = arith.constant 0 : i32
    %c0_i32_0 = arith.constant 0 : i32
    %c0_i32_1 = arith.constant 0 : i32
    return %c0_i32, %c0_i32_0 : i32, i32
  }
  func.func @transform_11(%arg0: i32) -> (i32, i32) {
    %c0_i32 = arith.constant 0 : i32
    %c0_i32_0 = arith.constant 0 : i32
    %c0_i32_1 = arith.constant 0 : i32
    return %c0_i32, %c0_i32_0 : i32, i32
  }
  func.func @transform_12(%arg0: i32) -> (i32, i32) {
    %c0_i32 = arith.constant 0 : i32
    %c0_i32_0 = arith.constant 0 : i32
    %c0_i32_1 = arith.constant 0 : i32
    return %c0_i32, %c0_i32_0 : i32, i32
  }
  func.func @transform_13(%arg0: i32) -> (i32, i32) {
    %c0_i32 = arith.constant 0 : i32
    %c0_i32_0 = arith.constant 0 : i32
    return %arg0, %c0_i32 : i32, i32
  }
}

</mosaic_0001>

<llo_original>
// kernel: net_forward.1
$region0: #{net_forward.1}
  #allocation0 [shape = 'u32[]', space=smem, size = 0x4, offset = 0x4, fixed_abs, tag = 'smem constant byte address 0x4 - core index']
  #allocation1 [shape = 'u32[144,128]{1,0:T(1,128)}', space=vmem, size = 0x12000, scoped, tag = 'internal scratch']
  #allocation2 [shape = 's8[2,256,2048]{2,1,0:T(32,128)(4,1)}', space=vmem, size = 0x100000, scoped, tag = 'scratch operand']
  #allocation3 [shape = 's8[2,512,1024]{2,1,0:T(32,128)(4,1)}', space=vmem, size = 0x100000, scoped, tag = 'scratch operand']
  #allocation4 [shape = 's32[2]{0}', space=sflag, size = 0x8, scoped, tag = 'scratch operand']
  #allocation5 [shape = 's32[2]{0}', space=sflag, size = 0x8, scoped, tag = 'scratch operand']
  #allocation22 [shape = 's32[]', space=sflag, size = 0x4, offset = 0, fixed_abs, tag = 'sflag constant byte address 0x0 - dummy sync flag']
  #allocation23 [shape = 's32[]', space=sflag, size = 0x4, offset = 0, fixed_abs, tag = 'sflag constant byte address 0x0 - dummy sync flag']
  #allocation24 [shape = 'u32[]', space=smem, size = 0x4, offset = 0x44, fixed_abs, tag = 'smem constant byte address 0x44 - assertion arg 0']
  #allocation25 [shape = 'u32[]', space=smem, size = 0x4, offset = 0x48, fixed_abs, tag = 'smem constant byte address 0x48 - assertion arg 1']
  #allocation26 [shape = 's32[]', space=sflag, size = 0x4, offset = 0, fixed_abs, tag = 'sflag constant byte address 0x0 - dummy sync flag']
  #allocation27 [shape = 's32[]', space=sflag, size = 0x4, offset = 0, fixed_abs, tag = 'sflag constant byte address 0x0 - dummy sync flag']
  #allocation28 [shape = 's32[]', space=sflag, size = 0x4, offset = 0, fixed_abs, tag = 'sflag constant byte address 0x0 - dummy sync flag']
  #allocation29 [shape = 's32[]', space=sflag, size = 0x4, offset = 0, fixed_abs, tag = 'sflag constant byte address 0x0 - dummy sync flag']
  #allocation30 [shape = 's32[]', space=sflag, size = 0x4, offset = 0, fixed_abs, tag = 'sflag constant byte address 0x0 - dummy sync flag']
  #allocation31 [shape = 's32[]', space=sflag, size = 0x4, offset = 0, fixed_abs, tag = 'sflag constant byte address 0x0 - dummy sync flag']
  #allocation32 [shape = 's32[]', space=sflag, size = 0x4, offset = 0, fixed_abs, tag = 'sflag constant byte address 0x0 - dummy sync flag']
  #allocation33 [shape = 's32[]', space=sflag, size = 0x4, offset = 0, fixed_abs, tag = 'sflag constant byte address 0x0 - dummy sync flag']
  #allocation34 [shape = 's32[]', space=sflag, size = 0x4, offset = 0, fixed_abs, tag = 'sflag constant byte address 0x0 - dummy sync flag']
  #allocation35 [shape = 's32[]', space=sflag, size = 0x4, offset = 0, fixed_abs, tag = 'sflag constant byte address 0x0 - dummy sync flag']
  #allocation36 [shape = 's32[]', space=sflag, size = 0x4, offset = 0, fixed_abs, tag = 'sflag constant byte address 0x0 - dummy sync flag']
  #allocation37 [shape = 's32[]', space=sflag, size = 0x4, offset = 0, fixed_abs, tag = 'sflag constant byte address 0x0 - dummy sync flag']
  %s0 = inlined_call_operand.vmem [shape: f32[8,768], index: 0, kind: input, shape index: {}]
  %s1 = inlined_call_operand.hbm [shape: s8[768,2048], index: 1, kind: input, shape index: {}]
  %s2 = inlined_call_operand.hbm [shape: f32[1,2048], index: 2, kind: input, shape index: {}]
  %s3 = inlined_call_operand.hbm [shape: f32[1,2048], index: 3, kind: input, shape index: {}]
  %s4 = inlined_call_operand.hbm [shape: s8[2048,1024], index: 4, kind: input, shape index: {}]
  %s5 = inlined_call_operand.hbm [shape: f32[1,1024], index: 5, kind: input, shape index: {}]
  %s6 = inlined_call_operand.hbm [shape: f32[1,1024], index: 6, kind: input, shape index: {}]
  %s7 = inlined_call_operand.hbm [shape: s8[1024,256], index: 7, kind: input, shape index: {}]
  %s8 = inlined_call_operand.hbm [shape: f32[1,256], index: 8, kind: input, shape index: {}]
  %s9 = inlined_call_operand.hbm [shape: f32[1,256], index: 9, kind: input, shape index: {}]
  %s10 = inlined_call_operand.hbm [shape: s8[256,128], index: 10, kind: input, shape index: {}]
  %s11 = inlined_call_operand.hbm [shape: f32[1,128], index: 11, kind: input, shape index: {}]
  %s12 = inlined_call_operand.hbm [shape: f32[1,128], index: 12, kind: input, shape index: {}]
  %s13 = inlined_call_operand.vmem [shape: f32[8,128], index: 13, kind: output, shape index: {}]
  %s14 = sld [smem:[#allocation0]]
  $region122: #{net_forward.1} parent=0
    _
  %s16 = ssub.s32 1, %s14
  %s17 = scalar_select 0, %s16, %s14
  $region1: #{net_forward.1} parent=0
    #allocation6 [shape = 'u8[8192]{0}', space=vmem, size = 0x2000, scoped, tag = 'input window, operand 2, single buffered']
    #allocation7 [shape = 's32[1]{0}', space=sflag, size = 0x4, scoped, tag = 'scoped memory for net_forward.1']
    #allocation8 [shape = 'u8[8192]{0}', space=vmem, size = 0x2000, scoped, tag = 'input window, operand 3, single buffered']
    #allocation9 [shape = 's32[1]{0}', space=sflag, size = 0x4, scoped, tag = 'scoped memory for net_forward.1']
    #allocation10 [shape = 'u8[4096]{0}', space=vmem, size = 0x1000, scoped, tag = 'input window, operand 5, single buffered']
    #allocation11 [shape = 'u8[4096]{0}', space=vmem, size = 0x1000, scoped, tag = 'input window, operand 6, single buffered']
    #allocation12 [shape = 's32[1]{0}', space=sflag, size = 0x4, scoped, tag = 'scoped memory for net_forward.1']
    #allocation13 [shape = 'u8[262144]{0}', space=vmem, size = 0x40000, scoped, tag = 'input window, operand 7, single buffered']
    #allocation14 [shape = 'u8[1024]{0}', space=vmem, size = 0x400, scoped, tag = 'input window, operand 8, single buffered']
    #allocation15 [shape = 's32[1]{0}', space=sflag, size = 0x4, scoped, tag = 'scoped memory for net_forward.1']
    #allocation16 [shape = 'u8[1024]{0}', space=vmem, size = 0x400, scoped, tag = 'input window, operand 9, single buffered']
    #allocation17 [shape = 'u8[32768]{0}', space=vmem, size = 0x8000, scoped, tag = 'input window, operand 10, single buffered']
    #allocation18 [shape = 's32[1]{0}', space=sflag, size = 0x4, scoped, tag = 'scoped memory for net_forward.1']
    #allocation19 [shape = 'u8[512]{0}', space=vmem, size = 0x400, scoped, tag = 'input window, operand 11, single buffered']
    #allocation20 [shape = 'u8[512]{0}', space=vmem, size = 0x400, scoped, tag = 'input window, operand 12, single buffered']
    #allocation21 [shape = 's32[1]{0}', space=sflag, size = 0x4, scoped, tag = 'scoped memory for net_forward.1']
    %18 = vsyncpa [#allocation7], 0
    %19 = vsyncpa [#allocation9], 0
    %20 = vsyncpa [#allocation12], 0
    %21 = vsyncpa [#allocation15], 0
    %22 = vsyncpa [#allocation18], 0
    %23 = vsyncpa [#allocation21], 0
    // Predicated region
    $region2: #{net_forward.1} parent=1 // pred_check
      _
    $region3: #{net_forward.1} parent=1 // pred_check_branch
      %25 = sbr.rel (0) target = $region5
    $region4: #{net_forward.1} parent=1 // pred_region
      _
    $region5: #{net_forward.1} parent=1 // pred_fallthru
      _
    // Predicated region
    $region6: #{net_forward.1} parent=1 // pred_check
      _
    $region7: #{net_forward.1} parent=1 // pred_check_branch
      %27 = sbr.rel (0) target = $region9
    $region8: #{net_forward.1} parent=1 // pred_region
      %s29 = ssub.s32 256, 256
      %30 = vsyncadd [#allocation7], %s29
      %s32 = sshll.u32 [#allocation6], 4
      %s33 = int_to_ptr.vmem [resolvable:$true] %s32
      %35 = dma.hbm_to_vmem [thread:$0]  %s2, 256, %s33, [#allocation7]
    $region9: #{net_forward.1} parent=1 // pred_fallthru
      _
    // Predicated region
    $region10: #{net_forward.1} parent=1 // pred_check
      _
    $region11: #{net_forward.1} parent=1 // pred_check_branch
      %37 = sbr.rel (0) target = $region13
    $region12: #{net_forward.1} parent=1 // pred_region
      %s39 = ssub.s32 256, 256
      %40 = vsyncadd [#allocation9], %s39
      %s42 = sshll.u32 [#allocation8], 4
      %s43 = int_to_ptr.vmem [resolvable:$true] %s42
      %45 = dma.hbm_to_vmem [thread:$0]  %s3, 256, %s43, [#allocation9]
    $region13: #{net_forward.1} parent=1 // pred_fallthru
      _
    // Predicated region
    $region14: #{net_forward.1} parent=1 // pred_check
      _
    $region15: #{net_forward.1} parent=1 // pred_check_branch
      %47 = sbr.rel (0) target = $region17
    $region16: #{net_forward.1} parent=1 // pred_region
      %s49 = ssub.s32 128, 128
      %50 = vsyncadd [#allocation9], %s49
      %s52 = sshll.u32 [#allocation10], 4
      %s53 = int_to_ptr.vmem [resolvable:$true] %s52
      %55 = dma.hbm_to_vmem [thread:$0]  %s5, 128, %s53, [#allocation9]
    $region17: #{net_forward.1} parent=1 // pred_fallthru
      _
    // Predicated region
    $region18: #{net_forward.1} parent=1 // pred_check
      _
    $region19: #{net_forward.1} parent=1 // pred_check_branch
      %57 = sbr.rel (0) target = $region21
    $region20: #{net_forward.1} parent=1 // pred_region
      %s59 = ssub.s32 128, 128
      %60 = vsyncadd [#allocation12], %s59
      %s62 = sshll.u32 [#allocation11], 4
      %s63 = int_to_ptr.vmem [resolvable:$true] %s62
      %65 = dma.hbm_to_vmem [thread:$0]  %s6, 128, %s63, [#allocation12]
    $region21: #{net_forward.1} parent=1 // pred_fallthru
      _
    // Predicated region
    $region22: #{net_forward.1} parent=1 // pred_check
      _
    $region23: #{net_forward.1} parent=1 // pred_check_branch
      %67 = sbr.rel (0) target = $region25
    $region24: #{net_forward.1} parent=1 // pred_region
      %s69 = ssub.s32 8192, 8192
      %70 = vsyncadd [#allocation12], %s69
      %s71 = sshll.u32 [#allocation13], 4
      %s72 = int_to_ptr.vmem [resolvable:$true] %s71
      %77 = dma.hbm_to_vmem [thread:$0]  %s7, 8192, %s72, [#allocation12], 256, 256, 16
    $region25: #{net_forward.1} parent=1 // pred_fallthru
      _
    // Predicated region
    $region26: #{net_forward.1} parent=1 // pred_check
      _
    $region27: #{net_forward.1} parent=1 // pred_check_branch
      %79 = sbr.rel (0) target = $region29
    $region28: #{net_forward.1} parent=1 // pred_region
      %s81 = ssub.s32 32, 32
      %82 = vsyncadd [#allocation15], %s81
      %s84 = sshll.u32 [#allocation14], 4
      %s85 = int_to_ptr.vmem [resolvable:$true] %s84
      %87 = dma.hbm_to_vmem [thread:$0]  %s8, 32, %s85, [#allocation15]
    $region29: #{net_forward.1} parent=1 // pred_fallthru
      _
    // Predicated region
    $region30: #{net_forward.1} parent=1 // pred_check
      _
    $region31: #{net_forward.1} parent=1 // pred_check_branch
      %89 = sbr.rel (0) target = $region33
    $region32: #{net_forward.1} parent=1 // pred_region
      %s91 = ssub.s32 32, 32
      %92 = vsyncadd [#allocation15], %s91
      %s94 = sshll.u32 [#allocation16], 4
      %s95 = int_to_ptr.vmem [resolvable:$true] %s94
      %97 = dma.hbm_to_vmem [thread:$0]  %s9, 32, %s95, [#allocation15]
    $region33: #{net_forward.1} parent=1 // pred_fallthru
      _
    // Predicated region
    $region34: #{net_forward.1} parent=1 // pred_check
      _
    $region35: #{net_forward.1} parent=1 // pred_check_branch
      %99 = sbr.rel (0) target = $region37
    $region36: #{net_forward.1} parent=1 // pred_region
      %s101 = ssub.s32 1024, 1024
      %102 = vsyncadd [#allocation18], %s101
      %s103 = sshll.u32 [#allocation17], 4
      %s104 = int_to_ptr.vmem [resolvable:$true] %s103
      %109 = dma.hbm_to_vmem [thread:$0]  %s10, 1024, %s104, [#allocation18], 128, 128, 8
    $region37: #{net_forward.1} parent=1 // pred_fallthru
      _
    // Predicated region
    $region38: #{net_forward.1} parent=1 // pred_check
      _
    $region39: #{net_forward.1} parent=1 // pred_check_branch
      %111 = sbr.rel (0) target = $region41
    $region40: #{net_forward.1} parent=1 // pred_region
      %s113 = ssub.s32 16, 16
      %114 = vsyncadd [#allocation18], %s113
      %s116 = sshll.u32 [#allocation19], 4
      %s117 = int_to_ptr.vmem [resolvable:$true] %s116
      %119 = dma.hbm_to_vmem [thread:$0]  %s11, 16, %s117, [#allocation18]
    $region41: #{net_forward.1} parent=1 // pred_fallthru
      _
    // Predicated region
    $region42: #{net_forward.1} parent=1 // pred_check
      _
    $region43: #{net_forward.1} parent=1 // pred_check_branch
      %121 = sbr.rel (0) target = $region45
    $region44: #{net_forward.1} parent=1 // pred_region
      %s123 = ssub.s32 16, 16
      %124 = vsyncadd [#allocation21], %s123
      %s126 = sshll.u32 [#allocation20], 4
      %s127 = int_to_ptr.vmem [resolvable:$true] %s126
      %129 = dma.hbm_to_vmem [thread:$0]  %s12, 16, %s127, [#allocation21]
    $region45: #{net_forward.1} parent=1 // pred_fallthru
      _
    // Predicated region
    $region46: #{net_forward.1} parent=1 // pred_check
      _
    $region47: #{net_forward.1} parent=1 // pred_check_branch
      %131 = sbr.rel (0) target = $region49
    $region48: #{net_forward.1} parent=1 // pred_region
      %132 = dma.done [#allocation7], 256
    $region49: #{net_forward.1} parent=1 // pred_fallthru
      _
    // Predicated region
    $region50: #{net_forward.1} parent=1 // pred_check
      _
    $region51: #{net_forward.1} parent=1 // pred_check_branch
      %134 = sbr.rel (0) target = $region53
    $region52: #{net_forward.1} parent=1 // pred_region
      %135 = dma.done [#allocation9], 256
    $region53: #{net_forward.1} parent=1 // pred_fallthru
      _
    // Predicated region
    $region54: #{net_forward.1} parent=1 // pred_check
      _
    $region55: #{net_forward.1} parent=1 // pred_check_branch
      %137 = sbr.rel (0) target = $region57
    $region56: #{net_forward.1} parent=1 // pred_region
      %138 = dma.done [#allocation9], 128
    $region57: #{net_forward.1} parent=1 // pred_fallthru
      _
    // Predicated region
    $region58: #{net_forward.1} parent=1 // pred_check
      _
    $region59: #{net_forward.1} parent=1 // pred_check_branch
      %140 = sbr.rel (0) target = $region61
    $region60: #{net_forward.1} parent=1 // pred_region
      %141 = dma.done [#allocation12], 128
    $region61: #{net_forward.1} parent=1 // pred_fallthru
      _
    // Predicated region
    $region62: #{net_forward.1} parent=1 // pred_check
      _
    $region63: #{net_forward.1} parent=1 // pred_check_branch
      %143 = sbr.rel (0) target = $region65
    $region64: #{net_forward.1} parent=1 // pred_region
      %144 = dma.done [#allocation12], 8192
    $region65: #{net_forward.1} parent=1 // pred_fallthru
      _
    // Predicated region
    $region66: #{net_forward.1} parent=1 // pred_check
      _
    $region67: #{net_forward.1} parent=1 // pred_check_branch
      %146 = sbr.rel (0) target = $region69
    $region68: #{net_forward.1} parent=1 // pred_region
      %147 = dma.done [#allocation15], 32
    $region69: #{net_forward.1} parent=1 // pred_fallthru
      _
    // Predicated region
    $region70: #{net_forward.1} parent=1 // pred_check
      _
    $region71: #{net_forward.1} parent=1 // pred_check_branch
      %149 = sbr.rel (0) target = $region73
    $region72: #{net_forward.1} parent=1 // pred_region
      %150 = dma.done [#allocation15], 32
    $region73: #{net_forward.1} parent=1 // pred_fallthru
      _
    // Predicated region
    $region74: #{net_forward.1} parent=1 // pred_check
      _
    $region75: #{net_forward.1} parent=1 // pred_check_branch
      %152 = sbr.rel (0) target = $region77
    $region76: #{net_forward.1} parent=1 // pred_region
      %153 = dma.done [#allocation18], 1024
    $region77: #{net_forward.1} parent=1 // pred_fallthru
      _
    // Predicated region
    $region78: #{net_forward.1} parent=1 // pred_check
      _
    $region79: #{net_forward.1} parent=1 // pred_check_branch
      %155 = sbr.rel (0) target = $region81
    $region80: #{net_forward.1} parent=1 // pred_region
      %156 = dma.done [#allocation18], 16
    $region81: #{net_forward.1} parent=1 // pred_fallthru
      _
    // Predicated region
    $region82: #{net_forward.1} parent=1 // pred_check
      _
    $region83: #{net_forward.1} parent=1 // pred_check_branch
      %158 = sbr.rel (0) target = $region85
    $region84: #{net_forward.1} parent=1 // pred_region
      %159 = dma.done [#allocation21], 16
    $region85: #{net_forward.1} parent=1 // pred_fallthru
      _
    // Predicated region
    $region86: #{net_forward.1} parent=1 // pred_check
      _
    $region87: #{net_forward.1} parent=1 // pred_check_branch
      %162 = sbr.rel target = $region89
    $region88: #{net_forward.1} parent=1 // pred_region
      %163 = sst [smem:[#allocation24]] [#allocation23]
      %164 = sst [smem:[#allocation25]] [#allocation22]
    $region89: #{net_forward.1} parent=1 // pred_fallthru
      _
    %166 = shalt.err (0)
    %s168 = sshll.u32 [#allocation2], 4
    %s169 = int_to_ptr.vmem [resolvable:$true] %s168
    %171 = dma.hbm_to_vmem [thread:$0]  %s1, 16384, %s169, [#allocation4]
    %v172 = vld [vmem:[%s0] sm:$0xff]
    %v173 = vld [vmem:[%s0 + $0x8] sm:$0xff]
    %v174 = vld [vmem:[%s0 + $0x10] sm:$0xff]
    %v175 = vld [vmem:[%s0 + $0x18] sm:$0xff]
    %v176 = vld [vmem:[%s0 + $0x20] sm:$0xff]
    %v177 = vld [vmem:[%s0 + $0x28] sm:$0xff]
    %v178 = vpack.c.bf16 %v172, %v172
    %v179 = vpack.c.bf16 %v173, %v173
    %v180 = vpack.c.bf16 %v174, %v174
    %v181 = vpack.c.bf16 %v175, %v175
    %v182 = vpack.c.bf16 %v176, %v176
    %v183 = vpack.c.bf16 %v177, %v177
    %s184 = smul.u32 2, 32
    %s185 = smul.u32 %s184, 16
    %s186 = sshll.u32 %s185, 4
    %187 = dma.done [#allocation4], %s186
    %s188 = scalar_lea.hbm %s1, 16384
    %s189 = scalar_lea.vmem [#allocation2], 1024
    %s190 = scalar_lea.sflag [#allocation4], 1
    // Predicated region
    $region90: #{net_forward.1} parent=1 // pred_check
      _
    $region91: #{net_forward.1} parent=1 // pred_check_branch
      %192 = sbr.rel target = $region93
    $region92: #{net_forward.1} parent=1 // pred_region
      %193 = sst [smem:[#allocation24]] [#allocation27]
      %194 = sst [smem:[#allocation25]] [#allocation26]
    $region93: #{net_forward.1} parent=1 // pred_fallthru
      _
    %196 = shalt.err (0)
    %s198 = sshll.u32 %s189, 4
    %s199 = int_to_ptr.vmem [resolvable:$true] %s198
    %201 = dma.hbm_to_vmem [thread:$0]  %s188, 16384, %s199, %s190
    %v202 = vld [vmem:[#allocation2] sm:$0xff]
    %v203 = vld [vmem:[#allocation2 + $0x8] sm:$0xff]
    %v204 = vld [vmem:[#allocation2 + $0x10] sm:$0xff]
    %v205 = vld [vmem:[#allocation2 + $0x18] sm:$0xff]
    %v206 = vld [vmem:[#allocation2 + $0x20] sm:$0xff]
    %v207 = vld [vmem:[#allocation2 + $0x28] sm:$0xff]
    %v208 = vld [vmem:[#allocation2 + $0x30] sm:$0xff]
    %v209 = vld [vmem:[#allocation2 + $0x38] sm:$0xff]
    %v210 = vld [vmem:[#allocation2 + $0x40] sm:$0xff]
    %v211 = vld [vmem:[#allocation2 + $0x48] sm:$0xff]
    %v212 = vld [vmem:[#allocation2 + $0x50] sm:$0xff]
    %v213 = vld [vmem:[#allocation2 + $0x58] sm:$0xff]
    %v214 = vld [vmem:[#allocation2 + $0x60] sm:$0xff]
    %v215 = vld [vmem:[#allocation2 + $0x68] sm:$0xff]
    %v216 = vld [vmem:[#allocation2 + $0x70] sm:$0xff]
    %v217 = vld [vmem:[#allocation2 + $0x78] sm:$0xff]
    %v218 = vld [vmem:[#allocation2 + $0x80] sm:$0xff]
    %v219 = vld [vmem:[#allocation2 + $0x88] sm:$0xff]
    %v220 = vld [vmem:[#allocation2 + $0x90] sm:$0xff]
    %v221 = vld [vmem:[#allocation2 + $0x98] sm:$0xff]
    %v222 = vld [vmem:[#allocation2 + $0xa0] sm:$0xff]
    %v223 = vld [vmem:[#allocation2 + $0xa8] sm:$0xff]
    %v224 = vld [vmem:[#allocation2 + $0xb0] sm:$0xff]
    %v225 = vld [vmem:[#allocation2 + $0xb8] sm:$0xff]
    %v226 = vld [vmem:[#allocation2 + $0xc0] sm:$0xff]
    %v227 = vld [vmem:[#allocation2 + $0xc8] sm:$0xff]
    %v228 = vld [vmem:[#allocation2 + $0xd0] sm:$0xff]
    %v229 = vld [vmem:[#allocation2 + $0xd8] sm:$0xff]
    %v230 = vld [vmem:[#allocation2 + $0xe0] sm:$0xff]
    %v231 = vld [vmem:[#allocation2 + $0xe8] sm:$0xff]
    %v232 = vld [vmem:[#allocation2 + $0xf0] sm:$0xff]
    %v233 = vld [vmem:[#allocation2 + $0xf8] sm:$0xff]
    %v234 = vld [vmem:[#allocation2 + $0x100] sm:$0xff]
    %v235 = vld [vmem:[#allocation2 + $0x108] sm:$0xff]
    %v236 = vld [vmem:[#allocation2 + $0x110] sm:$0xff]
    %v237 = vld [vmem:[#allocation2 + $0x118] sm:$0xff]
    %v238 = vld [vmem:[#allocation2 + $0x120] sm:$0xff]
    %v239 = vld [vmem:[#allocation2 + $0x128] sm:$0xff]
    %v240 = vld [vmem:[#allocation2 + $0x130] sm:$0xff]
    %v241 = vld [vmem:[#allocation2 + $0x138] sm:$0xff]
    %v242 = vld [vmem:[#allocation2 + $0x140] sm:$0xff]
    %v243 = vld [vmem:[#allocation2 + $0x148] sm:$0xff]
    %v244 = vld [vmem:[#allocation2 + $0x150] sm:$0xff]
    %v245 = vld [vmem:[#allocation2 + $0x158] sm:$0xff]
    %v246 = vld [vmem:[#allocation2 + $0x160] sm:$0xff]
    %v247 = vld [vmem:[#allocation2 + $0x168] sm:$0xff]
    %v248 = vld [vmem:[#allocation2 + $0x170] sm:$0xff]
    %v249 = vld [vmem:[#allocation2 + $0x178] sm:$0xff]
    %v250 = vld [vmem:[#allocation2 + $0x180] sm:$0xff]
    %v251 = vld [vmem:[#allocation2 + $0x188] sm:$0xff]
    %v252 = vld [vmem:[#allocation2 + $0x190] sm:$0xff]
    %v253 = vld [vmem:[#allocation2 + $0x198] sm:$0xff]
    %v254 = vld [vmem:[#allocation2 + $0x1a0] sm:$0xff]
    %v255 = vld [vmem:[#allocation2 + $0x1a8] sm:$0xff]
    %v256 = vld [vmem:[#allocation2 + $0x1b0] sm:$0xff]
    %v257 = vld [vmem:[#allocation2 + $0x1b8] sm:$0xff]
    %v258 = vld [vmem:[#allocation2 + $0x1c0] sm:$0xff]
    %v259 = vld [vmem:[#allocation2 + $0x1c8] sm:$0xff]
    %v260 = vld [vmem:[#allocation2 + $0x1d0] sm:$0xff]
    %v261 = vld [vmem:[#allocation2 + $0x1d8] sm:$0xff]
    %v262 = vld [vmem:[#allocation2 + $0x1e0] sm:$0xff]
    %v263 = vld [vmem:[#allocation2 + $0x1e8] sm:$0xff]
    %v264 = vld [vmem:[#allocation2 + $0x1f0] sm:$0xff]
    %v265 = vld [vmem:[#allocation2 + $0x1f8] sm:$0xff]
    %v266 = vld [vmem:[#allocation2 + $0x200] sm:$0xff]
    %v267 = vld [vmem:[#allocation2 + $0x208] sm:$0xff]
    %v268 = vld [vmem:[#allocation2 + $0x210] sm:$0xff]
    %v269 = vld [vmem:[#allocation2 + $0x218] sm:$0xff]
    %v270 = vld [vmem:[#allocation2 + $0x220] sm:$0xff]
    %v271 = vld [vmem:[#allocation2 + $0x228] sm:$0xff]
    %v272 = vld [vmem:[#allocation2 + $0x230] sm:$0xff]
    %v273 = vld [vmem:[#allocation2 + $0x238] sm:$0xff]
    %v274 = vld [vmem:[#allocation2 + $0x240] sm:$0xff]
    %v275 = vld [vmem:[#allocation2 + $0x248] sm:$0xff]
    %v276 = vld [vmem:[#allocation2 + $0x250] sm:$0xff]
    %v277 = vld [vmem:[#allocation2 + $0x258] sm:$0xff]
    %v278 = vld [vmem:[#allocation2 + $0x260] sm:$0xff]
    %v279 = vld [vmem:[#allocation2 + $0x268] sm:$0xff]
    %v280 = vld [vmem:[#allocation2 + $0x270] sm:$0xff]
    %v281 = vld [vmem:[#allocation2 + $0x278] sm:$0xff]
    %v282 = vld [vmem:[#allocation2 + $0x280] sm:$0xff]
    %v283 = vld [vmem:[#allocation2 + $0x288] sm:$0xff]
    %v284 = vld [vmem:[#allocation2 + $0x290] sm:$0xff]
    %v285 = vld [vmem:[#allocation2 + $0x298] sm:$0xff]
    %v286 = vld [vmem:[#allocation2 + $0x2a0] sm:$0xff]
    %v287 = vld [vmem:[#allocation2 + $0x2a8] sm:$0xff]
    %v288 = vld [vmem:[#allocation2 + $0x2b0] sm:$0xff]
    %v289 = vld [vmem:[#allocation2 + $0x2b8] sm:$0xff]
    %v290 = vld [vmem:[#allocation2 + $0x2c0] sm:$0xff]
    %v291 = vld [vmem:[#allocation2 + $0x2c8] sm:$0xff]
    %v292 = vld [vmem:[#allocation2 + $0x2d0] sm:$0xff]
    %v293 = vld [vmem:[#allocation2 + $0x2d8] sm:$0xff]
    %v294 = vld [vmem:[#allocation2 + $0x2e0] sm:$0xff]
    %v295 = vld [vmem:[#allocation2 + $0x2e8] sm:$0xff]
    %v296 = vld [vmem:[#allocation2 + $0x2f0] sm:$0xff]
    %v297 = vld [vmem:[#allocation2 + $0x2f8] sm:$0xff]
    %v298 = vld [vmem:[#allocation2 + $0x300] sm:$0xff]
    %v299 = vld [vmem:[#allocation2 + $0x308] sm:$0xff]
    %v300 = vld [vmem:[#allocation2 + $0x310] sm:$0xff]
    %v301 = vld [vmem:[#allocation2 + $0x318] sm:$0xff]
    %v302 = vld [vmem:[#allocation2 + $0x320] sm:$0xff]
    %v303 = vld [vmem:[#allocation2 + $0x328] sm:$0xff]
    %v304 = vld [vmem:[#allocation2 + $0x330] sm:$0xff]
    %v305 = vld [vmem:[#allocation2 + $0x338] sm:$0xff]
    %v306 = vld [vmem:[#allocation2 + $0x340] sm:$0xff]
    %v307 = vld [vmem:[#allocation2 + $0x348] sm:$0xff]
    %v308 = vld [vmem:[#allocation2 + $0x350] sm:$0xff]
    %v309 = vld [vmem:[#allocation2 + $0x358] sm:$0xff]
    %v310 = vld [vmem:[#allocation2 + $0x360] sm:$0xff]
    %v311 = vld [vmem:[#allocation2 + $0x368] sm:$0xff]
    %v312 = vld [vmem:[#allocation2 + $0x370] sm:$0xff]
    %v313 = vld [vmem:[#allocation2 + $0x378] sm:$0xff]
    %v314 = vld [vmem:[#allocation2 + $0x380] sm:$0xff]
    %v315 = vld [vmem:[#allocation2 + $0x388] sm:$0xff]
    %v316 = vld [vmem:[#allocation2 + $0x390] sm:$0xff]
    %v317 = vld [vmem:[#allocation2 + $0x398] sm:$0xff]
    %v318 = vld [vmem:[#allocation2 + $0x3a0] sm:$0xff]
    %v319 = vld [vmem:[#allocation2 + $0x3a8] sm:$0xff]
    %v320 = vld [vmem:[#allocation2 + $0x3b0] sm:$0xff]
    %v321 = vld [vmem:[#allocation2 + $0x3b8] sm:$0xff]
    %v322 = vld [vmem:[#allocation2 + $0x3c0] sm:$0xff]
    %v323 = vld [vmem:[#allocation2 + $0x3c8] sm:$0xff]
    %v324 = vld [vmem:[#allocation2 + $0x3d0] sm:$0xff]
    %v325 = vld [vmem:[#allocation2 + $0x3d8] sm:$0xff]
    %v326 = vld [vmem:[#allocation2 + $0x3e0] sm:$0xff]
    %v327 = vld [vmem:[#allocation2 + $0x3e8] sm:$0xff]
    %v328 = vld [vmem:[#allocation2 + $0x3f0] sm:$0xff]
    %v329 = vld [vmem:[#allocation2 + $0x3f8] sm:$0xff]
    %v330 = vunpack.c.l.s8.bf16 %v202
    %v331 = vunpack.c.l.s8.bf16 %v203
    %v332 = vunpack.c.l.s8.bf16 %v204
    %v333 = vunpack.c.l.s8.bf16 %v205
    %v334 = vunpack.c.l.s8.bf16 %v206
    %v335 = vunpack.c.l.s8.bf16 %v207
    %v336 = vunpack.c.l.s8.bf16 %v208
    %v337 = vunpack.c.l.s8.bf16 %v209
    %v338 = vunpack.c.l.s8.bf16 %v210
    %v339 = vunpack.c.l.s8.bf16 %v211
    %v340 = vunpack.c.l.s8.bf16 %v212
    %v341 = vunpack.c.l.s8.bf16 %v213
    %v342 = vunpack.c.l.s8.bf16 %v214
    %v343 = vunpack.c.l.s8.bf16 %v215
    %v344 = vunpack.c.l.s8.bf16 %v216
    %v345 = vunpack.c.l.s8.bf16 %v217
    %v346 = vunpack.c.h.s8.bf16 %v202
    %v347 = vunpack.c.h.s8.bf16 %v203
    %v348 = vunpack.c.h.s8.bf16 %v204
    %v349 = vunpack.c.h.s8.bf16 %v205
    %v350 = vunpack.c.h.s8.bf16 %v206
    %v351 = vunpack.c.h.s8.bf16 %v207
    %v352 = vunpack.c.h.s8.bf16 %v208
    %v353 = vunpack.c.h.s8.bf16 %v209
    %v354 = vunpack.c.h.s8.bf16 %v210
    %v355 = vunpack.c.h.s8.bf16 %v211
    %v356 = vunpack.c.h.s8.bf16 %v212
    %v357 = vunpack.c.h.s8.bf16 %v213
    %v358 = vunpack.c.h.s8.bf16 %v214
    %v359 = vunpack.c.h.s8.bf16 %v215
    %v360 = vunpack.c.h.s8.bf16 %v216
    %v361 = vunpack.c.h.s8.bf16 %v217
    %v362 = vunpack.c.l.s8.bf16 %v218
    %v363 = vunpack.c.l.s8.bf16 %v219
    %v364 = vunpack.c.l.s8.bf16 %v220
    %v365 = vunpack.c.l.s8.bf16 %v221
    %v366 = vunpack.c.l.s8.bf16 %v222
    %v367 = vunpack.c.l.s8.bf16 %v223
    %v368 = vunpack.c.l.s8.bf16 %v224
    %v369 = vunpack.c.l.s8.bf16 %v225
    %v370 = vunpack.c.l.s8.bf16 %v226
    %v371 = vunpack.c.l.s8.bf16 %v227
    %v372 = vunpack.c.l.s8.bf16 %v228
    %v373 = vunpack.c.l.s8.bf16 %v229
    %v374 = vunpack.c.l.s8.bf16 %v230
    %v375 = vunpack.c.l.s8.bf16 %v231
    %v376 = vunpack.c.l.s8.bf16 %v232
    %v377 = vunpack.c.l.s8.bf16 %v233
    %v378 = vunpack.c.h.s8.bf16 %v218
    %v379 = vunpack.c.h.s8.bf16 %v219
    %v380 = vunpack.c.h.s8.bf16 %v220
    %v381 = vunpack.c.h.s8.bf16 %v221
    %v382 = vunpack.c.h.s8.bf16 %v222
    %v383 = vunpack.c.h.s8.bf16 %v223
    %v384 = vunpack.c.h.s8.bf16 %v224
    %v385 = vunpack.c.h.s8.bf16 %v225
    %v386 = vunpack.c.h.s8.bf16 %v226
    %v387 = vunpack.c.h.s8.bf16 %v227
    %v388 = vunpack.c.h.s8.bf16 %v228
    %v389 = vunpack.c.h.s8.bf16 %v229
    %v390 = vunpack.c.h.s8.bf16 %v230
    %v391 = vunpack.c.h.s8.bf16 %v231
    %v392 = vunpack.c.h.s8.bf16 %v232
    %v393 = vunpack.c.h.s8.bf16 %v233
    %v394 = vunpack.c.l.s8.bf16 %v234
    %v395 = vunpack.c.l.s8.bf16 %v235
    %v396 = vunpack.c.l.s8.bf16 %v236
    %v397 = vunpack.c.l.s8.bf16 %v237
    %v398 = vunpack.c.l.s8.bf16 %v238
    %v399 = vunpack.c.l.s8.bf16 %v239
    %v400 = vunpack.c.l.s8.bf16 %v240
    %v401 = vunpack.c.l.s8.bf16 %v241
    %v402 = vunpack.c.l.s8.bf16 %v242
    %v403 = vunpack.c.l.s8.bf16 %v243
    %v404 = vunpack.c.l.s8.bf16 %v244
    %v405 = vunpack.c.l.s8.bf16 %v245
    %v406 = vunpack.c.l.s8.bf16 %v246
    %v407 = vunpack.c.l.s8.bf16 %v247
    %v408 = vunpack.c.l.s8.bf16 %v248
    %v409 = vunpack.c.l.s8.bf16 %v249
    %v410 = vunpack.c.h.s8.bf16 %v234
    %v411 = vunpack.c.h.s8.bf16 %v235
    %v412 = vunpack.c.h.s8.bf16 %v236
    %v413 = vunpack.c.h.s8.bf16 %v237
    %v414 = vunpack.c.h.s8.bf16 %v238
    %v415 = vunpack.c.h.s8.bf16 %v239
    %v416 = vunpack.c.h.s8.bf16 %v240
    %v417 = vunpack.c.h.s8.bf16 %v241
    %v418 = vunpack.c.h.s8.bf16 %v242
    %v419 = vunpack.c.h.s8.bf16 %v243
    %v420 = vunpack.c.h.s8.bf16 %v244
    %v421 = vunpack.c.h.s8.bf16 %v245
    %v422 = vunpack.c.h.s8.bf16 %v246
    %v423 = vunpack.c.h.s8.bf16 %v247
    %v424 = vunpack.c.h.s8.bf16 %v248
    %v425 = vunpack.c.h.s8.bf16 %v249
    %v426 = vunpack.c.l.s8.bf16 %v250
    %v427 = vunpack.c.l.s8.bf16 %v251
    %v428 = vunpack.c.l.s8.bf16 %v252
    %v429 = vunpack.c.l.s8.bf16 %v253
    %v430 = vunpack.c.l.s8.bf16 %v254
    %v431 = vunpack.c.l.s8.bf16 %v255
    %v432 = vunpack.c.l.s8.bf16 %v256
    %v433 = vunpack.c.l.s8.bf16 %v257
    %v434 = vunpack.c.l.s8.bf16 %v258
    %v435 = vunpack.c.l.s8.bf16 %v259
    %v436 = vunpack.c.l.s8.bf16 %v260
    %v437 = vunpack.c.l.s8.bf16 %v261
    %v438 = vunpack.c.l.s8.bf16 %v262
    %v439 = vunpack.c.l.s8.bf16 %v263
    %v440 = vunpack.c.l.s8.bf16 %v264
    %v441 = vunpack.c.l.s8.bf16 %v265
    %v442 = vunpack.c.h.s8.bf16 %v250
    %v443 = vunpack.c.h.s8.bf16 %v251
    %v444 = vunpack.c.h.s8.bf16 %v252
    %v445 = vunpack.c.h.s8.bf16 %v253
    %v446 = vunpack.c.h.s8.bf16 %v254
    %v447 = vunpack.c.h.s8.bf16 %v255
    %v448 = vunpack.c.h.s8.bf16 %v256
    %v449 = vunpack.c.h.s8.bf16 %v257
    %v450 = vunpack.c.h.s8.bf16 %v258
    %v451 = vunpack.c.h.s8.bf16 %v259
    %v452 = vunpack.c.h.s8.bf16 %v260
    %v453 = vunpack.c.h.s8.bf16 %v261
    %v454 = vunpack.c.h.s8.bf16 %v262
    %v455 = vunpack.c.h.s8.bf16 %v263
    %v456 = vunpack.c.h.s8.bf16 %v264
    %v457 = vunpack.c.h.s8.bf16 %v265
    %v458 = vunpack.c.l.s8.bf16 %v266
    %v459 = vunpack.c.l.s8.bf16 %v267
    %v460 = vunpack.c.l.s8.bf16 %v268
    %v461 = vunpack.c.l.s8.bf16 %v269
    %v462 = vunpack.c.l.s8.bf16 %v270
    %v463 = vunpack.c.l.s8.bf16 %v271
    %v464 = vunpack.c.l.s8.bf16 %v272
    %v465 = vunpack.c.l.s8.bf16 %v273
    %v466 = vunpack.c.l.s8.bf16 %v274
    %v467 = vunpack.c.l.s8.bf16 %v275
    %v468 = vunpack.c.l.s8.bf16 %v276
    %v469 = vunpack.c.l.s8.bf16 %v277
    %v470 = vunpack.c.l.s8.bf16 %v278
    %v471 = vunpack.c.l.s8.bf16 %v279
    %v472 = vunpack.c.l.s8.bf16 %v280
    %v473 = vunpack.c.l.s8.bf16 %v281
    %v474 = vunpack.c.h.s8.bf16 %v266
    %v475 = vunpack.c.h.s8.bf16 %v267
    %v476 = vunpack.c.h.s8.bf16 %v268
    %v477 = vunpack.c.h.s8.bf16 %v269
    %v478 = vunpack.c.h.s8.bf16 %v270
    %v479 = vunpack.c.h.s8.bf16 %v271
    %v480 = vunpack.c.h.s8.bf16 %v272
    %v481 = vunpack.c.h.s8.bf16 %v273
    %v482 = vunpack.c.h.s8.bf16 %v274
    %v483 = vunpack.c.h.s8.bf16 %v275
    %v484 = vunpack.c.h.s8.bf16 %v276
    %v485 = vunpack.c.h.s8.bf16 %v277
    %v486 = vunpack.c.h.s8.bf16 %v278
    %v487 = vunpack.c.h.s8.bf16 %v279
    %v488 = vunpack.c.h.s8.bf16 %v280
    %v489 = vunpack.c.h.s8.bf16 %v281
    %v490 = vunpack.c.l.s8.bf16 %v282
    %v491 = vunpack.c.l.s8.bf16 %v283
    %v492 = vunpack.c.l.s8.bf16 %v284
    %v493 = vunpack.c.l.s8.bf16 %v285
    %v494 = vunpack.c.l.s8.bf16 %v286
    %v495 = vunpack.c.l.s8.bf16 %v287
    %v496 = vunpack.c.l.s8.bf16 %v288
    %v497 = vunpack.c.l.s8.bf16 %v289
    %v498 = vunpack.c.l.s8.bf16 %v290
    %v499 = vunpack.c.l.s8.bf16 %v291
    %v500 = vunpack.c.l.s8.bf16 %v292
    %v501 = vunpack.c.l.s8.bf16 %v293
    %v502 = vunpack.c.l.s8.bf16 %v294
    %v503 = vunpack.c.l.s8.bf16 %v295
    %v504 = vunpack.c.l.s8.bf16 %v296
    %v505 = vunpack.c.l.s8.bf16 %v297
    %v506 = vunpack.c.h.s8.bf16 %v282
    %v507 = vunpack.c.h.s8.bf16 %v283
    %v508 = vunpack.c.h.s8.bf16 %v284
    %v509 = vunpack.c.h.s8.bf16 %v285
    %v510 = vunpack.c.h.s8.bf16 %v286
    %v511 = vunpack.c.h.s8.bf16 %v287
    %v512 = vunpack.c.h.s8.bf16 %v288
    %v513 = vunpack.c.h.s8.bf16 %v289
    %v514 = vunpack.c.h.s8.bf16 %v290
    %v515 = vunpack.c.h.s8.bf16 %v291
    %v516 = vunpack.c.h.s8.bf16 %v292
    %v517 = vunpack.c.h.s8.bf16 %v293
    %v518 = vunpack.c.h.s8.bf16 %v294
    %v519 = vunpack.c.h.s8.bf16 %v295
    %v520 = vunpack.c.h.s8.bf16 %v296
    %v521 = vunpack.c.h.s8.bf16 %v297
    %v522 = vunpack.c.l.s8.bf16 %v298
    %v523 = vunpack.c.l.s8.bf16 %v299
    %v524 = vunpack.c.l.s8.bf16 %v300
    %v525 = vunpack.c.l.s8.bf16 %v301
    %v526 = vunpack.c.l.s8.bf16 %v302
    %v527 = vunpack.c.l.s8.bf16 %v303
    %v528 = vunpack.c.l.s8.bf16 %v304
    %v529 = vunpack.c.l.s8.bf16 %v305
    %v530 = vunpack.c.l.s8.bf16 %v306
    %v531 = vunpack.c.l.s8.bf16 %v307
    %v532 = vunpack.c.l.s8.bf16 %v308
    %v533 = vunpack.c.l.s8.bf16 %v309
    %v534 = vunpack.c.l.s8.bf16 %v310
    %v535 = vunpack.c.l.s8.bf16 %v311
    %v536 = vunpack.c.l.s8.bf16 %v312
    %v537 = vunpack.c.l.s8.bf16 %v313
    %v538 = vunpack.c.h.s8.bf16 %v298
    %v539 = vunpack.c.h.s8.bf16 %v299
    %v540 = vunpack.c.h.s8.bf16 %v300
    %v541 = vunpack.c.h.s8.bf16 %v301
    %v542 = vunpack.c.h.s8.bf16 %v302
    %v543 = vunpack.c.h.s8.bf16 %v303
    %v544 = vunpack.c.h.s8.bf16 %v304
    %v545 = vunpack.c.h.s8.bf16 %v305
    %v546 = vunpack.c.h.s8.bf16 %v306
    %v547 = vunpack.c.h.s8.bf16 %v307
    %v548 = vunpack.c.h.s8.bf16 %v308
    %v549 = vunpack.c.h.s8.bf16 %v309
    %v550 = vunpack.c.h.s8.bf16 %v310
    %v551 = vunpack.c.h.s8.bf16 %v311
    %v552 = vunpack.c.h.s8.bf16 %v312
    %v553 = vunpack.c.h.s8.bf16 %v313
    %v554 = vunpack.c.l.s8.bf16 %v314
    %v555 = vunpack.c.l.s8.bf16 %v315
    %v556 = vunpack.c.l.s8.bf16 %v316
    %v557 = vunpack.c.l.s8.bf16 %v317
    %v558 = vunpack.c.l.s8.bf16 %v318
    %v559 = vunpack.c.l.s8.bf16 %v319
    %v560 = vunpack.c.l.s8.bf16 %v320
    %v561 = vunpack.c.l.s8.bf16 %v321
    %v562 = vunpack.c.l.s8.bf16 %v322
    %v563 = vunpack.c.l.s8.bf16 %v323
    %v564 = vunpack.c.l.s8.bf16 %v324
    %v565 = vunpack.c.l.s8.bf16 %v325
    %v566 = vunpack.c.l.s8.bf16 %v326
    %v567 = vunpack.c.l.s8.bf16 %v327
    %v568 = vunpack.c.l.s8.bf16 %v328
    %v569 = vunpack.c.l.s8.bf16 %v329
    %v570 = vunpack.c.h.s8.bf16 %v314
    %v571 = vunpack.c.h.s8.bf16 %v315
    %v572 = vunpack.c.h.s8.bf16 %v316
    %v573 = vunpack.c.h.s8.bf16 %v317
    %v574 = vunpack.c.h.s8.bf16 %v318
    %v575 = vunpack.c.h.s8.bf16 %v319
    %v576 = vunpack.c.h.s8.bf16 %v320
    %v577 = vunpack.c.h.s8.bf16 %v321
    %v578 = vunpack.c.h.s8.bf16 %v322
    %v579 = vunpack.c.h.s8.bf16 %v323
    %v580 = vunpack.c.h.s8.bf16 %v324
    %v581 = vunpack.c.h.s8.bf16 %v325
    %v582 = vunpack.c.h.s8.bf16 %v326
    %v583 = vunpack.c.h.s8.bf16 %v327
    %v584 = vunpack.c.h.s8.bf16 %v328
    %v585 = vunpack.c.h.s8.bf16 %v329
    %s586 = sshll.u32 %s185, 4
    %587 = dma.done %s190, %s586
    %s588 = scalar_lea.hbm %s1, 32768
    // Predicated region
    $region94: #{net_forward.1} parent=1 // pred_check
      _
    $region95: #{net_forward.1} parent=1 // pred_check_branch
      %590 = sbr.rel target = $region97
    $region96: #{net_forward.1} parent=1 // pred_region
      %591 = sst [smem:[#allocation24]] [#allocation29]
      %592 = sst [smem:[#allocation25]] [#allocation28]
    $region97: #{net_forward.1} parent=1 // pred_fallthru
      _
    %594 = shalt.err (0)
    %s596 = sshll.u32 [#allocation2], 4
    %s597 = int_to_ptr.vmem [resolvable:$true] %s596
    %599 = dma.hbm_to_vmem [thread:$0]  %s588, 16384, %s597, [#allocation4]
    %v600 = vld [vmem:[%s189] sm:$0xff]
    %v601 = vld [vmem:[%s189 + $0x8] sm:$0xff]
    %v602 = vld [vmem:[%s189 + $0x10] sm:$0xff]
    %v603 = vld [vmem:[%s189 + $0x18] sm:$0xff]
    %v604 = vld [vmem:[%s189 + $0x20] sm:$0xff]
    %v605 = vld [vmem:[%s189 + $0x28] sm:$0xff]
    %v606 = vld [vmem:[%s189 + $0x30] sm:$0xff]
    %v607 = vld [vmem:[%s189 + $0x38] sm:$0xff]
    %v608 = vld [vmem:[%s189 + $0x40] sm:$0xff]
    %v609 = vld [vmem:[%s189 + $0x48] sm:$0xff]
    %v610 = vld [vmem:[%s189 + $0x50] sm:$0xff]
    %v611 = vld [vmem:[%s189 + $0x58] sm:$0xff]
    %v612 = vld [vmem:[%s189 + $0x60] sm:$0xff]
    %v613 = vld [vmem:[%s189 + $0x68] sm:$0xff]
    %v614 = vld [vmem:[%s189 + $0x70] sm:$0xff]
    %v615 = vld [vmem:[%s189 + $0x78] sm:$0xff]
    %v616 = vld [vmem:[%s189 + $0x80] sm:$0xff]
    %v617 = vld [vmem:[%s189 + $0x88] sm:$0xff]
    %v618 = vld [vmem:[%s189 + $0x90] sm:$0xff]
    %v619 = vld [vmem:[%s189 + $0x98] sm:$0xff]
    %v620 = vld [vmem:[%s189 + $0xa0] sm:$0xff]
    %v621 = vld [vmem:[%s189 + $0xa8] sm:$0xff]
    %v622 = vld [vmem:[%s189 + $0xb0] sm:$0xff]
    %v623 = vld [vmem:[%s189 + $0xb8] sm:$0xff]
    %v624 = vld [vmem:[%s189 + $0xc0] sm:$0xff]
    %v625 = vld [vmem:[%s189 + $0xc8] sm:$0xff]
    %v626 = vld [vmem:[%s189 + $0xd0] sm:$0xff]
    %v627 = vld [vmem:[%s189 + $0xd8] sm:$0xff]
    %v628 = vld [vmem:[%s189 + $0xe0] sm:$0xff]
    %v629 = vld [vmem:[%s189 + $0xe8] sm:$0xff]
    %v630 = vld [vmem:[%s189 + $0xf0] sm:$0xff]
    %v631 = vld [vmem:[%s189 + $0xf8] sm:$0xff]
    %v632 = vld [vmem:[%s189 + $0x100] sm:$0xff]
    %v633 = vld [vmem:[%s189 + $0x108] sm:$0xff]
    %v634 = vld [vmem:[%s189 + $0x110] sm:$0xff]
    %v635 = vld [vmem:[%s189 + $0x118] sm:$0xff]
    %v636 = vld [vmem:[%s189 + $0x120] sm:$0xff]
    %v637 = vld [vmem:[%s189 + $0x128] sm:$0xff]
    %v638 = vld [vmem:[%s189 + $0x130] sm:$0xff]
    %v639 = vld [vmem:[%s189 + $0x138] sm:$0xff]
    %v640 = vld [vmem:[%s189 + $0x140] sm:$0xff]
    %v641 = vld [vmem:[%s189 + $0x148] sm:$0xff]
    %v642 = vld [vmem:[%s189 + $0x150] sm:$0xff]
    %v643 = vld [vmem:[%s189 + $0x158] sm:$0xff]
    %v644 = vld [vmem:[%s189 + $0x160] sm:$0xff]
    %v645 = vld [vmem:[%s189 + $0x168] sm:$0xff]
    %v646 = vld [vmem:[%s189 + $0x170] sm:$0xff]
    %v647 = vld [vmem:[%s189 + $0x178] sm:$0xff]
    %v648 = vld [vmem:[%s189 + $0x180] sm:$0xff]
    %v649 = vld [vmem:[%s189 + $0x188] sm:$0xff]
    %v650 = vld [vmem:[%s189 + $0x190] sm:$0xff]
    %v651 = vld [vmem:[%s189 + $0x198] sm:$0xff]
    %v652 = vld [vmem:[%s189 + $0x1a0] sm:$0xff]
    %v653 = vld [vmem:[%s189 + $0x1a8] sm:$0xff]
    %v654 = vld [vmem:[%s189 + $0x1b0] sm:$0xff]
    %v655 = vld [vmem:[%s189 + $0x1b8] sm:$0xff]
    %v656 = vld [vmem:[%s189 + $0x1c0] sm:$0xff]
    %v657 = vld [vmem:[%s189 + $0x1c8] sm:$0xff]
    %v658 = vld [vmem:[%s189 + $0x1d0] sm:$0xff]
    %v659 = vld [vmem:[%s189 + $0x1d8] sm:$0xff]
    %v660 = vld [vmem:[%s189 + $0x1e0] sm:$0xff]
    %v661 = vld [vmem:[%s189 + $0x1e8] sm:$0xff]
    %v662 = vld [vmem:[%s189 + $0x1f0] sm:$0xff]
    %v663 = vld [vmem:[%s189 + $0x1f8] sm:$0xff]
    %v664 = vld [vmem:[%s189 + $0x200] sm:$0xff]
    %v665 = vld [vmem:[%s189 + $0x208] sm:$0xff]
    %v666 = vld [vmem:[%s189 + $0x210] sm:$0xff]
    %v667 = vld [vmem:[%s189 + $0x218] sm:$0xff]
    %v668 = vld [vmem:[%s189 + $0x220] sm:$0xff]
    %v669 = vld [vmem:[%s189 + $0x228] sm:$0xff]
    %v670 = vld [vmem:[%s189 + $0x230] sm:$0xff]
    %v671 = vld [vmem:[%s189 + $0x238] sm:$0xff]
    %v672 = vld [vmem:[%s189 + $0x240] sm:$0xff]
    %v673 = vld [vmem:[%s189 + $0x248] sm:$0xff]
    %v674 = vld [vmem:[%s189 + $0x250] sm:$0xff]
    %v675 = vld [vmem:[%s189 + $0x258] sm:$0xff]
    %v676 = vld [vmem:[%s189 + $0x260] sm:$0xff]
    %v677 = vld [vmem:[%s189 + $0x268] sm:$0xff]
    %v678 = vld [vmem:[%s189 + $0x270] sm:$0xff]
    %v679 = vld [vmem:[%s189 + $0x278] sm:$0xff]
    %v680 = vld [vmem:[%s189 + $0x280] sm:$0xff]
    %v681 = vld [vmem:[%s189 + $0x288] sm:$0xff]
    %v682 = vld [vmem:[%s189 + $0x290] sm:$0xff]
    %v683 = vld [vmem:[%s189 + $0x298] sm:$0xff]
    %v684 = vld [vmem:[%s189 + $0x2a0] sm:$0xff]
    %v685 = vld [vmem:[%s189 + $0x2a8] sm:$0xff]
    %v686 = vld [vmem:[%s189 + $0x2b0] sm:$0xff]
    %v687 = vld [vmem:[%s189 + $0x2b8] sm:$0xff]
    %v688 = vld [vmem:[%s189 + $0x2c0] sm:$0xff]
    %v689 = vld [vmem:[%s189 + $0x2c8] sm:$0xff]
    %v690 = vld [vmem:[%s189 + $0x2d0] sm:$0xff]
    %v691 = vld [vmem:[%s189 + $0x2d8] sm:$0xff]
    %v692 = vld [vmem:[%s189 + $0x2e0] sm:$0xff]
    %v693 = vld [vmem:[%s189 + $0x2e8] sm:$0xff]
    %v694 = vld [vmem:[%s189 + $0x2f0] sm:$0xff]
    %v695 = vld [vmem:[%s189 + $0x2f8] sm:$0xff]
    %v696 = vld [vmem:[%s189 + $0x300] sm:$0xff]
    %v697 = vld [vmem:[%s189 + $0x308] sm:$0xff]
    %v698 = vld [vmem:[%s189 + $0x310] sm:$0xff]
    %v699 = vld [vmem:[%s189 + $0x318] sm:$0xff]
    %v700 = vld [vmem:[%s189 + $0x320] sm:$0xff]
    %v701 = vld [vmem:[%s189 + $0x328] sm:$0xff]
    %v702 = vld [vmem:[%s189 + $0x330] sm:$0xff]
    %v703 = vld [vmem:[%s189 + $0x338] sm:$0xff]
    %v704 = vld [vmem:[%s189 + $0x340] sm:$0xff]
    %v705 = vld [vmem:[%s189 + $0x348] sm:$0xff]
    %v706 = vld [vmem:[%s189 + $0x350] sm:$0xff]
    %v707 = vld [vmem:[%s189 + $0x358] sm:$0xff]
    %v708 = vld [vmem:[%s189 + $0x360] sm:$0xff]
    %v709 = vld [vmem:[%s189 + $0x368] sm:$0xff]
    %v710 = vld [vmem:[%s189 + $0x370] sm:$0xff]
    %v711 = vld [vmem:[%s189 + $0x378] sm:$0xff]
    %v712 = vld [vmem:[%s189 + $0x380] sm:$0xff]
    %v713 = vld [vmem:[%s189 + $0x388] sm:$0xff]
    %v714 = vld [vmem:[%s189 + $0x390] sm:$0xff]
    %v715 = vld [vmem:[%s189 + $0x398] sm:$0xff]
    %v716 = vld [vmem:[%s189 + $0x3a0] sm:$0xff]
    %v717 = vld [vmem:[%s189 + $0x3a8] sm:$0xff]
    %v718 = vld [vmem:[%s189 + $0x3b0] sm:$0xff]
    %v719 = vld [vmem:[%s189 + $0x3b8] sm:$0xff]
    %v720 = vld [vmem:[%s189 + $0x3c0] sm:$0xff]
    %v721 = vld [vmem:[%s189 + $0x3c8] sm:$0xff]
    %v722 = vld [vmem:[%s189 + $0x3d0] sm:$0xff]
    %v723 = vld [vmem:[%s189 + $0x3d8] sm:$0xff]
    %v724 = vld [vmem:[%s189 + $0x3e0] sm:$0xff]
    %v725 = vld [vmem:[%s189 + $0x3e8] sm:$0xff]
    %v726 = vld [vmem:[%s189 + $0x3f0] sm:$0xff]
    %v727 = vld [vmem:[%s189 + $0x3f8] sm:$0xff]
    %v728 = vunpack.c.l.s8.bf16 %v600
    %v729 = vunpack.c.l.s8.bf16 %v601
    %v730 = vunpack.c.l.s8.bf16 %v602
    %v731 = vunpack.c.l.s8.bf16 %v603
    %v732 = vunpack.c.l.s8.bf16 %v604
    %v733 = vunpack.c.l.s8.bf16 %v605
    %v734 = vunpack.c.l.s8.bf16 %v606
    %v735 = vunpack.c.l.s8.bf16 %v607
    %v736 = vunpack.c.l.s8.bf16 %v608
    %v737 = vunpack.c.l.s8.bf16 %v609
    %v738 = vunpack.c.l.s8.bf16 %v610
    %v739 = vunpack.c.l.s8.bf16 %v611
    %v740 = vunpack.c.l.s8.bf16 %v612
    %v741 = vunpack.c.l.s8.bf16 %v613
    %v742 = vunpack.c.l.s8.bf16 %v614
    %v743 = vunpack.c.l.s8.bf16 %v615
    %v744 = vunpack.c.h.s8.bf16 %v600
    %v745 = vunpack.c.h.s8.bf16 %v601
    %v746 = vunpack.c.h.s8.bf16 %v602
    %v747 = vunpack.c.h.s8.bf16 %v603
    %v748 = vunpack.c.h.s8.bf16 %v604
    %v749 = vunpack.c.h.s8.bf16 %v605
    %v750 = vunpack.c.h.s8.bf16 %v606
    %v751 = vunpack.c.h.s8.bf16 %v607
    %v752 = vunpack.c.h.s8.bf16 %v608
    %v753 = vunpack.c.h.s8.bf16 %v609
    %v754 = vunpack.c.h.s8.bf16 %v610
    %v755 = vunpack.c.h.s8.bf16 %v611
    %v756 = vunpack.c.h.s8.bf16 %v612
    %v757 = vunpack.c.h.s8.bf16 %v613
    %v758 = vunpack.c.h.s8.bf16 %v614
    %v759 = vunpack.c.h.s8.bf16 %v615
    %v760 = vunpack.c.l.s8.bf16 %v616
    %v761 = vunpack.c.l.s8.bf16 %v617
    %v762 = vunpack.c.l.s8.bf16 %v618
    %v763 = vunpack.c.l.s8.bf16 %v619
    %v764 = vunpack.c.l.s8.bf16 %v620
    %v765 = vunpack.c.l.s8.bf16 %v621
    %v766 = vunpack.c.l.s8.bf16 %v622
    %v767 = vunpack.c.l.s8.bf16 %v623
    %v768 = vunpack.c.l.s8.bf16 %v624
    %v769 = vunpack.c.l.s8.bf16 %v625
    %v770 = vunpack.c.l.s8.bf16 %v626
    %v771 = vunpack.c.l.s8.bf16 %v627
    %v772 = vunpack.c.l.s8.bf16 %v628
    %v773 = vunpack.c.l.s8.bf16 %v629
    %v774 = vunpack.c.l.s8.bf16 %v630
    %v775 = vunpack.c.l.s8.bf16 %v631
    %v776 = vunpack.c.h.s8.bf16 %v616
    %v777 = vunpack.c.h.s8.bf16 %v617
    %v778 = vunpack.c.h.s8.bf16 %v618
    %v779 = vunpack.c.h.s8.bf16 %v619
    %v780 = vunpack.c.h.s8.bf16 %v620
    %v781 = vunpack.c.h.s8.bf16 %v621
    %v782 = vunpack.c.h.s8.bf16 %v622
    %v783 = vunpack.c.h.s8.bf16 %v623
    %v784 = vunpack.c.h.s8.bf16 %v624
    %v785 = vunpack.c.h.s8.bf16 %v625
    %v786 = vunpack.c.h.s8.bf16 %v626
    %v787 = vunpack.c.h.s8.bf16 %v627
    %v788 = vunpack.c.h.s8.bf16 %v628
    %v789 = vunpack.c.h.s8.bf16 %v629
    %v790 = vunpack.c.h.s8.bf16 %v630
    %v791 = vunpack.c.h.s8.bf16 %v631
    %v792 = vunpack.c.l.s8.bf16 %v632
    %v793 = vunpack.c.l.s8.bf16 %v633
    %v794 = vunpack.c.l.s8.bf16 %v634
    %v795 = vunpack.c.l.s8.bf16 %v635
    %v796 = vunpack.c.l.s8.bf16 %v636
    %v797 = vunpack.c.l.s8.bf16 %v637
    %v798 = vunpack.c.l.s8.bf16 %v638
    %v799 = vunpack.c.l.s8.bf16 %v639
    %v800 = vunpack.c.l.s8.bf16 %v640
    %v801 = vunpack.c.l.s8.bf16 %v641
    %v802 = vunpack.c.l.s8.bf16 %v642
    %v803 = vunpack.c.l.s8.bf16 %v643
    %v804 = vunpack.c.l.s8.bf16 %v644
    %v805 = vunpack.c.l.s8.bf16 %v645
    %v806 = vunpack.c.l.s8.bf16 %v646
    %v807 = vunpack.c.l.s8.bf16 %v647
    %v808 = vunpack.c.h.s8.bf16 %v632
    %v809 = vunpack.c.h.s8.bf16 %v633
    %v810 = vunpack.c.h.s8.bf16 %v634
    %v811 = vunpack.c.h.s8.bf16 %v635
    %v812 = vunpack.c.h.s8.bf16 %v636
    %v813 = vunpack.c.h.s8.bf16 %v637
    %v814 = vunpack.c.h.s8.bf16 %v638
    %v815 = vunpack.c.h.s8.bf16 %v639
    %v816 = vunpack.c.h.s8.bf16 %v640
    %v817 = vunpack.c.h.s8.bf16 %v641
    %v818 = vunpack.c.h.s8.bf16 %v642
    %v819 = vunpack.c.h.s8.bf16 %v643
    %v820 = vunpack.c.h.s8.bf16 %v644
    %v821 = vunpack.c.h.s8.bf16 %v645
    %v822 = vunpack.c.h.s8.bf16 %v646
    %v823 = vunpack.c.h.s8.bf16 %v647
    %v824 = vunpack.c.l.s8.bf16 %v648
    %v825 = vunpack.c.l.s8.bf16 %v649
    %v826 = vunpack.c.l.s8.bf16 %v650
    %v827 = vunpack.c.l.s8.bf16 %v651
    %v828 = vunpack.c.l.s8.bf16 %v652
    %v829 = vunpack.c.l.s8.bf16 %v653
    %v830 = vunpack.c.l.s8.bf16 %v654
    %v831 = vunpack.c.l.s8.bf16 %v655
    %v832 = vunpack.c.l.s8.bf16 %v656
    %v833 = vunpack.c.l.s8.bf16 %v657
    %v834 = vunpack.c.l.s8.bf16 %v658
    %v835 = vunpack.c.l.s8.bf16 %v659
    %v836 = vunpack.c.l.s8.bf16 %v660
    %v837 = vunpack.c.l.s8.bf16 %v661
    %v838 = vunpack.c.l.s8.bf16 %v662
    %v839 = vunpack.c.l.s8.bf16 %v663
    %v840 = vunpack.c.h.s8.bf16 %v648
    %v841 = vunpack.c.h.s8.bf16 %v649
    %v842 = vunpack.c.h.s8.bf16 %v650
    %v843 = vunpack.c.h.s8.bf16 %v651
    %v844 = vunpack.c.h.s8.bf16 %v652
    %v845 = vunpack.c.h.s8.bf16 %v653
    %v846 = vunpack.c.h.s8.bf16 %v654
    %v847 = vunpack.c.h.s8.bf16 %v655
    %v848 = vunpack.c.h.s8.bf16 %v656
    %v849 = vunpack.c.h.s8.bf16 %v657
    %v850 = vunpack.c.h.s8.bf16 %v658
    %v851 = vunpack.c.h.s8.bf16 %v659
    %v852 = vunpack.c.h.s8.bf16 %v660
    %v853 = vunpack.c.h.s8.bf16 %v661
    %v854 = vunpack.c.h.s8.bf16 %v662
    %v855 = vunpack.c.h.s8.bf16 %v663
    %v856 = vunpack.c.l.s8.bf16 %v664
    %v857 = vunpack.c.l.s8.bf16 %v665
    %v858 = vunpack.c.l.s8.bf16 %v666
    %v859 = vunpack.c.l.s8.bf16 %v667
    %v860 = vunpack.c.l.s8.bf16 %v668
    %v861 = vunpack.c.l.s8.bf16 %v669
    %v862 = vunpack.c.l.s8.bf16 %v670
    %v863 = vunpack.c.l.s8.bf16 %v671
    %v864 = vunpack.c.l.s8.bf16 %v672
    %v865 = vunpack.c.l.s8.bf16 %v673
    %v866 = vunpack.c.l.s8.bf16 %v674
    %v867 = vunpack.c.l.s8.bf16 %v675
    %v868 = vunpack.c.l.s8.bf16 %v676
    %v869 = vunpack.c.l.s8.bf16 %v677
    %v870 = vunpack.c.l.s8.bf16 %v678
    %v871 = vunpack.c.l.s8.bf16 %v679
    %v872 = vunpack.c.h.s8.bf16 %v664
    %v873 = vunpack.c.h.s8.bf16 %v665
    %v874 = vunpack.c.h.s8.bf16 %v666
    %v875 = vunpack.c.h.s8.bf16 %v667
    %v876 = vunpack.c.h.s8.bf16 %v668
    %v877 = vunpack.c.h.s8.bf16 %v669
    %v878 = vunpack.c.h.s8.bf16 %v670
    %v879 = vunpack.c.h.s8.bf16 %v671
    %v880 = vunpack.c.h.s8.bf16 %v672
    %v881 = vunpack.c.h.s8.bf16 %v673
    %v882 = vunpack.c.h.s8.bf16 %v674
    %v883 = vunpack.c.h.s8.bf16 %v675
    %v884 = vunpack.c.h.s8.bf16 %v676
    %v885 = vunpack.c.h.s8.bf16 %v677
    %v886 = vunpack.c.h.s8.bf16 %v678
    %v887 = vunpack.c.h.s8.bf16 %v679
    %v888 = vunpack.c.l.s8.bf16 %v680
    %v889 = vunpack.c.l.s8.bf16 %v681
    %v890 = vunpack.c.l.s8.bf16 %v682
    %v891 = vunpack.c.l.s8.bf16 %v683
    %v892 = vunpack.c.l.s8.bf16 %v684
    %v893 = vunpack.c.l.s8.bf16 %v685
    %v894 = vunpack.c.l.s8.bf16 %v686
    %v895 = vunpack.c.l.s8.bf16 %v687
    %v896 = vunpack.c.l.s8.bf16 %v688
    %v897 = vunpack.c.l.s8.bf16 %v689
    %v898 = vunpack.c.l.s8.bf16 %v690
    %v899 = vunpack.c.l.s8.bf16 %v691
    %v900 = vunpack.c.l.s8.bf16 %v692
    %v901 = vunpack.c.l.s8.bf16 %v693
    %v902 = vunpack.c.l.s8.bf16 %v694
    %v903 = vunpack.c.l.s8.bf16 %v695
    %v904 = vunpack.c.h.s8.bf16 %v680
    %v905 = vunpack.c.h.s8.bf16 %v681
    %v906 = vunpack.c.h.s8.bf16 %v682
    %v907 = vunpack.c.h.s8.bf16 %v683
    %v908 = vunpack.c.h.s8.bf16 %v684
    %v909 = vunpack.c.h.s8.bf16 %v685
    %v910 = vunpack.c.h.s8.bf16 %v686
    %v911 = vunpack.c.h.s8.bf16 %v687
    %v912 = vunpack.c.h.s8.bf16 %v688
    %v913 = vunpack.c.h.s8.bf16 %v689
    %v914 = vunpack.c.h.s8.bf16 %v690
    %v915 = vunpack.c.h.s8.bf16 %v691
    %v916 = vunpack.c.h.s8.bf16 %v692
    %v917 = vunpack.c.h.s8.bf16 %v693
    %v918 = vunpack.c.h.s8.bf16 %v694
    %v919 = vunpack.c.h.s8.bf16 %v695
    %v920 = vunpack.c.l.s8.bf16 %v696
    %v921 = vunpack.c.l.s8.bf16 %v697
    %v922 = vunpack.c.l.s8.bf16 %v698
    %v923 = vunpack.c.l.s8.bf16 %v699
    %v924 = vunpack.c.l.s8.bf16 %v700
    %v925 = vunpack.c.l.s8.bf16 %v701
    %v926 = vunpack.c.l.s8.bf16 %v702
    %v927 = vunpack.c.l.s8.bf16 %v703
    %v928 = vunpack.c.l.s8.bf16 %v704
    %v929 = vunpack.c.l.s8.bf16 %v705
    %v930 = vunpack.c.l.s8.bf16 %v706
    %v931 = vunpack.c.l.s8.bf16 %v707
    %v932 = vunpack.c.l.s8.bf16 %v708
    %v933 = vunpack.c.l.s8.bf16 %v709
    %v934 = vunpack.c.l.s8.bf16 %v710
    %v935 = vunpack.c.l.s8.bf16 %v711
    %v936 = vunpack.c.h.s8.bf16 %v696
    %v937 = vunpack.c.h.s8.bf16 %v697
    %v938 = vunpack.c.h.s8.bf16 %v698
    %v939 = vunpack.c.h.s8.bf16 %v699
    %v940 = vunpack.c.h.s8.bf16 %v700
    %v941 = vunpack.c.h.s8.bf16 %v701
    %v942 = vunpack.c.h.s8.bf16 %v702
    %v943 = vunpack.c.h.s8.bf16 %v703
    %v944 = vunpack.c.h.s8.bf16 %v704
    %v945 = vunpack.c.h.s8.bf16 %v705
    %v946 = vunpack.c.h.s8.bf16 %v706
    %v947 = vunpack.c.h.s8.bf16 %v707
    %v948 = vunpack.c.h.s8.bf16 %v708
    %v949 = vunpack.c.h.s8.bf16 %v709
    %v950 = vunpack.c.h.s8.bf16 %v710
    %v951 = vunpack.c.h.s8.bf16 %v711
    %v952 = vunpack.c.l.s8.bf16 %v712
    %v953 = vunpack.c.l.s8.bf16 %v713
    %v954 = vunpack.c.l.s8.bf16 %v714
    %v955 = vunpack.c.l.s8.bf16 %v715
    %v956 = vunpack.c.l.s8.bf16 %v716
    %v957 = vunpack.c.l.s8.bf16 %v717
    %v958 = vunpack.c.l.s8.bf16 %v718
    %v959 = vunpack.c.l.s8.bf16 %v719
    %v960 = vunpack.c.l.s8.bf16 %v720
    %v961 = vunpack.c.l.s8.bf16 %v721
    %v962 = vunpack.c.l.s8.bf16 %v722
    %v963 = vunpack.c.l.s8.bf16 %v723
    %v964 = vunpack.c.l.s8.bf16 %v724
    %v965 = vunpack.c.l.s8.bf16 %v725
    %v966 = vunpack.c.l.s8.bf16 %v726
    %v967 = vunpack.c.l.s8.bf16 %v727
    %v968 = vunpack.c.h.s8.bf16 %v712
    %v969 = vunpack.c.h.s8.bf16 %v713
    %v970 = vunpack.c.h.s8.bf16 %v714
    %v971 = vunpack.c.h.s8.bf16 %v715
    %v972 = vunpack.c.h.s8.bf16 %v716
    %v973 = vunpack.c.h.s8.bf16 %v717
    %v974 = vunpack.c.h.s8.bf16 %v718
    %v975 = vunpack.c.h.s8.bf16 %v719
    %v976 = vunpack.c.h.s8.bf16 %v720
    %v977 = vunpack.c.h.s8.bf16 %v721
    %v978 = vunpack.c.h.s8.bf16 %v722
    %v979 = vunpack.c.h.s8.bf16 %v723
    %v980 = vunpack.c.h.s8.bf16 %v724
    %v981 = vunpack.c.h.s8.bf16 %v725
    %v982 = vunpack.c.h.s8.bf16 %v726
    %v983 = vunpack.c.h.s8.bf16 %v727
    %984 = vmatprep.subr.bf16.mxu0 %v729
    %985 = vmatpush1.bf16.msra.mxu0 %v728
    %986 = vmatprep.subr.bf16.mxu0 %v745
    %987 = vmatpush1.bf16.msra.mxu0 %v744
    %988 = vmatprep.subr.bf16.mxu0 %v761
    %989 = vmatpush1.bf16.msra.mxu0 %v760
    %990 = vmatprep.subr.bf16.mxu0 %v777
    %991 = vmatpush1.bf16.msra.mxu0 %v776
    %992 = vmatprep.subr.bf16.mxu0 %v793
    %993 = vmatpush1.bf16.msra.mxu0 %v792
    %994 = vmatprep.subr.bf16.mxu0 %v809
    %995 = vmatpush1.bf16.msra.mxu0 %v808
    %996 = vmatprep.subr.bf16.mxu0 %v825
    %997 = vmatpush1.bf16.msra.mxu0 %v824
    %998 = vmatprep.subr.bf16.mxu0 %v841
    %999 = vmatpush1.bf16.msra.mxu0 %v840
    %1000 = vmatprep.subr.bf16.mxu0 %v857
    %1001 = vmatpush1.bf16.msra.mxu0 %v856
    %1002 = vmatprep.subr.bf16.mxu0 %v873
    %1003 = vmatpush1.bf16.msra.mxu0 %v872
    %1004 = vmatprep.subr.bf16.mxu0 %v889
    %1005 = vmatpush1.bf16.msra.mxu0 %v888
    %1006 = vmatprep.subr.bf16.mxu0 %v905
    %1007 = vmatpush1.bf16.msra.mxu0 %v904
    %1008 = vmatprep.subr.bf16.mxu0 %v921
    %1009 = vmatpush1.bf16.msra.mxu0 %v920
    %1010 = vmatprep.subr.bf16.mxu0 %v937
    %1011 = vmatpush1.bf16.msra.mxu0 %v936
    %1012 = vmatprep.subr.bf16.mxu0 %v953
    %1013 = vmatpush1.bf16.msra.mxu0 %v952
    %1014 = vmatprep.subr.bf16.mxu0 %v969
    %1015 = vmatpush1.bf16.msra.mxu0 %v968
    %1016 = vmatprep.mubr.bf16.mxu0 %v181
    %1017 = vmatmul.mubr.bf16.gmra.mrb[0].mxu0 %v180
    %v1018 = vpop.f32.mrb[0].mxu0
    %v1019 = vadd.f32 0.0, %v1018
    %v1020 = vpop.f32.mrb[0].mxu0
    %v1021 = vadd.f32 0.0, %v1020
    %v1022 = vpop.f32.mrb[0].mxu0
    %v1023 = vpop.f32.mrb[0].mxu0
    %1024 = vdwg.mxu0
    %1025 = vmatprep.subr.bf16.mxu0 %v731
    %1026 = vmatpush1.bf16.msra.mxu0 %v730
    %1027 = vmatprep.subr.bf16.mxu0 %v747
    %1028 = vmatpush1.bf16.msra.mxu0 %v746
    %1029 = vmatprep.subr.bf16.mxu0 %v763
    %1030 = vmatpush1.bf16.msra.mxu0 %v762
    %1031 = vmatprep.subr.bf16.mxu0 %v779
    %1032 = vmatpush1.bf16.msra.mxu0 %v778
    %1033 = vmatprep.subr.bf16.mxu0 %v795
    %1034 = vmatpush1.bf16.msra.mxu0 %v794
    %1035 = vmatprep.subr.bf16.mxu0 %v811
    %1036 = vmatpush1.bf16.msra.mxu0 %v810
    %1037 = vmatprep.subr.bf16.mxu0 %v827
    %1038 = vmatpush1.bf16.msra.mxu0 %v826
    %1039 = vmatprep.subr.bf16.mxu0 %v843
    %1040 = vmatpush1.bf16.msra.mxu0 %v842
    %1041 = vmatprep.subr.bf16.mxu0 %v859
    %1042 = vmatpush1.bf16.msra.mxu0 %v858
    %1043 = vmatprep.subr.bf16.mxu0 %v875
    %1044 = vmatpush1.bf16.msra.mxu0 %v874
    %1045 = vmatprep.subr.bf16.mxu0 %v891
    %1046 = vmatpush1.bf16.msra.mxu0 %v890
    %1047 = vmatprep.subr.bf16.mxu0 %v907
    %1048 = vmatpush1.bf16.msra.mxu0 %v906
    %1049 = vmatprep.subr.bf16.mxu0 %v923
    %1050 = vmatpush1.bf16.msra.mxu0 %v922
    %1051 = vmatprep.subr.bf16.mxu0 %v939
    %1052 = vmatpush1.bf16.msra.mxu0 %v938
    %1053 = vmatprep.subr.bf16.mxu0 %v955
    %1054 = vmatpush1.bf16.msra.mxu0 %v954
    %1055 = vmatprep.subr.bf16.mxu0 %v971
    %1056 = vmatpush1.bf16.msra.mxu0 %v970
    %1057 = vmatprep.mubr.bf16.mxu0 %v181
    %1058 = vmatmul.mubr.bf16.gmra.mrb[0].mxu0 %v180
    %v1059 = vpop.f32.mrb[0].mxu0
    %v1060 = vadd.f32 0.0, %v1059
    %v1061 = vpop.f32.mrb[0].mxu0
    %v1062 = vadd.f32 0.0, %v1061
    %v1063 = vpop.f32.mrb[0].mxu0
    %v1064 = vpop.f32.mrb[0].mxu0
    %1065 = vdwg.mxu0
    %1066 = vmatprep.subr.bf16.mxu0 %v733
    %1067 = vmatpush1.bf16.msra.mxu0 %v732
    %1068 = vmatprep.subr.bf16.mxu0 %v749
    %1069 = vmatpush1.bf16.msra.mxu0 %v748
    %1070 = vmatprep.subr.bf16.mxu0 %v765
    %1071 = vmatpush1.bf16.msra.mxu0 %v764
    %1072 = vmatprep.subr.bf16.mxu0 %v781
    %1073 = vmatpush1.bf16.msra.mxu0 %v780
    %1074 = vmatprep.subr.bf16.mxu0 %v797
    %1075 = vmatpush1.bf16.msra.mxu0 %v796
    %1076 = vmatprep.subr.bf16.mxu0 %v813
    %1077 = vmatpush1.bf16.msra.mxu0 %v812
    %1078 = vmatprep.subr.bf16.mxu0 %v829
    %1079 = vmatpush1.bf16.msra.mxu0 %v828
    %1080 = vmatprep.subr.bf16.mxu0 %v845
    %1081 = vmatpush1.bf16.msra.mxu0 %v844
    %1082 = vmatprep.subr.bf16.mxu0 %v861
    %1083 = vmatpush1.bf16.msra.mxu0 %v860
    %1084 = vmatprep.subr.bf16.mxu0 %v877
    %1085 = vmatpush1.bf16.msra.mxu0 %v876
    %1086 = vmatprep.subr.bf16.mxu0 %v893
    %1087 = vmatpush1.bf16.msra.mxu0 %v892
    %1088 = vmatprep.subr.bf16.mxu0 %v909
    %1089 = vmatpush1.bf16.msra.mxu0 %v908
    %1090 = vmatprep.subr.bf16.mxu0 %v925
    %1091 = vmatpush1.bf16.msra.mxu0 %v924
    %1092 = vmatprep.subr.bf16.mxu0 %v941
    %1093 = vmatpush1.bf16.msra.mxu0 %v940
    %1094 = vmatprep.subr.bf16.mxu0 %v957
    %1095 = vmatpush1.bf16.msra.mxu0 %v956
    %1096 = vmatprep.subr.bf16.mxu0 %v973
    %1097 = vmatpush1.bf16.msra.mxu0 %v972
    %1098 = vmatprep.mubr.bf16.mxu0 %v181
    %1099 = vmatmul.mubr.bf16.gmra.mrb[0].mxu0 %v180
    %v1100 = vpop.f32.mrb[0].mxu0
    %v1101 = vadd.f32 0.0, %v1100
    %v1102 = vpop.f32.mrb[0].mxu0
    %v1103 = vadd.f32 0.0, %v1102
    %v1104 = vpop.f32.mrb[0].mxu0
    %v1105 = vpop.f32.mrb[0].mxu0
    %1106 = vdwg.mxu0
    %1107 = vmatprep.subr.bf16.mxu0 %v735
    %1108 = vmatpush1.bf16.msra.mxu0 %v734
    %1109 = vmatprep.subr.bf16.mxu0 %v751
    %1110 = vmatpush1.bf16.msra.mxu0 %v750
    %1111 = vmatprep.subr.bf16.mxu0 %v767
    %1112 = vmatpush1.bf16.msra.mxu0 %v766
    %1113 = vmatprep.subr.bf16.mxu0 %v783
    %1114 = vmatpush1.bf16.msra.mxu0 %v782
    %1115 = vmatprep.subr.bf16.mxu0 %v799
    %1116 = vmatpush1.bf16.msra.mxu0 %v798
    %1117 = vmatprep.subr.bf16.mxu0 %v815
    %1118 = vmatpush1.bf16.msra.mxu0 %v814
    %1119 = vmatprep.subr.bf16.mxu0 %v831
    %1120 = vmatpush1.bf16.msra.mxu0 %v830
    %1121 = vmatprep.subr.bf16.mxu0 %v847
    %1122 = vmatpush1.bf16.msra.mxu0 %v846
    %1123 = vmatprep.subr.bf16.mxu0 %v863
    %1124 = vmatpush1.bf16.msra.mxu0 %v862
    %1125 = vmatprep.subr.bf16.mxu0 %v879
    %1126 = vmatpush1.bf16.msra.mxu0 %v878
    %1127 = vmatprep.subr.bf16.mxu0 %v895
    %1128 = vmatpush1.bf16.msra.mxu0 %v894
    %1129 = vmatprep.subr.bf16.mxu0 %v911
    %1130 = vmatpush1.bf16.msra.mxu0 %v910
    %1131 = vmatprep.subr.bf16.mxu0 %v927
    %1132 = vmatpush1.bf16.msra.mxu0 %v926
    %1133 = vmatprep.subr.bf16.mxu0 %v943
    %1134 = vmatpush1.bf16.msra.mxu0 %v942
    %1135 = vmatprep.subr.bf16.mxu0 %v959
    %1136 = vmatpush1.bf16.msra.mxu0 %v958
    %1137 = vmatprep.subr.bf16.mxu0 %v975
    %1138 = vmatpush1.bf16.msra.mxu0 %v974
    %1139 = vmatprep.mubr.bf16.mxu0 %v181
    %1140 = vmatmul.mubr.bf16.gmra.mrb[0].mxu0 %v180
    %v1141 = vpop.f32.mrb[0].mxu0
    %v1142 = vadd.f32 0.0, %v1141
    %v1143 = vpop.f32.mrb[0].mxu0
    %v1144 = vadd.f32 0.0, %v1143
    %v1145 = vpop.f32.mrb[0].mxu0
    %v1146 = vpop.f32.mrb[0].mxu0
    %1147 = vdwg.mxu0
    %1148 = vmatprep.subr.bf16.mxu0 %v737
    %1149 = vmatpush1.bf16.msra.mxu0 %v736
    %1150 = vmatprep.subr.bf16.mxu0 %v753
    %1151 = vmatpush1.bf16.msra.mxu0 %v752
    %1152 = vmatprep.subr.bf16.mxu0 %v769
    %1153 = vmatpush1.bf16.msra.mxu0 %v768
    %1154 = vmatprep.subr.bf16.mxu0 %v785
    %1155 = vmatpush1.bf16.msra.mxu0 %v784
    %1156 = vmatprep.subr.bf16.mxu0 %v801
    %1157 = vmatpush1.bf16.msra.mxu0 %v800
    %1158 = vmatprep.subr.bf16.mxu0 %v817
    %1159 = vmatpush1.bf16.msra.mxu0 %v816
    %1160 = vmatprep.subr.bf16.mxu0 %v833
    %1161 = vmatpush1.bf16.msra.mxu0 %v832
    %1162 = vmatprep.subr.bf16.mxu0 %v849
    %1163 = vmatpush1.bf16.msra.mxu0 %v848
    %1164 = vmatprep.subr.bf16.mxu0 %v865
    %1165 = vmatpush1.bf16.msra.mxu0 %v864
    %1166 = vmatprep.subr.bf16.mxu0 %v881
    %1167 = vmatpush1.bf16.msra.mxu0 %v880
    %1168 = vmatprep.subr.bf16.mxu0 %v897
    %1169 = vmatpush1.bf16.msra.mxu0 %v896
    %1170 = vmatprep.subr.bf16.mxu0 %v913
    %1171 = vmatpush1.bf16.msra.mxu0 %v912
    %1172 = vmatprep.subr.bf16.mxu0 %v929
    %1173 = vmatpush1.bf16.msra.mxu0 %v928
    %1174 = vmatprep.subr.bf16.mxu0 %v945
    %1175 = vmatpush1.bf16.msra.mxu0 %v944
    %1176 = vmatprep.subr.bf16.mxu0 %v961
    %1177 = vmatpush1.bf16.msra.mxu0 %v960
    %1178 = vmatprep.subr.bf16.mxu0 %v977
    %1179 = vmatpush1.bf16.msra.mxu0 %v976
    %1180 = vmatprep.mubr.bf16.mxu0 %v181
    %1181 = vmatmul.mubr.bf16.gmra.mrb[0].mxu0 %v180
    %v1182 = vpop.f32.mrb[0].mxu0
    %v1183 = vadd.f32 0.0, %v1182
    %v1184 = vpop.f32.mrb[0].mxu0
    %v1185 = vadd.f32 0.0, %v1184
    %v1186 = vpop.f32.mrb[0].mxu0
    %v1187 = vpop.f32.mrb[0].mxu0
    %1188 = vdwg.mxu0
    %1189 = vmatprep.subr.bf16.mxu0 %v739
    %1190 = vmatpush1.bf16.msra.mxu0 %v738
    %1191 = vmatprep.subr.bf16.mxu0 %v755
    %1192 = vmatpush1.bf16.msra.mxu0 %v754
    %1193 = vmatprep.subr.bf16.mxu0 %v771
    %1194 = vmatpush1.bf16.msra.mxu0 %v770
    %1195 = vmatprep.subr.bf16.mxu0 %v787
    %1196 = vmatpush1.bf16.msra.mxu0 %v786
    %1197 = vmatprep.subr.bf16.mxu0 %v803
    %1198 = vmatpush1.bf16.msra.mxu0 %v802
    %1199 = vmatprep.subr.bf16.mxu0 %v819
    %1200 = vmatpush1.bf16.msra.mxu0 %v818
    %1201 = vmatprep.subr.bf16.mxu0 %v835
    %1202 = vmatpush1.bf16.msra.mxu0 %v834
    %1203 = vmatprep.subr.bf16.mxu0 %v851
    %1204 = vmatpush1.bf16.msra.mxu0 %v850
    %1205 = vmatprep.subr.bf16.mxu0 %v867
    %1206 = vmatpush1.bf16.msra.mxu0 %v866
    %1207 = vmatprep.subr.bf16.mxu0 %v883
    %1208 = vmatpush1.bf16.msra.mxu0 %v882
    %1209 = vmatprep.subr.bf16.mxu0 %v899
    %1210 = vmatpush1.bf16.msra.mxu0 %v898
    %1211 = vmatprep.subr.bf16.mxu0 %v915
    %1212 = vmatpush1.bf16.msra.mxu0 %v914
    %1213 = vmatprep.subr.bf16.mxu0 %v931
    %1214 = vmatpush1.bf16.msra.mxu0 %v930
    %1215 = vmatprep.subr.bf16.mxu0 %v947
    %1216 = vmatpush1.bf16.msra.mxu0 %v946
    %1217 = vmatprep.subr.bf16.mxu0 %v963
    %1218 = vmatpush1.bf16.msra.mxu0 %v962
    %1219 = vmatprep.subr.bf16.mxu0 %v979
    %1220 = vmatpush1.bf16.msra.mxu0 %v978
    %1221 = vmatprep.mubr.bf16.mxu0 %v181
    %1222 = vmatmul.mubr.bf16.gmra.mrb[0].mxu0 %v180
    %v1223 = vpop.f32.mrb[0].mxu0
    %v1224 = vadd.f32 0.0, %v1223
    %v1225 = vpop.f32.mrb[0].mxu0
    %v1226 = vadd.f32 0.0, %v1225
    %v1227 = vpop.f32.mrb[0].mxu0
    %v1228 = vpop.f32.mrb[0].mxu0
    %1229 = vdwg.mxu0
    %1230 = vmatprep.subr.bf16.mxu0 %v741
    %1231 = vmatpush1.bf16.msra.mxu0 %v740
    %1232 = vmatprep.subr.bf16.mxu0 %v757
    %1233 = vmatpush1.bf16.msra.mxu0 %v756
    %1234 = vmatprep.subr.bf16.mxu0 %v773
    %1235 = vmatpush1.bf16.msra.mxu0 %v772
    %1236 = vmatprep.subr.bf16.mxu0 %v789
    %1237 = vmatpush1.bf16.msra.mxu0 %v788
    %1238 = vmatprep.subr.bf16.mxu0 %v805
    %1239 = vmatpush1.bf16.msra.mxu0 %v804
    %1240 = vmatprep.subr.bf16.mxu0 %v821
    %1241 = vmatpush1.bf16.msra.mxu0 %v820
    %1242 = vmatprep.subr.bf16.mxu0 %v837
    %1243 = vmatpush1.bf16.msra.mxu0 %v836
    %1244 = vmatprep.subr.bf16.mxu0 %v853
    %1245 = vmatpush1.bf16.msra.mxu0 %v852
    %1246 = vmatprep.subr.bf16.mxu0 %v869
    %1247 = vmatpush1.bf16.msra.mxu0 %v868
    %1248 = vmatprep.subr.bf16.mxu0 %v885
    %1249 = vmatpush1.bf16.msra.mxu0 %v884
    %1250 = vmatprep.subr.bf16.mxu0 %v901
    %1251 = vmatpush1.bf16.msra.mxu0 %v900
    %1252 = vmatprep.subr.bf16.mxu0 %v917
    %1253 = vmatpush1.bf16.msra.mxu0 %v916
    %1254 = vmatprep.subr.bf16.mxu0 %v933
    %1255 = vmatpush1.bf16.msra.mxu0 %v932
    %1256 = vmatprep.subr.bf16.mxu0 %v949
    %1257 = vmatpush1.bf16.msra.mxu0 %v948
    %1258 = vmatprep.subr.bf16.mxu0 %v965
    %1259 = vmatpush1.bf16.msra.mxu0 %v964
    %1260 = vmatprep.subr.bf16.mxu0 %v981
    %1261 = vmatpush1.bf16.msra.mxu0 %v980
    %1262 = vmatprep.mubr.bf16.mxu0 %v181
    %1263 = vmatmul.mubr.bf16.gmra.mrb[0].mxu0 %v180
    %v1264 = vpop.f32.mrb[0].mxu0
    %v1265 = vadd.f32 0.0, %v1264
    %v1266 = vpop.f32.mrb[0].mxu0
    %v1267 = vadd.f32 0.0, %v1266
    %v1268 = vpop.f32.mrb[0].mxu0
    %v1269 = vpop.f32.mrb[0].mxu0
    %1270 = vdwg.mxu0
    %1271 = vmatprep.subr.bf16.mxu0 %v743
    %1272 = vmatpush1.bf16.msra.mxu0 %v742
    %1273 = vmatprep.subr.bf16.mxu0 %v759
    %1274 = vmatpush1.bf16.msra.mxu0 %v758
    %1275 = vmatprep.subr.bf16.mxu0 %v775
    %1276 = vmatpush1.bf16.msra.mxu0 %v774
    %1277 = vmatprep.subr.bf16.mxu0 %v791
    %1278 = vmatpush1.bf16.msra.mxu0 %v790
    %1279 = vmatprep.subr.bf16.mxu0 %v807
    %1280 = vmatpush1.bf16.msra.mxu0 %v806
    %1281 = vmatprep.subr.bf16.mxu0 %v823
    %1282 = vmatpush1.bf16.msra.mxu0 %v822
    %1283 = vmatprep.subr.bf16.mxu0 %v839
    %1284 = vmatpush1.bf16.msra.mxu0 %v838
    %1285 = vmatprep.subr.bf16.mxu0 %v855
    %1286 = vmatpush1.bf16.msra.mxu0 %v854
    %1287 = vmatprep.subr.bf16.mxu0 %v871
    %1288 = vmatpush1.bf16.msra.mxu0 %v870
    %1289 = vmatprep.subr.bf16.mxu0 %v887
    %1290 = vmatpush1.bf16.msra.mxu0 %v886
    %1291 = vmatprep.subr.bf16.mxu0 %v903
    %1292 = vmatpush1.bf16.msra.mxu0 %v902
    %1293 = vmatprep.subr.bf16.mxu0 %v919
    %1294 = vmatpush1.bf16.msra.mxu0 %v918
    %1295 = vmatprep.subr.bf16.mxu0 %v935
    %1296 = vmatpush1.bf16.msra.mxu0 %v934
    %1297 = vmatprep.subr.bf16.mxu0 %v951
    %1298 = vmatpush1.bf16.msra.mxu0 %v950
    %1299 = vmatprep.subr.bf16.mxu0 %v967
    %1300 = vmatpush1.bf16.msra.mxu0 %v966
    %1301 = vmatprep.subr.bf16.mxu0 %v983
    %1302 = vmatpush1.bf16.msra.mxu0 %v982
    %1303 = vmatprep.mubr.bf16.mxu0 %v181
    %1304 = vmatmul.mubr.bf16.gmra.mrb[0].mxu0 %v180
    %v1305 = vpop.f32.mrb[0].mxu0
    %v1306 = vadd.f32 0.0, %v1305
    %v1307 = vpop.f32.mrb[0].mxu0
    %v1308 = vadd.f32 0.0, %v1307
    %v1309 = vpop.f32.mrb[0].mxu0
    %v1310 = vpop.f32.mrb[0].mxu0
    %1311 = vdwg.mxu0
    %1312 = vmatprep.subr.bf16.mxu0 %v331
    %1313 = vmatpush1.bf16.msra.mxu0 %v330
    %1314 = vmatprep.subr.bf16.mxu0 %v347
    %1315 = vmatpush1.bf16.msra.mxu0 %v346
    %1316 = vmatprep.subr.bf16.mxu0 %v363
    %1317 = vmatpush1.bf16.msra.mxu0 %v362
    %1318 = vmatprep.subr.bf16.mxu0 %v379
    %1319 = vmatpush1.bf16.msra.mxu0 %v378
    %1320 = vmatprep.subr.bf16.mxu0 %v395
    %1321 = vmatpush1.bf16.msra.mxu0 %v394
    %1322 = vmatprep.subr.bf16.mxu0 %v411
    %1323 = vmatpush1.bf16.msra.mxu0 %v410
    %1324 = vmatprep.subr.bf16.mxu0 %v427
    %1325 = vmatpush1.bf16.msra.mxu0 %v426
    %1326 = vmatprep.subr.bf16.mxu0 %v443
    %1327 = vmatpush1.bf16.msra.mxu0 %v442
    %1328 = vmatprep.subr.bf16.mxu0 %v459
    %1329 = vmatpush1.bf16.msra.mxu0 %v458
    %1330 = vmatprep.subr.bf16.mxu0 %v475
    %1331 = vmatpush1.bf16.msra.mxu0 %v474
    %1332 = vmatprep.subr.bf16.mxu0 %v491
    %1333 = vmatpush1.bf16.msra.mxu0 %v490
    %1334 = vmatprep.subr.bf16.mxu0 %v507
    %1335 = vmatpush1.bf16.msra.mxu0 %v506
    %1336 = vmatprep.subr.bf16.mxu0 %v523
    %1337 = vmatpush1.bf16.msra.mxu0 %v522
    %1338 = vmatprep.subr.bf16.mxu0 %v539
    %1339 = vmatpush1.bf16.msra.mxu0 %v538
    %1340 = vmatprep.subr.bf16.mxu0 %v555
    %1341 = vmatpush1.bf16.msra.mxu0 %v554
    %1342 = vmatprep.subr.bf16.mxu0 %v571
    %1343 = vmatpush1.bf16.msra.mxu0 %v570
    %1344 = vmatprep.mubr.bf16.mxu0 %v179
    %1345 = vmatmul.mubr.bf16.gmra.mrb[0].mxu0 %v178
    %v1346 = vpop.f32.mrb[0].mxu0
    %v1347 = vadd.f32 %v1019, %v1346
    %v1348 = vpop.f32.mrb[0].mxu0
    %v1349 = vadd.f32 %v1021, %v1348
    %v1350 = vpop.f32.mrb[0].mxu0
    %v1351 = vpop.f32.mrb[0].mxu0
    %1352 = vdwg.mxu0
    %1353 = vmatprep.subr.bf16.mxu0 %v333
    %1354 = vmatpush1.bf16.msra.mxu0 %v332
    %1355 = vmatprep.subr.bf16.mxu0 %v349
    %1356 = vmatpush1.bf16.msra.mxu0 %v348
    %1357 = vmatprep.subr.bf16.mxu0 %v365
    %1358 = vmatpush1.bf16.msra.mxu0 %v364
    %1359 = vmatprep.subr.bf16.mxu0 %v381
    %1360 = vmatpush1.bf16.msra.mxu0 %v380
    %1361 = vmatprep.subr.bf16.mxu0 %v397
    %1362 = vmatpush1.bf16.msra.mxu0 %v396
    %1363 = vmatprep.subr.bf16.mxu0 %v413
    %1364 = vmatpush1.bf16.msra.mxu0 %v412
    %1365 = vmatprep.subr.bf16.mxu0 %v429
    %1366 = vmatpush1.bf16.msra.mxu0 %v428
    %1367 = vmatprep.subr.bf16.mxu0 %v445
    %1368 = vmatpush1.bf16.msra.mxu0 %v444
    %1369 = vmatprep.subr.bf16.mxu0 %v461
    %1370 = vmatpush1.bf16.msra.mxu0 %v460
    %1371 = vmatprep.subr.bf16.mxu0 %v477
    %1372 = vmatpush1.bf16.msra.mxu0 %v476
    %1373 = vmatprep.subr.bf16.mxu0 %v493
    %1374 = vmatpush1.bf16.msra.mxu0 %v492
    %1375 = vmatprep.subr.bf16.mxu0 %v509
    %1376 = vmatpush1.bf16.msra.mxu0 %v508
    %1377 = vmatprep.subr.bf16.mxu0 %v525
    %1378 = vmatpush1.bf16.msra.mxu0 %v524
    %1379 = vmatprep.subr.bf16.mxu0 %v541
    %1380 = vmatpush1.bf16.msra.mxu0 %v540
    %1381 = vmatprep.subr.bf16.mxu0 %v557
    %1382 = vmatpush1.bf16.msra.mxu0 %v556
    %1383 = vmatprep.subr.bf16.mxu0 %v573
    %1384 = vmatpush1.bf16.msra.mxu0 %v572
    %1385 = vmatprep.mubr.bf16.mxu0 %v179
    %1386 = vmatmul.mubr.bf16.gmra.mrb[0].mxu0 %v178
    %v1387 = vpop.f32.mrb[0].mxu0
    %v1388 = vadd.f32 %v1060, %v1387
    %v1389 = vpop.f32.mrb[0].mxu0
    %v1390 = vadd.f32 %v1062, %v1389
    %v1391 = vpop.f32.mrb[0].mxu0
    %v1392 = vpop.f32.mrb[0].mxu0
    %1393 = vdwg.mxu0
    %1394 = vmatprep.subr.bf16.mxu0 %v335
    %1395 = vmatpush1.bf16.msra.mxu0 %v334
    %1396 = vmatprep.subr.bf16.mxu0 %v351
    %1397 = vmatpush1.bf16.msra.mxu0 %v350
    %1398 = vmatprep.subr.bf16.mxu0 %v367
    %1399 = vmatpush1.bf16.msra.mxu0 %v366
    %1400 = vmatprep.subr.bf16.mxu0 %v383
    %1401 = vmatpush1.bf16.msra.mxu0 %v382
    %1402 = vmatprep.subr.bf16.mxu0 %v399
    %1403 = vmatpush1.bf16.msra.mxu0 %v398
    %1404 = vmatprep.subr.bf16.mxu0 %v415
    %1405 = vmatpush1.bf16.msra.mxu0 %v414
    %1406 = vmatprep.subr.bf16.mxu0 %v431
    %1407 = vmatpush1.bf16.msra.mxu0 %v430
    %1408 = vmatprep.subr.bf16.mxu0 %v447
    %1409 = vmatpush1.bf16.msra.mxu0 %v446
    %1410 = vmatprep.subr.bf16.mxu0 %v463
    %1411 = vmatpush1.bf16.msra.mxu0 %v462
    %1412 = vmatprep.subr.bf16.mxu0 %v479
    %1413 = vmatpush1.bf16.msra.mxu0 %v478
    %1414 = vmatprep.subr.bf16.mxu0 %v495
    %1415 = vmatpush1.bf16.msra.mxu0 %v494
    %1416 = vmatprep.subr.bf16.mxu0 %v511
    %1417 = vmatpush1.bf16.msra.mxu0 %v510
    %1418 = vmatprep.subr.bf16.mxu0 %v527
    %1419 = vmatpush1.bf16.msra.mxu0 %v526
    %1420 = vmatprep.subr.bf16.mxu0 %v543
    %1421 = vmatpush1.bf16.msra.mxu0 %v542
    %1422 = vmatprep.subr.bf16.mxu0 %v559
    %1423 = vmatpush1.bf16.msra.mxu0 %v558
    %1424 = vmatprep.subr.bf16.mxu0 %v575
    %1425 = vmatpush1.bf16.msra.mxu0 %v574
    %1426 = vmatprep.mubr.bf16.mxu0 %v179
    %1427 = vmatmul.mubr.bf16.gmra.mrb[0].mxu0 %v178
    %v1428 = vpop.f32.mrb[0].mxu0
    %v1429 = vadd.f32 %v1101, %v1428
    %v1430 = vpop.f32.mrb[0].mxu0
    %v1431 = vadd.f32 %v1103, %v1430
    %v1432 = vpop.f32.mrb[0].mxu0
    %v1433 = vpop.f32.mrb[0].mxu0
    %1434 = vdwg.mxu0
    %1435 = vmatprep.subr.bf16.mxu0 %v337
    %1436 = vmatpush1.bf16.msra.mxu0 %v336
    %1437 = vmatprep.subr.bf16.mxu0 %v353
    %1438 = vmatpush1.bf16.msra.mxu0 %v352
    %1439 = vmatprep.subr.bf16.mxu0 %v369
    %1440 = vmatpush1.bf16.msra.mxu0 %v368
    %1441 = vmatprep.subr.bf16.mxu0 %v385
    %1442 = vmatpush1.bf16.msra.mxu0 %v384
    %1443 = vmatprep.subr.bf16.mxu0 %v401
    %1444 = vmatpush1.bf16.msra.mxu0 %v400
    %1445 = vmatprep.subr.bf16.mxu0 %v417
    %1446 = vmatpush1.bf16.msra.mxu0 %v416
    %1447 = vmatprep.subr.bf16.mxu0 %v433
    %1448 = vmatpush1.bf16.msra.mxu0 %v432
    %1449 = vmatprep.subr.bf16.mxu0 %v449
    %1450 = vmatpush1.bf16.msra.mxu0 %v448
    %1451 = vmatprep.subr.bf16.mxu0 %v465
    %1452 = vmatpush1.bf16.msra.mxu0 %v464
    %1453 = vmatprep.subr.bf16.mxu0 %v481
    %1454 = vmatpush1.bf16.msra.mxu0 %v480
    %1455 = vmatprep.subr.bf16.mxu0 %v497
    %1456 = vmatpush1.bf16.msra.mxu0 %v496
    %1457 = vmatprep.subr.bf16.mxu0 %v513
    %1458 = vmatpush1.bf16.msra.mxu0 %v512
    %1459 = vmatprep.subr.bf16.mxu0 %v529
    %1460 = vmatpush1.bf16.msra.mxu0 %v528
    %1461 = vmatprep.subr.bf16.mxu0 %v545
    %1462 = vmatpush1.bf16.msra.mxu0 %v544
    %1463 = vmatprep.subr.bf16.mxu0 %v561
    %1464 = vmatpush1.bf16.msra.mxu0 %v560
    %1465 = vmatprep.subr.bf16.mxu0 %v577
    %1466 = vmatpush1.bf16.msra.mxu0 %v576
    %1467 = vmatprep.mubr.bf16.mxu0 %v179
    %1468 = vmatmul.mubr.bf16.gmra.mrb[0].mxu0 %v178
    %v1469 = vpop.f32.mrb[0].mxu0
    %v1470 = vadd.f32 %v1142, %v1469
    %v1471 = vpop.f32.mrb[0].mxu0
    %v1472 = vadd.f32 %v1144, %v1471
    %v1473 = vpop.f32.mrb[0].mxu0
    %v1474 = vpop.f32.mrb[0].mxu0
    %1475 = vdwg.mxu0
    %1476 = vmatprep.subr.bf16.mxu0 %v339
    %1477 = vmatpush1.bf16.msra.mxu0 %v338
    %1478 = vmatprep.subr.bf16.mxu0 %v355
    %1479 = vmatpush1.bf16.msra.mxu0 %v354
    %1480 = vmatprep.subr.bf16.mxu0 %v371
    %1481 = vmatpush1.bf16.msra.mxu0 %v370
    %1482 = vmatprep.subr.bf16.mxu0 %v387
    %1483 = vmatpush1.bf16.msra.mxu0 %v386
    %1484 = vmatprep.subr.bf16.mxu0 %v403
    %1485 = vmatpush1.bf16.msra.mxu0 %v402
    %1486 = vmatprep.subr.bf16.mxu0 %v419
    %1487 = vmatpush1.bf16.msra.mxu0 %v418
    %1488 = vmatprep.subr.bf16.mxu0 %v435
    %1489 = vmatpush1.bf16.msra.mxu0 %v434
    %1490 = vmatprep.subr.bf16.mxu0 %v451
    %1491 = vmatpush1.bf16.msra.mxu0 %v450
    %1492 = vmatprep.subr.bf16.mxu0 %v467
    %1493 = vmatpush1.bf16.msra.mxu0 %v466
    %1494 = vmatprep.subr.bf16.mxu0 %v483
    %1495 = vmatpush1.bf16.msra.mxu0 %v482
    %1496 = vmatprep.subr.bf16.mxu0 %v499
    %1497 = vmatpush1.bf16.msra.mxu0 %v498
    %1498 = vmatprep.subr.bf16.mxu0 %v515
    %1499 = vmatpush1.bf16.msra.mxu0 %v514
    %1500 = vmatprep.subr.bf16.mxu0 %v531
    %1501 = vmatpush1.bf16.msra.mxu0 %v530
    %1502 = vmatprep.subr.bf16.mxu0 %v547
    %1503 = vmatpush1.bf16.msra.mxu0 %v546
    %1504 = vmatprep.subr.bf16.mxu0 %v563
    %1505 = vmatpush1.bf16.msra.mxu0 %v562
    %1506 = vmatprep.subr.bf16.mxu0 %v579
    %1507 = vmatpush1.bf16.msra.mxu0 %v578
    %1508 = vmatprep.mubr.bf16.mxu0 %v179
    %1509 = vmatmul.mubr.bf16.gmra.mrb[0].mxu0 %v178
    %v1510 = vpop.f32.mrb[0].mxu0
    %v1511 = vadd.f32 %v1183, %v1510
    %v1512 = vpop.f32.mrb[0].mxu0
    %v1513 = vadd.f32 %v1185, %v1512
    %v1514 = vpop.f32.mrb[0].mxu0
    %v1515 = vpop.f32.mrb[0].mxu0
    %1516 = vdwg.mxu0
    %1517 = vmatprep.subr.bf16.mxu0 %v341
    %1518 = vmatpush1.bf16.msra.mxu0 %v340
    %1519 = vmatprep.subr.bf16.mxu0 %v357
    %1520 = vmatpush1.bf16.msra.mxu0 %v356
    %1521 = vmatprep.subr.bf16.mxu0 %v373
    %1522 = vmatpush1.bf16.msra.mxu0 %v372
    %1523 = vmatprep.subr.bf16.mxu0 %v389
    %1524 = vmatpush1.bf16.msra.mxu0 %v388
    %1525 = vmatprep.subr.bf16.mxu0 %v405
    %1526 = vmatpush1.bf16.msra.mxu0 %v404
    %1527 = vmatprep.subr.bf16.mxu0 %v421
    %1528 = vmatpush1.bf16.msra.mxu0 %v420
    %1529 = vmatprep.subr.bf16.mxu0 %v437
    %1530 = vmatpush1.bf16.msra.mxu0 %v436
    %1531 = vmatprep.subr.bf16.mxu0 %v453
    %1532 = vmatpush1.bf16.msra.mxu0 %v452
    %1533 = vmatprep.subr.bf16.mxu0 %v469
    %1534 = vmatpush1.bf16.msra.mxu0 %v468
    %1535 = vmatprep.subr.bf16.mxu0 %v485
    %1536 = vmatpush1.bf16.msra.mxu0 %v484
    %1537 = vmatprep.subr.bf16.mxu0 %v501
    %1538 = vmatpush1.bf16.msra.mxu0 %v500
    %1539 = vmatprep.subr.bf16.mxu0 %v517
    %1540 = vmatpush1.bf16.msra.mxu0 %v516
    %1541 = vmatprep.subr.bf16.mxu0 %v533
    %1542 = vmatpush1.bf16.msra.mxu0 %v532
    %1543 = vmatprep.subr.bf16.mxu0 %v549
    %1544 = vmatpush1.bf16.msra.mxu0 %v548
    %1545 = vmatprep.subr.bf16.mxu0 %v565
    %1546 = vmatpush1.bf16.msra.mxu0 %v564
    %1547 = vmatprep.subr.bf16.mxu0 %v581
    %1548 = vmatpush1.bf16.msra.mxu0 %v580
    %1549 = vmatprep.mubr.bf16.mxu0 %v179
    %1550 = vmatmul.mubr.bf16.gmra.mrb[0].mxu0 %v178
    %v1551 = vpop.f32.mrb[0].mxu0
    %v1552 = vadd.f32 %v1224, %v1551
    %v1553 = vpop.f32.mrb[0].mxu0
    %v1554 = vadd.f32 %v1226, %v1553
    %v1555 = vpop.f32.mrb[0].mxu0
    %v1556 = vpop.f32.mrb[0].mxu0
    %1557 = vdwg.mxu0
    %1558 = vmatprep.subr.bf16.mxu0 %v343
    %1559 = vmatpush1.bf16.msra.mxu0 %v342
    %1560 = vmatprep.subr.bf16.mxu0 %v359
    %1561 = vmatpush1.bf16.msra.mxu0 %v358
    %1562 = vmatprep.subr.bf16.mxu0 %v375
    %1563 = vmatpush1.bf16.msra.mxu0 %v374
    %1564 = vmatprep.subr.bf16.mxu0 %v391
    %1565 = vmatpush1.bf16.msra.mxu0 %v390
    %1566 = vmatprep.subr.bf16.mxu0 %v407
    %1567 = vmatpush1.bf16.msra.mxu0 %v406
    %1568 = vmatprep.subr.bf16.mxu0 %v423
    %1569 = vmatpush1.bf16.msra.mxu0 %v422
    %1570 = vmatprep.subr.bf16.mxu0 %v439
    %1571 = vmatpush1.bf16.msra.mxu0 %v438
    %1572 = vmatprep.subr.bf16.mxu0 %v455
    %1573 = vmatpush1.bf16.msra.mxu0 %v454
    %1574 = vmatprep.subr.bf16.mxu0 %v471
    %1575 = vmatpush1.bf16.msra.mxu0 %v470
    %1576 = vmatprep.subr.bf16.mxu0 %v487
    %1577 = vmatpush1.bf16.msra.mxu0 %v486
    %1578 = vmatprep.subr.bf16.mxu0 %v503
    %1579 = vmatpush1.bf16.msra.mxu0 %v502
    %1580 = vmatprep.subr.bf16.mxu0 %v519
    %1581 = vmatpush1.bf16.msra.mxu0 %v518
    %1582 = vmatprep.subr.bf16.mxu0 %v535
    %1583 = vmatpush1.bf16.msra.mxu0 %v534
    %1584 = vmatprep.subr.bf16.mxu0 %v551
    %1585 = vmatpush1.bf16.msra.mxu0 %v550
    %1586 = vmatprep.subr.bf16.mxu0 %v567
    %1587 = vmatpush1.bf16.msra.mxu0 %v566
    %1588 = vmatprep.subr.bf16.mxu0 %v583
    %1589 = vmatpush1.bf16.msra.mxu0 %v582
    %1590 = vmatprep.mubr.bf16.mxu0 %v179
    %1591 = vmatmul.mubr.bf16.gmra.mrb[0].mxu0 %v178
    %v1592 = vpop.f32.mrb[0].mxu0
    %v1593 = vadd.f32 %v1265, %v1592
    %v1594 = vpop.f32.mrb[0].mxu0
    %v1595 = vadd.f32 %v1267, %v1594
    %v1596 = vpop.f32.mrb[0].mxu0
    %v1597 = vpop.f32.mrb[0].mxu0
    %1598 = vdwg.mxu0
    %1599 = vmatprep.subr.bf16.mxu0 %v345
    %1600 = vmatpush1.bf16.msra.mxu0 %v344
    %1601 = vmatprep.subr.bf16.mxu0 %v361
    %1602 = vmatpush1.bf16.msra.mxu0 %v360
    %1603 = vmatprep.subr.bf16.mxu0 %v377
    %1604 = vmatpush1.bf16.msra.mxu0 %v376
    %1605 = vmatprep.subr.bf16.mxu0 %v393
    %1606 = vmatpush1.bf16.msra.mxu0 %v392
    %1607 = vmatprep.subr.bf16.mxu0 %v409
    %1608 = vmatpush1.bf16.msra.mxu0 %v408
    %1609 = vmatprep.subr.bf16.mxu0 %v425
    %1610 = vmatpush1.bf16.msra.mxu0 %v424
    %1611 = vmatprep.subr.bf16.mxu0 %v441
    %1612 = vmatpush1.bf16.msra.mxu0 %v440
    %1613 = vmatprep.subr.bf16.mxu0 %v457
    %1614 = vmatpush1.bf16.msra.mxu0 %v456
    %1615 = vmatprep.subr.bf16.mxu0 %v473
    %1616 = vmatpush1.bf16.msra.mxu0 %v472
    %1617 = vmatprep.subr.bf16.mxu0 %v489
    %1618 = vmatpush1.bf16.msra.mxu0 %v488
    %1619 = vmatprep.subr.bf16.mxu0 %v505
    %1620 = vmatpush1.bf16.msra.mxu0 %v504
    %1621 = vmatprep.subr.bf16.mxu0 %v521
    %1622 = vmatpush1.bf16.msra.mxu0 %v520
    %1623 = vmatprep.subr.bf16.mxu0 %v537
    %1624 = vmatpush1.bf16.msra.mxu0 %v536
    %1625 = vmatprep.subr.bf16.mxu0 %v553
    %1626 = vmatpush1.bf16.msra.mxu0 %v552
    %1627 = vmatprep.subr.bf16.mxu0 %v569
    %1628 = vmatpush1.bf16.msra.mxu0 %v568
    %1629 = vmatprep.subr.bf16.mxu0 %v585
    %1630 = vmatpush1.bf16.msra.mxu0 %v584
    %1631 = vmatprep.mubr.bf16.mxu0 %v179
    %1632 = vmatmul.mubr.bf16.gmra.mrb[0].mxu0 %v178
    %v1633 = vpop.f32.mrb[0].mxu0
    %v1634 = vadd.f32 %v1306, %v1633
    %v1635 = vpop.f32.mrb[0].mxu0
    %v1636 = vadd.f32 %v1308, %v1635
    %v1637 = vpop.f32.mrb[0].mxu0
    %v1638 = vpop.f32.mrb[0].mxu0
    %1639 = vdwg.mxu0
    %s1640 = sshll.u32 %s185, 4
    %1641 = dma.done [#allocation4], %s1640
    // Predicated region
    $region98: #{net_forward.1} parent=1 // pred_check
      _
    $region99: #{net_forward.1} parent=1 // pred_check_branch
      %1643 = sbr.rel target = $region101
    $region100: #{net_forward.1} parent=1 // pred_region
      %1644 = sst [smem:[#allocation24]] [#allocation31]
      %1645 = sst [smem:[#allocation25]] [#allocation30]
    $region101: #{net_forward.1} parent=1 // pred_fallthru
      _
    %1647 = shalt.err (0)
    %s1649 = sshll.u32 [#allocation3], 4
    %s1650 = int_to_ptr.vmem [resolvable:$true] %s1649
    %1652 = dma.hbm_to_vmem [thread:$0]  %s4, 16384, %s1650, [#allocation5]
    %v1653 = vld [vmem:[#allocation2] sm:$0xff]
    %v1654 = vld [vmem:[#allocation2 + $0x8] sm:$0xff]
    %v1655 = vld [vmem:[#allocation2 + $0x10] sm:$0xff]
    %v1656 = vld [vmem:[#allocation2 + $0x18] sm:$0xff]
    %v1657 = vld [vmem:[#allocation2 + $0x20] sm:$0xff]
    %v1658 = vld [vmem:[#allocation2 + $0x28] sm:$0xff]
    %v1659 = vld [vmem:[#allocation2 + $0x30] sm:$0xff]
    %v1660 = vld [vmem:[#allocation2 + $0x38] sm:$0xff]
    %v1661 = vld [vmem:[#allocation2 + $0x40] sm:$0xff]
    %v1662 = vld [vmem:[#allocation2 + $0x48] sm:$0xff]
    %v1663 = vld [vmem:[#allocation2 + $0x50] sm:$0xff]
    %v1664 = vld [vmem:[#allocation2 + $0x58] sm:$0xff]
    %v1665 = vld [vmem:[#allocation2 + $0x60] sm:$0xff]
    %v1666 = vld [vmem:[#allocation2 + $0x68] sm:$0xff]
    %v1667 = vld [vmem:[#allocation2 + $0x70] sm:$0xff]
    %v1668 = vld [vmem:[#allocation2 + $0x78] sm:$0xff]
    %v1669 = vld [vmem:[#allocation2 + $0x80] sm:$0xff]
    %v1670 = vld [vmem:[#allocation2 + $0x88] sm:$0xff]
    %v1671 = vld [vmem:[#allocation2 + $0x90] sm:$0xff]
    %v1672 = vld [vmem:[#allocation2 + $0x98] sm:$0xff]
    %v1673 = vld [vmem:[#allocation2 + $0xa0] sm:$0xff]
    %v1674 = vld [vmem:[#allocation2 + $0xa8] sm:$0xff]
    %v1675 = vld [vmem:[#allocation2 + $0xb0] sm:$0xff]
    %v1676 = vld [vmem:[#allocation2 + $0xb8] sm:$0xff]
    %v1677 = vld [vmem:[#allocation2 + $0xc0] sm:$0xff]
    %v1678 = vld [vmem:[#allocation2 + $0xc8] sm:$0xff]
    %v1679 = vld [vmem:[#allocation2 + $0xd0] sm:$0xff]
    %v1680 = vld [vmem:[#allocation2 + $0xd8] sm:$0xff]
    %v1681 = vld [vmem:[#allocation2 + $0xe0] sm:$0xff]
    %v1682 = vld [vmem:[#allocation2 + $0xe8] sm:$0xff]
    %v1683 = vld [vmem:[#allocation2 + $0xf0] sm:$0xff]
    %v1684 = vld [vmem:[#allocation2 + $0xf8] sm:$0xff]
    %v1685 = vld [vmem:[#allocation2 + $0x100] sm:$0xff]
    %v1686 = vld [vmem:[#allocation2 + $0x108] sm:$0xff]
    %v1687 = vld [vmem:[#allocation2 + $0x110] sm:$0xff]
    %v1688 = vld [vmem:[#allocation2 + $0x118] sm:$0xff]
    %v1689 = vld [vmem:[#allocation2 + $0x120] sm:$0xff]
    %v1690 = vld [vmem:[#allocation2 + $0x128] sm:$0xff]
    %v1691 = vld [vmem:[#allocation2 + $0x130] sm:$0xff]
    %v1692 = vld [vmem:[#allocation2 + $0x138] sm:$0xff]
    %v1693 = vld [vmem:[#allocation2 + $0x140] sm:$0xff]
    %v1694 = vld [vmem:[#allocation2 + $0x148] sm:$0xff]
    %v1695 = vld [vmem:[#allocation2 + $0x150] sm:$0xff]
    %v1696 = vld [vmem:[#allocation2 + $0x158] sm:$0xff]
    %v1697 = vld [vmem:[#allocation2 + $0x160] sm:$0xff]
    %v1698 = vld [vmem:[#allocation2 + $0x168] sm:$0xff]
    %v1699 = vld [vmem:[#allocation2 + $0x170] sm:$0xff]
    %v1700 = vld [vmem:[#allocation2 + $0x178] sm:$0xff]
    %v1701 = vld [vmem:[#allocation2 + $0x180] sm:$0xff]
    %v1702 = vld [vmem:[#allocation2 + $0x188] sm:$0xff]
    %v1703 = vld [vmem:[#allocation2 + $0x190] sm:$0xff]
    %v1704 = vld [vmem:[#allocation2 + $0x198] sm:$0xff]
    %v1705 = vld [vmem:[#allocation2 + $0x1a0] sm:$0xff]
    %v1706 = vld [vmem:[#allocation2 + $0x1a8] sm:$0xff]
    %v1707 = vld [vmem:[#allocation2 + $0x1b0] sm:$0xff]
    %v1708 = vld [vmem:[#allocation2 + $0x1b8] sm:$0xff]
    %v1709 = vld [vmem:[#allocation2 + $0x1c0] sm:$0xff]
    %v1710 = vld [vmem:[#allocation2 + $0x1c8] sm:$0xff]
    %v1711 = vld [vmem:[#allocation2 + $0x1d0] sm:$0xff]
    %v1712 = vld [vmem:[#allocation2 + $0x1d8] sm:$0xff]
    %v1713 = vld [vmem:[#allocation2 + $0x1e0] sm:$0xff]
    %v1714 = vld [vmem:[#allocation2 + $0x1e8] sm:$0xff]
    %v1715 = vld [vmem:[#allocation2 + $0x1f0] sm:$0xff]
    %v1716 = vld [vmem:[#allocation2 + $0x1f8] sm:$0xff]
    %v1717 = vld [vmem:[#allocation2 + $0x200] sm:$0xff]
    %v1718 = vld [vmem:[#allocation2 + $0x208] sm:$0xff]
    %v1719 = vld [vmem:[#allocation2 + $0x210] sm:$0xff]
    %v1720 = vld [vmem:[#allocation2 + $0x218] sm:$0xff]
    %v1721 = vld [vmem:[#allocation2 + $0x220] sm:$0xff]
    %v1722 = vld [vmem:[#allocation2 + $0x228] sm:$0xff]
    %v1723 = vld [vmem:[#allocation2 + $0x230] sm:$0xff]
    %v1724 = vld [vmem:[#allocation2 + $0x238] sm:$0xff]
    %v1725 = vld [vmem:[#allocation2 + $0x240] sm:$0xff]
    %v1726 = vld [vmem:[#allocation2 + $0x248] sm:$0xff]
    %v1727 = vld [vmem:[#allocation2 + $0x250] sm:$0xff]
    %v1728 = vld [vmem:[#allocation2 + $0x258] sm:$0xff]
    %v1729 = vld [vmem:[#allocation2 + $0x260] sm:$0xff]
    %v1730 = vld [vmem:[#allocation2 + $0x268] sm:$0xff]
    %v1731 = vld [vmem:[#allocation2 + $0x270] sm:$0xff]
    %v1732 = vld [vmem:[#allocation2 + $0x278] sm:$0xff]
    %v1733 = vld [vmem:[#allocation2 + $0x280] sm:$0xff]
    %v1734 = vld [vmem:[#allocation2 + $0x288] sm:$0xff]
    %v1735 = vld [vmem:[#allocation2 + $0x290] sm:$0xff]
    %v1736 = vld [vmem:[#allocation2 + $0x298] sm:$0xff]
    %v1737 = vld [vmem:[#allocation2 + $0x2a0] sm:$0xff]
    %v1738 = vld [vmem:[#allocation2 + $0x2a8] sm:$0xff]
    %v1739 = vld [vmem:[#allocation2 + $0x2b0] sm:$0xff]
    %v1740 = vld [vmem:[#allocation2 + $0x2b8] sm:$0xff]
    %v1741 = vld [vmem:[#allocation2 + $0x2c0] sm:$0xff]
    %v1742 = vld [vmem:[#allocation2 + $0x2c8] sm:$0xff]
    %v1743 = vld [vmem:[#allocation2 + $0x2d0] sm:$0xff]
    %v1744 = vld [vmem:[#allocation2 + $0x2d8] sm:$0xff]
    %v1745 = vld [vmem:[#allocation2 + $0x2e0] sm:$0xff]
    %v1746 = vld [vmem:[#allocation2 + $0x2e8] sm:$0xff]
    %v1747 = vld [vmem:[#allocation2 + $0x2f0] sm:$0xff]
    %v1748 = vld [vmem:[#allocation2 + $0x2f8] sm:$0xff]
    %v1749 = vld [vmem:[#allocation2 + $0x300] sm:$0xff]
    %v1750 = vld [vmem:[#allocation2 + $0x308] sm:$0xff]
    %v1751 = vld [vmem:[#allocation2 + $0x310] sm:$0xff]
    %v1752 = vld [vmem:[#allocation2 + $0x318] sm:$0xff]
    %v1753 = vld [vmem:[#allocation2 + $0x320] sm:$0xff]
    %v1754 = vld [vmem:[#allocation2 + $0x328] sm:$0xff]
    %v1755 = vld [vmem:[#allocation2 + $0x330] sm:$0xff]
    %v1756 = vld [vmem:[#allocation2 + $0x338] sm:$0xff]
    %v1757 = vld [vmem:[#allocation2 + $0x340] sm:$0xff]
    %v1758 = vld [vmem:[#allocation2 + $0x348] sm:$0xff]
    %v1759 = vld [vmem:[#allocation2 + $0x350] sm:$0xff]
    %v1760 = vld [vmem:[#allocation2 + $0x358] sm:$0xff]
    %v1761 = vld [vmem:[#allocation2 + $0x360] sm:$0xff]
    %v1762 = vld [vmem:[#allocation2 + $0x368] sm:$0xff]
    %v1763 = vld [vmem:[#allocation2 + $0x370] sm:$0xff]
    %v1764 = vld [vmem:[#allocation2 + $0x378] sm:$0xff]
    %v1765 = vld [vmem:[#allocation2 + $0x380] sm:$0xff]
    %v1766 = vld [vmem:[#allocation2 + $0x388] sm:$0xff]
    %v1767 = vld [vmem:[#allocation2 + $0x390] sm:$0xff]
    %v1768 = vld [vmem:[#allocation2 + $0x398] sm:$0xff]
    %v1769 = vld [vmem:[#allocation2 + $0x3a0] sm:$0xff]
    %v1770 = vld [vmem:[#allocation2 + $0x3a8] sm:$0xff]
    %v1771 = vld [vmem:[#allocation2 + $0x3b0] sm:$0xff]
    %v1772 = vld [vmem:[#allocation2 + $0x3b8] sm:$0xff]
    %v1773 = vld [vmem:[#allocation2 + $0x3c0] sm:$0xff]
    %v1774 = vld [vmem:[#allocation2 + $0x3c8] sm:$0xff]
    %v1775 = vld [vmem:[#allocation2 + $0x3d0] sm:$0xff]
    %v1776 = vld [vmem:[#allocation2 + $0x3d8] sm:$0xff]
    %v1777 = vld [vmem:[#allocation2 + $0x3e0] sm:$0xff]
    %v1778 = vld [vmem:[#allocation2 + $0x3e8] sm:$0xff]
    %v1779 = vld [vmem:[#allocation2 + $0x3f0] sm:$0xff]
    %v1780 = vld [vmem:[#allocation2 + $0x3f8] sm:$0xff]
    %v1781 = vunpack.c.l.s8.bf16 %v1653
    %v1782 = vunpack.c.l.s8.bf16 %v1654
    %v1783 = vunpack.c.l.s8.bf16 %v1655
    %v1784 = vunpack.c.l.s8.bf16 %v1656
    %v1785 = vunpack.c.l.s8.bf16 %v1657
    %v1786 = vunpack.c.l.s8.bf16 %v1658
    %v1787 = vunpack.c.l.s8.bf16 %v1659
    %v1788 = vunpack.c.l.s8.bf16 %v1660
    %v1789 = vunpack.c.l.s8.bf16 %v1661
    %v1790 = vunpack.c.l.s8.bf16 %v1662
    %v1791 = vunpack.c.l.s8.bf16 %v1663
    %v1792 = vunpack.c.l.s8.bf16 %v1664
    %v1793 = vunpack.c.l.s8.bf16 %v1665
    %v1794 = vunpack.c.l.s8.bf16 %v1666
    %v1795 = vunpack.c.l.s8.bf16 %v1667
    %v1796 = vunpack.c.l.s8.bf16 %v1668
    %v1797 = vunpack.c.h.s8.bf16 %v1653
    %v1798 = vunpack.c.h.s8.bf16 %v1654
    %v1799 = vunpack.c.h.s8.bf16 %v1655
    %v1800 = vunpack.c.h.s8.bf16 %v1656
    %v1801 = vunpack.c.h.s8.bf16 %v1657
    %v1802 = vunpack.c.h.s8.bf16 %v1658
    %v1803 = vunpack.c.h.s8.bf16 %v1659
    %v1804 = vunpack.c.h.s8.bf16 %v1660
    %v1805 = vunpack.c.h.s8.bf16 %v1661
    %v1806 = vunpack.c.h.s8.bf16 %v1662
    %v1807 = vunpack.c.h.s8.bf16 %v1663
    %v1808 = vunpack.c.h.s8.bf16 %v1664
    %v1809 = vunpack.c.h.s8.bf16 %v1665
    %v1810 = vunpack.c.h.s8.bf16 %v1666
    %v1811 = vunpack.c.h.s8.bf16 %v1667
    %v1812 = vunpack.c.h.s8.bf16 %v1668
    %v1813 = vunpack.c.l.s8.bf16 %v1669
    %v1814 = vunpack.c.l.s8.bf16 %v1670
    %v1815 = vunpack.c.l.s8.bf16 %v1671
    %v1816 = vunpack.c.l.s8.bf16 %v1672
    %v1817 = vunpack.c.l.s8.bf16 %v1673
    %v1818 = vunpack.c.l.s8.bf16 %v1674
    %v1819 = vunpack.c.l.s8.bf16 %v1675
    %v1820 = vunpack.c.l.s8.bf16 %v1676
    %v1821 = vunpack.c.l.s8.bf16 %v1677
    %v1822 = vunpack.c.l.s8.bf16 %v1678
    %v1823 = vunpack.c.l.s8.bf16 %v1679
    %v1824 = vunpack.c.l.s8.bf16 %v1680
    %v1825 = vunpack.c.l.s8.bf16 %v1681
    %v1826 = vunpack.c.l.s8.bf16 %v1682
    %v1827 = vunpack.c.l.s8.bf16 %v1683
    %v1828 = vunpack.c.l.s8.bf16 %v1684
    %v1829 = vunpack.c.h.s8.bf16 %v1669
    %v1830 = vunpack.c.h.s8.bf16 %v1670
    %v1831 = vunpack.c.h.s8.bf16 %v1671
    %v1832 = vunpack.c.h.s8.bf16 %v1672
    %v1833 = vunpack.c.h.s8.bf16 %v1673
    %v1834 = vunpack.c.h.s8.bf16 %v1674
    %v1835 = vunpack.c.h.s8.bf16 %v1675
    %v1836 = vunpack.c.h.s8.bf16 %v1676
    %v1837 = vunpack.c.h.s8.bf16 %v1677
    %v1838 = vunpack.c.h.s8.bf16 %v1678
    %v1839 = vunpack.c.h.s8.bf16 %v1679
    %v1840 = vunpack.c.h.s8.bf16 %v1680
    %v1841 = vunpack.c.h.s8.bf16 %v1681
    %v1842 = vunpack.c.h.s8.bf16 %v1682
    %v1843 = vunpack.c.h.s8.bf16 %v1683
    %v1844 = vunpack.c.h.s8.bf16 %v1684
    %v1845 = vunpack.c.l.s8.bf16 %v1685
    %v1846 = vunpack.c.l.s8.bf16 %v1686
    %v1847 = vunpack.c.l.s8.bf16 %v1687
    %v1848 = vunpack.c.l.s8.bf16 %v1688
    %v1849 = vunpack.c.l.s8.bf16 %v1689
    %v1850 = vunpack.c.l.s8.bf16 %v1690
    %v1851 = vunpack.c.l.s8.bf16 %v1691
    %v1852 = vunpack.c.l.s8.bf16 %v1692
    %v1853 = vunpack.c.l.s8.bf16 %v1693
    %v1854 = vunpack.c.l.s8.bf16 %v1694
    %v1855 = vunpack.c.l.s8.bf16 %v1695
    %v1856 = vunpack.c.l.s8.bf16 %v1696
    %v1857 = vunpack.c.l.s8.bf16 %v1697
    %v1858 = vunpack.c.l.s8.bf16 %v1698
    %v1859 = vunpack.c.l.s8.bf16 %v1699
    %v1860 = vunpack.c.l.s8.bf16 %v1700
    %v1861 = vunpack.c.h.s8.bf16 %v1685
    %v1862 = vunpack.c.h.s8.bf16 %v1686
    %v1863 = vunpack.c.h.s8.bf16 %v1687
    %v1864 = vunpack.c.h.s8.bf16 %v1688
    %v1865 = vunpack.c.h.s8.bf16 %v1689
    %v1866 = vunpack.c.h.s8.bf16 %v1690
    %v1867 = vunpack.c.h.s8.bf16 %v1691
    %v1868 = vunpack.c.h.s8.bf16 %v1692
    %v1869 = vunpack.c.h.s8.bf16 %v1693
    %v1870 = vunpack.c.h.s8.bf16 %v1694
    %v1871 = vunpack.c.h.s8.bf16 %v1695
    %v1872 = vunpack.c.h.s8.bf16 %v1696
    %v1873 = vunpack.c.h.s8.bf16 %v1697
    %v1874 = vunpack.c.h.s8.bf16 %v1698
    %v1875 = vunpack.c.h.s8.bf16 %v1699
    %v1876 = vunpack.c.h.s8.bf16 %v1700
    %v1877 = vunpack.c.l.s8.bf16 %v1701
    %v1878 = vunpack.c.l.s8.bf16 %v1702
    %v1879 = vunpack.c.l.s8.bf16 %v1703
    %v1880 = vunpack.c.l.s8.bf16 %v1704
    %v1881 = vunpack.c.l.s8.bf16 %v1705
    %v1882 = vunpack.c.l.s8.bf16 %v1706
    %v1883 = vunpack.c.l.s8.bf16 %v1707
    %v1884 = vunpack.c.l.s8.bf16 %v1708
    %v1885 = vunpack.c.l.s8.bf16 %v1709
    %v1886 = vunpack.c.l.s8.bf16 %v1710
    %v1887 = vunpack.c.l.s8.bf16 %v1711
    %v1888 = vunpack.c.l.s8.bf16 %v1712
    %v1889 = vunpack.c.l.s8.bf16 %v1713
    %v1890 = vunpack.c.l.s8.bf16 %v1714
    %v1891 = vunpack.c.l.s8.bf16 %v1715
    %v1892 = vunpack.c.l.s8.bf16 %v1716
    %v1893 = vunpack.c.h.s8.bf16 %v1701
    %v1894 = vunpack.c.h.s8.bf16 %v1702
    %v1895 = vunpack.c.h.s8.bf16 %v1703
    %v1896 = vunpack.c.h.s8.bf16 %v1704
    %v1897 = vunpack.c.h.s8.bf16 %v1705
    %v1898 = vunpack.c.h.s8.bf16 %v1706
    %v1899 = vunpack.c.h.s8.bf16 %v1707
    %v1900 = vunpack.c.h.s8.bf16 %v1708
    %v1901 = vunpack.c.h.s8.bf16 %v1709
    %v1902 = vunpack.c.h.s8.bf16 %v1710
    %v1903 = vunpack.c.h.s8.bf16 %v1711
    %v1904 = vunpack.c.h.s8.bf16 %v1712
    %v1905 = vunpack.c.h.s8.bf16 %v1713
    %v1906 = vunpack.c.h.s8.bf16 %v1714
    %v1907 = vunpack.c.h.s8.bf16 %v1715
    %v1908 = vunpack.c.h.s8.bf16 %v1716
    %v1909 = vunpack.c.l.s8.bf16 %v1717
    %v1910 = vunpack.c.l.s8.bf16 %v1718
    %v1911 = vunpack.c.l.s8.bf16 %v1719
    %v1912 = vunpack.c.l.s8.bf16 %v1720
    %v1913 = vunpack.c.l.s8.bf16 %v1721
    %v1914 = vunpack.c.l.s8.bf16 %v1722
    %v1915 = vunpack.c.l.s8.bf16 %v1723
    %v1916 = vunpack.c.l.s8.bf16 %v1724
    %v1917 = vunpack.c.l.s8.bf16 %v1725
    %v1918 = vunpack.c.l.s8.bf16 %v1726
    %v1919 = vunpack.c.l.s8.bf16 %v1727
    %v1920 = vunpack.c.l.s8.bf16 %v1728
    %v1921 = vunpack.c.l.s8.bf16 %v1729
    %v1922 = vunpack.c.l.s8.bf16 %v1730
    %v1923 = vunpack.c.l.s8.bf16 %v1731
    %v1924 = vunpack.c.l.s8.bf16 %v1732
    %v1925 = vunpack.c.h.s8.bf16 %v1717
    %v1926 = vunpack.c.h.s8.bf16 %v1718
    %v1927 = vunpack.c.h.s8.bf16 %v1719
    %v1928 = vunpack.c.h.s8.bf16 %v1720
    %v1929 = vunpack.c.h.s8.bf16 %v1721
    %v1930 = vunpack.c.h.s8.bf16 %v1722
    %v1931 = vunpack.c.h.s8.bf16 %v1723
    %v1932 = vunpack.c.h.s8.bf16 %v1724
    %v1933 = vunpack.c.h.s8.bf16 %v1725
    %v1934 = vunpack.c.h.s8.bf16 %v1726
    %v1935 = vunpack.c.h.s8.bf16 %v1727
    %v1936 = vunpack.c.h.s8.bf16 %v1728
    %v1937 = vunpack.c.h.s8.bf16 %v1729
    %v1938 = vunpack.c.h.s8.bf16 %v1730
    %v1939 = vunpack.c.h.s8.bf16 %v1731
    %v1940 = vunpack.c.h.s8.bf16 %v1732
    %v1941 = vunpack.c.l.s8.bf16 %v1733
    %v1942 = vunpack.c.l.s8.bf16 %v1734
    %v1943 = vunpack.c.l.s8.bf16 %v1735
    %v1944 = vunpack.c.l.s8.bf16 %v1736
    %v1945 = vunpack.c.l.s8.bf16 %v1737
    %v1946 = vunpack.c.l.s8.bf16 %v1738
    %v1947 = vunpack.c.l.s8.bf16 %v1739
    %v1948 = vunpack.c.l.s8.bf16 %v1740
    %v1949 = vunpack.c.l.s8.bf16 %v1741
    %v1950 = vunpack.c.l.s8.bf16 %v1742
    %v1951 = vunpack.c.l.s8.bf16 %v1743
    %v1952 = vunpack.c.l.s8.bf16 %v1744
    %v1953 = vunpack.c.l.s8.bf16 %v1745
    %v1954 = vunpack.c.l.s8.bf16 %v1746
    %v1955 = vunpack.c.l.s8.bf16 %v1747
    %v1956 = vunpack.c.l.s8.bf16 %v1748
    %v1957 = vunpack.c.h.s8.bf16 %v1733
    %v1958 = vunpack.c.h.s8.bf16 %v1734
    %v1959 = vunpack.c.h.s8.bf16 %v1735
    %v1960 = vunpack.c.h.s8.bf16 %v1736
    %v1961 = vunpack.c.h.s8.bf16 %v1737
    %v1962 = vunpack.c.h.s8.bf16 %v1738
    %v1963 = vunpack.c.h.s8.bf16 %v1739
    %v1964 = vunpack.c.h.s8.bf16 %v1740
    %v1965 = vunpack.c.h.s8.bf16 %v1741
    %v1966 = vunpack.c.h.s8.bf16 %v1742
    %v1967 = vunpack.c.h.s8.bf16 %v1743
    %v1968 = vunpack.c.h.s8.bf16 %v1744
    %v1969 = vunpack.c.h.s8.bf16 %v1745
    %v1970 = vunpack.c.h.s8.bf16 %v1746
    %v1971 = vunpack.c.h.s8.bf16 %v1747
    %v1972 = vunpack.c.h.s8.bf16 %v1748
    %v1973 = vunpack.c.l.s8.bf16 %v1749
    %v1974 = vunpack.c.l.s8.bf16 %v1750
    %v1975 = vunpack.c.l.s8.bf16 %v1751
    %v1976 = vunpack.c.l.s8.bf16 %v1752
    %v1977 = vunpack.c.l.s8.bf16 %v1753
    %v1978 = vunpack.c.l.s8.bf16 %v1754
    %v1979 = vunpack.c.l.s8.bf16 %v1755
    %v1980 = vunpack.c.l.s8.bf16 %v1756
    %v1981 = vunpack.c.l.s8.bf16 %v1757
    %v1982 = vunpack.c.l.s8.bf16 %v1758
    %v1983 = vunpack.c.l.s8.bf16 %v1759
    %v1984 = vunpack.c.l.s8.bf16 %v1760
    %v1985 = vunpack.c.l.s8.bf16 %v1761
    %v1986 = vunpack.c.l.s8.bf16 %v1762
    %v1987 = vunpack.c.l.s8.bf16 %v1763
    %v1988 = vunpack.c.l.s8.bf16 %v1764
    %v1989 = vunpack.c.h.s8.bf16 %v1749
    %v1990 = vunpack.c.h.s8.bf16 %v1750
    %v1991 = vunpack.c.h.s8.bf16 %v1751
    %v1992 = vunpack.c.h.s8.bf16 %v1752
    %v1993 = vunpack.c.h.s8.bf16 %v1753
    %v1994 = vunpack.c.h.s8.bf16 %v1754
    %v1995 = vunpack.c.h.s8.bf16 %v1755
    %v1996 = vunpack.c.h.s8.bf16 %v1756
    %v1997 = vunpack.c.h.s8.bf16 %v1757
    %v1998 = vunpack.c.h.s8.bf16 %v1758
    %v1999 = vunpack.c.h.s8.bf16 %v1759
    %v2000 = vunpack.c.h.s8.bf16 %v1760
    %v2001 = vunpack.c.h.s8.bf16 %v1761
    %v2002 = vunpack.c.h.s8.bf16 %v1762
    %v2003 = vunpack.c.h.s8.bf16 %v1763
    %v2004 = vunpack.c.h.s8.bf16 %v1764
    %v2005 = vunpack.c.l.s8.bf16 %v1765
    %v2006 = vunpack.c.l.s8.bf16 %v1766
    %v2007 = vunpack.c.l.s8.bf16 %v1767
    %v2008 = vunpack.c.l.s8.bf16 %v1768
    %v2009 = vunpack.c.l.s8.bf16 %v1769
    %v2010 = vunpack.c.l.s8.bf16 %v1770
    %v2011 = vunpack.c.l.s8.bf16 %v1771
    %v2012 = vunpack.c.l.s8.bf16 %v1772
    %v2013 = vunpack.c.l.s8.bf16 %v1773
    %v2014 = vunpack.c.l.s8.bf16 %v1774
    %v2015 = vunpack.c.l.s8.bf16 %v1775
    %v2016 = vunpack.c.l.s8.bf16 %v1776
    %v2017 = vunpack.c.l.s8.bf16 %v1777
    %v2018 = vunpack.c.l.s8.bf16 %v1778
    %v2019 = vunpack.c.l.s8.bf16 %v1779
    %v2020 = vunpack.c.l.s8.bf16 %v1780
    %v2021 = vunpack.c.h.s8.bf16 %v1765
    %v2022 = vunpack.c.h.s8.bf16 %v1766
    %v2023 = vunpack.c.h.s8.bf16 %v1767
    %v2024 = vunpack.c.h.s8.bf16 %v1768
    %v2025 = vunpack.c.h.s8.bf16 %v1769
    %v2026 = vunpack.c.h.s8.bf16 %v1770
    %v2027 = vunpack.c.h.s8.bf16 %v1771
    %v2028 = vunpack.c.h.s8.bf16 %v1772
    %v2029 = vunpack.c.h.s8.bf16 %v1773
    %v2030 = vunpack.c.h.s8.bf16 %v1774
    %v2031 = vunpack.c.h.s8.bf16 %v1775
    %v2032 = vunpack.c.h.s8.bf16 %v1776
    %v2033 = vunpack.c.h.s8.bf16 %v1777
    %v2034 = vunpack.c.h.s8.bf16 %v1778
    %v2035 = vunpack.c.h.s8.bf16 %v1779
    %v2036 = vunpack.c.h.s8.bf16 %v1780
    %2037 = vmatprep.subr.bf16.mxu0 %v1782
    %2038 = vmatpush1.bf16.msra.mxu0 %v1781
    %2039 = vmatprep.subr.bf16.mxu0 %v1798
    %2040 = vmatpush1.bf16.msra.mxu0 %v1797
    %2041 = vmatprep.subr.bf16.mxu0 %v1814
    %2042 = vmatpush1.bf16.msra.mxu0 %v1813
    %2043 = vmatprep.subr.bf16.mxu0 %v1830
    %2044 = vmatpush1.bf16.msra.mxu0 %v1829
    %2045 = vmatprep.subr.bf16.mxu0 %v1846
    %2046 = vmatpush1.bf16.msra.mxu0 %v1845
    %2047 = vmatprep.subr.bf16.mxu0 %v1862
    %2048 = vmatpush1.bf16.msra.mxu0 %v1861
    %2049 = vmatprep.subr.bf16.mxu0 %v1878
    %2050 = vmatpush1.bf16.msra.mxu0 %v1877
    %2051 = vmatprep.subr.bf16.mxu0 %v1894
    %2052 = vmatpush1.bf16.msra.mxu0 %v1893
    %2053 = vmatprep.subr.bf16.mxu0 %v1910
    %2054 = vmatpush1.bf16.msra.mxu0 %v1909
    %2055 = vmatprep.subr.bf16.mxu0 %v1926
    %2056 = vmatpush1.bf16.msra.mxu0 %v1925
    %2057 = vmatprep.subr.bf16.mxu0 %v1942
    %2058 = vmatpush1.bf16.msra.mxu0 %v1941
    %2059 = vmatprep.subr.bf16.mxu0 %v1958
    %2060 = vmatpush1.bf16.msra.mxu0 %v1957
    %2061 = vmatprep.subr.bf16.mxu0 %v1974
    %2062 = vmatpush1.bf16.msra.mxu0 %v1973
    %2063 = vmatprep.subr.bf16.mxu0 %v1990
    %2064 = vmatpush1.bf16.msra.mxu0 %v1989
    %2065 = vmatprep.subr.bf16.mxu0 %v2006
    %2066 = vmatpush1.bf16.msra.mxu0 %v2005
    %2067 = vmatprep.subr.bf16.mxu0 %v2022
    %2068 = vmatpush1.bf16.msra.mxu0 %v2021
    %2069 = vmatprep.mubr.bf16.mxu0 %v183
    %2070 = vmatmul.mubr.bf16.gmra.mrb[0].mxu0 %v182
    %v2071 = vpop.f32.mrb[0].mxu0
    %v2072 = vadd.f32 0.0, %v2071
    %v2073 = vpop.f32.mrb[0].mxu0
    %v2074 = vadd.f32 0.0, %v2073
    %v2075 = vpop.f32.mrb[0].mxu0
    %v2076 = vpop.f32.mrb[0].mxu0
    %2077 = vdwg.mxu0
    %2078 = vmatprep.subr.bf16.mxu0 %v1784
    %2079 = vmatpush1.bf16.msra.mxu0 %v1783
    %2080 = vmatprep.subr.bf16.mxu0 %v1800
    %2081 = vmatpush1.bf16.msra.mxu0 %v1799
    %2082 = vmatprep.subr.bf16.mxu0 %v1816
    %2083 = vmatpush1.bf16.msra.mxu0 %v1815
    %2084 = vmatprep.subr.bf16.mxu0 %v1832
    %2085 = vmatpush1.bf16.msra.mxu0 %v1831
    %2086 = vmatprep.subr.bf16.mxu0 %v1848
    %2087 = vmatpush1.bf16.msra.mxu0 %v1847
    %2088 = vmatprep.subr.bf16.mxu0 %v1864
    %2089 = vmatpush1.bf16.msra.mxu0 %v1863
    %2090 = vmatprep.subr.bf16.mxu0 %v1880
    %2091 = vmatpush1.bf16.msra.mxu0 %v1879
    %2092 = vmatprep.subr.bf16.mxu0 %v1896
    %2093 = vmatpush1.bf16.msra.mxu0 %v1895
    %2094 = vmatprep.subr.bf16.mxu0 %v1912
    %2095 = vmatpush1.bf16.msra.mxu0 %v1911
    %2096 = vmatprep.subr.bf16.mxu0 %v1928
    %2097 = vmatpush1.bf16.msra.mxu0 %v1927
    %2098 = vmatprep.subr.bf16.mxu0 %v1944
    %2099 = vmatpush1.bf16.msra.mxu0 %v1943
    %2100 = vmatprep.subr.bf16.mxu0 %v1960
    %2101 = vmatpush1.bf16.msra.mxu0 %v1959
    %2102 = vmatprep.subr.bf16.mxu0 %v1976
    %2103 = vmatpush1.bf16.msra.mxu0 %v1975
    %2104 = vmatprep.subr.bf16.mxu0 %v1992
    %2105 = vmatpush1.bf16.msra.mxu0 %v1991
    %2106 = vmatprep.subr.bf16.mxu0 %v2008
    %2107 = vmatpush1.bf16.msra.mxu0 %v2007
    %2108 = vmatprep.subr.bf16.mxu0 %v2024
    %2109 = vmatpush1.bf16.msra.mxu0 %v2023
    %2110 = vmatprep.mubr.bf16.mxu0 %v183
    %2111 = vmatmul.mubr.bf16.gmra.mrb[0].mxu0 %v182
    %v2112 = vpop.f32.mrb[0].mxu0
    %v2113 = vadd.f32 0.0, %v2112
    %v2114 = vpop.f32.mrb[0].mxu0
    %v2115 = vadd.f32 0.0, %v2114
    %v2116 = vpop.f32.mrb[0].mxu0
    %v2117 = vpop.f32.mrb[0].mxu0
    %2118 = vdwg.mxu0
    %2119 = vmatprep.subr.bf16.mxu0 %v1786
    %2120 = vmatpush1.bf16.msra.mxu0 %v1785
    %2121 = vmatprep.subr.bf16.mxu0 %v1802
    %2122 = vmatpush1.bf16.msra.mxu0 %v1801
    %2123 = vmatprep.subr.bf16.mxu0 %v1818
    %2124 = vmatpush1.bf16.msra.mxu0 %v1817
    %2125 = vmatprep.subr.bf16.mxu0 %v1834
    %2126 = vmatpush1.bf16.msra.mxu0 %v1833
    %2127 = vmatprep.subr.bf16.mxu0 %v1850
    %2128 = vmatpush1.bf16.msra.mxu0 %v1849
    %2129 = vmatprep.subr.bf16.mxu0 %v1866
    %2130 = vmatpush1.bf16.msra.mxu0 %v1865
    %2131 = vmatprep.subr.bf16.mxu0 %v1882
    %2132 = vmatpush1.bf16.msra.mxu0 %v1881
    %2133 = vmatprep.subr.bf16.mxu0 %v1898
    %2134 = vmatpush1.bf16.msra.mxu0 %v1897
    %2135 = vmatprep.subr.bf16.mxu0 %v1914
    %2136 = vmatpush1.bf16.msra.mxu0 %v1913
    %2137 = vmatprep.subr.bf16.mxu0 %v1930
    %2138 = vmatpush1.bf16.msra.mxu0 %v1929
    %2139 = vmatprep.subr.bf16.mxu0 %v1946
    %2140 = vmatpush1.bf16.msra.mxu0 %v1945
    %2141 = vmatprep.subr.bf16.mxu0 %v1962
    %2142 = vmatpush1.bf16.msra.mxu0 %v1961
    %2143 = vmatprep.subr.bf16.mxu0 %v1978
    %2144 = vmatpush1.bf16.msra.mxu0 %v1977
    %2145 = vmatprep.subr.bf16.mxu0 %v1994
    %2146 = vmatpush1.bf16.msra.mxu0 %v1993
    %2147 = vmatprep.subr.bf16.mxu0 %v2010
    %2148 = vmatpush1.bf16.msra.mxu0 %v2009
    %2149 = vmatprep.subr.bf16.mxu0 %v2026
    %2150 = vmatpush1.bf16.msra.mxu0 %v2025
    %2151 = vmatprep.mubr.bf16.mxu0 %v183
    %2152 = vmatmul.mubr.bf16.gmra.mrb[0].mxu0 %v182
    %v2153 = vpop.f32.mrb[0].mxu0
    %v2154 = vadd.f32 0.0, %v2153
    %v2155 = vpop.f32.mrb[0].mxu0
    %v2156 = vadd.f32 0.0, %v2155
    %v2157 = vpop.f32.mrb[0].mxu0
    %v2158 = vpop.f32.mrb[0].mxu0
    %2159 = vdwg.mxu0
    %2160 = vmatprep.subr.bf16.mxu0 %v1788
    %2161 = vmatpush1.bf16.msra.mxu0 %v1787
    %2162 = vmatprep.subr.bf16.mxu0 %v1804
    %2163 = vmatpush1.bf16.msra.mxu0 %v1803
    %2164 = vmatprep.subr.bf16.mxu0 %v1820
    %2165 = vmatpush1.bf16.msra.mxu0 %v1819
    %2166 = vmatprep.subr.bf16.mxu0 %v1836
    %2167 = vmatpush1.bf16.msra.mxu0 %v1835
    %2168 = vmatprep.subr.bf16.mxu0 %v1852
    %2169 = vmatpush1.bf16.msra.mxu0 %v1851
    %2170 = vmatprep.subr.bf16.mxu0 %v1868
    %2171 = vmatpush1.bf16.msra.mxu0 %v1867
    %2172 = vmatprep.subr.bf16.mxu0 %v1884
    %2173 = vmatpush1.bf16.msra.mxu0 %v1883
    %2174 = vmatprep.subr.bf16.mxu0 %v1900
    %2175 = vmatpush1.bf16.msra.mxu0 %v1899
    %2176 = vmatprep.subr.bf16.mxu0 %v1916
    %2177 = vmatpush1.bf16.msra.mxu0 %v1915
    %2178 = vmatprep.subr.bf16.mxu0 %v1932
    %2179 = vmatpush1.bf16.msra.mxu0 %v1931
    %2180 = vmatprep.subr.bf16.mxu0 %v1948
    %2181 = vmatpush1.bf16.msra.mxu0 %v1947
    %2182 = vmatprep.subr.bf16.mxu0 %v1964
    %2183 = vmatpush1.bf16.msra.mxu0 %v1963
    %2184 = vmatprep.subr.bf16.mxu0 %v1980
    %2185 = vmatpush1.bf16.msra.mxu0 %v1979
    %2186 = vmatprep.subr.bf16.mxu0 %v1996
    %2187 = vmatpush1.bf16.msra.mxu0 %v1995
    %2188 = vmatprep.subr.bf16.mxu0 %v2012
    %2189 = vmatpush1.bf16.msra.mxu0 %v2011
    %2190 = vmatprep.subr.bf16.mxu0 %v2028
    %2191 = vmatpush1.bf16.msra.mxu0 %v2027
    %2192 = vmatprep.mubr.bf16.mxu0 %v183
    %2193 = vmatmul.mubr.bf16.gmra.mrb[0].mxu0 %v182
    %v2194 = vpop.f32.mrb[0].mxu0
    %v2195 = vadd.f32 0.0, %v2194
    %v2196 = vpop.f32.mrb[0].mxu0
    %v2197 = vadd.f32 0.0, %v2196
    %v2198 = vpop.f32.mrb[0].mxu0
    %v2199 = vpop.f32.mrb[0].mxu0
    %2200 = vdwg.mxu0
    %2201 = vmatprep.subr.bf16.mxu0 %v1790
    %2202 = vmatpush1.bf16.msra.mxu0 %v1789
    %2203 = vmatprep.subr.bf16.mxu0 %v1806
    %2204 = vmatpush1.bf16.msra.mxu0 %v1805
    %2205 = vmatprep.subr.bf16.mxu0 %v1822
    %2206 = vmatpush1.bf16.msra.mxu0 %v1821
    %2207 = vmatprep.subr.bf16.mxu0 %v1838
    %2208 = vmatpush1.bf16.msra.mxu0 %v1837
    %2209 = vmatprep.subr.bf16.mxu0 %v1854
    %2210 = vmatpush1.bf16.msra.mxu0 %v1853
    %2211 = vmatprep.subr.bf16.mxu0 %v1870
    %2212 = vmatpush1.bf16.msra.mxu0 %v1869
    %2213 = vmatprep.subr.bf16.mxu0 %v1886
    %2214 = vmatpush1.bf16.msra.mxu0 %v1885
    %2215 = vmatprep.subr.bf16.mxu0 %v1902
    %2216 = vmatpush1.bf16.msra.mxu0 %v1901
    %2217 = vmatprep.subr.bf16.mxu0 %v1918
    %2218 = vmatpush1.bf16.msra.mxu0 %v1917
    %2219 = vmatprep.subr.bf16.mxu0 %v1934
    %2220 = vmatpush1.bf16.msra.mxu0 %v1933
    %2221 = vmatprep.subr.bf16.mxu0 %v1950
    %2222 = vmatpush1.bf16.msra.mxu0 %v1949
    %2223 = vmatprep.subr.bf16.mxu0 %v1966
    %2224 = vmatpush1.bf16.msra.mxu0 %v1965
    %2225 = vmatprep.subr.bf16.mxu0 %v1982
    %2226 = vmatpush1.bf16.msra.mxu0 %v1981
    %2227 = vmatprep.subr.bf16.mxu0 %v1998
    %2228 = vmatpush1.bf16.msra.mxu0 %v1997
    %2229 = vmatprep.subr.bf16.mxu0 %v2014
    %2230 = vmatpush1.bf16.msra.mxu0 %v2013
    %2231 = vmatprep.subr.bf16.mxu0 %v2030
    %2232 = vmatpush1.bf16.msra.mxu0 %v2029
    %2233 = vmatprep.mubr.bf16.mxu0 %v183
    %2234 = vmatmul.mubr.bf16.gmra.mrb[0].mxu0 %v182
    %v2235 = vpop.f32.mrb[0].mxu0
    %v2236 = vadd.f32 0.0, %v2235
    %v2237 = vpop.f32.mrb[0].mxu0
    %v2238 = vadd.f32 0.0, %v2237
    %v2239 = vpop.f32.mrb[0].mxu0
    %v2240 = vpop.f32.mrb[0].mxu0
    %2241 = vdwg.mxu0
    %2242 = vmatprep.subr.bf16.mxu0 %v1792
    %2243 = vmatpush1.bf16.msra.mxu0 %v1791
    %2244 = vmatprep.subr.bf16.mxu0 %v1808
    %2245 = vmatpush1.bf16.msra.mxu0 %v1807
    %2246 = vmatprep.subr.bf16.mxu0 %v1824
    %2247 = vmatpush1.bf16.msra.mxu0 %v1823
    %2248 = vmatprep.subr.bf16.mxu0 %v1840
    %2249 = vmatpush1.bf16.msra.mxu0 %v1839
    %2250 = vmatprep.subr.bf16.mxu0 %v1856
    %2251 = vmatpush1.bf16.msra.mxu0 %v1855
    %2252 = vmatprep.subr.bf16.mxu0 %v1872
    %2253 = vmatpush1.bf16.msra.mxu0 %v1871
    %2254 = vmatprep.subr.bf16.mxu0 %v1888
    %2255 = vmatpush1.bf16.msra.mxu0 %v1887
    %2256 = vmatprep.subr.bf16.mxu0 %v1904
    %2257 = vmatpush1.bf16.msra.mxu0 %v1903
    %2258 = vmatprep.subr.bf16.mxu0 %v1920
    %2259 = vmatpush1.bf16.msra.mxu0 %v1919
    %2260 = vmatprep.subr.bf16.mxu0 %v1936
    %2261 = vmatpush1.bf16.msra.mxu0 %v1935
    %2262 = vmatprep.subr.bf16.mxu0 %v1952
    %2263 = vmatpush1.bf16.msra.mxu0 %v1951
    %2264 = vmatprep.subr.bf16.mxu0 %v1968
    %2265 = vmatpush1.bf16.msra.mxu0 %v1967
    %2266 = vmatprep.subr.bf16.mxu0 %v1984
    %2267 = vmatpush1.bf16.msra.mxu0 %v1983
    %2268 = vmatprep.subr.bf16.mxu0 %v2000
    %2269 = vmatpush1.bf16.msra.mxu0 %v1999
    %2270 = vmatprep.subr.bf16.mxu0 %v2016
    %2271 = vmatpush1.bf16.msra.mxu0 %v2015
    %2272 = vmatprep.subr.bf16.mxu0 %v2032
    %2273 = vmatpush1.bf16.msra.mxu0 %v2031
    %2274 = vmatprep.mubr.bf16.mxu0 %v183
    %2275 = vmatmul.mubr.bf16.gmra.mrb[0].mxu0 %v182
    %v2276 = vpop.f32.mrb[0].mxu0
    %v2277 = vadd.f32 0.0, %v2276
    %v2278 = vpop.f32.mrb[0].mxu0
    %v2279 = vadd.f32 0.0, %v2278
    %v2280 = vpop.f32.mrb[0].mxu0
    %v2281 = vpop.f32.mrb[0].mxu0
    %2282 = vdwg.mxu0
    %2283 = vmatprep.subr.bf16.mxu0 %v1794
    %2284 = vmatpush1.bf16.msra.mxu0 %v1793
    %2285 = vmatprep.subr.bf16.mxu0 %v1810
    %2286 = vmatpush1.bf16.msra.mxu0 %v1809
    %2287 = vmatprep.subr.bf16.mxu0 %v1826
    %2288 = vmatpush1.bf16.msra.mxu0 %v1825
    %2289 = vmatprep.subr.bf16.mxu0 %v1842
    %2290 = vmatpush1.bf16.msra.mxu0 %v1841
    %2291 = vmatprep.subr.bf16.mxu0 %v1858
    %2292 = vmatpush1.bf16.msra.mxu0 %v1857
    %2293 = vmatprep.subr.bf16.mxu0 %v1874
    %2294 = vmatpush1.bf16.msra.mxu0 %v1873
    %2295 = vmatprep.subr.bf16.mxu0 %v1890
    %2296 = vmatpush1.bf16.msra.mxu0 %v1889
    %2297 = vmatprep.subr.bf16.mxu0 %v1906
    %2298 = vmatpush1.bf16.msra.mxu0 %v1905
    %2299 = vmatprep.subr.bf16.mxu0 %v1922
    %2300 = vmatpush1.bf16.msra.mxu0 %v1921
    %2301 = vmatprep.subr.bf16.mxu0 %v1938
    %2302 = vmatpush1.bf16.msra.mxu0 %v1937
    %2303 = vmatprep.subr.bf16.mxu0 %v1954
    %2304 = vmatpush1.bf16.msra.mxu0 %v1953
    %2305 = vmatprep.subr.bf16.mxu0 %v1970
    %2306 = vmatpush1.bf16.msra.mxu0 %v1969
    %2307 = vmatprep.subr.bf16.mxu0 %v1986
    %2308 = vmatpush1.bf16.msra.mxu0 %v1985
    %2309 = vmatprep.subr.bf16.mxu0 %v2002
    %2310 = vmatpush1.bf16.msra.mxu0 %v2001
    %2311 = vmatprep.subr.bf16.mxu0 %v2018
    %2312 = vmatpush1.bf16.msra.mxu0 %v2017
    %2313 = vmatprep.subr.bf16.mxu0 %v2034
    %2314 = vmatpush1.bf16.msra.mxu0 %v2033
    %2315 = vmatprep.mubr.bf16.mxu0 %v183
    %2316 = vmatmul.mubr.bf16.gmra.mrb[0].mxu0 %v182
    %v2317 = vpop.f32.mrb[0].mxu0
    %v2318 = vadd.f32 0.0, %v2317
    %v2319 = vpop.f32.mrb[0].mxu0
    %v2320 = vadd.f32 0.0, %v2319
    %v2321 = vpop.f32.mrb[0].mxu0
    %v2322 = vpop.f32.mrb[0].mxu0
    %2323 = vdwg.mxu0
    %2324 = vmatprep.subr.bf16.mxu0 %v1796
    %2325 = vmatpush1.bf16.msra.mxu0 %v1795
    %2326 = vmatprep.subr.bf16.mxu0 %v1812
    %2327 = vmatpush1.bf16.msra.mxu0 %v1811
    %2328 = vmatprep.subr.bf16.mxu0 %v1828
    %2329 = vmatpush1.bf16.msra.mxu0 %v1827
    %2330 = vmatprep.subr.bf16.mxu0 %v1844
    %2331 = vmatpush1.bf16.msra.mxu0 %v1843
    %2332 = vmatprep.subr.bf16.mxu0 %v1860
    %2333 = vmatpush1.bf16.msra.mxu0 %v1859
    %2334 = vmatprep.subr.bf16.mxu0 %v1876
    %2335 = vmatpush1.bf16.msra.mxu0 %v1875
    %2336 = vmatprep.subr.bf16.mxu0 %v1892
    %2337 = vmatpush1.bf16.msra.mxu0 %v1891
    %2338 = vmatprep.subr.bf16.mxu0 %v1908
    %2339 = vmatpush1.bf16.msra.mxu0 %v1907
    %2340 = vmatprep.subr.bf16.mxu0 %v1924
    %2341 = vmatpush1.bf16.msra.mxu0 %v1923
    %2342 = vmatprep.subr.bf16.mxu0 %v1940
    %2343 = vmatpush1.bf16.msra.mxu0 %v1939
    %2344 = vmatprep.subr.bf16.mxu0 %v1956
    %2345 = vmatpush1.bf16.msra.mxu0 %v1955
    %2346 = vmatprep.subr.bf16.mxu0 %v1972
    %2347 = vmatpush1.bf16.msra.mxu0 %v1971
    %2348 = vmatprep.subr.bf16.mxu0 %v1988
    %2349 = vmatpush1.bf16.msra.mxu0 %v1987
    %2350 = vmatprep.subr.bf16.mxu0 %v2004
    %2351 = vmatpush1.bf16.msra.mxu0 %v2003
    %2352 = vmatprep.subr.bf16.mxu0 %v2020
    %2353 = vmatpush1.bf16.msra.mxu0 %v2019
    %2354 = vmatprep.subr.bf16.mxu0 %v2036
    %2355 = vmatpush1.bf16.msra.mxu0 %v2035
    %2356 = vmatprep.mubr.bf16.mxu0 %v183
    %2357 = vmatmul.mubr.bf16.gmra.mrb[0].mxu0 %v182
    %v2358 = vpop.f32.mrb[0].mxu0
    %v2359 = vadd.f32 0.0, %v2358
    %v2360 = vpop.f32.mrb[0].mxu0
    %v2361 = vadd.f32 0.0, %v2360
    %v2362 = vpop.f32.mrb[0].mxu0
    %v2363 = vpop.f32.mrb[0].mxu0
    %2364 = vdwg.mxu0
    %v2365 = vadd.f32 %v1347, %v2072
    %v2366 = vadd.f32 %v1349, %v2074
    %v2367 = vadd.f32 %v1388, %v2113
    %v2368 = vadd.f32 %v1390, %v2115
    %v2369 = vadd.f32 %v1429, %v2154
    %v2370 = vadd.f32 %v1431, %v2156
    %v2371 = vadd.f32 %v1470, %v2195
    %v2372 = vadd.f32 %v1472, %v2197
    %v2373 = vadd.f32 %v1511, %v2236
    %v2374 = vadd.f32 %v1513, %v2238
    %v2375 = vadd.f32 %v1552, %v2277
    %v2376 = vadd.f32 %v1554, %v2279
    %v2377 = vadd.f32 %v1593, %v2318
    %v2378 = vadd.f32 %v1595, %v2320
    %v2379 = vadd.f32 %v1634, %v2359
    %v2380 = vadd.f32 %v1636, %v2361
    %v2381 = vld [vmem:[#allocation6] sm:$0xff]
    %v2382 = vld [vmem:[#allocation6 + $0x8] sm:$0xff]
    %v2385 = vlaneseq
    %v2386 = vshrl.u32 %v2385, 7
    %v2387 = vsub.s32 0, %v2386
    %v2388 = vrot.slane %v2381, %v2387
    %v2389 = vlaneseq
    %v2390 = vshrl.u32 %v2389, 7
    %v2391 = vsub.s32 1, %v2390
    %v2392 = vrot.slane %v2381, %v2391
    %v2393 = vlaneseq
    %v2394 = vshrl.u32 %v2393, 7
    %v2395 = vsub.s32 2, %v2394
    %v2396 = vrot.slane %v2381, %v2395
    %v2397 = vlaneseq
    %v2398 = vshrl.u32 %v2397, 7
    %v2399 = vsub.s32 3, %v2398
    %v2400 = vrot.slane %v2381, %v2399
    %v2401 = vlaneseq
    %v2402 = vshrl.u32 %v2401, 7
    %v2403 = vsub.s32 4, %v2402
    %v2404 = vrot.slane %v2381, %v2403
    %v2405 = vlaneseq
    %v2406 = vshrl.u32 %v2405, 7
    %v2407 = vsub.s32 5, %v2406
    %v2408 = vrot.slane %v2381, %v2407
    %v2409 = vlaneseq
    %v2410 = vshrl.u32 %v2409, 7
    %v2411 = vsub.s32 6, %v2410
    %v2412 = vrot.slane %v2381, %v2411
    %v2413 = vlaneseq
    %v2414 = vshrl.u32 %v2413, 7
    %v2415 = vsub.s32 7, %v2414
    %v2416 = vrot.slane %v2381, %v2415
    %v2417 = vlaneseq
    %v2418 = vshrl.u32 %v2417, 7
    %v2419 = vsub.s32 0, %v2418
    %v2420 = vrot.slane %v2382, %v2419
    %v2421 = vlaneseq
    %v2422 = vshrl.u32 %v2421, 7
    %v2423 = vsub.s32 1, %v2422
    %v2424 = vrot.slane %v2382, %v2423
    %v2425 = vlaneseq
    %v2426 = vshrl.u32 %v2425, 7
    %v2427 = vsub.s32 2, %v2426
    %v2428 = vrot.slane %v2382, %v2427
    %v2429 = vlaneseq
    %v2430 = vshrl.u32 %v2429, 7
    %v2431 = vsub.s32 3, %v2430
    %v2432 = vrot.slane %v2382, %v2431
    %v2433 = vlaneseq
    %v2434 = vshrl.u32 %v2433, 7
    %v2435 = vsub.s32 4, %v2434
    %v2436 = vrot.slane %v2382, %v2435
    %v2437 = vlaneseq
    %v2438 = vshrl.u32 %v2437, 7
    %v2439 = vsub.s32 5, %v2438
    %v2440 = vrot.slane %v2382, %v2439
    %v2441 = vlaneseq
    %v2442 = vshrl.u32 %v2441, 7
    %v2443 = vsub.s32 6, %v2442
    %v2444 = vrot.slane %v2382, %v2443
    %v2445 = vlaneseq
    %v2446 = vshrl.u32 %v2445, 7
    %v2447 = vsub.s32 7, %v2446
    %v2448 = vrot.slane %v2382, %v2447
    %v2465 = vmul.f32 %v2365, %v2388
    %v2466 = vmul.f32 %v2366, %v2392
    %v2467 = vmul.f32 %v2367, %v2396
    %v2468 = vmul.f32 %v2368, %v2400
    %v2469 = vmul.f32 %v2369, %v2404
    %v2470 = vmul.f32 %v2370, %v2408
    %v2471 = vmul.f32 %v2371, %v2412
    %v2472 = vmul.f32 %v2372, %v2416
    %v2473 = vmul.f32 %v2373, %v2420
    %v2474 = vmul.f32 %v2374, %v2424
    %v2475 = vmul.f32 %v2375, %v2428
    %v2476 = vmul.f32 %v2376, %v2432
    %v2477 = vmul.f32 %v2377, %v2436
    %v2478 = vmul.f32 %v2378, %v2440
    %v2479 = vmul.f32 %v2379, %v2444
    %v2480 = vmul.f32 %v2380, %v2448
    %v2481 = vld [vmem:[#allocation8] sm:$0xff]
    %v2482 = vld [vmem:[#allocation8 + $0x8] sm:$0xff]
    %v2485 = vlaneseq
    %v2486 = vshrl.u32 %v2485, 7
    %v2487 = vsub.s32 0, %v2486
    %v2488 = vrot.slane %v2481, %v2487
    %v2489 = vlaneseq
    %v2490 = vshrl.u32 %v2489, 7
    %v2491 = vsub.s32 1, %v2490
    %v2492 = vrot.slane %v2481, %v2491
    %v2493 = vlaneseq
    %v2494 = vshrl.u32 %v2493, 7
    %v2495 = vsub.s32 2, %v2494
    %v2496 = vrot.slane %v2481, %v2495
    %v2497 = vlaneseq
    %v2498 = vshrl.u32 %v2497, 7
    %v2499 = vsub.s32 3, %v2498
    %v2500 = vrot.slane %v2481, %v2499
    %v2501 = vlaneseq
    %v2502 = vshrl.u32 %v2501, 7
    %v2503 = vsub.s32 4, %v2502
    %v2504 = vrot.slane %v2481, %v2503
    %v2505 = vlaneseq
    %v2506 = vshrl.u32 %v2505, 7
    %v2507 = vsub.s32 5, %v2506
    %v2508 = vrot.slane %v2481, %v2507
    %v2509 = vlaneseq
    %v2510 = vshrl.u32 %v2509, 7
    %v2511 = vsub.s32 6, %v2510
    %v2512 = vrot.slane %v2481, %v2511
    %v2513 = vlaneseq
    %v2514 = vshrl.u32 %v2513, 7
    %v2515 = vsub.s32 7, %v2514
    %v2516 = vrot.slane %v2481, %v2515
    %v2517 = vlaneseq
    %v2518 = vshrl.u32 %v2517, 7
    %v2519 = vsub.s32 0, %v2518
    %v2520 = vrot.slane %v2482, %v2519
    %v2521 = vlaneseq
    %v2522 = vshrl.u32 %v2521, 7
    %v2523 = vsub.s32 1, %v2522
    %v2524 = vrot.slane %v2482, %v2523
    %v2525 = vlaneseq
    %v2526 = vshrl.u32 %v2525, 7
    %v2527 = vsub.s32 2, %v2526
    %v2528 = vrot.slane %v2482, %v2527
    %v2529 = vlaneseq
    %v2530 = vshrl.u32 %v2529, 7
    %v2531 = vsub.s32 3, %v2530
    %v2532 = vrot.slane %v2482, %v2531
    %v2533 = vlaneseq
    %v2534 = vshrl.u32 %v2533, 7
    %v2535 = vsub.s32 4, %v2534
    %v2536 = vrot.slane %v2482, %v2535
    %v2537 = vlaneseq
    %v2538 = vshrl.u32 %v2537, 7
    %v2539 = vsub.s32 5, %v2538
    %v2540 = vrot.slane %v2482, %v2539
    %v2541 = vlaneseq
    %v2542 = vshrl.u32 %v2541, 7
    %v2543 = vsub.s32 6, %v2542
    %v2544 = vrot.slane %v2482, %v2543
    %v2545 = vlaneseq
    %v2546 = vshrl.u32 %v2545, 7
    %v2547 = vsub.s32 7, %v2546
    %v2548 = vrot.slane %v2482, %v2547
    %v2565 = vadd.f32 %v2465, %v2488
    %v2566 = vadd.f32 %v2466, %v2492
    %v2567 = vadd.f32 %v2467, %v2496
    %v2568 = vadd.f32 %v2468, %v2500
    %v2569 = vadd.f32 %v2469, %v2504
    %v2570 = vadd.f32 %v2470, %v2508
    %v2571 = vadd.f32 %v2471, %v2512
    %v2572 = vadd.f32 %v2472, %v2516
    %v2573 = vadd.f32 %v2473, %v2520
    %v2574 = vadd.f32 %v2474, %v2524
    %v2575 = vadd.f32 %v2475, %v2528
    %v2576 = vadd.f32 %v2476, %v2532
    %v2577 = vadd.f32 %v2477, %v2536
    %v2578 = vadd.f32 %v2478, %v2540
    %v2579 = vadd.f32 %v2479, %v2544
    %v2580 = vadd.f32 %v2480, %v2548
    %v2581 = vmax.f32 %v2565, 0.0
    %v2582 = vmax.f32 %v2566, 0.0
    %v2583 = vmax.f32 %v2567, 0.0
    %v2584 = vmax.f32 %v2568, 0.0
    %v2585 = vmax.f32 %v2569, 0.0
    %v2586 = vmax.f32 %v2570, 0.0
    %v2587 = vmax.f32 %v2571, 0.0
    %v2588 = vmax.f32 %v2572, 0.0
    %v2589 = vmax.f32 %v2573, 0.0
    %v2590 = vmax.f32 %v2574, 0.0
    %v2591 = vmax.f32 %v2575, 0.0
    %v2592 = vmax.f32 %v2576, 0.0
    %v2593 = vmax.f32 %v2577, 0.0
    %v2594 = vmax.f32 %v2578, 0.0
    %v2595 = vmax.f32 %v2579, 0.0
    %v2596 = vmax.f32 %v2580, 0.0
    %v2597 = vpack.c.bf16 %v2581, %v2581
    %v2598 = vpack.c.bf16 %v2582, %v2582
    %v2599 = vpack.c.bf16 %v2583, %v2583
    %v2600 = vpack.c.bf16 %v2584, %v2584
    %v2601 = vpack.c.bf16 %v2585, %v2585
    %v2602 = vpack.c.bf16 %v2586, %v2586
    %v2603 = vpack.c.bf16 %v2587, %v2587
    %v2604 = vpack.c.bf16 %v2588, %v2588
    %v2605 = vpack.c.bf16 %v2589, %v2589
    %v2606 = vpack.c.bf16 %v2590, %v2590
    %v2607 = vpack.c.bf16 %v2591, %v2591
    %v2608 = vpack.c.bf16 %v2592, %v2592
    %v2609 = vpack.c.bf16 %v2593, %v2593
    %v2610 = vpack.c.bf16 %v2594, %v2594
    %v2611 = vpack.c.bf16 %v2595, %v2595
    %v2612 = vpack.c.bf16 %v2596, %v2596
    %s2613 = smul.u32 2, 64
    %s2614 = smul.u32 %s2613, 8
    %s2615 = sshll.u32 %s2614, 4
    %2616 = dma.done [#allocation5], %s2615
    %s2617 = scalar_lea.hbm %s4, 16384
    %s2618 = scalar_lea.vmem [#allocation3], 1024
    %s2619 = scalar_lea.sflag [#allocation5], 1
    // Predicated region
    $region102: #{net_forward.1} parent=1 // pred_check
      _
    $region103: #{net_forward.1} parent=1 // pred_check_branch
      %2621 = sbr.rel target = $region105
    $region104: #{net_forward.1} parent=1 // pred_region
      %2622 = sst [smem:[#allocation24]] [#allocation33]
      %2623 = sst [smem:[#allocation25]] [#allocation32]
    $region105: #{net_forward.1} parent=1 // pred_fallthru
      _
    %2625 = shalt.err (0)
    %s2627 = sshll.u32 %s2618, 4
    %s2628 = int_to_ptr.vmem [resolvable:$true] %s2627
    %2630 = dma.hbm_to_vmem [thread:$0]  %s2617, 16384, %s2628, %s2619
    %v2631 = vld [vmem:[#allocation3] sm:$0xff]
    %v2632 = vld [vmem:[#allocation3 + $0x8] sm:$0xff]
    %v2633 = vld [vmem:[#allocation3 + $0x10] sm:$0xff]
    %v2634 = vld [vmem:[#allocation3 + $0x18] sm:$0xff]
    %v2635 = vld [vmem:[#allocation3 + $0x20] sm:$0xff]
    %v2636 = vld [vmem:[#allocation3 + $0x28] sm:$0xff]
    %v2637 = vld [vmem:[#allocation3 + $0x30] sm:$0xff]
    %v2638 = vld [vmem:[#allocation3 + $0x38] sm:$0xff]
    %v2639 = vld [vmem:[#allocation3 + $0x40] sm:$0xff]
    %v2640 = vld [vmem:[#allocation3 + $0x48] sm:$0xff]
    %v2641 = vld [vmem:[#allocation3 + $0x50] sm:$0xff]
    %v2642 = vld [vmem:[#allocation3 + $0x58] sm:$0xff]
    %v2643 = vld [vmem:[#allocation3 + $0x60] sm:$0xff]
    %v2644 = vld [vmem:[#allocation3 + $0x68] sm:$0xff]
    %v2645 = vld [vmem:[#allocation3 + $0x70] sm:$0xff]
    %v2646 = vld [vmem:[#allocation3 + $0x78] sm:$0xff]
    %v2647 = vld [vmem:[#allocation3 + $0x80] sm:$0xff]
    %v2648 = vld [vmem:[#allocation3 + $0x88] sm:$0xff]
    %v2649 = vld [vmem:[#allocation3 + $0x90] sm:$0xff]
    %v2650 = vld [vmem:[#allocation3 + $0x98] sm:$0xff]
    %v2651 = vld [vmem:[#allocation3 + $0xa0] sm:$0xff]
    %v2652 = vld [vmem:[#allocation3 + $0xa8] sm:$0xff]
    %v2653 = vld [vmem:[#allocation3 + $0xb0] sm:$0xff]
    %v2654 = vld [vmem:[#allocation3 + $0xb8] sm:$0xff]
    %v2655 = vld [vmem:[#allocation3 + $0xc0] sm:$0xff]
    %v2656 = vld [vmem:[#allocation3 + $0xc8] sm:$0xff]
    %v2657 = vld [vmem:[#allocation3 + $0xd0] sm:$0xff]
    %v2658 = vld [vmem:[#allocation3 + $0xd8] sm:$0xff]
    %v2659 = vld [vmem:[#allocation3 + $0xe0] sm:$0xff]
    %v2660 = vld [vmem:[#allocation3 + $0xe8] sm:$0xff]
    %v2661 = vld [vmem:[#allocation3 + $0xf0] sm:$0xff]
    %v2662 = vld [vmem:[#allocation3 + $0xf8] sm:$0xff]
    %v2663 = vld [vmem:[#allocation3 + $0x100] sm:$0xff]
    %v2664 = vld [vmem:[#allocation3 + $0x108] sm:$0xff]
    %v2665 = vld [vmem:[#allocation3 + $0x110] sm:$0xff]
    %v2666 = vld [vmem:[#allocation3 + $0x118] sm:$0xff]
    %v2667 = vld [vmem:[#allocation3 + $0x120] sm:$0xff]
    %v2668 = vld [vmem:[#allocation3 + $0x128] sm:$0xff]
    %v2669 = vld [vmem:[#allocation3 + $0x130] sm:$0xff]
    %v2670 = vld [vmem:[#allocation3 + $0x138] sm:$0xff]
    %v2671 = vld [vmem:[#allocation3 + $0x140] sm:$0xff]
    %v2672 = vld [vmem:[#allocation3 + $0x148] sm:$0xff]
    %v2673 = vld [vmem:[#allocation3 + $0x150] sm:$0xff]
    %v2674 = vld [vmem:[#allocation3 + $0x158] sm:$0xff]
    %v2675 = vld [vmem:[#allocation3 + $0x160] sm:$0xff]
    %v2676 = vld [vmem:[#allocation3 + $0x168] sm:$0xff]
    %v2677 = vld [vmem:[#allocation3 + $0x170] sm:$0xff]
    %v2678 = vld [vmem:[#allocation3 + $0x178] sm:$0xff]
    %v2679 = vld [vmem:[#allocation3 + $0x180] sm:$0xff]
    %v2680 = vld [vmem:[#allocation3 + $0x188] sm:$0xff]
    %v2681 = vld [vmem:[#allocation3 + $0x190] sm:$0xff]
    %v2682 = vld [vmem:[#allocation3 + $0x198] sm:$0xff]
    %v2683 = vld [vmem:[#allocation3 + $0x1a0] sm:$0xff]
    %v2684 = vld [vmem:[#allocation3 + $0x1a8] sm:$0xff]
    %v2685 = vld [vmem:[#allocation3 + $0x1b0] sm:$0xff]
    %v2686 = vld [vmem:[#allocation3 + $0x1b8] sm:$0xff]
    %v2687 = vld [vmem:[#allocation3 + $0x1c0] sm:$0xff]
    %v2688 = vld [vmem:[#allocation3 + $0x1c8] sm:$0xff]
    %v2689 = vld [vmem:[#allocation3 + $0x1d0] sm:$0xff]
    %v2690 = vld [vmem:[#allocation3 + $0x1d8] sm:$0xff]
    %v2691 = vld [vmem:[#allocation3 + $0x1e0] sm:$0xff]
    %v2692 = vld [vmem:[#allocation3 + $0x1e8] sm:$0xff]
    %v2693 = vld [vmem:[#allocation3 + $0x1f0] sm:$0xff]
    %v2694 = vld [vmem:[#allocation3 + $0x1f8] sm:$0xff]
    %v2695 = vld [vmem:[#allocation3 + $0x200] sm:$0xff]
    %v2696 = vld [vmem:[#allocation3 + $0x208] sm:$0xff]
    %v2697 = vld [vmem:[#allocation3 + $0x210] sm:$0xff]
    %v2698 = vld [vmem:[#allocation3 + $0x218] sm:$0xff]
    %v2699 = vld [vmem:[#allocation3 + $0x220] sm:$0xff]
    %v2700 = vld [vmem:[#allocation3 + $0x228] sm:$0xff]
    %v2701 = vld [vmem:[#allocation3 + $0x230] sm:$0xff]
    %v2702 = vld [vmem:[#allocation3 + $0x238] sm:$0xff]
    %v2703 = vld [vmem:[#allocation3 + $0x240] sm:$0xff]
    %v2704 = vld [vmem:[#allocation3 + $0x248] sm:$0xff]
    %v2705 = vld [vmem:[#allocation3 + $0x250] sm:$0xff]
    %v2706 = vld [vmem:[#allocation3 + $0x258] sm:$0xff]
    %v2707 = vld [vmem:[#allocation3 + $0x260] sm:$0xff]
    %v2708 = vld [vmem:[#allocation3 + $0x268] sm:$0xff]
    %v2709 = vld [vmem:[#allocation3 + $0x270] sm:$0xff]
    %v2710 = vld [vmem:[#allocation3 + $0x278] sm:$0xff]
    %v2711 = vld [vmem:[#allocation3 + $0x280] sm:$0xff]
    %v2712 = vld [vmem:[#allocation3 + $0x288] sm:$0xff]
    %v2713 = vld [vmem:[#allocation3 + $0x290] sm:$0xff]
    %v2714 = vld [vmem:[#allocation3 + $0x298] sm:$0xff]
    %v2715 = vld [vmem:[#allocation3 + $0x2a0] sm:$0xff]
    %v2716 = vld [vmem:[#allocation3 + $0x2a8] sm:$0xff]
    %v2717 = vld [vmem:[#allocation3 + $0x2b0] sm:$0xff]
    %v2718 = vld [vmem:[#allocation3 + $0x2b8] sm:$0xff]
    %v2719 = vld [vmem:[#allocation3 + $0x2c0] sm:$0xff]
    %v2720 = vld [vmem:[#allocation3 + $0x2c8] sm:$0xff]
    %v2721 = vld [vmem:[#allocation3 + $0x2d0] sm:$0xff]
    %v2722 = vld [vmem:[#allocation3 + $0x2d8] sm:$0xff]
    %v2723 = vld [vmem:[#allocation3 + $0x2e0] sm:$0xff]
    %v2724 = vld [vmem:[#allocation3 + $0x2e8] sm:$0xff]
    %v2725 = vld [vmem:[#allocation3 + $0x2f0] sm:$0xff]
    %v2726 = vld [vmem:[#allocation3 + $0x2f8] sm:$0xff]
    %v2727 = vld [vmem:[#allocation3 + $0x300] sm:$0xff]
    %v2728 = vld [vmem:[#allocation3 + $0x308] sm:$0xff]
    %v2729 = vld [vmem:[#allocation3 + $0x310] sm:$0xff]
    %v2730 = vld [vmem:[#allocation3 + $0x318] sm:$0xff]
    %v2731 = vld [vmem:[#allocation3 + $0x320] sm:$0xff]
    %v2732 = vld [vmem:[#allocation3 + $0x328] sm:$0xff]
    %v2733 = vld [vmem:[#allocation3 + $0x330] sm:$0xff]
    %v2734 = vld [vmem:[#allocation3 + $0x338] sm:$0xff]
    %v2735 = vld [vmem:[#allocation3 + $0x340] sm:$0xff]
    %v2736 = vld [vmem:[#allocation3 + $0x348] sm:$0xff]
    %v2737 = vld [vmem:[#allocation3 + $0x350] sm:$0xff]
    %v2738 = vld [vmem:[#allocation3 + $0x358] sm:$0xff]
    %v2739 = vld [vmem:[#allocation3 + $0x360] sm:$0xff]
    %v2740 = vld [vmem:[#allocation3 + $0x368] sm:$0xff]
    %v2741 = vld [vmem:[#allocation3 + $0x370] sm:$0xff]
    %v2742 = vld [vmem:[#allocation3 + $0x378] sm:$0xff]
    %v2743 = vld [vmem:[#allocation3 + $0x380] sm:$0xff]
    %v2744 = vld [vmem:[#allocation3 + $0x388] sm:$0xff]
    %v2745 = vld [vmem:[#allocation3 + $0x390] sm:$0xff]
    %v2746 = vld [vmem:[#allocation3 + $0x398] sm:$0xff]
    %v2747 = vld [vmem:[#allocation3 + $0x3a0] sm:$0xff]
    %v2748 = vld [vmem:[#allocation3 + $0x3a8] sm:$0xff]
    %v2749 = vld [vmem:[#allocation3 + $0x3b0] sm:$0xff]
    %v2750 = vld [vmem:[#allocation3 + $0x3b8] sm:$0xff]
    %v2751 = vld [vmem:[#allocation3 + $0x3c0] sm:$0xff]
    %v2752 = vld [vmem:[#allocation3 + $0x3c8] sm:$0xff]
    %v2753 = vld [vmem:[#allocation3 + $0x3d0] sm:$0xff]
    %v2754 = vld [vmem:[#allocation3 + $0x3d8] sm:$0xff]
    %v2755 = vld [vmem:[#allocation3 + $0x3e0] sm:$0xff]
    %v2756 = vld [vmem:[#allocation3 + $0x3e8] sm:$0xff]
    %v2757 = vld [vmem:[#allocation3 + $0x3f0] sm:$0xff]
    %v2758 = vld [vmem:[#allocation3 + $0x3f8] sm:$0xff]
    %v2759 = vunpack.c.l.s8.bf16 %v2631
    %v2760 = vunpack.c.l.s8.bf16 %v2632
    %v2761 = vunpack.c.l.s8.bf16 %v2633
    %v2762 = vunpack.c.l.s8.bf16 %v2634
    %v2763 = vunpack.c.l.s8.bf16 %v2635
    %v2764 = vunpack.c.l.s8.bf16 %v2636
    %v2765 = vunpack.c.l.s8.bf16 %v2637
    %v2766 = vunpack.c.l.s8.bf16 %v2638
    %v2767 = vunpack.c.h.s8.bf16 %v2631
    %v2768 = vunpack.c.h.s8.bf16 %v2632
    %v2769 = vunpack.c.h.s8.bf16 %v2633
    %v2770 = vunpack.c.h.s8.bf16 %v2634
    %v2771 = vunpack.c.h.s8.bf16 %v2635
    %v2772 = vunpack.c.h.s8.bf16 %v2636
    %v2773 = vunpack.c.h.s8.bf16 %v2637
    %v2774 = vunpack.c.h.s8.bf16 %v2638
    %v2775 = vunpack.c.l.s8.bf16 %v2639
    %v2776 = vunpack.c.l.s8.bf16 %v2640
    %v2777 = vunpack.c.l.s8.bf16 %v2641
    %v2778 = vunpack.c.l.s8.bf16 %v2642
    %v2779 = vunpack.c.l.s8.bf16 %v2643
    %v2780 = vunpack.c.l.s8.bf16 %v2644
    %v2781 = vunpack.c.l.s8.bf16 %v2645
    %v2782 = vunpack.c.l.s8.bf16 %v2646
    %v2783 = vunpack.c.h.s8.bf16 %v2639
    %v2784 = vunpack.c.h.s8.bf16 %v2640
    %v2785 = vunpack.c.h.s8.bf16 %v2641
    %v2786 = vunpack.c.h.s8.bf16 %v2642
    %v2787 = vunpack.c.h.s8.bf16 %v2643
    %v2788 = vunpack.c.h.s8.bf16 %v2644
    %v2789 = vunpack.c.h.s8.bf16 %v2645
    %v2790 = vunpack.c.h.s8.bf16 %v2646
    %v2791 = vunpack.c.l.s8.bf16 %v2647
    %v2792 = vunpack.c.l.s8.bf16 %v2648
    %v2793 = vunpack.c.l.s8.bf16 %v2649
    %v2794 = vunpack.c.l.s8.bf16 %v2650
    %v2795 = vunpack.c.l.s8.bf16 %v2651
    %v2796 = vunpack.c.l.s8.bf16 %v2652
    %v2797 = vunpack.c.l.s8.bf16 %v2653
    %v2798 = vunpack.c.l.s8.bf16 %v2654
    %v2799 = vunpack.c.h.s8.bf16 %v2647
    %v2800 = vunpack.c.h.s8.bf16 %v2648
    %v2801 = vunpack.c.h.s8.bf16 %v2649
    %v2802 = vunpack.c.h.s8.bf16 %v2650
    %v2803 = vunpack.c.h.s8.bf16 %v2651
    %v2804 = vunpack.c.h.s8.bf16 %v2652
    %v2805 = vunpack.c.h.s8.bf16 %v2653
    %v2806 = vunpack.c.h.s8.bf16 %v2654
    %v2807 = vunpack.c.l.s8.bf16 %v2655
    %v2808 = vunpack.c.l.s8.bf16 %v2656
    %v2809 = vunpack.c.l.s8.bf16 %v2657
    %v2810 = vunpack.c.l.s8.bf16 %v2658
    %v2811 = vunpack.c.l.s8.bf16 %v2659
    %v2812 = vunpack.c.l.s8.bf16 %v2660
    %v2813 = vunpack.c.l.s8.bf16 %v2661
    %v2814 = vunpack.c.l.s8.bf16 %v2662
    %v2815 = vunpack.c.h.s8.bf16 %v2655
    %v2816 = vunpack.c.h.s8.bf16 %v2656
    %v2817 = vunpack.c.h.s8.bf16 %v2657
    %v2818 = vunpack.c.h.s8.bf16 %v2658
    %v2819 = vunpack.c.h.s8.bf16 %v2659
    %v2820 = vunpack.c.h.s8.bf16 %v2660
    %v2821 = vunpack.c.h.s8.bf16 %v2661
    %v2822 = vunpack.c.h.s8.bf16 %v2662
    %v2823 = vunpack.c.l.s8.bf16 %v2663
    %v2824 = vunpack.c.l.s8.bf16 %v2664
    %v2825 = vunpack.c.l.s8.bf16 %v2665
    %v2826 = vunpack.c.l.s8.bf16 %v2666
    %v2827 = vunpack.c.l.s8.bf16 %v2667
    %v2828 = vunpack.c.l.s8.bf16 %v2668
    %v2829 = vunpack.c.l.s8.bf16 %v2669
    %v2830 = vunpack.c.l.s8.bf16 %v2670
    %v2831 = vunpack.c.h.s8.bf16 %v2663
    %v2832 = vunpack.c.h.s8.bf16 %v2664
    %v2833 = vunpack.c.h.s8.bf16 %v2665
    %v2834 = vunpack.c.h.s8.bf16 %v2666
    %v2835 = vunpack.c.h.s8.bf16 %v2667
    %v2836 = vunpack.c.h.s8.bf16 %v2668
    %v2837 = vunpack.c.h.s8.bf16 %v2669
    %v2838 = vunpack.c.h.s8.bf16 %v2670
    %v2839 = vunpack.c.l.s8.bf16 %v2671
    %v2840 = vunpack.c.l.s8.bf16 %v2672
    %v2841 = vunpack.c.l.s8.bf16 %v2673
    %v2842 = vunpack.c.l.s8.bf16 %v2674
    %v2843 = vunpack.c.l.s8.bf16 %v2675
    %v2844 = vunpack.c.l.s8.bf16 %v2676
    %v2845 = vunpack.c.l.s8.bf16 %v2677
    %v2846 = vunpack.c.l.s8.bf16 %v2678
    %v2847 = vunpack.c.h.s8.bf16 %v2671
    %v2848 = vunpack.c.h.s8.bf16 %v2672
    %v2849 = vunpack.c.h.s8.bf16 %v2673
    %v2850 = vunpack.c.h.s8.bf16 %v2674
    %v2851 = vunpack.c.h.s8.bf16 %v2675
    %v2852 = vunpack.c.h.s8.bf16 %v2676
    %v2853 = vunpack.c.h.s8.bf16 %v2677
    %v2854 = vunpack.c.h.s8.bf16 %v2678
    %v2855 = vunpack.c.l.s8.bf16 %v2679
    %v2856 = vunpack.c.l.s8.bf16 %v2680
    %v2857 = vunpack.c.l.s8.bf16 %v2681
    %v2858 = vunpack.c.l.s8.bf16 %v2682
    %v2859 = vunpack.c.l.s8.bf16 %v2683
    %v2860 = vunpack.c.l.s8.bf16 %v2684
    %v2861 = vunpack.c.l.s8.bf16 %v2685
    %v2862 = vunpack.c.l.s8.bf16 %v2686
    %v2863 = vunpack.c.h.s8.bf16 %v2679
    %v2864 = vunpack.c.h.s8.bf16 %v2680
    %v2865 = vunpack.c.h.s8.bf16 %v2681
    %v2866 = vunpack.c.h.s8.bf16 %v2682
    %v2867 = vunpack.c.h.s8.bf16 %v2683
    %v2868 = vunpack.c.h.s8.bf16 %v2684
    %v2869 = vunpack.c.h.s8.bf16 %v2685
    %v2870 = vunpack.c.h.s8.bf16 %v2686
    %v2871 = vunpack.c.l.s8.bf16 %v2687
    %v2872 = vunpack.c.l.s8.bf16 %v2688
    %v2873 = vunpack.c.l.s8.bf16 %v2689
    %v2874 = vunpack.c.l.s8.bf16 %v2690
    %v2875 = vunpack.c.l.s8.bf16 %v2691
    %v2876 = vunpack.c.l.s8.bf16 %v2692
    %v2877 = vunpack.c.l.s8.bf16 %v2693
    %v2878 = vunpack.c.l.s8.bf16 %v2694
    %v2879 = vunpack.c.h.s8.bf16 %v2687
    %v2880 = vunpack.c.h.s8.bf16 %v2688
    %v2881 = vunpack.c.h.s8.bf16 %v2689
    %v2882 = vunpack.c.h.s8.bf16 %v2690
    %v2883 = vunpack.c.h.s8.bf16 %v2691
    %v2884 = vunpack.c.h.s8.bf16 %v2692
    %v2885 = vunpack.c.h.s8.bf16 %v2693
    %v2886 = vunpack.c.h.s8.bf16 %v2694
    %v2887 = vunpack.c.l.s8.bf16 %v2695
    %v2888 = vunpack.c.l.s8.bf16 %v2696
    %v2889 = vunpack.c.l.s8.bf16 %v2697
    %v2890 = vunpack.c.l.s8.bf16 %v2698
    %v2891 = vunpack.c.l.s8.bf16 %v2699
    %v2892 = vunpack.c.l.s8.bf16 %v2700
    %v2893 = vunpack.c.l.s8.bf16 %v2701
    %v2894 = vunpack.c.l.s8.bf16 %v2702
    %v2895 = vunpack.c.h.s8.bf16 %v2695
    %v2896 = vunpack.c.h.s8.bf16 %v2696
    %v2897 = vunpack.c.h.s8.bf16 %v2697
    %v2898 = vunpack.c.h.s8.bf16 %v2698
    %v2899 = vunpack.c.h.s8.bf16 %v2699
    %v2900 = vunpack.c.h.s8.bf16 %v2700
    %v2901 = vunpack.c.h.s8.bf16 %v2701
    %v2902 = vunpack.c.h.s8.bf16 %v2702
    %v2903 = vunpack.c.l.s8.bf16 %v2703
    %v2904 = vunpack.c.l.s8.bf16 %v2704
    %v2905 = vunpack.c.l.s8.bf16 %v2705
    %v2906 = vunpack.c.l.s8.bf16 %v2706
    %v2907 = vunpack.c.l.s8.bf16 %v2707
    %v2908 = vunpack.c.l.s8.bf16 %v2708
    %v2909 = vunpack.c.l.s8.bf16 %v2709
    %v2910 = vunpack.c.l.s8.bf16 %v2710
    %v2911 = vunpack.c.h.s8.bf16 %v2703
    %v2912 = vunpack.c.h.s8.bf16 %v2704
    %v2913 = vunpack.c.h.s8.bf16 %v2705
    %v2914 = vunpack.c.h.s8.bf16 %v2706
    %v2915 = vunpack.c.h.s8.bf16 %v2707
    %v2916 = vunpack.c.h.s8.bf16 %v2708
    %v2917 = vunpack.c.h.s8.bf16 %v2709
    %v2918 = vunpack.c.h.s8.bf16 %v2710
    %v2919 = vunpack.c.l.s8.bf16 %v2711
    %v2920 = vunpack.c.l.s8.bf16 %v2712
    %v2921 = vunpack.c.l.s8.bf16 %v2713
    %v2922 = vunpack.c.l.s8.bf16 %v2714
    %v2923 = vunpack.c.l.s8.bf16 %v2715
    %v2924 = vunpack.c.l.s8.bf16 %v2716
    %v2925 = vunpack.c.l.s8.bf16 %v2717
    %v2926 = vunpack.c.l.s8.bf16 %v2718
    %v2927 = vunpack.c.h.s8.bf16 %v2711
    %v2928 = vunpack.c.h.s8.bf16 %v2712
    %v2929 = vunpack.c.h.s8.bf16 %v2713
    %v2930 = vunpack.c.h.s8.bf16 %v2714
    %v2931 = vunpack.c.h.s8.bf16 %v2715
    %v2932 = vunpack.c.h.s8.bf16 %v2716
    %v2933 = vunpack.c.h.s8.bf16 %v2717
    %v2934 = vunpack.c.h.s8.bf16 %v2718
    %v2935 = vunpack.c.l.s8.bf16 %v2719
    %v2936 = vunpack.c.l.s8.bf16 %v2720
    %v2937 = vunpack.c.l.s8.bf16 %v2721
    %v2938 = vunpack.c.l.s8.bf16 %v2722
    %v2939 = vunpack.c.l.s8.bf16 %v2723
    %v2940 = vunpack.c.l.s8.bf16 %v2724
    %v2941 = vunpack.c.l.s8.bf16 %v2725
    %v2942 = vunpack.c.l.s8.bf16 %v2726
    %v2943 = vunpack.c.h.s8.bf16 %v2719
    %v2944 = vunpack.c.h.s8.bf16 %v2720
    %v2945 = vunpack.c.h.s8.bf16 %v2721
    %v2946 = vunpack.c.h.s8.bf16 %v2722
    %v2947 = vunpack.c.h.s8.bf16 %v2723
    %v2948 = vunpack.c.h.s8.bf16 %v2724
    %v2949 = vunpack.c.h.s8.bf16 %v2725
    %v2950 = vunpack.c.h.s8.bf16 %v2726
    %v2951 = vunpack.c.l.s8.bf16 %v2727
    %v2952 = vunpack.c.l.s8.bf16 %v2728
    %v2953 = vunpack.c.l.s8.bf16 %v2729
    %v2954 = vunpack.c.l.s8.bf16 %v2730
    %v2955 = vunpack.c.l.s8.bf16 %v2731
    %v2956 = vunpack.c.l.s8.bf16 %v2732
    %v2957 = vunpack.c.l.s8.bf16 %v2733
    %v2958 = vunpack.c.l.s8.bf16 %v2734
    %v2959 = vunpack.c.h.s8.bf16 %v2727
    %v2960 = vunpack.c.h.s8.bf16 %v2728
    %v2961 = vunpack.c.h.s8.bf16 %v2729
    %v2962 = vunpack.c.h.s8.bf16 %v2730
    %v2963 = vunpack.c.h.s8.bf16 %v2731
    %v2964 = vunpack.c.h.s8.bf16 %v2732
    %v2965 = vunpack.c.h.s8.bf16 %v2733
    %v2966 = vunpack.c.h.s8.bf16 %v2734
    %v2967 = vunpack.c.l.s8.bf16 %v2735
    %v2968 = vunpack.c.l.s8.bf16 %v2736
    %v2969 = vunpack.c.l.s8.bf16 %v2737
    %v2970 = vunpack.c.l.s8.bf16 %v2738
    %v2971 = vunpack.c.l.s8.bf16 %v2739
    %v2972 = vunpack.c.l.s8.bf16 %v2740
    %v2973 = vunpack.c.l.s8.bf16 %v2741
    %v2974 = vunpack.c.l.s8.bf16 %v2742
    %v2975 = vunpack.c.h.s8.bf16 %v2735
    %v2976 = vunpack.c.h.s8.bf16 %v2736
    %v2977 = vunpack.c.h.s8.bf16 %v2737
    %v2978 = vunpack.c.h.s8.bf16 %v2738
    %v2979 = vunpack.c.h.s8.bf16 %v2739
    %v2980 = vunpack.c.h.s8.bf16 %v2740
    %v2981 = vunpack.c.h.s8.bf16 %v2741
    %v2982 = vunpack.c.h.s8.bf16 %v2742
    %v2983 = vunpack.c.l.s8.bf16 %v2743
    %v2984 = vunpack.c.l.s8.bf16 %v2744
    %v2985 = vunpack.c.l.s8.bf16 %v2745
    %v2986 = vunpack.c.l.s8.bf16 %v2746
    %v2987 = vunpack.c.l.s8.bf16 %v2747
    %v2988 = vunpack.c.l.s8.bf16 %v2748
    %v2989 = vunpack.c.l.s8.bf16 %v2749
    %v2990 = vunpack.c.l.s8.bf16 %v2750
    %v2991 = vunpack.c.h.s8.bf16 %v2743
    %v2992 = vunpack.c.h.s8.bf16 %v2744
    %v2993 = vunpack.c.h.s8.bf16 %v2745
    %v2994 = vunpack.c.h.s8.bf16 %v2746
    %v2995 = vunpack.c.h.s8.bf16 %v2747
    %v2996 = vunpack.c.h.s8.bf16 %v2748
    %v2997 = vunpack.c.h.s8.bf16 %v2749
    %v2998 = vunpack.c.h.s8.bf16 %v2750
    %v2999 = vunpack.c.l.s8.bf16 %v2751
    %v3000 = vunpack.c.l.s8.bf16 %v2752
    %v3001 = vunpack.c.l.s8.bf16 %v2753
    %v3002 = vunpack.c.l.s8.bf16 %v2754
    %v3003 = vunpack.c.l.s8.bf16 %v2755
    %v3004 = vunpack.c.l.s8.bf16 %v2756
    %v3005 = vunpack.c.l.s8.bf16 %v2757
    %v3006 = vunpack.c.l.s8.bf16 %v2758
    %v3007 = vunpack.c.h.s8.bf16 %v2751
    %v3008 = vunpack.c.h.s8.bf16 %v2752
    %v3009 = vunpack.c.h.s8.bf16 %v2753
    %v3010 = vunpack.c.h.s8.bf16 %v2754
    %v3011 = vunpack.c.h.s8.bf16 %v2755
    %v3012 = vunpack.c.h.s8.bf16 %v2756
    %v3013 = vunpack.c.h.s8.bf16 %v2757
    %v3014 = vunpack.c.h.s8.bf16 %v2758
    %s3015 = sshll.u32 %s2614, 4
    %3016 = dma.done %s2619, %s3015
    %s3017 = scalar_lea.hbm %s4, 32768
    // Predicated region
    $region106: #{net_forward.1} parent=1 // pred_check
      _
    $region107: #{net_forward.1} parent=1 // pred_check_branch
      %3019 = sbr.rel target = $region109
    $region108: #{net_forward.1} parent=1 // pred_region
      %3020 = sst [smem:[#allocation24]] [#allocation35]
      %3021 = sst [smem:[#allocation25]] [#allocation34]
    $region109: #{net_forward.1} parent=1 // pred_fallthru
      _
    %3023 = shalt.err (0)
    %s3025 = sshll.u32 [#allocation3], 4
    %s3026 = int_to_ptr.vmem [resolvable:$true] %s3025
    %3028 = dma.hbm_to_vmem [thread:$0]  %s3017, 16384, %s3026, [#allocation5]
    %v3029 = vld [vmem:[%s2618] sm:$0xff]
    %v3030 = vld [vmem:[%s2618 + $0x8] sm:$0xff]
    %v3031 = vld [vmem:[%s2618 + $0x10] sm:$0xff]
    %v3032 = vld [vmem:[%s2618 + $0x18] sm:$0xff]
    %v3033 = vld [vmem:[%s2618 + $0x20] sm:$0xff]
    %v3034 = vld [vmem:[%s2618 + $0x28] sm:$0xff]
    %v3035 = vld [vmem:[%s2618 + $0x30] sm:$0xff]
    %v3036 = vld [vmem:[%s2618 + $0x38] sm:$0xff]
    %v3037 = vld [vmem:[%s2618 + $0x40] sm:$0xff]
    %v3038 = vld [vmem:[%s2618 + $0x48] sm:$0xff]
    %v3039 = vld [vmem:[%s2618 + $0x50] sm:$0xff]
    %v3040 = vld [vmem:[%s2618 + $0x58] sm:$0xff]
    %v3041 = vld [vmem:[%s2618 + $0x60] sm:$0xff]
    %v3042 = vld [vmem:[%s2618 + $0x68] sm:$0xff]
    %v3043 = vld [vmem:[%s2618 + $0x70] sm:$0xff]
    %v3044 = vld [vmem:[%s2618 + $0x78] sm:$0xff]
    %v3045 = vld [vmem:[%s2618 + $0x80] sm:$0xff]
    %v3046 = vld [vmem:[%s2618 + $0x88] sm:$0xff]
    %v3047 = vld [vmem:[%s2618 + $0x90] sm:$0xff]
    %v3048 = vld [vmem:[%s2618 + $0x98] sm:$0xff]
    %v3049 = vld [vmem:[%s2618 + $0xa0] sm:$0xff]
    %v3050 = vld [vmem:[%s2618 + $0xa8] sm:$0xff]
    %v3051 = vld [vmem:[%s2618 + $0xb0] sm:$0xff]
    %v3052 = vld [vmem:[%s2618 + $0xb8] sm:$0xff]
    %v3053 = vld [vmem:[%s2618 + $0xc0] sm:$0xff]
    %v3054 = vld [vmem:[%s2618 + $0xc8] sm:$0xff]
    %v3055 = vld [vmem:[%s2618 + $0xd0] sm:$0xff]
    %v3056 = vld [vmem:[%s2618 + $0xd8] sm:$0xff]
    %v3057 = vld [vmem:[%s2618 + $0xe0] sm:$0xff]
    %v3058 = vld [vmem:[%s2618 + $0xe8] sm:$0xff]
    %v3059 = vld [vmem:[%s2618 + $0xf0] sm:$0xff]
    %v3060 = vld [vmem:[%s2618 + $0xf8] sm:$0xff]
    %v3061 = vld [vmem:[%s2618 + $0x100] sm:$0xff]
    %v3062 = vld [vmem:[%s2618 + $0x108] sm:$0xff]
    %v3063 = vld [vmem:[%s2618 + $0x110] sm:$0xff]
    %v3064 = vld [vmem:[%s2618 + $0x118] sm:$0xff]
    %v3065 = vld [vmem:[%s2618 + $0x120] sm:$0xff]
    %v3066 = vld [vmem:[%s2618 + $0x128] sm:$0xff]
    %v3067 = vld [vmem:[%s2618 + $0x130] sm:$0xff]
    %v3068 = vld [vmem:[%s2618 + $0x138] sm:$0xff]
    %v3069 = vld [vmem:[%s2618 + $0x140] sm:$0xff]
    %v3070 = vld [vmem:[%s2618 + $0x148] sm:$0xff]
    %v3071 = vld [vmem:[%s2618 + $0x150] sm:$0xff]
    %v3072 = vld [vmem:[%s2618 + $0x158] sm:$0xff]
    %v3073 = vld [vmem:[%s2618 + $0x160] sm:$0xff]
    %v3074 = vld [vmem:[%s2618 + $0x168] sm:$0xff]
    %v3075 = vld [vmem:[%s2618 + $0x170] sm:$0xff]
    %v3076 = vld [vmem:[%s2618 + $0x178] sm:$0xff]
    %v3077 = vld [vmem:[%s2618 + $0x180] sm:$0xff]
    %v3078 = vld [vmem:[%s2618 + $0x188] sm:$0xff]
    %v3079 = vld [vmem:[%s2618 + $0x190] sm:$0xff]
    %v3080 = vld [vmem:[%s2618 + $0x198] sm:$0xff]
    %v3081 = vld [vmem:[%s2618 + $0x1a0] sm:$0xff]
    %v3082 = vld [vmem:[%s2618 + $0x1a8] sm:$0xff]
    %v3083 = vld [vmem:[%s2618 + $0x1b0] sm:$0xff]
    %v3084 = vld [vmem:[%s2618 + $0x1b8] sm:$0xff]
    %v3085 = vld [vmem:[%s2618 + $0x1c0] sm:$0xff]
    %v3086 = vld [vmem:[%s2618 + $0x1c8] sm:$0xff]
    %v3087 = vld [vmem:[%s2618 + $0x1d0] sm:$0xff]
    %v3088 = vld [vmem:[%s2618 + $0x1d8] sm:$0xff]
    %v3089 = vld [vmem:[%s2618 + $0x1e0] sm:$0xff]
    %v3090 = vld [vmem:[%s2618 + $0x1e8] sm:$0xff]
    %v3091 = vld [vmem:[%s2618 + $0x1f0] sm:$0xff]
    %v3092 = vld [vmem:[%s2618 + $0x1f8] sm:$0xff]
    %v3093 = vld [vmem:[%s2618 + $0x200] sm:$0xff]
    %v3094 = vld [vmem:[%s2618 + $0x208] sm:$0xff]
    %v3095 = vld [vmem:[%s2618 + $0x210] sm:$0xff]
    %v3096 = vld [vmem:[%s2618 + $0x218] sm:$0xff]
    %v3097 = vld [vmem:[%s2618 + $0x220] sm:$0xff]
    %v3098 = vld [vmem:[%s2618 + $0x228] sm:$0xff]
    %v3099 = vld [vmem:[%s2618 + $0x230] sm:$0xff]
    %v3100 = vld [vmem:[%s2618 + $0x238] sm:$0xff]
    %v3101 = vld [vmem:[%s2618 + $0x240] sm:$0xff]
    %v3102 = vld [vmem:[%s2618 + $0x248] sm:$0xff]
    %v3103 = vld [vmem:[%s2618 + $0x250] sm:$0xff]
    %v3104 = vld [vmem:[%s2618 + $0x258] sm:$0xff]
    %v3105 = vld [vmem:[%s2618 + $0x260] sm:$0xff]
    %v3106 = vld [vmem:[%s2618 + $0x268] sm:$0xff]
    %v3107 = vld [vmem:[%s2618 + $0x270] sm:$0xff]
    %v3108 = vld [vmem:[%s2618 + $0x278] sm:$0xff]
    %v3109 = vld [vmem:[%s2618 + $0x280] sm:$0xff]
    %v3110 = vld [vmem:[%s2618 + $0x288] sm:$0xff]
    %v3111 = vld [vmem:[%s2618 + $0x290] sm:$0xff]
    %v3112 = vld [vmem:[%s2618 + $0x298] sm:$0xff]
    %v3113 = vld [vmem:[%s2618 + $0x2a0] sm:$0xff]
    %v3114 = vld [vmem:[%s2618 + $0x2a8] sm:$0xff]
    %v3115 = vld [vmem:[%s2618 + $0x2b0] sm:$0xff]
    %v3116 = vld [vmem:[%s2618 + $0x2b8] sm:$0xff]
    %v3117 = vld [vmem:[%s2618 + $0x2c0] sm:$0xff]
    %v3118 = vld [vmem:[%s2618 + $0x2c8] sm:$0xff]
    %v3119 = vld [vmem:[%s2618 + $0x2d0] sm:$0xff]
    %v3120 = vld [vmem:[%s2618 + $0x2d8] sm:$0xff]
    %v3121 = vld [vmem:[%s2618 + $0x2e0] sm:$0xff]
    %v3122 = vld [vmem:[%s2618 + $0x2e8] sm:$0xff]
    %v3123 = vld [vmem:[%s2618 + $0x2f0] sm:$0xff]
    %v3124 = vld [vmem:[%s2618 + $0x2f8] sm:$0xff]
    %v3125 = vld [vmem:[%s2618 + $0x300] sm:$0xff]
    %v3126 = vld [vmem:[%s2618 + $0x308] sm:$0xff]
    %v3127 = vld [vmem:[%s2618 + $0x310] sm:$0xff]
    %v3128 = vld [vmem:[%s2618 + $0x318] sm:$0xff]
    %v3129 = vld [vmem:[%s2618 + $0x320] sm:$0xff]
    %v3130 = vld [vmem:[%s2618 + $0x328] sm:$0xff]
    %v3131 = vld [vmem:[%s2618 + $0x330] sm:$0xff]
    %v3132 = vld [vmem:[%s2618 + $0x338] sm:$0xff]
    %v3133 = vld [vmem:[%s2618 + $0x340] sm:$0xff]
    %v3134 = vld [vmem:[%s2618 + $0x348] sm:$0xff]
    %v3135 = vld [vmem:[%s2618 + $0x350] sm:$0xff]
    %v3136 = vld [vmem:[%s2618 + $0x358] sm:$0xff]
    %v3137 = vld [vmem:[%s2618 + $0x360] sm:$0xff]
    %v3138 = vld [vmem:[%s2618 + $0x368] sm:$0xff]
    %v3139 = vld [vmem:[%s2618 + $0x370] sm:$0xff]
    %v3140 = vld [vmem:[%s2618 + $0x378] sm:$0xff]
    %v3141 = vld [vmem:[%s2618 + $0x380] sm:$0xff]
    %v3142 = vld [vmem:[%s2618 + $0x388] sm:$0xff]
    %v3143 = vld [vmem:[%s2618 + $0x390] sm:$0xff]
    %v3144 = vld [vmem:[%s2618 + $0x398] sm:$0xff]
    %v3145 = vld [vmem:[%s2618 + $0x3a0] sm:$0xff]
    %v3146 = vld [vmem:[%s2618 + $0x3a8] sm:$0xff]
    %v3147 = vld [vmem:[%s2618 + $0x3b0] sm:$0xff]
    %v3148 = vld [vmem:[%s2618 + $0x3b8] sm:$0xff]
    %v3149 = vld [vmem:[%s2618 + $0x3c0] sm:$0xff]
    %v3150 = vld [vmem:[%s2618 + $0x3c8] sm:$0xff]
    %v3151 = vld [vmem:[%s2618 + $0x3d0] sm:$0xff]
    %v3152 = vld [vmem:[%s2618 + $0x3d8] sm:$0xff]
    %v3153 = vld [vmem:[%s2618 + $0x3e0] sm:$0xff]
    %v3154 = vld [vmem:[%s2618 + $0x3e8] sm:$0xff]
    %v3155 = vld [vmem:[%s2618 + $0x3f0] sm:$0xff]
    %v3156 = vld [vmem:[%s2618 + $0x3f8] sm:$0xff]
    %v3157 = vunpack.c.l.s8.bf16 %v3029
    %v3158 = vunpack.c.l.s8.bf16 %v3030
    %v3159 = vunpack.c.l.s8.bf16 %v3031
    %v3160 = vunpack.c.l.s8.bf16 %v3032
    %v3161 = vunpack.c.l.s8.bf16 %v3033
    %v3162 = vunpack.c.l.s8.bf16 %v3034
    %v3163 = vunpack.c.l.s8.bf16 %v3035
    %v3164 = vunpack.c.l.s8.bf16 %v3036
    %v3165 = vunpack.c.h.s8.bf16 %v3029
    %v3166 = vunpack.c.h.s8.bf16 %v3030
    %v3167 = vunpack.c.h.s8.bf16 %v3031
    %v3168 = vunpack.c.h.s8.bf16 %v3032
    %v3169 = vunpack.c.h.s8.bf16 %v3033
    %v3170 = vunpack.c.h.s8.bf16 %v3034
    %v3171 = vunpack.c.h.s8.bf16 %v3035
    %v3172 = vunpack.c.h.s8.bf16 %v3036
    %v3173 = vunpack.c.l.s8.bf16 %v3037
    %v3174 = vunpack.c.l.s8.bf16 %v3038
    %v3175 = vunpack.c.l.s8.bf16 %v3039
    %v3176 = vunpack.c.l.s8.bf16 %v3040
    %v3177 = vunpack.c.l.s8.bf16 %v3041
    %v3178 = vunpack.c.l.s8.bf16 %v3042
    %v3179 = vunpack.c.l.s8.bf16 %v3043
    %v3180 = vunpack.c.l.s8.bf16 %v3044
    %v3181 = vunpack.c.h.s8.bf16 %v3037
    %v3182 = vunpack.c.h.s8.bf16 %v3038
    %v3183 = vunpack.c.h.s8.bf16 %v3039
    %v3184 = vunpack.c.h.s8.bf16 %v3040
    %v3185 = vunpack.c.h.s8.bf16 %v3041
    %v3186 = vunpack.c.h.s8.bf16 %v3042
    %v3187 = vunpack.c.h.s8.bf16 %v3043
    %v3188 = vunpack.c.h.s8.bf16 %v3044
    %v3189 = vunpack.c.l.s8.bf16 %v3045
    %v3190 = vunpack.c.l.s8.bf16 %v3046
    %v3191 = vunpack.c.l.s8.bf16 %v3047
    %v3192 = vunpack.c.l.s8.bf16 %v3048
    %v3193 = vunpack.c.l.s8.bf16 %v3049
    %v3194 = vunpack.c.l.s8.bf16 %v3050
    %v3195 = vunpack.c.l.s8.bf16 %v3051
    %v3196 = vunpack.c.l.s8.bf16 %v3052
    %v3197 = vunpack.c.h.s8.bf16 %v3045
    %v3198 = vunpack.c.h.s8.bf16 %v3046
    %v3199 = vunpack.c.h.s8.bf16 %v3047
    %v3200 = vunpack.c.h.s8.bf16 %v3048
    %v3201 = vunpack.c.h.s8.bf16 %v3049
    %v3202 = vunpack.c.h.s8.bf16 %v3050
    %v3203 = vunpack.c.h.s8.bf16 %v3051
    %v3204 = vunpack.c.h.s8.bf16 %v3052
    %v3205 = vunpack.c.l.s8.bf16 %v3053
    %v3206 = vunpack.c.l.s8.bf16 %v3054
    %v3207 = vunpack.c.l.s8.bf16 %v3055
    %v3208 = vunpack.c.l.s8.bf16 %v3056
    %v3209 = vunpack.c.l.s8.bf16 %v3057
    %v3210 = vunpack.c.l.s8.bf16 %v3058
    %v3211 = vunpack.c.l.s8.bf16 %v3059
    %v3212 = vunpack.c.l.s8.bf16 %v3060
    %v3213 = vunpack.c.h.s8.bf16 %v3053
    %v3214 = vunpack.c.h.s8.bf16 %v3054
    %v3215 = vunpack.c.h.s8.bf16 %v3055
    %v3216 = vunpack.c.h.s8.bf16 %v3056
    %v3217 = vunpack.c.h.s8.bf16 %v3057
    %v3218 = vunpack.c.h.s8.bf16 %v3058
    %v3219 = vunpack.c.h.s8.bf16 %v3059
    %v3220 = vunpack.c.h.s8.bf16 %v3060
    %v3221 = vunpack.c.l.s8.bf16 %v3061
    %v3222 = vunpack.c.l.s8.bf16 %v3062
    %v3223 = vunpack.c.l.s8.bf16 %v3063
    %v3224 = vunpack.c.l.s8.bf16 %v3064
    %v3225 = vunpack.c.l.s8.bf16 %v3065
    %v3226 = vunpack.c.l.s8.bf16 %v3066
    %v3227 = vunpack.c.l.s8.bf16 %v3067
    %v3228 = vunpack.c.l.s8.bf16 %v3068
    %v3229 = vunpack.c.h.s8.bf16 %v3061
    %v3230 = vunpack.c.h.s8.bf16 %v3062
    %v3231 = vunpack.c.h.s8.bf16 %v3063
    %v3232 = vunpack.c.h.s8.bf16 %v3064
    %v3233 = vunpack.c.h.s8.bf16 %v3065
    %v3234 = vunpack.c.h.s8.bf16 %v3066
    %v3235 = vunpack.c.h.s8.bf16 %v3067
    %v3236 = vunpack.c.h.s8.bf16 %v3068
    %v3237 = vunpack.c.l.s8.bf16 %v3069
    %v3238 = vunpack.c.l.s8.bf16 %v3070
    %v3239 = vunpack.c.l.s8.bf16 %v3071
    %v3240 = vunpack.c.l.s8.bf16 %v3072
    %v3241 = vunpack.c.l.s8.bf16 %v3073
    %v3242 = vunpack.c.l.s8.bf16 %v3074
    %v3243 = vunpack.c.l.s8.bf16 %v3075
    %v3244 = vunpack.c.l.s8.bf16 %v3076
    %v3245 = vunpack.c.h.s8.bf16 %v3069
    %v3246 = vunpack.c.h.s8.bf16 %v3070
    %v3247 = vunpack.c.h.s8.bf16 %v3071
    %v3248 = vunpack.c.h.s8.bf16 %v3072
    %v3249 = vunpack.c.h.s8.bf16 %v3073
    %v3250 = vunpack.c.h.s8.bf16 %v3074
    %v3251 = vunpack.c.h.s8.bf16 %v3075
    %v3252 = vunpack.c.h.s8.bf16 %v3076
    %v3253 = vunpack.c.l.s8.bf16 %v3077
    %v3254 = vunpack.c.l.s8.bf16 %v3078
    %v3255 = vunpack.c.l.s8.bf16 %v3079
    %v3256 = vunpack.c.l.s8.bf16 %v3080
    %v3257 = vunpack.c.l.s8.bf16 %v3081
    %v3258 = vunpack.c.l.s8.bf16 %v3082
    %v3259 = vunpack.c.l.s8.bf16 %v3083
    %v3260 = vunpack.c.l.s8.bf16 %v3084
    %v3261 = vunpack.c.h.s8.bf16 %v3077
    %v3262 = vunpack.c.h.s8.bf16 %v3078
    %v3263 = vunpack.c.h.s8.bf16 %v3079
    %v3264 = vunpack.c.h.s8.bf16 %v3080
    %v3265 = vunpack.c.h.s8.bf16 %v3081
    %v3266 = vunpack.c.h.s8.bf16 %v3082
    %v3267 = vunpack.c.h.s8.bf16 %v3083
    %v3268 = vunpack.c.h.s8.bf16 %v3084
    %v3269 = vunpack.c.l.s8.bf16 %v3085
    %v3270 = vunpack.c.l.s8.bf16 %v3086
    %v3271 = vunpack.c.l.s8.bf16 %v3087
    %v3272 = vunpack.c.l.s8.bf16 %v3088
    %v3273 = vunpack.c.l.s8.bf16 %v3089
    %v3274 = vunpack.c.l.s8.bf16 %v3090
    %v3275 = vunpack.c.l.s8.bf16 %v3091
    %v3276 = vunpack.c.l.s8.bf16 %v3092
    %v3277 = vunpack.c.h.s8.bf16 %v3085
    %v3278 = vunpack.c.h.s8.bf16 %v3086
    %v3279 = vunpack.c.h.s8.bf16 %v3087
    %v3280 = vunpack.c.h.s8.bf16 %v3088
    %v3281 = vunpack.c.h.s8.bf16 %v3089
    %v3282 = vunpack.c.h.s8.bf16 %v3090
    %v3283 = vunpack.c.h.s8.bf16 %v3091
    %v3284 = vunpack.c.h.s8.bf16 %v3092
    %v3285 = vunpack.c.l.s8.bf16 %v3093
    %v3286 = vunpack.c.l.s8.bf16 %v3094
    %v3287 = vunpack.c.l.s8.bf16 %v3095
    %v3288 = vunpack.c.l.s8.bf16 %v3096
    %v3289 = vunpack.c.l.s8.bf16 %v3097
    %v3290 = vunpack.c.l.s8.bf16 %v3098
    %v3291 = vunpack.c.l.s8.bf16 %v3099
    %v3292 = vunpack.c.l.s8.bf16 %v3100
    %v3293 = vunpack.c.h.s8.bf16 %v3093
    %v3294 = vunpack.c.h.s8.bf16 %v3094
    %v3295 = vunpack.c.h.s8.bf16 %v3095
    %v3296 = vunpack.c.h.s8.bf16 %v3096
    %v3297 = vunpack.c.h.s8.bf16 %v3097
    %v3298 = vunpack.c.h.s8.bf16 %v3098
    %v3299 = vunpack.c.h.s8.bf16 %v3099
    %v3300 = vunpack.c.h.s8.bf16 %v3100
    %v3301 = vunpack.c.l.s8.bf16 %v3101
    %v3302 = vunpack.c.l.s8.bf16 %v3102
    %v3303 = vunpack.c.l.s8.bf16 %v3103
    %v3304 = vunpack.c.l.s8.bf16 %v3104
    %v3305 = vunpack.c.l.s8.bf16 %v3105
    %v3306 = vunpack.c.l.s8.bf16 %v3106
    %v3307 = vunpack.c.l.s8.bf16 %v3107
    %v3308 = vunpack.c.l.s8.bf16 %v3108
    %v3309 = vunpack.c.h.s8.bf16 %v3101
    %v3310 = vunpack.c.h.s8.bf16 %v3102
    %v3311 = vunpack.c.h.s8.bf16 %v3103
    %v3312 = vunpack.c.h.s8.bf16 %v3104
    %v3313 = vunpack.c.h.s8.bf16 %v3105
    %v3314 = vunpack.c.h.s8.bf16 %v3106
    %v3315 = vunpack.c.h.s8.bf16 %v3107
    %v3316 = vunpack.c.h.s8.bf16 %v3108
    %v3317 = vunpack.c.l.s8.bf16 %v3109
    %v3318 = vunpack.c.l.s8.bf16 %v3110
    %v3319 = vunpack.c.l.s8.bf16 %v3111
    %v3320 = vunpack.c.l.s8.bf16 %v3112
    %v3321 = vunpack.c.l.s8.bf16 %v3113
    %v3322 = vunpack.c.l.s8.bf16 %v3114
    %v3323 = vunpack.c.l.s8.bf16 %v3115
    %v3324 = vunpack.c.l.s8.bf16 %v3116
    %v3325 = vunpack.c.h.s8.bf16 %v3109
    %v3326 = vunpack.c.h.s8.bf16 %v3110
    %v3327 = vunpack.c.h.s8.bf16 %v3111
    %v3328 = vunpack.c.h.s8.bf16 %v3112
    %v3329 = vunpack.c.h.s8.bf16 %v3113
    %v3330 = vunpack.c.h.s8.bf16 %v3114
    %v3331 = vunpack.c.h.s8.bf16 %v3115
    %v3332 = vunpack.c.h.s8.bf16 %v3116
    %v3333 = vunpack.c.l.s8.bf16 %v3117
    %v3334 = vunpack.c.l.s8.bf16 %v3118
    %v3335 = vunpack.c.l.s8.bf16 %v3119
    %v3336 = vunpack.c.l.s8.bf16 %v3120
    %v3337 = vunpack.c.l.s8.bf16 %v3121
    %v3338 = vunpack.c.l.s8.bf16 %v3122
    %v3339 = vunpack.c.l.s8.bf16 %v3123
    %v3340 = vunpack.c.l.s8.bf16 %v3124
    %v3341 = vunpack.c.h.s8.bf16 %v3117
    %v3342 = vunpack.c.h.s8.bf16 %v3118
    %v3343 = vunpack.c.h.s8.bf16 %v3119
    %v3344 = vunpack.c.h.s8.bf16 %v3120
    %v3345 = vunpack.c.h.s8.bf16 %v3121
    %v3346 = vunpack.c.h.s8.bf16 %v3122
    %v3347 = vunpack.c.h.s8.bf16 %v3123
    %v3348 = vunpack.c.h.s8.bf16 %v3124
    %v3349 = vunpack.c.l.s8.bf16 %v3125
    %v3350 = vunpack.c.l.s8.bf16 %v3126
    %v3351 = vunpack.c.l.s8.bf16 %v3127
    %v3352 = vunpack.c.l.s8.bf16 %v3128
    %v3353 = vunpack.c.l.s8.bf16 %v3129
    %v3354 = vunpack.c.l.s8.bf16 %v3130
    %v3355 = vunpack.c.l.s8.bf16 %v3131
    %v3356 = vunpack.c.l.s8.bf16 %v3132
    %v3357 = vunpack.c.h.s8.bf16 %v3125
    %v3358 = vunpack.c.h.s8.bf16 %v3126
    %v3359 = vunpack.c.h.s8.bf16 %v3127
    %v3360 = vunpack.c.h.s8.bf16 %v3128
    %v3361 = vunpack.c.h.s8.bf16 %v3129
    %v3362 = vunpack.c.h.s8.bf16 %v3130
    %v3363 = vunpack.c.h.s8.bf16 %v3131
    %v3364 = vunpack.c.h.s8.bf16 %v3132
    %v3365 = vunpack.c.l.s8.bf16 %v3133
    %v3366 = vunpack.c.l.s8.bf16 %v3134
    %v3367 = vunpack.c.l.s8.bf16 %v3135
    %v3368 = vunpack.c.l.s8.bf16 %v3136
    %v3369 = vunpack.c.l.s8.bf16 %v3137
    %v3370 = vunpack.c.l.s8.bf16 %v3138
    %v3371 = vunpack.c.l.s8.bf16 %v3139
    %v3372 = vunpack.c.l.s8.bf16 %v3140
    %v3373 = vunpack.c.h.s8.bf16 %v3133
    %v3374 = vunpack.c.h.s8.bf16 %v3134
    %v3375 = vunpack.c.h.s8.bf16 %v3135
    %v3376 = vunpack.c.h.s8.bf16 %v3136
    %v3377 = vunpack.c.h.s8.bf16 %v3137
    %v3378 = vunpack.c.h.s8.bf16 %v3138
    %v3379 = vunpack.c.h.s8.bf16 %v3139
    %v3380 = vunpack.c.h.s8.bf16 %v3140
    %v3381 = vunpack.c.l.s8.bf16 %v3141
    %v3382 = vunpack.c.l.s8.bf16 %v3142
    %v3383 = vunpack.c.l.s8.bf16 %v3143
    %v3384 = vunpack.c.l.s8.bf16 %v3144
    %v3385 = vunpack.c.l.s8.bf16 %v3145
    %v3386 = vunpack.c.l.s8.bf16 %v3146
    %v3387 = vunpack.c.l.s8.bf16 %v3147
    %v3388 = vunpack.c.l.s8.bf16 %v3148
    %v3389 = vunpack.c.h.s8.bf16 %v3141
    %v3390 = vunpack.c.h.s8.bf16 %v3142
    %v3391 = vunpack.c.h.s8.bf16 %v3143
    %v3392 = vunpack.c.h.s8.bf16 %v3144
    %v3393 = vunpack.c.h.s8.bf16 %v3145
    %v3394 = vunpack.c.h.s8.bf16 %v3146
    %v3395 = vunpack.c.h.s8.bf16 %v3147
    %v3396 = vunpack.c.h.s8.bf16 %v3148
    %v3397 = vunpack.c.l.s8.bf16 %v3149
    %v3398 = vunpack.c.l.s8.bf16 %v3150
    %v3399 = vunpack.c.l.s8.bf16 %v3151
    %v3400 = vunpack.c.l.s8.bf16 %v3152
    %v3401 = vunpack.c.l.s8.bf16 %v3153
    %v3402 = vunpack.c.l.s8.bf16 %v3154
    %v3403 = vunpack.c.l.s8.bf16 %v3155
    %v3404 = vunpack.c.l.s8.bf16 %v3156
    %v3405 = vunpack.c.h.s8.bf16 %v3149
    %v3406 = vunpack.c.h.s8.bf16 %v3150
    %v3407 = vunpack.c.h.s8.bf16 %v3151
    %v3408 = vunpack.c.h.s8.bf16 %v3152
    %v3409 = vunpack.c.h.s8.bf16 %v3153
    %v3410 = vunpack.c.h.s8.bf16 %v3154
    %v3411 = vunpack.c.h.s8.bf16 %v3155
    %v3412 = vunpack.c.h.s8.bf16 %v3156
    %3413 = vmatprep.subr.bf16.mxu0 %v3158
    %3414 = vmatpush1.bf16.msra.mxu0 %v3157
    %3415 = vmatprep.subr.bf16.mxu0 %v3166
    %3416 = vmatpush1.bf16.msra.mxu0 %v3165
    %3417 = vmatprep.subr.bf16.mxu0 %v3174
    %3418 = vmatpush1.bf16.msra.mxu0 %v3173
    %3419 = vmatprep.subr.bf16.mxu0 %v3182
    %3420 = vmatpush1.bf16.msra.mxu0 %v3181
    %3421 = vmatprep.subr.bf16.mxu0 %v3190
    %3422 = vmatpush1.bf16.msra.mxu0 %v3189
    %3423 = vmatprep.subr.bf16.mxu0 %v3198
    %3424 = vmatpush1.bf16.msra.mxu0 %v3197
    %3425 = vmatprep.subr.bf16.mxu0 %v3206
    %3426 = vmatpush1.bf16.msra.mxu0 %v3205
    %3427 = vmatprep.subr.bf16.mxu0 %v3214
    %3428 = vmatpush1.bf16.msra.mxu0 %v3213
    %3429 = vmatprep.subr.bf16.mxu0 %v3222
    %3430 = vmatpush1.bf16.msra.mxu0 %v3221
    %3431 = vmatprep.subr.bf16.mxu0 %v3230
    %3432 = vmatpush1.bf16.msra.mxu0 %v3229
    %3433 = vmatprep.subr.bf16.mxu0 %v3238
    %3434 = vmatpush1.bf16.msra.mxu0 %v3237
    %3435 = vmatprep.subr.bf16.mxu0 %v3246
    %3436 = vmatpush1.bf16.msra.mxu0 %v3245
    %3437 = vmatprep.subr.bf16.mxu0 %v3254
    %3438 = vmatpush1.bf16.msra.mxu0 %v3253
    %3439 = vmatprep.subr.bf16.mxu0 %v3262
    %3440 = vmatpush1.bf16.msra.mxu0 %v3261
    %3441 = vmatprep.subr.bf16.mxu0 %v3270
    %3442 = vmatpush1.bf16.msra.mxu0 %v3269
    %3443 = vmatprep.subr.bf16.mxu0 %v3278
    %3444 = vmatpush1.bf16.msra.mxu0 %v3277
    %3445 = vmatprep.mubr.bf16.mxu0 %v2602
    %3446 = vmatmul.mubr.bf16.gmra.mrb[0].mxu0 %v2601
    %v3447 = vpop.f32.mrb[0].mxu0
    %v3448 = vadd.f32 0.0, %v3447
    %v3449 = vpop.f32.mrb[0].mxu0
    %v3450 = vadd.f32 0.0, %v3449
    %v3451 = vpop.f32.mrb[0].mxu0
    %v3452 = vpop.f32.mrb[0].mxu0
    %3453 = vdwg.mxu0
    %3454 = vmatprep.subr.bf16.mxu0 %v3286
    %3455 = vmatpush1.bf16.msra.mxu0 %v3285
    %3456 = vmatprep.subr.bf16.mxu0 %v3294
    %3457 = vmatpush1.bf16.msra.mxu0 %v3293
    %3458 = vmatprep.subr.bf16.mxu0 %v3302
    %3459 = vmatpush1.bf16.msra.mxu0 %v3301
    %3460 = vmatprep.subr.bf16.mxu0 %v3310
    %3461 = vmatpush1.bf16.msra.mxu0 %v3309
    %3462 = vmatprep.subr.bf16.mxu0 %v3318
    %3463 = vmatpush1.bf16.msra.mxu0 %v3317
    %3464 = vmatprep.subr.bf16.mxu0 %v3326
    %3465 = vmatpush1.bf16.msra.mxu0 %v3325
    %3466 = vmatprep.subr.bf16.mxu0 %v3334
    %3467 = vmatpush1.bf16.msra.mxu0 %v3333
    %3468 = vmatprep.subr.bf16.mxu0 %v3342
    %3469 = vmatpush1.bf16.msra.mxu0 %v3341
    %3470 = vmatprep.subr.bf16.mxu0 %v3350
    %3471 = vmatpush1.bf16.msra.mxu0 %v3349
    %3472 = vmatprep.subr.bf16.mxu0 %v3358
    %3473 = vmatpush1.bf16.msra.mxu0 %v3357
    %3474 = vmatprep.subr.bf16.mxu0 %v3366
    %3475 = vmatpush1.bf16.msra.mxu0 %v3365
    %3476 = vmatprep.subr.bf16.mxu0 %v3374
    %3477 = vmatpush1.bf16.msra.mxu0 %v3373
    %3478 = vmatprep.subr.bf16.mxu0 %v3382
    %3479 = vmatpush1.bf16.msra.mxu0 %v3381
    %3480 = vmatprep.subr.bf16.mxu0 %v3390
    %3481 = vmatpush1.bf16.msra.mxu0 %v3389
    %3482 = vmatprep.subr.bf16.mxu0 %v3398
    %3483 = vmatpush1.bf16.msra.mxu0 %v3397
    %3484 = vmatprep.subr.bf16.mxu0 %v3406
    %3485 = vmatpush1.bf16.msra.mxu0 %v3405
    %3486 = vmatprep.mubr.bf16.mxu0 %v2604
    %3487 = vmatmul.mubr.bf16.gmra.mrb[0].mxu0 %v2603
    %v3488 = vpop.f32.mrb[0].mxu0
    %v3489 = vadd.f32 %v3448, %v3488
    %v3490 = vpop.f32.mrb[0].mxu0
    %v3491 = vadd.f32 %v3450, %v3490
    %v3492 = vpop.f32.mrb[0].mxu0
    %v3493 = vpop.f32.mrb[0].mxu0
    %3494 = vdwg.mxu0
    %3495 = vmatprep.subr.bf16.mxu0 %v3160
    %3496 = vmatpush1.bf16.msra.mxu0 %v3159
    %3497 = vmatprep.subr.bf16.mxu0 %v3168
    %3498 = vmatpush1.bf16.msra.mxu0 %v3167
    %3499 = vmatprep.subr.bf16.mxu0 %v3176
    %3500 = vmatpush1.bf16.msra.mxu0 %v3175
    %3501 = vmatprep.subr.bf16.mxu0 %v3184
    %3502 = vmatpush1.bf16.msra.mxu0 %v3183
    %3503 = vmatprep.subr.bf16.mxu0 %v3192
    %3504 = vmatpush1.bf16.msra.mxu0 %v3191
    %3505 = vmatprep.subr.bf16.mxu0 %v3200
    %3506 = vmatpush1.bf16.msra.mxu0 %v3199
    %3507 = vmatprep.subr.bf16.mxu0 %v3208
    %3508 = vmatpush1.bf16.msra.mxu0 %v3207
    %3509 = vmatprep.subr.bf16.mxu0 %v3216
    %3510 = vmatpush1.bf16.msra.mxu0 %v3215
    %3511 = vmatprep.subr.bf16.mxu0 %v3224
    %3512 = vmatpush1.bf16.msra.mxu0 %v3223
    %3513 = vmatprep.subr.bf16.mxu0 %v3232
    %3514 = vmatpush1.bf16.msra.mxu0 %v3231
    %3515 = vmatprep.subr.bf16.mxu0 %v3240
    %3516 = vmatpush1.bf16.msra.mxu0 %v3239
    %3517 = vmatprep.subr.bf16.mxu0 %v3248
    %3518 = vmatpush1.bf16.msra.mxu0 %v3247
    %3519 = vmatprep.subr.bf16.mxu0 %v3256
    %3520 = vmatpush1.bf16.msra.mxu0 %v3255
    %3521 = vmatprep.subr.bf16.mxu0 %v3264
    %3522 = vmatpush1.bf16.msra.mxu0 %v3263
    %3523 = vmatprep.subr.bf16.mxu0 %v3272
    %3524 = vmatpush1.bf16.msra.mxu0 %v3271
    %3525 = vmatprep.subr.bf16.mxu0 %v3280
    %3526 = vmatpush1.bf16.msra.mxu0 %v3279
    %3527 = vmatprep.mubr.bf16.mxu0 %v2602
    %3528 = vmatmul.mubr.bf16.gmra.mrb[0].mxu0 %v2601
    %v3529 = vpop.f32.mrb[0].mxu0
    %v3530 = vadd.f32 0.0, %v3529
    %v3531 = vpop.f32.mrb[0].mxu0
    %v3532 = vadd.f32 0.0, %v3531
    %v3533 = vpop.f32.mrb[0].mxu0
    %v3534 = vpop.f32.mrb[0].mxu0
    %3535 = vdwg.mxu0
    %3536 = vmatprep.subr.bf16.mxu0 %v3288
    %3537 = vmatpush1.bf16.msra.mxu0 %v3287
    %3538 = vmatprep.subr.bf16.mxu0 %v3296
    %3539 = vmatpush1.bf16.msra.mxu0 %v3295
    %3540 = vmatprep.subr.bf16.mxu0 %v3304
    %3541 = vmatpush1.bf16.msra.mxu0 %v3303
    %3542 = vmatprep.subr.bf16.mxu0 %v3312
    %3543 = vmatpush1.bf16.msra.mxu0 %v3311
    %3544 = vmatprep.subr.bf16.mxu0 %v3320
    %3545 = vmatpush1.bf16.msra.mxu0 %v3319
    %3546 = vmatprep.subr.bf16.mxu0 %v3328
    %3547 = vmatpush1.bf16.msra.mxu0 %v3327
    %3548 = vmatprep.subr.bf16.mxu0 %v3336
    %3549 = vmatpush1.bf16.msra.mxu0 %v3335
    %3550 = vmatprep.subr.bf16.mxu0 %v3344
    %3551 = vmatpush1.bf16.msra.mxu0 %v3343
    %3552 = vmatprep.subr.bf16.mxu0 %v3352
    %3553 = vmatpush1.bf16.msra.mxu0 %v3351
    %3554 = vmatprep.subr.bf16.mxu0 %v3360
    %3555 = vmatpush1.bf16.msra.mxu0 %v3359
    %3556 = vmatprep.subr.bf16.mxu0 %v3368
    %3557 = vmatpush1.bf16.msra.mxu0 %v3367
    %3558 = vmatprep.subr.bf16.mxu0 %v3376
    %3559 = vmatpush1.bf16.msra.mxu0 %v3375
    %3560 = vmatprep.subr.bf16.mxu0 %v3384
    %3561 = vmatpush1.bf16.msra.mxu0 %v3383
    %3562 = vmatprep.subr.bf16.mxu0 %v3392
    %3563 = vmatpush1.bf16.msra.mxu0 %v3391
    %3564 = vmatprep.subr.bf16.mxu0 %v3400
    %3565 = vmatpush1.bf16.msra.mxu0 %v3399
    %3566 = vmatprep.subr.bf16.mxu0 %v3408
    %3567 = vmatpush1.bf16.msra.mxu0 %v3407
    %3568 = vmatprep.mubr.bf16.mxu0 %v2604
    %3569 = vmatmul.mubr.bf16.gmra.mrb[0].mxu0 %v2603
    %v3570 = vpop.f32.mrb[0].mxu0
    %v3571 = vadd.f32 %v3530, %v3570
    %v3572 = vpop.f32.mrb[0].mxu0
    %v3573 = vadd.f32 %v3532, %v3572
    %v3574 = vpop.f32.mrb[0].mxu0
    %v3575 = vpop.f32.mrb[0].mxu0
    %3576 = vdwg.mxu0
    %3577 = vmatprep.subr.bf16.mxu0 %v3162
    %3578 = vmatpush1.bf16.msra.mxu0 %v3161
    %3579 = vmatprep.subr.bf16.mxu0 %v3170
    %3580 = vmatpush1.bf16.msra.mxu0 %v3169
    %3581 = vmatprep.subr.bf16.mxu0 %v3178
    %3582 = vmatpush1.bf16.msra.mxu0 %v3177
    %3583 = vmatprep.subr.bf16.mxu0 %v3186
    %3584 = vmatpush1.bf16.msra.mxu0 %v3185
    %3585 = vmatprep.subr.bf16.mxu0 %v3194
    %3586 = vmatpush1.bf16.msra.mxu0 %v3193
    %3587 = vmatprep.subr.bf16.mxu0 %v3202
    %3588 = vmatpush1.bf16.msra.mxu0 %v3201
    %3589 = vmatprep.subr.bf16.mxu0 %v3210
    %3590 = vmatpush1.bf16.msra.mxu0 %v3209
    %3591 = vmatprep.subr.bf16.mxu0 %v3218
    %3592 = vmatpush1.bf16.msra.mxu0 %v3217
    %3593 = vmatprep.subr.bf16.mxu0 %v3226
    %3594 = vmatpush1.bf16.msra.mxu0 %v3225
    %3595 = vmatprep.subr.bf16.mxu0 %v3234
    %3596 = vmatpush1.bf16.msra.mxu0 %v3233
    %3597 = vmatprep.subr.bf16.mxu0 %v3242
    %3598 = vmatpush1.bf16.msra.mxu0 %v3241
    %3599 = vmatprep.subr.bf16.mxu0 %v3250
    %3600 = vmatpush1.bf16.msra.mxu0 %v3249
    %3601 = vmatprep.subr.bf16.mxu0 %v3258
    %3602 = vmatpush1.bf16.msra.mxu0 %v3257
    %3603 = vmatprep.subr.bf16.mxu0 %v3266
    %3604 = vmatpush1.bf16.msra.mxu0 %v3265
    %3605 = vmatprep.subr.bf16.mxu0 %v3274
    %3606 = vmatpush1.bf16.msra.mxu0 %v3273
    %3607 = vmatprep.subr.bf16.mxu0 %v3282
    %3608 = vmatpush1.bf16.msra.mxu0 %v3281
    %3609 = vmatprep.mubr.bf16.mxu0 %v2602
    %3610 = vmatmul.mubr.bf16.gmra.mrb[0].mxu0 %v2601
    %v3611 = vpop.f32.mrb[0].mxu0
    %v3612 = vadd.f32 0.0, %v3611
    %v3613 = vpop.f32.mrb[0].mxu0
    %v3614 = vadd.f32 0.0, %v3613
    %v3615 = vpop.f32.mrb[0].mxu0
    %v3616 = vpop.f32.mrb[0].mxu0
    %3617 = vdwg.mxu0
    %3618 = vmatprep.subr.bf16.mxu0 %v3290
    %3619 = vmatpush1.bf16.msra.mxu0 %v3289
    %3620 = vmatprep.subr.bf16.mxu0 %v3298
    %3621 = vmatpush1.bf16.msra.mxu0 %v3297
    %3622 = vmatprep.subr.bf16.mxu0 %v3306
    %3623 = vmatpush1.bf16.msra.mxu0 %v3305
    %3624 = vmatprep.subr.bf16.mxu0 %v3314
    %3625 = vmatpush1.bf16.msra.mxu0 %v3313
    %3626 = vmatprep.subr.bf16.mxu0 %v3322
    %3627 = vmatpush1.bf16.msra.mxu0 %v3321
    %3628 = vmatprep.subr.bf16.mxu0 %v3330
    %3629 = vmatpush1.bf16.msra.mxu0 %v3329
    %3630 = vmatprep.subr.bf16.mxu0 %v3338
    %3631 = vmatpush1.bf16.msra.mxu0 %v3337
    %3632 = vmatprep.subr.bf16.mxu0 %v3346
    %3633 = vmatpush1.bf16.msra.mxu0 %v3345
    %3634 = vmatprep.subr.bf16.mxu0 %v3354
    %3635 = vmatpush1.bf16.msra.mxu0 %v3353
    %3636 = vmatprep.subr.bf16.mxu0 %v3362
    %3637 = vmatpush1.bf16.msra.mxu0 %v3361
    %3638 = vmatprep.subr.bf16.mxu0 %v3370
    %3639 = vmatpush1.bf16.msra.mxu0 %v3369
    %3640 = vmatprep.subr.bf16.mxu0 %v3378
    %3641 = vmatpush1.bf16.msra.mxu0 %v3377
    %3642 = vmatprep.subr.bf16.mxu0 %v3386
    %3643 = vmatpush1.bf16.msra.mxu0 %v3385
    %3644 = vmatprep.subr.bf16.mxu0 %v3394
    %3645 = vmatpush1.bf16.msra.mxu0 %v3393
    %3646 = vmatprep.subr.bf16.mxu0 %v3402
    %3647 = vmatpush1.bf16.msra.mxu0 %v3401
    %3648 = vmatprep.subr.bf16.mxu0 %v3410
    %3649 = vmatpush1.bf16.msra.mxu0 %v3409
    %3650 = vmatprep.mubr.bf16.mxu0 %v2604
    %3651 = vmatmul.mubr.bf16.gmra.mrb[0].mxu0 %v2603
    %v3652 = vpop.f32.mrb[0].mxu0
    %v3653 = vadd.f32 %v3612, %v3652
    %v3654 = vpop.f32.mrb[0].mxu0
    %v3655 = vadd.f32 %v3614, %v3654
    %v3656 = vpop.f32.mrb[0].mxu0
    %v3657 = vpop.f32.mrb[0].mxu0
    %3658 = vdwg.mxu0
    %3659 = vmatprep.subr.bf16.mxu0 %v3164
    %3660 = vmatpush1.bf16.msra.mxu0 %v3163
    %3661 = vmatprep.subr.bf16.mxu0 %v3172
    %3662 = vmatpush1.bf16.msra.mxu0 %v3171
    %3663 = vmatprep.subr.bf16.mxu0 %v3180
    %3664 = vmatpush1.bf16.msra.mxu0 %v3179
    %3665 = vmatprep.subr.bf16.mxu0 %v3188
    %3666 = vmatpush1.bf16.msra.mxu0 %v3187
    %3667 = vmatprep.subr.bf16.mxu0 %v3196
    %3668 = vmatpush1.bf16.msra.mxu0 %v3195
    %3669 = vmatprep.subr.bf16.mxu0 %v3204
    %3670 = vmatpush1.bf16.msra.mxu0 %v3203
    %3671 = vmatprep.subr.bf16.mxu0 %v3212
    %3672 = vmatpush1.bf16.msra.mxu0 %v3211
    %3673 = vmatprep.subr.bf16.mxu0 %v3220
    %3674 = vmatpush1.bf16.msra.mxu0 %v3219
    %3675 = vmatprep.subr.bf16.mxu0 %v3228
    %3676 = vmatpush1.bf16.msra.mxu0 %v3227
    %3677 = vmatprep.subr.bf16.mxu0 %v3236
    %3678 = vmatpush1.bf16.msra.mxu0 %v3235
    %3679 = vmatprep.subr.bf16.mxu0 %v3244
    %3680 = vmatpush1.bf16.msra.mxu0 %v3243
    %3681 = vmatprep.subr.bf16.mxu0 %v3252
    %3682 = vmatpush1.bf16.msra.mxu0 %v3251
    %3683 = vmatprep.subr.bf16.mxu0 %v3260
    %3684 = vmatpush1.bf16.msra.mxu0 %v3259
    %3685 = vmatprep.subr.bf16.mxu0 %v3268
    %3686 = vmatpush1.bf16.msra.mxu0 %v3267
    %3687 = vmatprep.subr.bf16.mxu0 %v3276
    %3688 = vmatpush1.bf16.msra.mxu0 %v3275
    %3689 = vmatprep.subr.bf16.mxu0 %v3284
    %3690 = vmatpush1.bf16.msra.mxu0 %v3283
    %3691 = vmatprep.mubr.bf16.mxu0 %v2602
    %3692 = vmatmul.mubr.bf16.gmra.mrb[0].mxu0 %v2601
    %v3693 = vpop.f32.mrb[0].mxu0
    %v3694 = vadd.f32 0.0, %v3693
    %v3695 = vpop.f32.mrb[0].mxu0
    %v3696 = vadd.f32 0.0, %v3695
    %v3697 = vpop.f32.mrb[0].mxu0
    %v3698 = vpop.f32.mrb[0].mxu0
    %3699 = vdwg.mxu0
    %3700 = vmatprep.subr.bf16.mxu0 %v3292
    %3701 = vmatpush1.bf16.msra.mxu0 %v3291
    %3702 = vmatprep.subr.bf16.mxu0 %v3300
    %3703 = vmatpush1.bf16.msra.mxu0 %v3299
    %3704 = vmatprep.subr.bf16.mxu0 %v3308
    %3705 = vmatpush1.bf16.msra.mxu0 %v3307
    %3706 = vmatprep.subr.bf16.mxu0 %v3316
    %3707 = vmatpush1.bf16.msra.mxu0 %v3315
    %3708 = vmatprep.subr.bf16.mxu0 %v3324
    %3709 = vmatpush1.bf16.msra.mxu0 %v3323
    %3710 = vmatprep.subr.bf16.mxu0 %v3332
    %3711 = vmatpush1.bf16.msra.mxu0 %v3331
    %3712 = vmatprep.subr.bf16.mxu0 %v3340
    %3713 = vmatpush1.bf16.msra.mxu0 %v3339
    %3714 = vmatprep.subr.bf16.mxu0 %v3348
    %3715 = vmatpush1.bf16.msra.mxu0 %v3347
    %3716 = vmatprep.subr.bf16.mxu0 %v3356
    %3717 = vmatpush1.bf16.msra.mxu0 %v3355
    %3718 = vmatprep.subr.bf16.mxu0 %v3364
    %3719 = vmatpush1.bf16.msra.mxu0 %v3363
    %3720 = vmatprep.subr.bf16.mxu0 %v3372
    %3721 = vmatpush1.bf16.msra.mxu0 %v3371
    %3722 = vmatprep.subr.bf16.mxu0 %v3380
    %3723 = vmatpush1.bf16.msra.mxu0 %v3379
    %3724 = vmatprep.subr.bf16.mxu0 %v3388
    %3725 = vmatpush1.bf16.msra.mxu0 %v3387
    %3726 = vmatprep.subr.bf16.mxu0 %v3396
    %3727 = vmatpush1.bf16.msra.mxu0 %v3395
    %3728 = vmatprep.subr.bf16.mxu0 %v3404
    %3729 = vmatpush1.bf16.msra.mxu0 %v3403
    %3730 = vmatprep.subr.bf16.mxu0 %v3412
    %3731 = vmatpush1.bf16.msra.mxu0 %v3411
    %3732 = vmatprep.mubr.bf16.mxu0 %v2604
    %3733 = vmatmul.mubr.bf16.gmra.mrb[0].mxu0 %v2603
    %v3734 = vpop.f32.mrb[0].mxu0
    %v3735 = vadd.f32 %v3694, %v3734
    %v3736 = vpop.f32.mrb[0].mxu0
    %v3737 = vadd.f32 %v3696, %v3736
    %v3738 = vpop.f32.mrb[0].mxu0
    %v3739 = vpop.f32.mrb[0].mxu0
    %3740 = vdwg.mxu0
    %3741 = vmatprep.subr.bf16.mxu0 %v2760
    %3742 = vmatpush1.bf16.msra.mxu0 %v2759
    %3743 = vmatprep.subr.bf16.mxu0 %v2768
    %3744 = vmatpush1.bf16.msra.mxu0 %v2767
    %3745 = vmatprep.subr.bf16.mxu0 %v2776
    %3746 = vmatpush1.bf16.msra.mxu0 %v2775
    %3747 = vmatprep.subr.bf16.mxu0 %v2784
    %3748 = vmatpush1.bf16.msra.mxu0 %v2783
    %3749 = vmatprep.subr.bf16.mxu0 %v2792
    %3750 = vmatpush1.bf16.msra.mxu0 %v2791
    %3751 = vmatprep.subr.bf16.mxu0 %v2800
    %3752 = vmatpush1.bf16.msra.mxu0 %v2799
    %3753 = vmatprep.subr.bf16.mxu0 %v2808
    %3754 = vmatpush1.bf16.msra.mxu0 %v2807
    %3755 = vmatprep.subr.bf16.mxu0 %v2816
    %3756 = vmatpush1.bf16.msra.mxu0 %v2815
    %3757 = vmatprep.subr.bf16.mxu0 %v2824
    %3758 = vmatpush1.bf16.msra.mxu0 %v2823
    %3759 = vmatprep.subr.bf16.mxu0 %v2832
    %3760 = vmatpush1.bf16.msra.mxu0 %v2831
    %3761 = vmatprep.subr.bf16.mxu0 %v2840
    %3762 = vmatpush1.bf16.msra.mxu0 %v2839
    %3763 = vmatprep.subr.bf16.mxu0 %v2848
    %3764 = vmatpush1.bf16.msra.mxu0 %v2847
    %3765 = vmatprep.subr.bf16.mxu0 %v2856
    %3766 = vmatpush1.bf16.msra.mxu0 %v2855
    %3767 = vmatprep.subr.bf16.mxu0 %v2864
    %3768 = vmatpush1.bf16.msra.mxu0 %v2863
    %3769 = vmatprep.subr.bf16.mxu0 %v2872
    %3770 = vmatpush1.bf16.msra.mxu0 %v2871
    %3771 = vmatprep.subr.bf16.mxu0 %v2880
    %3772 = vmatpush1.bf16.msra.mxu0 %v2879
    %3773 = vmatprep.mubr.bf16.mxu0 %v2598
    %3774 = vmatmul.mubr.bf16.gmra.mrb[0].mxu0 %v2597
    %v3775 = vpop.f32.mrb[0].mxu0
    %v3776 = vadd.f32 %v3489, %v3775
    %v3777 = vpop.f32.mrb[0].mxu0
    %v3778 = vadd.f32 %v3491, %v3777
    %v3779 = vpop.f32.mrb[0].mxu0
    %v3780 = vpop.f32.mrb[0].mxu0
    %3781 = vdwg.mxu0
    %3782 = vmatprep.subr.bf16.mxu0 %v2888
    %3783 = vmatpush1.bf16.msra.mxu0 %v2887
    %3784 = vmatprep.subr.bf16.mxu0 %v2896
    %3785 = vmatpush1.bf16.msra.mxu0 %v2895
    %3786 = vmatprep.subr.bf16.mxu0 %v2904
    %3787 = vmatpush1.bf16.msra.mxu0 %v2903
    %3788 = vmatprep.subr.bf16.mxu0 %v2912
    %3789 = vmatpush1.bf16.msra.mxu0 %v2911
    %3790 = vmatprep.subr.bf16.mxu0 %v2920
    %3791 = vmatpush1.bf16.msra.mxu0 %v2919
    %3792 = vmatprep.subr.bf16.mxu0 %v2928
    %3793 = vmatpush1.bf16.msra.mxu0 %v2927
    %3794 = vmatprep.subr.bf16.mxu0 %v2936
    %3795 = vmatpush1.bf16.msra.mxu0 %v2935
    %3796 = vmatprep.subr.bf16.mxu0 %v2944
    %3797 = vmatpush1.bf16.msra.mxu0 %v2943
    %3798 = vmatprep.subr.bf16.mxu0 %v2952
    %3799 = vmatpush1.bf16.msra.mxu0 %v2951
    %3800 = vmatprep.subr.bf16.mxu0 %v2960
    %3801 = vmatpush1.bf16.msra.mxu0 %v2959
    %3802 = vmatprep.subr.bf16.mxu0 %v2968
    %3803 = vmatpush1.bf16.msra.mxu0 %v2967
    %3804 = vmatprep.subr.bf16.mxu0 %v2976
    %3805 = vmatpush1.bf16.msra.mxu0 %v2975
    %3806 = vmatprep.subr.bf16.mxu0 %v2984
    %3807 = vmatpush1.bf16.msra.mxu0 %v2983
    %3808 = vmatprep.subr.bf16.mxu0 %v2992
    %3809 = vmatpush1.bf16.msra.mxu0 %v2991
    %3810 = vmatprep.subr.bf16.mxu0 %v3000
    %3811 = vmatpush1.bf16.msra.mxu0 %v2999
    %3812 = vmatprep.subr.bf16.mxu0 %v3008
    %3813 = vmatpush1.bf16.msra.mxu0 %v3007
    %3814 = vmatprep.mubr.bf16.mxu0 %v2600
    %3815 = vmatmul.mubr.bf16.gmra.mrb[0].mxu0 %v2599
    %v3816 = vpop.f32.mrb[0].mxu0
    %v3817 = vadd.f32 %v3776, %v3816
    %v3818 = vpop.f32.mrb[0].mxu0
    %v3819 = vadd.f32 %v3778, %v3818
    %v3820 = vpop.f32.mrb[0].mxu0
    %v3821 = vpop.f32.mrb[0].mxu0
    %3822 = vdwg.mxu0
    %3823 = vmatprep.subr.bf16.mxu0 %v2762
    %3824 = vmatpush1.bf16.msra.mxu0 %v2761
    %3825 = vmatprep.subr.bf16.mxu0 %v2770
    %3826 = vmatpush1.bf16.msra.mxu0 %v2769
    %3827 = vmatprep.subr.bf16.mxu0 %v2778
    %3828 = vmatpush1.bf16.msra.mxu0 %v2777
    %3829 = vmatprep.subr.bf16.mxu0 %v2786
    %3830 = vmatpush1.bf16.msra.mxu0 %v2785
    %3831 = vmatprep.subr.bf16.mxu0 %v2794
    %3832 = vmatpush1.bf16.msra.mxu0 %v2793
    %3833 = vmatprep.subr.bf16.mxu0 %v2802
    %3834 = vmatpush1.bf16.msra.mxu0 %v2801
    %3835 = vmatprep.subr.bf16.mxu0 %v2810
    %3836 = vmatpush1.bf16.msra.mxu0 %v2809
    %3837 = vmatprep.subr.bf16.mxu0 %v2818
    %3838 = vmatpush1.bf16.msra.mxu0 %v2817
    %3839 = vmatprep.subr.bf16.mxu0 %v2826
    %3840 = vmatpush1.bf16.msra.mxu0 %v2825
    %3841 = vmatprep.subr.bf16.mxu0 %v2834
    %3842 = vmatpush1.bf16.msra.mxu0 %v2833
    %3843 = vmatprep.subr.bf16.mxu0 %v2842
    %3844 = vmatpush1.bf16.msra.mxu0 %v2841
    %3845 = vmatprep.subr.bf16.mxu0 %v2850
    %3846 = vmatpush1.bf16.msra.mxu0 %v2849
    %3847 = vmatprep.subr.bf16.mxu0 %v2858
    %3848 = vmatpush1.bf16.msra.mxu0 %v2857
    %3849 = vmatprep.subr.bf16.mxu0 %v2866
    %3850 = vmatpush1.bf16.msra.mxu0 %v2865
    %3851 = vmatprep.subr.bf16.mxu0 %v2874
    %3852 = vmatpush1.bf16.msra.mxu0 %v2873
    %3853 = vmatprep.subr.bf16.mxu0 %v2882
    %3854 = vmatpush1.bf16.msra.mxu0 %v2881
    %3855 = vmatprep.mubr.bf16.mxu0 %v2598
    %3856 = vmatmul.mubr.bf16.gmra.mrb[0].mxu0 %v2597
    %v3857 = vpop.f32.mrb[0].mxu0
    %v3858 = vadd.f32 %v3571, %v3857
    %v3859 = vpop.f32.mrb[0].mxu0
    %v3860 = vadd.f32 %v3573, %v3859
    %v3861 = vpop.f32.mrb[0].mxu0
    %v3862 = vpop.f32.mrb[0].mxu0
    %3863 = vdwg.mxu0
    %3864 = vmatprep.subr.bf16.mxu0 %v2890
    %3865 = vmatpush1.bf16.msra.mxu0 %v2889
    %3866 = vmatprep.subr.bf16.mxu0 %v2898
    %3867 = vmatpush1.bf16.msra.mxu0 %v2897
    %3868 = vmatprep.subr.bf16.mxu0 %v2906
    %3869 = vmatpush1.bf16.msra.mxu0 %v2905
    %3870 = vmatprep.subr.bf16.mxu0 %v2914
    %3871 = vmatpush1.bf16.msra.mxu0 %v2913
    %3872 = vmatprep.subr.bf16.mxu0 %v2922
    %3873 = vmatpush1.bf16.msra.mxu0 %v2921
    %3874 = vmatprep.subr.bf16.mxu0 %v2930
    %3875 = vmatpush1.bf16.msra.mxu0 %v2929
    %3876 = vmatprep.subr.bf16.mxu0 %v2938
    %3877 = vmatpush1.bf16.msra.mxu0 %v2937
    %3878 = vmatprep.subr.bf16.mxu0 %v2946
    %3879 = vmatpush1.bf16.msra.mxu0 %v2945
    %3880 = vmatprep.subr.bf16.mxu0 %v2954
    %3881 = vmatpush1.bf16.msra.mxu0 %v2953
    %3882 = vmatprep.subr.bf16.mxu0 %v2962
    %3883 = vmatpush1.bf16.msra.mxu0 %v2961
    %3884 = vmatprep.subr.bf16.mxu0 %v2970
    %3885 = vmatpush1.bf16.msra.mxu0 %v2969
    %3886 = vmatprep.subr.bf16.mxu0 %v2978
    %3887 = vmatpush1.bf16.msra.mxu0 %v2977
    %3888 = vmatprep.subr.bf16.mxu0 %v2986
    %3889 = vmatpush1.bf16.msra.mxu0 %v2985
    %3890 = vmatprep.subr.bf16.mxu0 %v2994
    %3891 = vmatpush1.bf16.msra.mxu0 %v2993
    %3892 = vmatprep.subr.bf16.mxu0 %v3002
    %3893 = vmatpush1.bf16.msra.mxu0 %v3001
    %3894 = vmatprep.subr.bf16.mxu0 %v3010
    %3895 = vmatpush1.bf16.msra.mxu0 %v3009
    %3896 = vmatprep.mubr.bf16.mxu0 %v2600
    %3897 = vmatmul.mubr.bf16.gmra.mrb[0].mxu0 %v2599
    %v3898 = vpop.f32.mrb[0].mxu0
    %v3899 = vadd.f32 %v3858, %v3898
    %v3900 = vpop.f32.mrb[0].mxu0
    %v3901 = vadd.f32 %v3860, %v3900
    %v3902 = vpop.f32.mrb[0].mxu0
    %v3903 = vpop.f32.mrb[0].mxu0
    %3904 = vdwg.mxu0
    %3905 = vmatprep.subr.bf16.mxu0 %v2764
    %3906 = vmatpush1.bf16.msra.mxu0 %v2763
    %3907 = vmatprep.subr.bf16.mxu0 %v2772
    %3908 = vmatpush1.bf16.msra.mxu0 %v2771
    %3909 = vmatprep.subr.bf16.mxu0 %v2780
    %3910 = vmatpush1.bf16.msra.mxu0 %v2779
    %3911 = vmatprep.subr.bf16.mxu0 %v2788
    %3912 = vmatpush1.bf16.msra.mxu0 %v2787
    %3913 = vmatprep.subr.bf16.mxu0 %v2796
    %3914 = vmatpush1.bf16.msra.mxu0 %v2795
    %3915 = vmatprep.subr.bf16.mxu0 %v2804
    %3916 = vmatpush1.bf16.msra.mxu0 %v2803
    %3917 = vmatprep.subr.bf16.mxu0 %v2812
    %3918 = vmatpush1.bf16.msra.mxu0 %v2811
    %3919 = vmatprep.subr.bf16.mxu0 %v2820
    %3920 = vmatpush1.bf16.msra.mxu0 %v2819
    %3921 = vmatprep.subr.bf16.mxu0 %v2828
    %3922 = vmatpush1.bf16.msra.mxu0 %v2827
    %3923 = vmatprep.subr.bf16.mxu0 %v2836
    %3924 = vmatpush1.bf16.msra.mxu0 %v2835
    %3925 = vmatprep.subr.bf16.mxu0 %v2844
    %3926 = vmatpush1.bf16.msra.mxu0 %v2843
    %3927 = vmatprep.subr.bf16.mxu0 %v2852
    %3928 = vmatpush1.bf16.msra.mxu0 %v2851
    %3929 = vmatprep.subr.bf16.mxu0 %v2860
    %3930 = vmatpush1.bf16.msra.mxu0 %v2859
    %3931 = vmatprep.subr.bf16.mxu0 %v2868
    %3932 = vmatpush1.bf16.msra.mxu0 %v2867
    %3933 = vmatprep.subr.bf16.mxu0 %v2876
    %3934 = vmatpush1.bf16.msra.mxu0 %v2875
    %3935 = vmatprep.subr.bf16.mxu0 %v2884
    %3936 = vmatpush1.bf16.msra.mxu0 %v2883
    %3937 = vmatprep.mubr.bf16.mxu0 %v2598
    %3938 = vmatmul.mubr.bf16.gmra.mrb[0].mxu0 %v2597
    %v3939 = vpop.f32.mrb[0].mxu0
    %v3940 = vadd.f32 %v3653, %v3939
    %v3941 = vpop.f32.mrb[0].mxu0
    %v3942 = vadd.f32 %v3655, %v3941
    %v3943 = vpop.f32.mrb[0].mxu0
    %v3944 = vpop.f32.mrb[0].mxu0
    %3945 = vdwg.mxu0
    %3946 = vmatprep.subr.bf16.mxu0 %v2892
    %3947 = vmatpush1.bf16.msra.mxu0 %v2891
    %3948 = vmatprep.subr.bf16.mxu0 %v2900
    %3949 = vmatpush1.bf16.msra.mxu0 %v2899
    %3950 = vmatprep.subr.bf16.mxu0 %v2908
    %3951 = vmatpush1.bf16.msra.mxu0 %v2907
    %3952 = vmatprep.subr.bf16.mxu0 %v2916
    %3953 = vmatpush1.bf16.msra.mxu0 %v2915
    %3954 = vmatprep.subr.bf16.mxu0 %v2924
    %3955 = vmatpush1.bf16.msra.mxu0 %v2923
    %3956 = vmatprep.subr.bf16.mxu0 %v2932
    %3957 = vmatpush1.bf16.msra.mxu0 %v2931
    %3958 = vmatprep.subr.bf16.mxu0 %v2940
    %3959 = vmatpush1.bf16.msra.mxu0 %v2939
    %3960 = vmatprep.subr.bf16.mxu0 %v2948
    %3961 = vmatpush1.bf16.msra.mxu0 %v2947
    %3962 = vmatprep.subr.bf16.mxu0 %v2956
    %3963 = vmatpush1.bf16.msra.mxu0 %v2955
    %3964 = vmatprep.subr.bf16.mxu0 %v2964
    %3965 = vmatpush1.bf16.msra.mxu0 %v2963
    %3966 = vmatprep.subr.bf16.mxu0 %v2972
    %3967 = vmatpush1.bf16.msra.mxu0 %v2971
    %3968 = vmatprep.subr.bf16.mxu0 %v2980
    %3969 = vmatpush1.bf16.msra.mxu0 %v2979
    %3970 = vmatprep.subr.bf16.mxu0 %v2988
    %3971 = vmatpush1.bf16.msra.mxu0 %v2987
    %3972 = vmatprep.subr.bf16.mxu0 %v2996
    %3973 = vmatpush1.bf16.msra.mxu0 %v2995
    %3974 = vmatprep.subr.bf16.mxu0 %v3004
    %3975 = vmatpush1.bf16.msra.mxu0 %v3003
    %3976 = vmatprep.subr.bf16.mxu0 %v3012
    %3977 = vmatpush1.bf16.msra.mxu0 %v3011
    %3978 = vmatprep.mubr.bf16.mxu0 %v2600
    %3979 = vmatmul.mubr.bf16.gmra.mrb[0].mxu0 %v2599
    %v3980 = vpop.f32.mrb[0].mxu0
    %v3981 = vadd.f32 %v3940, %v3980
    %v3982 = vpop.f32.mrb[0].mxu0
    %v3983 = vadd.f32 %v3942, %v3982
    %v3984 = vpop.f32.mrb[0].mxu0
    %v3985 = vpop.f32.mrb[0].mxu0
    %3986 = vdwg.mxu0
    %3987 = vmatprep.subr.bf16.mxu0 %v2766
    %3988 = vmatpush1.bf16.msra.mxu0 %v2765
    %3989 = vmatprep.subr.bf16.mxu0 %v2774
    %3990 = vmatpush1.bf16.msra.mxu0 %v2773
    %3991 = vmatprep.subr.bf16.mxu0 %v2782
    %3992 = vmatpush1.bf16.msra.mxu0 %v2781
    %3993 = vmatprep.subr.bf16.mxu0 %v2790
    %3994 = vmatpush1.bf16.msra.mxu0 %v2789
    %3995 = vmatprep.subr.bf16.mxu0 %v2798
    %3996 = vmatpush1.bf16.msra.mxu0 %v2797
    %3997 = vmatprep.subr.bf16.mxu0 %v2806
    %3998 = vmatpush1.bf16.msra.mxu0 %v2805
    %3999 = vmatprep.subr.bf16.mxu0 %v2814
    %4000 = vmatpush1.bf16.msra.mxu0 %v2813
    %4001 = vmatprep.subr.bf16.mxu0 %v2822
    %4002 = vmatpush1.bf16.msra.mxu0 %v2821
    %4003 = vmatprep.subr.bf16.mxu0 %v2830
    %4004 = vmatpush1.bf16.msra.mxu0 %v2829
    %4005 = vmatprep.subr.bf16.mxu0 %v2838
    %4006 = vmatpush1.bf16.msra.mxu0 %v2837
    %4007 = vmatprep.subr.bf16.mxu0 %v2846
    %4008 = vmatpush1.bf16.msra.mxu0 %v2845
    %4009 = vmatprep.subr.bf16.mxu0 %v2854
    %4010 = vmatpush1.bf16.msra.mxu0 %v2853
    %4011 = vmatprep.subr.bf16.mxu0 %v2862
    %4012 = vmatpush1.bf16.msra.mxu0 %v2861
    %4013 = vmatprep.subr.bf16.mxu0 %v2870
    %4014 = vmatpush1.bf16.msra.mxu0 %v2869
    %4015 = vmatprep.subr.bf16.mxu0 %v2878
    %4016 = vmatpush1.bf16.msra.mxu0 %v2877
    %4017 = vmatprep.subr.bf16.mxu0 %v2886
    %4018 = vmatpush1.bf16.msra.mxu0 %v2885
    %4019 = vmatprep.mubr.bf16.mxu0 %v2598
    %4020 = vmatmul.mubr.bf16.gmra.mrb[0].mxu0 %v2597
    %v4021 = vpop.f32.mrb[0].mxu0
    %v4022 = vadd.f32 %v3735, %v4021
    %v4023 = vpop.f32.mrb[0].mxu0
    %v4024 = vadd.f32 %v3737, %v4023
    %v4025 = vpop.f32.mrb[0].mxu0
    %v4026 = vpop.f32.mrb[0].mxu0
    %4027 = vdwg.mxu0
    %4028 = vmatprep.subr.bf16.mxu0 %v2894
    %4029 = vmatpush1.bf16.msra.mxu0 %v2893
    %4030 = vmatprep.subr.bf16.mxu0 %v2902
    %4031 = vmatpush1.bf16.msra.mxu0 %v2901
    %4032 = vmatprep.subr.bf16.mxu0 %v2910
    %4033 = vmatpush1.bf16.msra.mxu0 %v2909
    %4034 = vmatprep.subr.bf16.mxu0 %v2918
    %4035 = vmatpush1.bf16.msra.mxu0 %v2917
    %4036 = vmatprep.subr.bf16.mxu0 %v2926
    %4037 = vmatpush1.bf16.msra.mxu0 %v2925
    %4038 = vmatprep.subr.bf16.mxu0 %v2934
    %4039 = vmatpush1.bf16.msra.mxu0 %v2933
    %4040 = vmatprep.subr.bf16.mxu0 %v2942
    %4041 = vmatpush1.bf16.msra.mxu0 %v2941
    %4042 = vmatprep.subr.bf16.mxu0 %v2950
    %4043 = vmatpush1.bf16.msra.mxu0 %v2949
    %4044 = vmatprep.subr.bf16.mxu0 %v2958
    %4045 = vmatpush1.bf16.msra.mxu0 %v2957
    %4046 = vmatprep.subr.bf16.mxu0 %v2966
    %4047 = vmatpush1.bf16.msra.mxu0 %v2965
    %4048 = vmatprep.subr.bf16.mxu0 %v2974
    %4049 = vmatpush1.bf16.msra.mxu0 %v2973
    %4050 = vmatprep.subr.bf16.mxu0 %v2982
    %4051 = vmatpush1.bf16.msra.mxu0 %v2981
    %4052 = vmatprep.subr.bf16.mxu0 %v2990
    %4053 = vmatpush1.bf16.msra.mxu0 %v2989
    %4054 = vmatprep.subr.bf16.mxu0 %v2998
    %4055 = vmatpush1.bf16.msra.mxu0 %v2997
    %4056 = vmatprep.subr.bf16.mxu0 %v3006
    %4057 = vmatpush1.bf16.msra.mxu0 %v3005
    %4058 = vmatprep.subr.bf16.mxu0 %v3014
    %4059 = vmatpush1.bf16.msra.mxu0 %v3013
    %4060 = vmatprep.mubr.bf16.mxu0 %v2600
    %4061 = vmatmul.mubr.bf16.gmra.mrb[0].mxu0 %v2599
    %v4062 = vpop.f32.mrb[0].mxu0
    %v4063 = vadd.f32 %v4022, %v4062
    %v4064 = vpop.f32.mrb[0].mxu0
    %v4065 = vadd.f32 %v4024, %v4064
    %v4066 = vpop.f32.mrb[0].mxu0
    %v4067 = vpop.f32.mrb[0].mxu0
    %4068 = vdwg.mxu0
    %s4069 = sshll.u32 %s2614, 4
    %4070 = dma.done [#allocation5], %s4069
    %s4071 = scalar_lea.hbm %s4, 49152
    // Predicated region
    $region110: #{net_forward.1} parent=1 // pred_check
      _
    $region111: #{net_forward.1} parent=1 // pred_check_branch
      %4073 = sbr.rel target = $region113
    $region112: #{net_forward.1} parent=1 // pred_region
      %4074 = sst [smem:[#allocation24]] [#allocation37]
      %4075 = sst [smem:[#allocation25]] [#allocation36]
    $region113: #{net_forward.1} parent=1 // pred_fallthru
      _
    %4077 = shalt.err (0)
    %s4079 = sshll.u32 %s2618, 4
    %s4080 = int_to_ptr.vmem [resolvable:$true] %s4079
    %4082 = dma.hbm_to_vmem [thread:$0]  %s4071, 16384, %s4080, %s2619
    %v4083 = vld [vmem:[#allocation3] sm:$0xff]
    %v4084 = vld [vmem:[#allocation3 + $0x8] sm:$0xff]
    %v4085 = vld [vmem:[#allocation3 + $0x10] sm:$0xff]
    %v4086 = vld [vmem:[#allocation3 + $0x18] sm:$0xff]
    %v4087 = vld [vmem:[#allocation3 + $0x20] sm:$0xff]
    %v4088 = vld [vmem:[#allocation3 + $0x28] sm:$0xff]
    %v4089 = vld [vmem:[#allocation3 + $0x30] sm:$0xff]
    %v4090 = vld [vmem:[#allocation3 + $0x38] sm:$0xff]
    %v4091 = vld [vmem:[#allocation3 + $0x40] sm:$0xff]
    %v4092 = vld [vmem:[#allocation3 + $0x48] sm:$0xff]
    %v4093 = vld [vmem:[#allocation3 + $0x50] sm:$0xff]
    %v4094 = vld [vmem:[#allocation3 + $0x58] sm:$0xff]
    %v4095 = vld [vmem:[#allocation3 + $0x60] sm:$0xff]
    %v4096 = vld [vmem:[#allocation3 + $0x68] sm:$0xff]
    %v4097 = vld [vmem:[#allocation3 + $0x70] sm:$0xff]
    %v4098 = vld [vmem:[#allocation3 + $0x78] sm:$0xff]
    %v4099 = vld [vmem:[#allocation3 + $0x80] sm:$0xff]
    %v4100 = vld [vmem:[#allocation3 + $0x88] sm:$0xff]
    %v4101 = vld [vmem:[#allocation3 + $0x90] sm:$0xff]
    %v4102 = vld [vmem:[#allocation3 + $0x98] sm:$0xff]
    %v4103 = vld [vmem:[#allocation3 + $0xa0] sm:$0xff]
    %v4104 = vld [vmem:[#allocation3 + $0xa8] sm:$0xff]
    %v4105 = vld [vmem:[#allocation3 + $0xb0] sm:$0xff]
    %v4106 = vld [vmem:[#allocation3 + $0xb8] sm:$0xff]
    %v4107 = vld [vmem:[#allocation3 + $0xc0] sm:$0xff]
    %v4108 = vld [vmem:[#allocation3 + $0xc8] sm:$0xff]
    %v4109 = vld [vmem:[#allocation3 + $0xd0] sm:$0xff]
    %v4110 = vld [vmem:[#allocation3 + $0xd8] sm:$0xff]
    %v4111 = vld [vmem:[#allocation3 + $0xe0] sm:$0xff]
    %v4112 = vld [vmem:[#allocation3 + $0xe8] sm:$0xff]
    %v4113 = vld [vmem:[#allocation3 + $0xf0] sm:$0xff]
    %v4114 = vld [vmem:[#allocation3 + $0xf8] sm:$0xff]
    %v4115 = vld [vmem:[#allocation3 + $0x100] sm:$0xff]
    %v4116 = vld [vmem:[#allocation3 + $0x108] sm:$0xff]
    %v4117 = vld [vmem:[#allocation3 + $0x110] sm:$0xff]
    %v4118 = vld [vmem:[#allocation3 + $0x118] sm:$0xff]
    %v4119 = vld [vmem:[#allocation3 + $0x120] sm:$0xff]
    %v4120 = vld [vmem:[#allocation3 + $0x128] sm:$0xff]
    %v4121 = vld [vmem:[#allocation3 + $0x130] sm:$0xff]
    %v4122 = vld [vmem:[#allocation3 + $0x138] sm:$0xff]
    %v4123 = vld [vmem:[#allocation3 + $0x140] sm:$0xff]
    %v4124 = vld [vmem:[#allocation3 + $0x148] sm:$0xff]
    %v4125 = vld [vmem:[#allocation3 + $0x150] sm:$0xff]
    %v4126 = vld [vmem:[#allocation3 + $0x158] sm:$0xff]
    %v4127 = vld [vmem:[#allocation3 + $0x160] sm:$0xff]
    %v4128 = vld [vmem:[#allocation3 + $0x168] sm:$0xff]
    %v4129 = vld [vmem:[#allocation3 + $0x170] sm:$0xff]
    %v4130 = vld [vmem:[#allocation3 + $0x178] sm:$0xff]
    %v4131 = vld [vmem:[#allocation3 + $0x180] sm:$0xff]
    %v4132 = vld [vmem:[#allocation3 + $0x188] sm:$0xff]
    %v4133 = vld [vmem:[#allocation3 + $0x190] sm:$0xff]
    %v4134 = vld [vmem:[#allocation3 + $0x198] sm:$0xff]
    %v4135 = vld [vmem:[#allocation3 + $0x1a0] sm:$0xff]
    %v4136 = vld [vmem:[#allocation3 + $0x1a8] sm:$0xff]
    %v4137 = vld [vmem:[#allocation3 + $0x1b0] sm:$0xff]
    %v4138 = vld [vmem:[#allocation3 + $0x1b8] sm:$0xff]
    %v4139 = vld [vmem:[#allocation3 + $0x1c0] sm:$0xff]
    %v4140 = vld [vmem:[#allocation3 + $0x1c8] sm:$0xff]
    %v4141 = vld [vmem:[#allocation3 + $0x1d0] sm:$0xff]
    %v4142 = vld [vmem:[#allocation3 + $0x1d8] sm:$0xff]
    %v4143 = vld [vmem:[#allocation3 + $0x1e0] sm:$0xff]
    %v4144 = vld [vmem:[#allocation3 + $0x1e8] sm:$0xff]
    %v4145 = vld [vmem:[#allocation3 + $0x1f0] sm:$0xff]
    %v4146 = vld [vmem:[#allocation3 + $0x1f8] sm:$0xff]
    %v4147 = vld [vmem:[#allocation3 + $0x200] sm:$0xff]
    %v4148 = vld [vmem:[#allocation3 + $0x208] sm:$0xff]
    %v4149 = vld [vmem:[#allocation3 + $0x210] sm:$0xff]
    %v4150 = vld [vmem:[#allocation3 + $0x218] sm:$0xff]
    %v4151 = vld [vmem:[#allocation3 + $0x220] sm:$0xff]
    %v4152 = vld [vmem:[#allocation3 + $0x228] sm:$0xff]
    %v4153 = vld [vmem:[#allocation3 + $0x230] sm:$0xff]
    %v4154 = vld [vmem:[#allocation3 + $0x238] sm:$0xff]
    %v4155 = vld [vmem:[#allocation3 + $0x240] sm:$0xff]
    %v4156 = vld [vmem:[#allocation3 + $0x248] sm:$0xff]
    %v4157 = vld [vmem:[#allocation3 + $0x250] sm:$0xff]
    %v4158 = vld [vmem:[#allocation3 + $0x258] sm:$0xff]
    %v4159 = vld [vmem:[#allocation3 + $0x260] sm:$0xff]
    %v4160 = vld [vmem:[#allocation3 + $0x268] sm:$0xff]
    %v4161 = vld [vmem:[#allocation3 + $0x270] sm:$0xff]
    %v4162 = vld [vmem:[#allocation3 + $0x278] sm:$0xff]
    %v4163 = vld [vmem:[#allocation3 + $0x280] sm:$0xff]
    %v4164 = vld [vmem:[#allocation3 + $0x288] sm:$0xff]
    %v4165 = vld [vmem:[#allocation3 + $0x290] sm:$0xff]
    %v4166 = vld [vmem:[#allocation3 + $0x298] sm:$0xff]
    %v4167 = vld [vmem:[#allocation3 + $0x2a0] sm:$0xff]
    %v4168 = vld [vmem:[#allocation3 + $0x2a8] sm:$0xff]
    %v4169 = vld [vmem:[#allocation3 + $0x2b0] sm:$0xff]
    %v4170 = vld [vmem:[#allocation3 + $0x2b8] sm:$0xff]
    %v4171 = vld [vmem:[#allocation3 + $0x2c0] sm:$0xff]
    %v4172 = vld [vmem:[#allocation3 + $0x2c8] sm:$0xff]
    %v4173 = vld [vmem:[#allocation3 + $0x2d0] sm:$0xff]
    %v4174 = vld [vmem:[#allocation3 + $0x2d8] sm:$0xff]
    %v4175 = vld [vmem:[#allocation3 + $0x2e0] sm:$0xff]
    %v4176 = vld [vmem:[#allocation3 + $0x2e8] sm:$0xff]
    %v4177 = vld [vmem:[#allocation3 + $0x2f0] sm:$0xff]
    %v4178 = vld [vmem:[#allocation3 + $0x2f8] sm:$0xff]
    %v4179 = vld [vmem:[#allocation3 + $0x300] sm:$0xff]
    %v4180 = vld [vmem:[#allocation3 + $0x308] sm:$0xff]
    %v4181 = vld [vmem:[#allocation3 + $0x310] sm:$0xff]
    %v4182 = vld [vmem:[#allocation3 + $0x318] sm:$0xff]
    %v4183 = vld [vmem:[#allocation3 + $0x320] sm:$0xff]
    %v4184 = vld [vmem:[#allocation3 + $0x328] sm:$0xff]
    %v4185 = vld [vmem:[#allocation3 + $0x330] sm:$0xff]
    %v4186 = vld [vmem:[#allocation3 + $0x338] sm:$0xff]
    %v4187 = vld [vmem:[#allocation3 + $0x340] sm:$0xff]
    %v4188 = vld [vmem:[#allocation3 + $0x348] sm:$0xff]
    %v4189 = vld [vmem:[#allocation3 + $0x350] sm:$0xff]
    %v4190 = vld [vmem:[#allocation3 + $0x358] sm:$0xff]
    %v4191 = vld [vmem:[#allocation3 + $0x360] sm:$0xff]
    %v4192 = vld [vmem:[#allocation3 + $0x368] sm:$0xff]
    %v4193 = vld [vmem:[#allocation3 + $0x370] sm:$0xff]
    %v4194 = vld [vmem:[#allocation3 + $0x378] sm:$0xff]
    %v4195 = vld [vmem:[#allocation3 + $0x380] sm:$0xff]
    %v4196 = vld [vmem:[#allocation3 + $0x388] sm:$0xff]
    %v4197 = vld [vmem:[#allocation3 + $0x390] sm:$0xff]
    %v4198 = vld [vmem:[#allocation3 + $0x398] sm:$0xff]
    %v4199 = vld [vmem:[#allocation3 + $0x3a0] sm:$0xff]
    %v4200 = vld [vmem:[#allocation3 + $0x3a8] sm:$0xff]
    %v4201 = vld [vmem:[#allocation3 + $0x3b0] sm:$0xff]
    %v4202 = vld [vmem:[#allocation3 + $0x3b8] sm:$0xff]
    %v4203 = vld [vmem:[#allocation3 + $0x3c0] sm:$0xff]
    %v4204 = vld [vmem:[#allocation3 + $0x3c8] sm:$0xff]
    %v4205 = vld [vmem:[#allocation3 + $0x3d0] sm:$0xff]
    %v4206 = vld [vmem:[#allocation3 + $0x3d8] sm:$0xff]
    %v4207 = vld [vmem:[#allocation3 + $0x3e0] sm:$0xff]
    %v4208 = vld [vmem:[#allocation3 + $0x3e8] sm:$0xff]
    %v4209 = vld [vmem:[#allocation3 + $0x3f0] sm:$0xff]
    %v4210 = vld [vmem:[#allocation3 + $0x3f8] sm:$0xff]
    %v4211 = vunpack.c.l.s8.bf16 %v4083
    %v4212 = vunpack.c.l.s8.bf16 %v4084
    %v4213 = vunpack.c.l.s8.bf16 %v4085
    %v4214 = vunpack.c.l.s8.bf16 %v4086
    %v4215 = vunpack.c.l.s8.bf16 %v4087
    %v4216 = vunpack.c.l.s8.bf16 %v4088
    %v4217 = vunpack.c.l.s8.bf16 %v4089
    %v4218 = vunpack.c.l.s8.bf16 %v4090
    %v4219 = vunpack.c.h.s8.bf16 %v4083
    %v4220 = vunpack.c.h.s8.bf16 %v4084
    %v4221 = vunpack.c.h.s8.bf16 %v4085
    %v4222 = vunpack.c.h.s8.bf16 %v4086
    %v4223 = vunpack.c.h.s8.bf16 %v4087
    %v4224 = vunpack.c.h.s8.bf16 %v4088
    %v4225 = vunpack.c.h.s8.bf16 %v4089
    %v4226 = vunpack.c.h.s8.bf16 %v4090
    %v4227 = vunpack.c.l.s8.bf16 %v4091
    %v4228 = vunpack.c.l.s8.bf16 %v4092
    %v4229 = vunpack.c.l.s8.bf16 %v4093
    %v4230 = vunpack.c.l.s8.bf16 %v4094
    %v4231 = vunpack.c.l.s8.bf16 %v4095
    %v4232 = vunpack.c.l.s8.bf16 %v4096
    %v4233 = vunpack.c.l.s8.bf16 %v4097
    %v4234 = vunpack.c.l.s8.bf16 %v4098
    %v4235 = vunpack.c.h.s8.bf16 %v4091
    %v4236 = vunpack.c.h.s8.bf16 %v4092
    %v4237 = vunpack.c.h.s8.bf16 %v4093
    %v4238 = vunpack.c.h.s8.bf16 %v4094
    %v4239 = vunpack.c.h.s8.bf16 %v4095
    %v4240 = vunpack.c.h.s8.bf16 %v4096
    %v4241 = vunpack.c.h.s8.bf16 %v4097
    %v4242 = vunpack.c.h.s8.bf16 %v4098
    %v4243 = vunpack.c.l.s8.bf16 %v4099
    %v4244 = vunpack.c.l.s8.bf16 %v4100
    %v4245 = vunpack.c.l.s8.bf16 %v4101
    %v4246 = vunpack.c.l.s8.bf16 %v4102
    %v4247 = vunpack.c.l.s8.bf16 %v4103
    %v4248 = vunpack.c.l.s8.bf16 %v4104
    %v4249 = vunpack.c.l.s8.bf16 %v4105
    %v4250 = vunpack.c.l.s8.bf16 %v4106
    %v4251 = vunpack.c.h.s8.bf16 %v4099
    %v4252 = vunpack.c.h.s8.bf16 %v4100
    %v4253 = vunpack.c.h.s8.bf16 %v4101
    %v4254 = vunpack.c.h.s8.bf16 %v4102
    %v4255 = vunpack.c.h.s8.bf16 %v4103
    %v4256 = vunpack.c.h.s8.bf16 %v4104
    %v4257 = vunpack.c.h.s8.bf16 %v4105
    %v4258 = vunpack.c.h.s8.bf16 %v4106
    %v4259 = vunpack.c.l.s8.bf16 %v4107
    %v4260 = vunpack.c.l.s8.bf16 %v4108
    %v4261 = vunpack.c.l.s8.bf16 %v4109
    %v4262 = vunpack.c.l.s8.bf16 %v4110
    %v4263 = vunpack.c.l.s8.bf16 %v4111
    %v4264 = vunpack.c.l.s8.bf16 %v4112
    %v4265 = vunpack.c.l.s8.bf16 %v4113
    %v4266 = vunpack.c.l.s8.bf16 %v4114
    %v4267 = vunpack.c.h.s8.bf16 %v4107
    %v4268 = vunpack.c.h.s8.bf16 %v4108
    %v4269 = vunpack.c.h.s8.bf16 %v4109
    %v4270 = vunpack.c.h.s8.bf16 %v4110
    %v4271 = vunpack.c.h.s8.bf16 %v4111
    %v4272 = vunpack.c.h.s8.bf16 %v4112
    %v4273 = vunpack.c.h.s8.bf16 %v4113
    %v4274 = vunpack.c.h.s8.bf16 %v4114
    %v4275 = vunpack.c.l.s8.bf16 %v4115
    %v4276 = vunpack.c.l.s8.bf16 %v4116
    %v4277 = vunpack.c.l.s8.bf16 %v4117
    %v4278 = vunpack.c.l.s8.bf16 %v4118
    %v4279 = vunpack.c.l.s8.bf16 %v4119
    %v4280 = vunpack.c.l.s8.bf16 %v4120
    %v4281 = vunpack.c.l.s8.bf16 %v4121
    %v4282 = vunpack.c.l.s8.bf16 %v4122
    %v4283 = vunpack.c.h.s8.bf16 %v4115
    %v4284 = vunpack.c.h.s8.bf16 %v4116
    %v4285 = vunpack.c.h.s8.bf16 %v4117
    %v4286 = vunpack.c.h.s8.bf16 %v4118
    %v4287 = vunpack.c.h.s8.bf16 %v4119
    %v4288 = vunpack.c.h.s8.bf16 %v4120
    %v4289 = vunpack.c.h.s8.bf16 %v4121
    %v4290 = vunpack.c.h.s8.bf16 %v4122
    %v4291 = vunpack.c.l.s8.bf16 %v4123
    %v4292 = vunpack.c.l.s8.bf16 %v4124
    %v4293 = vunpack.c.l.s8.bf16 %v4125
    %v4294 = vunpack.c.l.s8.bf16 %v4126
    %v4295 = vunpack.c.l.s8.bf16 %v4127
    %v4296 = vunpack.c.l.s8.bf16 %v4128
    %v4297 = vunpack.c.l.s8.bf16 %v4129
    %v4298 = vunpack.c.l.s8.bf16 %v4130
    %v4299 = vunpack.c.h.s8.bf16 %v4123
    %v4300 = vunpack.c.h.s8.bf16 %v4124
    %v4301 = vunpack.c.h.s8.bf16 %v4125
    %v4302 = vunpack.c.h.s8.bf16 %v4126
    %v4303 = vunpack.c.h.s8.bf16 %v4127
    %v4304 = vunpack.c.h.s8.bf16 %v4128
    %v4305 = vunpack.c.h.s8.bf16 %v4129
    %v4306 = vunpack.c.h.s8.bf16 %v4130
    %v4307 = vunpack.c.l.s8.bf16 %v4131
    %v4308 = vunpack.c.l.s8.bf16 %v4132
    %v4309 = vunpack.c.l.s8.bf16 %v4133
    %v4310 = vunpack.c.l.s8.bf16 %v4134
    %v4311 = vunpack.c.l.s8.bf16 %v4135
    %v4312 = vunpack.c.l.s8.bf16 %v4136
    %v4313 = vunpack.c.l.s8.bf16 %v4137
    %v4314 = vunpack.c.l.s8.bf16 %v4138
    %v4315 = vunpack.c.h.s8.bf16 %v4131
    %v4316 = vunpack.c.h.s8.bf16 %v4132
    %v4317 = vunpack.c.h.s8.bf16 %v4133
    %v4318 = vunpack.c.h.s8.bf16 %v4134
    %v4319 = vunpack.c.h.s8.bf16 %v4135
    %v4320 = vunpack.c.h.s8.bf16 %v4136
    %v4321 = vunpack.c.h.s8.bf16 %v4137
    %v4322 = vunpack.c.h.s8.bf16 %v4138
    %v4323 = vunpack.c.l.s8.bf16 %v4139
    %v4324 = vunpack.c.l.s8.bf16 %v4140
    %v4325 = vunpack.c.l.s8.bf16 %v4141
    %v4326 = vunpack.c.l.s8.bf16 %v4142
    %v4327 = vunpack.c.l.s8.bf16 %v4143
    %v4328 = vunpack.c.l.s8.bf16 %v4144
    %v4329 = vunpack.c.l.s8.bf16 %v4145
    %v4330 = vunpack.c.l.s8.bf16 %v4146
    %v4331 = vunpack.c.h.s8.bf16 %v4139
    %v4332 = vunpack.c.h.s8.bf16 %v4140
    %v4333 = vunpack.c.h.s8.bf16 %v4141
    %v4334 = vunpack.c.h.s8.bf16 %v4142
    %v4335 = vunpack.c.h.s8.bf16 %v4143
    %v4336 = vunpack.c.h.s8.bf16 %v4144
    %v4337 = vunpack.c.h.s8.bf16 %v4145
    %v4338 = vunpack.c.h.s8.bf16 %v4146
    %v4339 = vunpack.c.l.s8.bf16 %v4147
    %v4340 = vunpack.c.l.s8.bf16 %v4148
    %v4341 = vunpack.c.l.s8.bf16 %v4149
    %v4342 = vunpack.c.l.s8.bf16 %v4150
    %v4343 = vunpack.c.l.s8.bf16 %v4151
    %v4344 = vunpack.c.l.s8.bf16 %v4152
    %v4345 = vunpack.c.l.s8.bf16 %v4153
    %v4346 = vunpack.c.l.s8.bf16 %v4154
    %v4347 = vunpack.c.h.s8.bf16 %v4147
    %v4348 = vunpack.c.h.s8.bf16 %v4148
    %v4349 = vunpack.c.h.s8.bf16 %v4149
    %v4350 = vunpack.c.h.s8.bf16 %v4150
    %v4351 = vunpack.c.h.s8.bf16 %v4151
    %v4352 = vunpack.c.h.s8.bf16 %v4152
    %v4353 = vunpack.c.h.s8.bf16 %v4153
    %v4354 = vunpack.c.h.s8.bf16 %v4154
    %v4355 = vunpack.c.l.s8.bf16 %v4155
    %v4356 = vunpack.c.l.s8.bf16 %v4156
    %v4357 = vunpack.c.l.s8.bf16 %v4157
    %v4358 = vunpack.c.l.s8.bf16 %v4158
    %v4359 = vunpack.c.l.s8.bf16 %v4159
    %v4360 = vunpack.c.l.s8.bf16 %v4160
    %v4361 = vunpack.c.l.s8.bf16 %v4161
    %v4362 = vunpack.c.l.s8.bf16 %v4162
    %v4363 = vunpack.c.h.s8.bf16 %v4155
    %v4364 = vunpack.c.h.s8.bf16 %v4156
    %v4365 = vunpack.c.h.s8.bf16 %v4157
    %v4366 = vunpack.c.h.s8.bf16 %v4158
    %v4367 = vunpack.c.h.s8.bf16 %v4159
    %v4368 = vunpack.c.h.s8.bf16 %v4160
    %v4369 = vunpack.c.h.s8.bf16 %v4161
    %v4370 = vunpack.c.h.s8.bf16 %v4162
    %v4371 = vunpack.c.l.s8.bf16 %v4163
    %v4372 = vunpack.c.l.s8.bf16 %v4164
    %v4373 = vunpack.c.l.s8.bf16 %v4165
    %v4374 = vunpack.c.l.s8.bf16 %v4166
    %v4375 = vunpack.c.l.s8.bf16 %v4167
    %v4376 = vunpack.c.l.s8.bf16 %v4168
    %v4377 = vunpack.c.l.s8.bf16 %v4169
    %v4378 = vunpack.c.l.s8.bf16 %v4170
    %v4379 = vunpack.c.h.s8.bf16 %v4163
    %v4380 = vunpack.c.h.s8.bf16 %v4164
    %v4381 = vunpack.c.h.s8.bf16 %v4165
    %v4382 = vunpack.c.h.s8.bf16 %v4166
    %v4383 = vunpack.c.h.s8.bf16 %v4167
    %v4384 = vunpack.c.h.s8.bf16 %v4168
    %v4385 = vunpack.c.h.s8.bf16 %v4169
    %v4386 = vunpack.c.h.s8.bf16 %v4170
    %v4387 = vunpack.c.l.s8.bf16 %v4171
    %v4388 = vunpack.c.l.s8.bf16 %v4172
    %v4389 = vunpack.c.l.s8.bf16 %v4173
    %v4390 = vunpack.c.l.s8.bf16 %v4174
    %v4391 = vunpack.c.l.s8.bf16 %v4175
    %v4392 = vunpack.c.l.s8.bf16 %v4176
    %v4393 = vunpack.c.l.s8.bf16 %v4177
    %v4394 = vunpack.c.l.s8.bf16 %v4178
    %v4395 = vunpack.c.h.s8.bf16 %v4171
    %v4396 = vunpack.c.h.s8.bf16 %v4172
    %v4397 = vunpack.c.h.s8.bf16 %v4173
    %v4398 = vunpack.c.h.s8.bf16 %v4174
    %v4399 = vunpack.c.h.s8.bf16 %v4175
    %v4400 = vunpack.c.h.s8.bf16 %v4176
    %v4401 = vunpack.c.h.s8.bf16 %v4177
    %v4402 = vunpack.c.h.s8.bf16 %v4178
    %v4403 = vunpack.c.l.s8.bf16 %v4179
    %v4404 = vunpack.c.l.s8.bf16 %v4180
    %v4405 = vunpack.c.l.s8.bf16 %v4181
    %v4406 = vunpack.c.l.s8.bf16 %v4182
    %v4407 = vunpack.c.l.s8.bf16 %v4183
    %v4408 = vunpack.c.l.s8.bf16 %v4184
    %v4409 = vunpack.c.l.s8.bf16 %v4185
    %v4410 = vunpack.c.l.s8.bf16 %v4186
    %v4411 = vunpack.c.h.s8.bf16 %v4179
    %v4412 = vunpack.c.h.s8.bf16 %v4180
    %v4413 = vunpack.c.h.s8.bf16 %v4181
    %v4414 = vunpack.c.h.s8.bf16 %v4182
    %v4415 = vunpack.c.h.s8.bf16 %v4183
    %v4416 = vunpack.c.h.s8.bf16 %v4184
    %v4417 = vunpack.c.h.s8.bf16 %v4185
    %v4418 = vunpack.c.h.s8.bf16 %v4186
    %v4419 = vunpack.c.l.s8.bf16 %v4187
    %v4420 = vunpack.c.l.s8.bf16 %v4188
    %v4421 = vunpack.c.l.s8.bf16 %v4189
    %v4422 = vunpack.c.l.s8.bf16 %v4190
    %v4423 = vunpack.c.l.s8.bf16 %v4191
    %v4424 = vunpack.c.l.s8.bf16 %v4192
    %v4425 = vunpack.c.l.s8.bf16 %v4193
    %v4426 = vunpack.c.l.s8.bf16 %v4194
    %v4427 = vunpack.c.h.s8.bf16 %v4187
    %v4428 = vunpack.c.h.s8.bf16 %v4188
    %v4429 = vunpack.c.h.s8.bf16 %v4189
    %v4430 = vunpack.c.h.s8.bf16 %v4190
    %v4431 = vunpack.c.h.s8.bf16 %v4191
    %v4432 = vunpack.c.h.s8.bf16 %v4192
    %v4433 = vunpack.c.h.s8.bf16 %v4193
    %v4434 = vunpack.c.h.s8.bf16 %v4194
    %v4435 = vunpack.c.l.s8.bf16 %v4195
    %v4436 = vunpack.c.l.s8.bf16 %v4196
    %v4437 = vunpack.c.l.s8.bf16 %v4197
    %v4438 = vunpack.c.l.s8.bf16 %v4198
    %v4439 = vunpack.c.l.s8.bf16 %v4199
    %v4440 = vunpack.c.l.s8.bf16 %v4200
    %v4441 = vunpack.c.l.s8.bf16 %v4201
    %v4442 = vunpack.c.l.s8.bf16 %v4202
    %v4443 = vunpack.c.h.s8.bf16 %v4195
    %v4444 = vunpack.c.h.s8.bf16 %v4196
    %v4445 = vunpack.c.h.s8.bf16 %v4197
    %v4446 = vunpack.c.h.s8.bf16 %v4198
    %v4447 = vunpack.c.h.s8.bf16 %v4199
    %v4448 = vunpack.c.h.s8.bf16 %v4200
    %v4449 = vunpack.c.h.s8.bf16 %v4201
    %v4450 = vunpack.c.h.s8.bf16 %v4202
    %v4451 = vunpack.c.l.s8.bf16 %v4203
    %v4452 = vunpack.c.l.s8.bf16 %v4204
    %v4453 = vunpack.c.l.s8.bf16 %v4205
    %v4454 = vunpack.c.l.s8.bf16 %v4206
    %v4455 = vunpack.c.l.s8.bf16 %v4207
    %v4456 = vunpack.c.l.s8.bf16 %v4208
    %v4457 = vunpack.c.l.s8.bf16 %v4209
    %v4458 = vunpack.c.l.s8.bf16 %v4210
    %v4459 = vunpack.c.h.s8.bf16 %v4203
    %v4460 = vunpack.c.h.s8.bf16 %v4204
    %v4461 = vunpack.c.h.s8.bf16 %v4205
    %v4462 = vunpack.c.h.s8.bf16 %v4206
    %v4463 = vunpack.c.h.s8.bf16 %v4207
    %v4464 = vunpack.c.h.s8.bf16 %v4208
    %v4465 = vunpack.c.h.s8.bf16 %v4209
    %v4466 = vunpack.c.h.s8.bf16 %v4210
    %4467 = vmatprep.subr.bf16.mxu0 %v4212
    %4468 = vmatpush1.bf16.msra.mxu0 %v4211
    %4469 = vmatprep.subr.bf16.mxu0 %v4220
    %4470 = vmatpush1.bf16.msra.mxu0 %v4219
    %4471 = vmatprep.subr.bf16.mxu0 %v4228
    %4472 = vmatpush1.bf16.msra.mxu0 %v4227
    %4473 = vmatprep.subr.bf16.mxu0 %v4236
    %4474 = vmatpush1.bf16.msra.mxu0 %v4235
    %4475 = vmatprep.subr.bf16.mxu0 %v4244
    %4476 = vmatpush1.bf16.msra.mxu0 %v4243
    %4477 = vmatprep.subr.bf16.mxu0 %v4252
    %4478 = vmatpush1.bf16.msra.mxu0 %v4251
    %4479 = vmatprep.subr.bf16.mxu0 %v4260
    %4480 = vmatpush1.bf16.msra.mxu0 %v4259
    %4481 = vmatprep.subr.bf16.mxu0 %v4268
    %4482 = vmatpush1.bf16.msra.mxu0 %v4267
    %4483 = vmatprep.subr.bf16.mxu0 %v4276
    %4484 = vmatpush1.bf16.msra.mxu0 %v4275
    %4485 = vmatprep.subr.bf16.mxu0 %v4284
    %4486 = vmatpush1.bf16.msra.mxu0 %v4283
    %4487 = vmatprep.subr.bf16.mxu0 %v4292
    %4488 = vmatpush1.bf16.msra.mxu0 %v4291
    %4489 = vmatprep.subr.bf16.mxu0 %v4300
    %4490 = vmatpush1.bf16.msra.mxu0 %v4299
    %4491 = vmatprep.subr.bf16.mxu0 %v4308
    %4492 = vmatpush1.bf16.msra.mxu0 %v4307
    %4493 = vmatprep.subr.bf16.mxu0 %v4316
    %4494 = vmatpush1.bf16.msra.mxu0 %v4315
    %4495 = vmatprep.subr.bf16.mxu0 %v4324
    %4496 = vmatpush1.bf16.msra.mxu0 %v4323
    %4497 = vmatprep.subr.bf16.mxu0 %v4332
    %4498 = vmatpush1.bf16.msra.mxu0 %v4331
    %4499 = vmatprep.mubr.bf16.mxu0 %v2606
    %4500 = vmatmul.mubr.bf16.gmra.mrb[0].mxu0 %v2605
    %v4501 = vpop.f32.mrb[0].mxu0
    %v4502 = vadd.f32 0.0, %v4501
    %v4503 = vpop.f32.mrb[0].mxu0
    %v4504 = vadd.f32 0.0, %v4503
    %v4505 = vpop.f32.mrb[0].mxu0
    %v4506 = vpop.f32.mrb[0].mxu0
    %4507 = vdwg.mxu0
    %4508 = vmatprep.subr.bf16.mxu0 %v4340
    %4509 = vmatpush1.bf16.msra.mxu0 %v4339
    %4510 = vmatprep.subr.bf16.mxu0 %v4348
    %4511 = vmatpush1.bf16.msra.mxu0 %v4347
    %4512 = vmatprep.subr.bf16.mxu0 %v4356
    %4513 = vmatpush1.bf16.msra.mxu0 %v4355
    %4514 = vmatprep.subr.bf16.mxu0 %v4364
    %4515 = vmatpush1.bf16.msra.mxu0 %v4363
    %4516 = vmatprep.subr.bf16.mxu0 %v4372
    %4517 = vmatpush1.bf16.msra.mxu0 %v4371
    %4518 = vmatprep.subr.bf16.mxu0 %v4380
    %4519 = vmatpush1.bf16.msra.mxu0 %v4379
    %4520 = vmatprep.subr.bf16.mxu0 %v4388
    %4521 = vmatpush1.bf16.msra.mxu0 %v4387
    %4522 = vmatprep.subr.bf16.mxu0 %v4396
    %4523 = vmatpush1.bf16.msra.mxu0 %v4395
    %4524 = vmatprep.subr.bf16.mxu0 %v4404
    %4525 = vmatpush1.bf16.msra.mxu0 %v4403
    %4526 = vmatprep.subr.bf16.mxu0 %v4412
    %4527 = vmatpush1.bf16.msra.mxu0 %v4411
    %4528 = vmatprep.subr.bf16.mxu0 %v4420
    %4529 = vmatpush1.bf16.msra.mxu0 %v4419
    %4530 = vmatprep.subr.bf16.mxu0 %v4428
    %4531 = vmatpush1.bf16.msra.mxu0 %v4427
    %4532 = vmatprep.subr.bf16.mxu0 %v4436
    %4533 = vmatpush1.bf16.msra.mxu0 %v4435
    %4534 = vmatprep.subr.bf16.mxu0 %v4444
    %4535 = vmatpush1.bf16.msra.mxu0 %v4443
    %4536 = vmatprep.subr.bf16.mxu0 %v4452
    %4537 = vmatpush1.bf16.msra.mxu0 %v4451
    %4538 = vmatprep.subr.bf16.mxu0 %v4460
    %4539 = vmatpush1.bf16.msra.mxu0 %v4459
    %4540 = vmatprep.mubr.bf16.mxu0 %v2608
    %4541 = vmatmul.mubr.bf16.gmra.mrb[0].mxu0 %v2607
    %v4542 = vpop.f32.mrb[0].mxu0
    %v4543 = vadd.f32 %v4502, %v4542
    %v4544 = vpop.f32.mrb[0].mxu0
    %v4545 = vadd.f32 %v4504, %v4544
    %v4546 = vpop.f32.mrb[0].mxu0
    %v4547 = vpop.f32.mrb[0].mxu0
    %4548 = vdwg.mxu0
    %4549 = vmatprep.subr.bf16.mxu0 %v4214
    %4550 = vmatpush1.bf16.msra.mxu0 %v4213
    %4551 = vmatprep.subr.bf16.mxu0 %v4222
    %4552 = vmatpush1.bf16.msra.mxu0 %v4221
    %4553 = vmatprep.subr.bf16.mxu0 %v4230
    %4554 = vmatpush1.bf16.msra.mxu0 %v4229
    %4555 = vmatprep.subr.bf16.mxu0 %v4238
    %4556 = vmatpush1.bf16.msra.mxu0 %v4237
    %4557 = vmatprep.subr.bf16.mxu0 %v4246
    %4558 = vmatpush1.bf16.msra.mxu0 %v4245
    %4559 = vmatprep.subr.bf16.mxu0 %v4254
    %4560 = vmatpush1.bf16.msra.mxu0 %v4253
    %4561 = vmatprep.subr.bf16.mxu0 %v4262
    %4562 = vmatpush1.bf16.msra.mxu0 %v4261
    %4563 = vmatprep.subr.bf16.mxu0 %v4270
    %4564 = vmatpush1.bf16.msra.mxu0 %v4269
    %4565 = vmatprep.subr.bf16.mxu0 %v4278
    %4566 = vmatpush1.bf16.msra.mxu0 %v4277
    %4567 = vmatprep.subr.bf16.mxu0 %v4286
    %4568 = vmatpush1.bf16.msra.mxu0 %v4285
    %4569 = vmatprep.subr.bf16.mxu0 %v4294
    %4570 = vmatpush1.bf16.msra.mxu0 %v4293
    %4571 = vmatprep.subr.bf16.mxu0 %v4302
    %4572 = vmatpush1.bf16.msra.mxu0 %v4301
    %4573 = vmatprep.subr.bf16.mxu0 %v4310
    %4574 = vmatpush1.bf16.msra.mxu0 %v4309
    %4575 = vmatprep.subr.bf16.mxu0 %v4318
    %4576 = vmatpush1.bf16.msra.mxu0 %v4317
    %4577 = vmatprep.subr.bf16.mxu0 %v4326
    %4578 = vmatpush1.bf16.msra.mxu0 %v4325
    %4579 = vmatprep.subr.bf16.mxu0 %v4334
    %4580 = vmatpush1.bf16.msra.mxu0 %v4333
    %4581 = vmatprep.mubr.bf16.mxu0 %v2606
    %4582 = vmatmul.mubr.bf16.gmra.mrb[0].mxu0 %v2605
    %v4583 = vpop.f32.mrb[0].mxu0
    %v4584 = vadd.f32 0.0, %v4583
    %v4585 = vpop.f32.mrb[0].mxu0
    %v4586 = vadd.f32 0.0, %v4585
    %v4587 = vpop.f32.mrb[0].mxu0
    %v4588 = vpop.f32.mrb[0].mxu0
    %4589 = vdwg.mxu0
    %4590 = vmatprep.subr.bf16.mxu0 %v4342
    %4591 = vmatpush1.bf16.msra.mxu0 %v4341
    %4592 = vmatprep.subr.bf16.mxu0 %v4350
    %4593 = vmatpush1.bf16.msra.mxu0 %v4349
    %4594 = vmatprep.subr.bf16.mxu0 %v4358
    %4595 = vmatpush1.bf16.msra.mxu0 %v4357
    %4596 = vmatprep.subr.bf16.mxu0 %v4366
    %4597 = vmatpush1.bf16.msra.mxu0 %v4365
    %4598 = vmatprep.subr.bf16.mxu0 %v4374
    %4599 = vmatpush1.bf16.msra.mxu0 %v4373
    %4600 = vmatprep.subr.bf16.mxu0 %v4382
    %4601 = vmatpush1.bf16.msra.mxu0 %v4381
    %4602 = vmatprep.subr.bf16.mxu0 %v4390
    %4603 = vmatpush1.bf16.msra.mxu0 %v4389
    %4604 = vmatprep.subr.bf16.mxu0 %v4398
    %4605 = vmatpush1.bf16.msra.mxu0 %v4397
    %4606 = vmatprep.subr.bf16.mxu0 %v4406
    %4607 = vmatpush1.bf16.msra.mxu0 %v4405
    %4608 = vmatprep.subr.bf16.mxu0 %v4414
    %4609 = vmatpush1.bf16.msra.mxu0 %v4413
    %4610 = vmatprep.subr.bf16.mxu0 %v4422
    %4611 = vmatpush1.bf16.msra.mxu0 %v4421
    %4612 = vmatprep.subr.bf16.mxu0 %v4430
    %4613 = vmatpush1.bf16.msra.mxu0 %v4429
    %4614 = vmatprep.subr.bf16.mxu0 %v4438
    %4615 = vmatpush1.bf16.msra.mxu0 %v4437
    %4616 = vmatprep.subr.bf16.mxu0 %v4446
    %4617 = vmatpush1.bf16.msra.mxu0 %v4445
    %4618 = vmatprep.subr.bf16.mxu0 %v4454
    %4619 = vmatpush1.bf16.msra.mxu0 %v4453
    %4620 = vmatprep.subr.bf16.mxu0 %v4462
    %4621 = vmatpush1.bf16.msra.mxu0 %v4461
    %4622 = vmatprep.mubr.bf16.mxu0 %v2608
    %4623 = vmatmul.mubr.bf16.gmra.mrb[0].mxu0 %v2607
    %v4624 = vpop.f32.mrb[0].mxu0
    %v4625 = vadd.f32 %v4584, %v4624
    %v4626 = vpop.f32.mrb[0].mxu0
    %v4627 = vadd.f32 %v4586, %v4626
    %v4628 = vpop.f32.mrb[0].mxu0
    %v4629 = vpop.f32.mrb[0].mxu0
    %4630 = vdwg.mxu0
    %4631 = vmatprep.subr.bf16.mxu0 %v4216
    %4632 = vmatpush1.bf16.msra.mxu0 %v4215
    %4633 = vmatprep.subr.bf16.mxu0 %v4224
    %4634 = vmatpush1.bf16.msra.mxu0 %v4223
    %4635 = vmatprep.subr.bf16.mxu0 %v4232
    %4636 = vmatpush1.bf16.msra.mxu0 %v4231
    %4637 = vmatprep.subr.bf16.mxu0 %v4240
    %4638 = vmatpush1.bf16.msra.mxu0 %v4239
    %4639 = vmatprep.subr.bf16.mxu0 %v4248
    %4640 = vmatpush1.bf16.msra.mxu0 %v4247
    %4641 = vmatprep.subr.bf16.mxu0 %v4256
    %4642 = vmatpush1.bf16.msra.mxu0 %v4255
    %4643 = vmatprep.subr.bf16.mxu0 %v4264
    %4644 = vmatpush1.bf16.msra.mxu0 %v4263
    %4645 = vmatprep.subr.bf16.mxu0 %v4272
    %4646 = vmatpush1.bf16.msra.mxu0 %v4271
    %4647 = vmatprep.subr.bf16.mxu0 %v4280
    %4648 = vmatpush1.bf16.msra.mxu0 %v4279
    %4649 = vmatprep.subr.bf16.mxu0 %v4288
    %4650 = vmatpush1.bf16.msra.mxu0 %v4287
    %4651 = vmatprep.subr.bf16.mxu0 %v4296
    %4652 = vmatpush1.bf16.msra.mxu0 %v4295
    %4653 = vmatprep.subr.bf16.mxu0 %v4304
    %4654 = vmatpush1.bf16.msra.mxu0 %v4303
    %4655 = vmatprep.subr.bf16.mxu0 %v4312
    %4656 = vmatpush1.bf16.msra.mxu0 %v4311
    %4657 = vmatprep.subr.bf16.mxu0 %v4320
    %4658 = vmatpush1.bf16.msra.mxu0 %v4319
    %4659 = vmatprep.subr.bf16.mxu0 %v4328
    %4660 = vmatpush1.bf16.msra.mxu0 %v4327
    %4661 = vmatprep.subr.bf16.mxu0 %v4336
    %4662 = vmatpush1.bf16.msra.mxu0 %v4335
    %4663 = vmatprep.mubr.bf16.mxu0 %v2606
    %4664 = vmatmul.mubr.bf16.gmra.mrb[0].mxu0 %v2605
    %v4665 = vpop.f32.mrb[0].mxu0
    %v4666 = vadd.f32 0.0, %v4665
    %v4667 = vpop.f32.mrb[0].mxu0
    %v4668 = vadd.f32 0.0, %v4667
    %v4669 = vpop.f32.mrb[0].mxu0
    %v4670 = vpop.f32.mrb[0].mxu0
    %4671 = vdwg.mxu0
    %4672 = vmatprep.subr.bf16.mxu0 %v4344
    %4673 = vmatpush1.bf16.msra.mxu0 %v4343
    %4674 = vmatprep.subr.bf16.mxu0 %v4352
    %4675 = vmatpush1.bf16.msra.mxu0 %v4351
    %4676 = vmatprep.subr.bf16.mxu0 %v4360
    %4677 = vmatpush1.bf16.msra.mxu0 %v4359
    %4678 = vmatprep.subr.bf16.mxu0 %v4368
    %4679 = vmatpush1.bf16.msra.mxu0 %v4367
    %4680 = vmatprep.subr.bf16.mxu0 %v4376
    %4681 = vmatpush1.bf16.msra.mxu0 %v4375
    %4682 = vmatprep.subr.bf16.mxu0 %v4384
    %4683 = vmatpush1.bf16.msra.mxu0 %v4383
    %4684 = vmatprep.subr.bf16.mxu0 %v4392
    %4685 = vmatpush1.bf16.msra.mxu0 %v4391
    %4686 = vmatprep.subr.bf16.mxu0 %v4400
    %4687 = vmatpush1.bf16.msra.mxu0 %v4399
    %4688 = vmatprep.subr.bf16.mxu0 %v4408
    %4689 = vmatpush1.bf16.msra.mxu0 %v4407
    %4690 = vmatprep.subr.bf16.mxu0 %v4416
    %4691 = vmatpush1.bf16.msra.mxu0 %v4415
    %4692 = vmatprep.subr.bf16.mxu0 %v4424
    %4693 = vmatpush1.bf16.msra.mxu0 %v4423
    %4694 = vmatprep.subr.bf16.mxu0 %v4432
    %4695 = vmatpush1.bf16.msra.mxu0 %v4431
    %4696 = vmatprep.subr.bf16.mxu0 %v4440
    %4697 = vmatpush1.bf16.msra.mxu0 %v4439
    %4698 = vmatprep.subr.bf16.mxu0 %v4448
    %4699 = vmatpush1.bf16.msra.mxu0 %v4447
    %4700 = vmatprep.subr.bf16.mxu0 %v4456
    %4701 = vmatpush1.bf16.msra.mxu0 %v4455
    %4702 = vmatprep.subr.bf16.mxu0 %v4464
    %4703 = vmatpush1.bf16.msra.mxu0 %v4463
    %4704 = vmatprep.mubr.bf16.mxu0 %v2608
    %4705 = vmatmul.mubr.bf16.gmra.mrb[0].mxu0 %v2607
    %v4706 = vpop.f32.mrb[0].mxu0
    %v4707 = vadd.f32 %v4666, %v4706
    %v4708 = vpop.f32.mrb[0].mxu0
    %v4709 = vadd.f32 %v4668, %v4708
    %v4710 = vpop.f32.mrb[0].mxu0
    %v4711 = vpop.f32.mrb[0].mxu0
    %4712 = vdwg.mxu0
    %4713 = vmatprep.subr.bf16.mxu0 %v4218
    %4714 = vmatpush1.bf16.msra.mxu0 %v4217
    %4715 = vmatprep.subr.bf16.mxu0 %v4226
    %4716 = vmatpush1.bf16.msra.mxu0 %v4225
    %4717 = vmatprep.subr.bf16.mxu0 %v4234
    %4718 = vmatpush1.bf16.msra.mxu0 %v4233
    %4719 = vmatprep.subr.bf16.mxu0 %v4242
    %4720 = vmatpush1.bf16.msra.mxu0 %v4241
    %4721 = vmatprep.subr.bf16.mxu0 %v4250
    %4722 = vmatpush1.bf16.msra.mxu0 %v4249
    %4723 = vmatprep.subr.bf16.mxu0 %v4258
    %4724 = vmatpush1.bf16.msra.mxu0 %v4257
    %4725 = vmatprep.subr.bf16.mxu0 %v4266
    %4726 = vmatpush1.bf16.msra.mxu0 %v4265
    %4727 = vmatprep.subr.bf16.mxu0 %v4274
    %4728 = vmatpush1.bf16.msra.mxu0 %v4273
    %4729 = vmatprep.subr.bf16.mxu0 %v4282
    %4730 = vmatpush1.bf16.msra.mxu0 %v4281
    %4731 = vmatprep.subr.bf16.mxu0 %v4290
    %4732 = vmatpush1.bf16.msra.mxu0 %v4289
    %4733 = vmatprep.subr.bf16.mxu0 %v4298
    %4734 = vmatpush1.bf16.msra.mxu0 %v4297
    %4735 = vmatprep.subr.bf16.mxu0 %v4306
    %4736 = vmatpush1.bf16.msra.mxu0 %v4305
    %4737 = vmatprep.subr.bf16.mxu0 %v4314
    %4738 = vmatpush1.bf16.msra.mxu0 %v4313
    %4739 = vmatprep.subr.bf16.mxu0 %v4322
    %4740 = vmatpush1.bf16.msra.mxu0 %v4321
    %4741 = vmatprep.subr.bf16.mxu0 %v4330
    %4742 = vmatpush1.bf16.msra.mxu0 %v4329
    %4743 = vmatprep.subr.bf16.mxu0 %v4338
    %4744 = vmatpush1.bf16.msra.mxu0 %v4337
    %4745 = vmatprep.mubr.bf16.mxu0 %v2606
    %4746 = vmatmul.mubr.bf16.gmra.mrb[0].mxu0 %v2605
    %v4747 = vpop.f32.mrb[0].mxu0
    %v4748 = vadd.f32 0.0, %v4747
    %v4749 = vpop.f32.mrb[0].mxu0
    %v4750 = vadd.f32 0.0, %v4749
    %v4751 = vpop.f32.mrb[0].mxu0
    %v4752 = vpop.f32.mrb[0].mxu0
    %4753 = vdwg.mxu0
    %4754 = vmatprep.subr.bf16.mxu0 %v4346
    %4755 = vmatpush1.bf16.msra.mxu0 %v4345
    %4756 = vmatprep.subr.bf16.mxu0 %v4354
    %4757 = vmatpush1.bf16.msra.mxu0 %v4353
    %4758 = vmatprep.subr.bf16.mxu0 %v4362
    %4759 = vmatpush1.bf16.msra.mxu0 %v4361
    %4760 = vmatprep.subr.bf16.mxu0 %v4370
    %4761 = vmatpush1.bf16.msra.mxu0 %v4369
    %4762 = vmatprep.subr.bf16.mxu0 %v4378
    %4763 = vmatpush1.bf16.msra.mxu0 %v4377
    %4764 = vmatprep.subr.bf16.mxu0 %v4386
    %4765 = vmatpush1.bf16.msra.mxu0 %v4385
    %4766 = vmatprep.subr.bf16.mxu0 %v4394
    %4767 = vmatpush1.bf16.msra.mxu0 %v4393
    %4768 = vmatprep.subr.bf16.mxu0 %v4402
    %4769 = vmatpush1.bf16.msra.mxu0 %v4401
    %4770 = vmatprep.subr.bf16.mxu0 %v4410
    %4771 = vmatpush1.bf16.msra.mxu0 %v4409
    %4772 = vmatprep.subr.bf16.mxu0 %v4418
    %4773 = vmatpush1.bf16.msra.mxu0 %v4417
    %4774 = vmatprep.subr.bf16.mxu0 %v4426
    %4775 = vmatpush1.bf16.msra.mxu0 %v4425
    %4776 = vmatprep.subr.bf16.mxu0 %v4434
    %4777 = vmatpush1.bf16.msra.mxu0 %v4433
    %4778 = vmatprep.subr.bf16.mxu0 %v4442
    %4779 = vmatpush1.bf16.msra.mxu0 %v4441
    %4780 = vmatprep.subr.bf16.mxu0 %v4450
    %4781 = vmatpush1.bf16.msra.mxu0 %v4449
    %4782 = vmatprep.subr.bf16.mxu0 %v4458
    %4783 = vmatpush1.bf16.msra.mxu0 %v4457
    %4784 = vmatprep.subr.bf16.mxu0 %v4466
    %4785 = vmatpush1.bf16.msra.mxu0 %v4465
    %4786 = vmatprep.mubr.bf16.mxu0 %v2608
    %4787 = vmatmul.mubr.bf16.gmra.mrb[0].mxu0 %v2607
    %v4788 = vpop.f32.mrb[0].mxu0
    %v4789 = vadd.f32 %v4748, %v4788
    %v4790 = vpop.f32.mrb[0].mxu0
    %v4791 = vadd.f32 %v4750, %v4790
    %v4792 = vpop.f32.mrb[0].mxu0
    %v4793 = vpop.f32.mrb[0].mxu0
    %4794 = vdwg.mxu0
    %v4795 = vadd.f32 %v3817, %v4543
    %v4796 = vadd.f32 %v3819, %v4545
    %v4797 = vadd.f32 %v3899, %v4625
    %v4798 = vadd.f32 %v3901, %v4627
    %v4799 = vadd.f32 %v3981, %v4707
    %v4800 = vadd.f32 %v3983, %v4709
    %v4801 = vadd.f32 %v4063, %v4789
    %v4802 = vadd.f32 %v4065, %v4791
    %s4803 = sshll.u32 %s2614, 4
    %4804 = dma.done %s2619, %s4803
    %v4805 = vld [vmem:[%s2618] sm:$0xff]
    %v4806 = vld [vmem:[%s2618 + $0x8] sm:$0xff]
    %v4807 = vld [vmem:[%s2618 + $0x10] sm:$0xff]
    %v4808 = vld [vmem:[%s2618 + $0x18] sm:$0xff]
    %v4809 = vld [vmem:[%s2618 + $0x20] sm:$0xff]
    %v4810 = vld [vmem:[%s2618 + $0x28] sm:$0xff]
    %v4811 = vld [vmem:[%s2618 + $0x30] sm:$0xff]
    %v4812 = vld [vmem:[%s2618 + $0x38] sm:$0xff]
    %v4813 = vld [vmem:[%s2618 + $0x40] sm:$0xff]
    %v4814 = vld [vmem:[%s2618 + $0x48] sm:$0xff]
    %v4815 = vld [vmem:[%s2618 + $0x50] sm:$0xff]
    %v4816 = vld [vmem:[%s2618 + $0x58] sm:$0xff]
    %v4817 = vld [vmem:[%s2618 + $0x60] sm:$0xff]
    %v4818 = vld [vmem:[%s2618 + $0x68] sm:$0xff]
    %v4819 = vld [vmem:[%s2618 + $0x70] sm:$0xff]
    %v4820 = vld [vmem:[%s2618 + $0x78] sm:$0xff]
    %v4821 = vld [vmem:[%s2618 + $0x80] sm:$0xff]
    %v4822 = vld [vmem:[%s2618 + $0x88] sm:$0xff]
    %v4823 = vld [vmem:[%s2618 + $0x90] sm:$0xff]
    %v4824 = vld [vmem:[%s2618 + $0x98] sm:$0xff]
    %v4825 = vld [vmem:[%s2618 + $0xa0] sm:$0xff]
    %v4826 = vld [vmem:[%s2618 + $0xa8] sm:$0xff]
    %v4827 = vld [vmem:[%s2618 + $0xb0] sm:$0xff]
    %v4828 = vld [vmem:[%s2618 + $0xb8] sm:$0xff]
    %v4829 = vld [vmem:[%s2618 + $0xc0] sm:$0xff]
    %v4830 = vld [vmem:[%s2618 + $0xc8] sm:$0xff]
    %v4831 = vld [vmem:[%s2618 + $0xd0] sm:$0xff]
    %v4832 = vld [vmem:[%s2618 + $0xd8] sm:$0xff]
    %v4833 = vld [vmem:[%s2618 + $0xe0] sm:$0xff]
    %v4834 = vld [vmem:[%s2618 + $0xe8] sm:$0xff]
    %v4835 = vld [vmem:[%s2618 + $0xf0] sm:$0xff]
    %v4836 = vld [vmem:[%s2618 + $0xf8] sm:$0xff]
    %v4837 = vld [vmem:[%s2618 + $0x100] sm:$0xff]
    %v4838 = vld [vmem:[%s2618 + $0x108] sm:$0xff]
    %v4839 = vld [vmem:[%s2618 + $0x110] sm:$0xff]
    %v4840 = vld [vmem:[%s2618 + $0x118] sm:$0xff]
    %v4841 = vld [vmem:[%s2618 + $0x120] sm:$0xff]
    %v4842 = vld [vmem:[%s2618 + $0x128] sm:$0xff]
    %v4843 = vld [vmem:[%s2618 + $0x130] sm:$0xff]
    %v4844 = vld [vmem:[%s2618 + $0x138] sm:$0xff]
    %v4845 = vld [vmem:[%s2618 + $0x140] sm:$0xff]
    %v4846 = vld [vmem:[%s2618 + $0x148] sm:$0xff]
    %v4847 = vld [vmem:[%s2618 + $0x150] sm:$0xff]
    %v4848 = vld [vmem:[%s2618 + $0x158] sm:$0xff]
    %v4849 = vld [vmem:[%s2618 + $0x160] sm:$0xff]
    %v4850 = vld [vmem:[%s2618 + $0x168] sm:$0xff]
    %v4851 = vld [vmem:[%s2618 + $0x170] sm:$0xff]
    %v4852 = vld [vmem:[%s2618 + $0x178] sm:$0xff]
    %v4853 = vld [vmem:[%s2618 + $0x180] sm:$0xff]
    %v4854 = vld [vmem:[%s2618 + $0x188] sm:$0xff]
    %v4855 = vld [vmem:[%s2618 + $0x190] sm:$0xff]
    %v4856 = vld [vmem:[%s2618 + $0x198] sm:$0xff]
    %v4857 = vld [vmem:[%s2618 + $0x1a0] sm:$0xff]
    %v4858 = vld [vmem:[%s2618 + $0x1a8] sm:$0xff]
    %v4859 = vld [vmem:[%s2618 + $0x1b0] sm:$0xff]
    %v4860 = vld [vmem:[%s2618 + $0x1b8] sm:$0xff]
    %v4861 = vld [vmem:[%s2618 + $0x1c0] sm:$0xff]
    %v4862 = vld [vmem:[%s2618 + $0x1c8] sm:$0xff]
    %v4863 = vld [vmem:[%s2618 + $0x1d0] sm:$0xff]
    %v4864 = vld [vmem:[%s2618 + $0x1d8] sm:$0xff]
    %v4865 = vld [vmem:[%s2618 + $0x1e0] sm:$0xff]
    %v4866 = vld [vmem:[%s2618 + $0x1e8] sm:$0xff]
    %v4867 = vld [vmem:[%s2618 + $0x1f0] sm:$0xff]
    %v4868 = vld [vmem:[%s2618 + $0x1f8] sm:$0xff]
    %v4869 = vld [vmem:[%s2618 + $0x200] sm:$0xff]
    %v4870 = vld [vmem:[%s2618 + $0x208] sm:$0xff]
    %v4871 = vld [vmem:[%s2618 + $0x210] sm:$0xff]
    %v4872 = vld [vmem:[%s2618 + $0x218] sm:$0xff]
    %v4873 = vld [vmem:[%s2618 + $0x220] sm:$0xff]
    %v4874 = vld [vmem:[%s2618 + $0x228] sm:$0xff]
    %v4875 = vld [vmem:[%s2618 + $0x230] sm:$0xff]
    %v4876 = vld [vmem:[%s2618 + $0x238] sm:$0xff]
    %v4877 = vld [vmem:[%s2618 + $0x240] sm:$0xff]
    %v4878 = vld [vmem:[%s2618 + $0x248] sm:$0xff]
    %v4879 = vld [vmem:[%s2618 + $0x250] sm:$0xff]
    %v4880 = vld [vmem:[%s2618 + $0x258] sm:$0xff]
    %v4881 = vld [vmem:[%s2618 + $0x260] sm:$0xff]
    %v4882 = vld [vmem:[%s2618 + $0x268] sm:$0xff]
    %v4883 = vld [vmem:[%s2618 + $0x270] sm:$0xff]
    %v4884 = vld [vmem:[%s2618 + $0x278] sm:$0xff]
    %v4885 = vld [vmem:[%s2618 + $0x280] sm:$0xff]
    %v4886 = vld [vmem:[%s2618 + $0x288] sm:$0xff]
    %v4887 = vld [vmem:[%s2618 + $0x290] sm:$0xff]
    %v4888 = vld [vmem:[%s2618 + $0x298] sm:$0xff]
    %v4889 = vld [vmem:[%s2618 + $0x2a0] sm:$0xff]
    %v4890 = vld [vmem:[%s2618 + $0x2a8] sm:$0xff]
    %v4891 = vld [vmem:[%s2618 + $0x2b0] sm:$0xff]
    %v4892 = vld [vmem:[%s2618 + $0x2b8] sm:$0xff]
    %v4893 = vld [vmem:[%s2618 + $0x2c0] sm:$0xff]
    %v4894 = vld [vmem:[%s2618 + $0x2c8] sm:$0xff]
    %v4895 = vld [vmem:[%s2618 + $0x2d0] sm:$0xff]
    %v4896 = vld [vmem:[%s2618 + $0x2d8] sm:$0xff]
    %v4897 = vld [vmem:[%s2618 + $0x2e0] sm:$0xff]
    %v4898 = vld [vmem:[%s2618 + $0x2e8] sm:$0xff]
    %v4899 = vld [vmem:[%s2618 + $0x2f0] sm:$0xff]
    %v4900 = vld [vmem:[%s2618 + $0x2f8] sm:$0xff]
    %v4901 = vld [vmem:[%s2618 + $0x300] sm:$0xff]
    %v4902 = vld [vmem:[%s2618 + $0x308] sm:$0xff]
    %v4903 = vld [vmem:[%s2618 + $0x310] sm:$0xff]
    %v4904 = vld [vmem:[%s2618 + $0x318] sm:$0xff]
    %v4905 = vld [vmem:[%s2618 + $0x320] sm:$0xff]
    %v4906 = vld [vmem:[%s2618 + $0x328] sm:$0xff]
    %v4907 = vld [vmem:[%s2618 + $0x330] sm:$0xff]
    %v4908 = vld [vmem:[%s2618 + $0x338] sm:$0xff]
    %v4909 = vld [vmem:[%s2618 + $0x340] sm:$0xff]
    %v4910 = vld [vmem:[%s2618 + $0x348] sm:$0xff]
    %v4911 = vld [vmem:[%s2618 + $0x350] sm:$0xff]
    %v4912 = vld [vmem:[%s2618 + $0x358] sm:$0xff]
    %v4913 = vld [vmem:[%s2618 + $0x360] sm:$0xff]
    %v4914 = vld [vmem:[%s2618 + $0x368] sm:$0xff]
    %v4915 = vld [vmem:[%s2618 + $0x370] sm:$0xff]
    %v4916 = vld [vmem:[%s2618 + $0x378] sm:$0xff]
    %v4917 = vld [vmem:[%s2618 + $0x380] sm:$0xff]
    %v4918 = vld [vmem:[%s2618 + $0x388] sm:$0xff]
    %v4919 = vld [vmem:[%s2618 + $0x390] sm:$0xff]
    %v4920 = vld [vmem:[%s2618 + $0x398] sm:$0xff]
    %v4921 = vld [vmem:[%s2618 + $0x3a0] sm:$0xff]
    %v4922 = vld [vmem:[%s2618 + $0x3a8] sm:$0xff]
    %v4923 = vld [vmem:[%s2618 + $0x3b0] sm:$0xff]
    %v4924 = vld [vmem:[%s2618 + $0x3b8] sm:$0xff]
    %v4925 = vld [vmem:[%s2618 + $0x3c0] sm:$0xff]
    %v4926 = vld [vmem:[%s2618 + $0x3c8] sm:$0xff]
    %v4927 = vld [vmem:[%s2618 + $0x3d0] sm:$0xff]
    %v4928 = vld [vmem:[%s2618 + $0x3d8] sm:$0xff]
    %v4929 = vld [vmem:[%s2618 + $0x3e0] sm:$0xff]
    %v4930 = vld [vmem:[%s2618 + $0x3e8] sm:$0xff]
    %v4931 = vld [vmem:[%s2618 + $0x3f0] sm:$0xff]
    %v4932 = vld [vmem:[%s2618 + $0x3f8] sm:$0xff]
    %v4933 = vunpack.c.l.s8.bf16 %v4805
    %v4934 = vunpack.c.l.s8.bf16 %v4806
    %v4935 = vunpack.c.l.s8.bf16 %v4807
    %v4936 = vunpack.c.l.s8.bf16 %v4808
    %v4937 = vunpack.c.l.s8.bf16 %v4809
    %v4938 = vunpack.c.l.s8.bf16 %v4810
    %v4939 = vunpack.c.l.s8.bf16 %v4811
    %v4940 = vunpack.c.l.s8.bf16 %v4812
    %v4941 = vunpack.c.h.s8.bf16 %v4805
    %v4942 = vunpack.c.h.s8.bf16 %v4806
    %v4943 = vunpack.c.h.s8.bf16 %v4807
    %v4944 = vunpack.c.h.s8.bf16 %v4808
    %v4945 = vunpack.c.h.s8.bf16 %v4809
    %v4946 = vunpack.c.h.s8.bf16 %v4810
    %v4947 = vunpack.c.h.s8.bf16 %v4811
    %v4948 = vunpack.c.h.s8.bf16 %v4812
    %v4949 = vunpack.c.l.s8.bf16 %v4813
    %v4950 = vunpack.c.l.s8.bf16 %v4814
    %v4951 = vunpack.c.l.s8.bf16 %v4815
    %v4952 = vunpack.c.l.s8.bf16 %v4816
    %v4953 = vunpack.c.l.s8.bf16 %v4817
    %v4954 = vunpack.c.l.s8.bf16 %v4818
    %v4955 = vunpack.c.l.s8.bf16 %v4819
    %v4956 = vunpack.c.l.s8.bf16 %v4820
    %v4957 = vunpack.c.h.s8.bf16 %v4813
    %v4958 = vunpack.c.h.s8.bf16 %v4814
    %v4959 = vunpack.c.h.s8.bf16 %v4815
    %v4960 = vunpack.c.h.s8.bf16 %v4816
    %v4961 = vunpack.c.h.s8.bf16 %v4817
    %v4962 = vunpack.c.h.s8.bf16 %v4818
    %v4963 = vunpack.c.h.s8.bf16 %v4819
    %v4964 = vunpack.c.h.s8.bf16 %v4820
    %v4965 = vunpack.c.l.s8.bf16 %v4821
    %v4966 = vunpack.c.l.s8.bf16 %v4822
    %v4967 = vunpack.c.l.s8.bf16 %v4823
    %v4968 = vunpack.c.l.s8.bf16 %v4824
    %v4969 = vunpack.c.l.s8.bf16 %v4825
    %v4970 = vunpack.c.l.s8.bf16 %v4826
    %v4971 = vunpack.c.l.s8.bf16 %v4827
    %v4972 = vunpack.c.l.s8.bf16 %v4828
    %v4973 = vunpack.c.h.s8.bf16 %v4821
    %v4974 = vunpack.c.h.s8.bf16 %v4822
    %v4975 = vunpack.c.h.s8.bf16 %v4823
    %v4976 = vunpack.c.h.s8.bf16 %v4824
    %v4977 = vunpack.c.h.s8.bf16 %v4825
    %v4978 = vunpack.c.h.s8.bf16 %v4826
    %v4979 = vunpack.c.h.s8.bf16 %v4827
    %v4980 = vunpack.c.h.s8.bf16 %v4828
    %v4981 = vunpack.c.l.s8.bf16 %v4829
    %v4982 = vunpack.c.l.s8.bf16 %v4830
    %v4983 = vunpack.c.l.s8.bf16 %v4831
    %v4984 = vunpack.c.l.s8.bf16 %v4832
    %v4985 = vunpack.c.l.s8.bf16 %v4833
    %v4986 = vunpack.c.l.s8.bf16 %v4834
    %v4987 = vunpack.c.l.s8.bf16 %v4835
    %v4988 = vunpack.c.l.s8.bf16 %v4836
    %v4989 = vunpack.c.h.s8.bf16 %v4829
    %v4990 = vunpack.c.h.s8.bf16 %v4830
    %v4991 = vunpack.c.h.s8.bf16 %v4831
    %v4992 = vunpack.c.h.s8.bf16 %v4832
    %v4993 = vunpack.c.h.s8.bf16 %v4833
    %v4994 = vunpack.c.h.s8.bf16 %v4834
    %v4995 = vunpack.c.h.s8.bf16 %v4835
    %v4996 = vunpack.c.h.s8.bf16 %v4836
    %v4997 = vunpack.c.l.s8.bf16 %v4837
    %v4998 = vunpack.c.l.s8.bf16 %v4838
    %v4999 = vunpack.c.l.s8.bf16 %v4839
    %v5000 = vunpack.c.l.s8.bf16 %v4840
    %v5001 = vunpack.c.l.s8.bf16 %v4841
    %v5002 = vunpack.c.l.s8.bf16 %v4842
    %v5003 = vunpack.c.l.s8.bf16 %v4843
    %v5004 = vunpack.c.l.s8.bf16 %v4844
    %v5005 = vunpack.c.h.s8.bf16 %v4837
    %v5006 = vunpack.c.h.s8.bf16 %v4838
    %v5007 = vunpack.c.h.s8.bf16 %v4839
    %v5008 = vunpack.c.h.s8.bf16 %v4840
    %v5009 = vunpack.c.h.s8.bf16 %v4841
    %v5010 = vunpack.c.h.s8.bf16 %v4842
    %v5011 = vunpack.c.h.s8.bf16 %v4843
    %v5012 = vunpack.c.h.s8.bf16 %v4844
    %v5013 = vunpack.c.l.s8.bf16 %v4845
    %v5014 = vunpack.c.l.s8.bf16 %v4846
    %v5015 = vunpack.c.l.s8.bf16 %v4847
    %v5016 = vunpack.c.l.s8.bf16 %v4848
    %v5017 = vunpack.c.l.s8.bf16 %v4849
    %v5018 = vunpack.c.l.s8.bf16 %v4850
    %v5019 = vunpack.c.l.s8.bf16 %v4851
    %v5020 = vunpack.c.l.s8.bf16 %v4852
    %v5021 = vunpack.c.h.s8.bf16 %v4845
    %v5022 = vunpack.c.h.s8.bf16 %v4846
    %v5023 = vunpack.c.h.s8.bf16 %v4847
    %v5024 = vunpack.c.h.s8.bf16 %v4848
    %v5025 = vunpack.c.h.s8.bf16 %v4849
    %v5026 = vunpack.c.h.s8.bf16 %v4850
    %v5027 = vunpack.c.h.s8.bf16 %v4851
    %v5028 = vunpack.c.h.s8.bf16 %v4852
    %v5029 = vunpack.c.l.s8.bf16 %v4853
    %v5030 = vunpack.c.l.s8.bf16 %v4854
    %v5031 = vunpack.c.l.s8.bf16 %v4855
    %v5032 = vunpack.c.l.s8.bf16 %v4856
    %v5033 = vunpack.c.l.s8.bf16 %v4857
    %v5034 = vunpack.c.l.s8.bf16 %v4858
    %v5035 = vunpack.c.l.s8.bf16 %v4859
    %v5036 = vunpack.c.l.s8.bf16 %v4860
    %v5037 = vunpack.c.h.s8.bf16 %v4853
    %v5038 = vunpack.c.h.s8.bf16 %v4854
    %v5039 = vunpack.c.h.s8.bf16 %v4855
    %v5040 = vunpack.c.h.s8.bf16 %v4856
    %v5041 = vunpack.c.h.s8.bf16 %v4857
    %v5042 = vunpack.c.h.s8.bf16 %v4858
    %v5043 = vunpack.c.h.s8.bf16 %v4859
    %v5044 = vunpack.c.h.s8.bf16 %v4860
    %v5045 = vunpack.c.l.s8.bf16 %v4861
    %v5046 = vunpack.c.l.s8.bf16 %v4862
    %v5047 = vunpack.c.l.s8.bf16 %v4863
    %v5048 = vunpack.c.l.s8.bf16 %v4864
    %v5049 = vunpack.c.l.s8.bf16 %v4865
    %v5050 = vunpack.c.l.s8.bf16 %v4866
    %v5051 = vunpack.c.l.s8.bf16 %v4867
    %v5052 = vunpack.c.l.s8.bf16 %v4868
    %v5053 = vunpack.c.h.s8.bf16 %v4861
    %v5054 = vunpack.c.h.s8.bf16 %v4862
    %v5055 = vunpack.c.h.s8.bf16 %v4863
    %v5056 = vunpack.c.h.s8.bf16 %v4864
    %v5057 = vunpack.c.h.s8.bf16 %v4865
    %v5058 = vunpack.c.h.s8.bf16 %v4866
    %v5059 = vunpack.c.h.s8.bf16 %v4867
    %v5060 = vunpack.c.h.s8.bf16 %v4868
    %v5061 = vunpack.c.l.s8.bf16 %v4869
    %v5062 = vunpack.c.l.s8.bf16 %v4870
    %v5063 = vunpack.c.l.s8.bf16 %v4871
    %v5064 = vunpack.c.l.s8.bf16 %v4872
    %v5065 = vunpack.c.l.s8.bf16 %v4873
    %v5066 = vunpack.c.l.s8.bf16 %v4874
    %v5067 = vunpack.c.l.s8.bf16 %v4875
    %v5068 = vunpack.c.l.s8.bf16 %v4876
    %v5069 = vunpack.c.h.s8.bf16 %v4869
    %v5070 = vunpack.c.h.s8.bf16 %v4870
    %v5071 = vunpack.c.h.s8.bf16 %v4871
    %v5072 = vunpack.c.h.s8.bf16 %v4872
    %v5073 = vunpack.c.h.s8.bf16 %v4873
    %v5074 = vunpack.c.h.s8.bf16 %v4874
    %v5075 = vunpack.c.h.s8.bf16 %v4875
    %v5076 = vunpack.c.h.s8.bf16 %v4876
    %v5077 = vunpack.c.l.s8.bf16 %v4877
    %v5078 = vunpack.c.l.s8.bf16 %v4878
    %v5079 = vunpack.c.l.s8.bf16 %v4879
    %v5080 = vunpack.c.l.s8.bf16 %v4880
    %v5081 = vunpack.c.l.s8.bf16 %v4881
    %v5082 = vunpack.c.l.s8.bf16 %v4882
    %v5083 = vunpack.c.l.s8.bf16 %v4883
    %v5084 = vunpack.c.l.s8.bf16 %v4884
    %v5085 = vunpack.c.h.s8.bf16 %v4877
    %v5086 = vunpack.c.h.s8.bf16 %v4878
    %v5087 = vunpack.c.h.s8.bf16 %v4879
    %v5088 = vunpack.c.h.s8.bf16 %v4880
    %v5089 = vunpack.c.h.s8.bf16 %v4881
    %v5090 = vunpack.c.h.s8.bf16 %v4882
    %v5091 = vunpack.c.h.s8.bf16 %v4883
    %v5092 = vunpack.c.h.s8.bf16 %v4884
    %v5093 = vunpack.c.l.s8.bf16 %v4885
    %v5094 = vunpack.c.l.s8.bf16 %v4886
    %v5095 = vunpack.c.l.s8.bf16 %v4887
    %v5096 = vunpack.c.l.s8.bf16 %v4888
    %v5097 = vunpack.c.l.s8.bf16 %v4889
    %v5098 = vunpack.c.l.s8.bf16 %v4890
    %v5099 = vunpack.c.l.s8.bf16 %v4891
    %v5100 = vunpack.c.l.s8.bf16 %v4892
    %v5101 = vunpack.c.h.s8.bf16 %v4885
    %v5102 = vunpack.c.h.s8.bf16 %v4886
    %v5103 = vunpack.c.h.s8.bf16 %v4887
    %v5104 = vunpack.c.h.s8.bf16 %v4888
    %v5105 = vunpack.c.h.s8.bf16 %v4889
    %v5106 = vunpack.c.h.s8.bf16 %v4890
    %v5107 = vunpack.c.h.s8.bf16 %v4891
    %v5108 = vunpack.c.h.s8.bf16 %v4892
    %v5109 = vunpack.c.l.s8.bf16 %v4893
    %v5110 = vunpack.c.l.s8.bf16 %v4894
    %v5111 = vunpack.c.l.s8.bf16 %v4895
    %v5112 = vunpack.c.l.s8.bf16 %v4896
    %v5113 = vunpack.c.l.s8.bf16 %v4897
    %v5114 = vunpack.c.l.s8.bf16 %v4898
    %v5115 = vunpack.c.l.s8.bf16 %v4899
    %v5116 = vunpack.c.l.s8.bf16 %v4900
    %v5117 = vunpack.c.h.s8.bf16 %v4893
    %v5118 = vunpack.c.h.s8.bf16 %v4894
    %v5119 = vunpack.c.h.s8.bf16 %v4895
    %v5120 = vunpack.c.h.s8.bf16 %v4896
    %v5121 = vunpack.c.h.s8.bf16 %v4897
    %v5122 = vunpack.c.h.s8.bf16 %v4898
    %v5123 = vunpack.c.h.s8.bf16 %v4899
    %v5124 = vunpack.c.h.s8.bf16 %v4900
    %v5125 = vunpack.c.l.s8.bf16 %v4901
    %v5126 = vunpack.c.l.s8.bf16 %v4902
    %v5127 = vunpack.c.l.s8.bf16 %v4903
    %v5128 = vunpack.c.l.s8.bf16 %v4904
    %v5129 = vunpack.c.l.s8.bf16 %v4905
    %v5130 = vunpack.c.l.s8.bf16 %v4906
    %v5131 = vunpack.c.l.s8.bf16 %v4907
    %v5132 = vunpack.c.l.s8.bf16 %v4908
    %v5133 = vunpack.c.h.s8.bf16 %v4901
    %v5134 = vunpack.c.h.s8.bf16 %v4902
    %v5135 = vunpack.c.h.s8.bf16 %v4903
    %v5136 = vunpack.c.h.s8.bf16 %v4904
    %v5137 = vunpack.c.h.s8.bf16 %v4905
    %v5138 = vunpack.c.h.s8.bf16 %v4906
    %v5139 = vunpack.c.h.s8.bf16 %v4907
    %v5140 = vunpack.c.h.s8.bf16 %v4908
    %v5141 = vunpack.c.l.s8.bf16 %v4909
    %v5142 = vunpack.c.l.s8.bf16 %v4910
    %v5143 = vunpack.c.l.s8.bf16 %v4911
    %v5144 = vunpack.c.l.s8.bf16 %v4912
    %v5145 = vunpack.c.l.s8.bf16 %v4913
    %v5146 = vunpack.c.l.s8.bf16 %v4914
    %v5147 = vunpack.c.l.s8.bf16 %v4915
    %v5148 = vunpack.c.l.s8.bf16 %v4916
    %v5149 = vunpack.c.h.s8.bf16 %v4909
    %v5150 = vunpack.c.h.s8.bf16 %v4910
    %v5151 = vunpack.c.h.s8.bf16 %v4911
    %v5152 = vunpack.c.h.s8.bf16 %v4912
    %v5153 = vunpack.c.h.s8.bf16 %v4913
    %v5154 = vunpack.c.h.s8.bf16 %v4914
    %v5155 = vunpack.c.h.s8.bf16 %v4915
    %v5156 = vunpack.c.h.s8.bf16 %v4916
    %v5157 = vunpack.c.l.s8.bf16 %v4917
    %v5158 = vunpack.c.l.s8.bf16 %v4918
    %v5159 = vunpack.c.l.s8.bf16 %v4919
    %v5160 = vunpack.c.l.s8.bf16 %v4920
    %v5161 = vunpack.c.l.s8.bf16 %v4921
    %v5162 = vunpack.c.l.s8.bf16 %v4922
    %v5163 = vunpack.c.l.s8.bf16 %v4923
    %v5164 = vunpack.c.l.s8.bf16 %v4924
    %v5165 = vunpack.c.h.s8.bf16 %v4917
    %v5166 = vunpack.c.h.s8.bf16 %v4918
    %v5167 = vunpack.c.h.s8.bf16 %v4919
    %v5168 = vunpack.c.h.s8.bf16 %v4920
    %v5169 = vunpack.c.h.s8.bf16 %v4921
    %v5170 = vunpack.c.h.s8.bf16 %v4922
    %v5171 = vunpack.c.h.s8.bf16 %v4923
    %v5172 = vunpack.c.h.s8.bf16 %v4924
    %v5173 = vunpack.c.l.s8.bf16 %v4925
    %v5174 = vunpack.c.l.s8.bf16 %v4926
    %v5175 = vunpack.c.l.s8.bf16 %v4927
    %v5176 = vunpack.c.l.s8.bf16 %v4928
    %v5177 = vunpack.c.l.s8.bf16 %v4929
    %v5178 = vunpack.c.l.s8.bf16 %v4930
    %v5179 = vunpack.c.l.s8.bf16 %v4931
    %v5180 = vunpack.c.l.s8.bf16 %v4932
    %v5181 = vunpack.c.h.s8.bf16 %v4925
    %v5182 = vunpack.c.h.s8.bf16 %v4926
    %v5183 = vunpack.c.h.s8.bf16 %v4927
    %v5184 = vunpack.c.h.s8.bf16 %v4928
    %v5185 = vunpack.c.h.s8.bf16 %v4929
    %v5186 = vunpack.c.h.s8.bf16 %v4930
    %v5187 = vunpack.c.h.s8.bf16 %v4931
    %v5188 = vunpack.c.h.s8.bf16 %v4932
    %5189 = vmatprep.subr.bf16.mxu0 %v4934
    %5190 = vmatpush1.bf16.msra.mxu0 %v4933
    %5191 = vmatprep.subr.bf16.mxu0 %v4942
    %5192 = vmatpush1.bf16.msra.mxu0 %v4941
    %5193 = vmatprep.subr.bf16.mxu0 %v4950
    %5194 = vmatpush1.bf16.msra.mxu0 %v4949
    %5195 = vmatprep.subr.bf16.mxu0 %v4958
    %5196 = vmatpush1.bf16.msra.mxu0 %v4957
    %5197 = vmatprep.subr.bf16.mxu0 %v4966
    %5198 = vmatpush1.bf16.msra.mxu0 %v4965
    %5199 = vmatprep.subr.bf16.mxu0 %v4974
    %5200 = vmatpush1.bf16.msra.mxu0 %v4973
    %5201 = vmatprep.subr.bf16.mxu0 %v4982
    %5202 = vmatpush1.bf16.msra.mxu0 %v4981
    %5203 = vmatprep.subr.bf16.mxu0 %v4990
    %5204 = vmatpush1.bf16.msra.mxu0 %v4989
    %5205 = vmatprep.subr.bf16.mxu0 %v4998
    %5206 = vmatpush1.bf16.msra.mxu0 %v4997
    %5207 = vmatprep.subr.bf16.mxu0 %v5006
    %5208 = vmatpush1.bf16.msra.mxu0 %v5005
    %5209 = vmatprep.subr.bf16.mxu0 %v5014
    %5210 = vmatpush1.bf16.msra.mxu0 %v5013
    %5211 = vmatprep.subr.bf16.mxu0 %v5022
    %5212 = vmatpush1.bf16.msra.mxu0 %v5021
    %5213 = vmatprep.subr.bf16.mxu0 %v5030
    %5214 = vmatpush1.bf16.msra.mxu0 %v5029
    %5215 = vmatprep.subr.bf16.mxu0 %v5038
    %5216 = vmatpush1.bf16.msra.mxu0 %v5037
    %5217 = vmatprep.subr.bf16.mxu0 %v5046
    %5218 = vmatpush1.bf16.msra.mxu0 %v5045
    %5219 = vmatprep.subr.bf16.mxu0 %v5054
    %5220 = vmatpush1.bf16.msra.mxu0 %v5053
    %5221 = vmatprep.mubr.bf16.mxu0 %v2610
    %5222 = vmatmul.mubr.bf16.gmra.mrb[0].mxu0 %v2609
    %v5223 = vpop.f32.mrb[0].mxu0
    %v5224 = vadd.f32 0.0, %v5223
    %v5225 = vpop.f32.mrb[0].mxu0
    %v5226 = vadd.f32 0.0, %v5225
    %v5227 = vpop.f32.mrb[0].mxu0
    %v5228 = vpop.f32.mrb[0].mxu0
    %5229 = vdwg.mxu0
    %5230 = vmatprep.subr.bf16.mxu0 %v5062
    %5231 = vmatpush1.bf16.msra.mxu0 %v5061
    %5232 = vmatprep.subr.bf16.mxu0 %v5070
    %5233 = vmatpush1.bf16.msra.mxu0 %v5069
    %5234 = vmatprep.subr.bf16.mxu0 %v5078
    %5235 = vmatpush1.bf16.msra.mxu0 %v5077
    %5236 = vmatprep.subr.bf16.mxu0 %v5086
    %5237 = vmatpush1.bf16.msra.mxu0 %v5085
    %5238 = vmatprep.subr.bf16.mxu0 %v5094
    %5239 = vmatpush1.bf16.msra.mxu0 %v5093
    %5240 = vmatprep.subr.bf16.mxu0 %v5102
    %5241 = vmatpush1.bf16.msra.mxu0 %v5101
    %5242 = vmatprep.subr.bf16.mxu0 %v5110
    %5243 = vmatpush1.bf16.msra.mxu0 %v5109
    %5244 = vmatprep.subr.bf16.mxu0 %v5118
    %5245 = vmatpush1.bf16.msra.mxu0 %v5117
    %5246 = vmatprep.subr.bf16.mxu0 %v5126
    %5247 = vmatpush1.bf16.msra.mxu0 %v5125
    %5248 = vmatprep.subr.bf16.mxu0 %v5134
    %5249 = vmatpush1.bf16.msra.mxu0 %v5133
    %5250 = vmatprep.subr.bf16.mxu0 %v5142
    %5251 = vmatpush1.bf16.msra.mxu0 %v5141
    %5252 = vmatprep.subr.bf16.mxu0 %v5150
    %5253 = vmatpush1.bf16.msra.mxu0 %v5149
    %5254 = vmatprep.subr.bf16.mxu0 %v5158
    %5255 = vmatpush1.bf16.msra.mxu0 %v5157
    %5256 = vmatprep.subr.bf16.mxu0 %v5166
    %5257 = vmatpush1.bf16.msra.mxu0 %v5165
    %5258 = vmatprep.subr.bf16.mxu0 %v5174
    %5259 = vmatpush1.bf16.msra.mxu0 %v5173
    %5260 = vmatprep.subr.bf16.mxu0 %v5182
    %5261 = vmatpush1.bf16.msra.mxu0 %v5181
    %5262 = vmatprep.mubr.bf16.mxu0 %v2612
    %5263 = vmatmul.mubr.bf16.gmra.mrb[0].mxu0 %v2611
    %v5264 = vpop.f32.mrb[0].mxu0
    %v5265 = vadd.f32 %v5224, %v5264
    %v5266 = vpop.f32.mrb[0].mxu0
    %v5267 = vadd.f32 %v5226, %v5266
    %v5268 = vpop.f32.mrb[0].mxu0
    %v5269 = vpop.f32.mrb[0].mxu0
    %5270 = vdwg.mxu0
    %5271 = vmatprep.subr.bf16.mxu0 %v4936
    %5272 = vmatpush1.bf16.msra.mxu0 %v4935
    %5273 = vmatprep.subr.bf16.mxu0 %v4944
    %5274 = vmatpush1.bf16.msra.mxu0 %v4943
    %5275 = vmatprep.subr.bf16.mxu0 %v4952
    %5276 = vmatpush1.bf16.msra.mxu0 %v4951
    %5277 = vmatprep.subr.bf16.mxu0 %v4960
    %5278 = vmatpush1.bf16.msra.mxu0 %v4959
    %5279 = vmatprep.subr.bf16.mxu0 %v4968
    %5280 = vmatpush1.bf16.msra.mxu0 %v4967
    %5281 = vmatprep.subr.bf16.mxu0 %v4976
    %5282 = vmatpush1.bf16.msra.mxu0 %v4975
    %5283 = vmatprep.subr.bf16.mxu0 %v4984
    %5284 = vmatpush1.bf16.msra.mxu0 %v4983
    %5285 = vmatprep.subr.bf16.mxu0 %v4992
    %5286 = vmatpush1.bf16.msra.mxu0 %v4991
    %5287 = vmatprep.subr.bf16.mxu0 %v5000
    %5288 = vmatpush1.bf16.msra.mxu0 %v4999
    %5289 = vmatprep.subr.bf16.mxu0 %v5008
    %5290 = vmatpush1.bf16.msra.mxu0 %v5007
    %5291 = vmatprep.subr.bf16.mxu0 %v5016
    %5292 = vmatpush1.bf16.msra.mxu0 %v5015
    %5293 = vmatprep.subr.bf16.mxu0 %v5024
    %5294 = vmatpush1.bf16.msra.mxu0 %v5023
    %5295 = vmatprep.subr.bf16.mxu0 %v5032
    %5296 = vmatpush1.bf16.msra.mxu0 %v5031
    %5297 = vmatprep.subr.bf16.mxu0 %v5040
    %5298 = vmatpush1.bf16.msra.mxu0 %v5039
    %5299 = vmatprep.subr.bf16.mxu0 %v5048
    %5300 = vmatpush1.bf16.msra.mxu0 %v5047
    %5301 = vmatprep.subr.bf16.mxu0 %v5056
    %5302 = vmatpush1.bf16.msra.mxu0 %v5055
    %5303 = vmatprep.mubr.bf16.mxu0 %v2610
    %5304 = vmatmul.mubr.bf16.gmra.mrb[0].mxu0 %v2609
    %v5305 = vpop.f32.mrb[0].mxu0
    %v5306 = vadd.f32 0.0, %v5305
    %v5307 = vpop.f32.mrb[0].mxu0
    %v5308 = vadd.f32 0.0, %v5307
    %v5309 = vpop.f32.mrb[0].mxu0
    %v5310 = vpop.f32.mrb[0].mxu0
    %5311 = vdwg.mxu0
    %5312 = vmatprep.subr.bf16.mxu0 %v5064
    %5313 = vmatpush1.bf16.msra.mxu0 %v5063
    %5314 = vmatprep.subr.bf16.mxu0 %v5072
    %5315 = vmatpush1.bf16.msra.mxu0 %v5071
    %5316 = vmatprep.subr.bf16.mxu0 %v5080
    %5317 = vmatpush1.bf16.msra.mxu0 %v5079
    %5318 = vmatprep.subr.bf16.mxu0 %v5088
    %5319 = vmatpush1.bf16.msra.mxu0 %v5087
    %5320 = vmatprep.subr.bf16.mxu0 %v5096
    %5321 = vmatpush1.bf16.msra.mxu0 %v5095
    %5322 = vmatprep.subr.bf16.mxu0 %v5104
    %5323 = vmatpush1.bf16.msra.mxu0 %v5103
    %5324 = vmatprep.subr.bf16.mxu0 %v5112
    %5325 = vmatpush1.bf16.msra.mxu0 %v5111
    %5326 = vmatprep.subr.bf16.mxu0 %v5120
    %5327 = vmatpush1.bf16.msra.mxu0 %v5119
    %5328 = vmatprep.subr.bf16.mxu0 %v5128
    %5329 = vmatpush1.bf16.msra.mxu0 %v5127
    %5330 = vmatprep.subr.bf16.mxu0 %v5136
    %5331 = vmatpush1.bf16.msra.mxu0 %v5135
    %5332 = vmatprep.subr.bf16.mxu0 %v5144
    %5333 = vmatpush1.bf16.msra.mxu0 %v5143
    %5334 = vmatprep.subr.bf16.mxu0 %v5152
    %5335 = vmatpush1.bf16.msra.mxu0 %v5151
    %5336 = vmatprep.subr.bf16.mxu0 %v5160
    %5337 = vmatpush1.bf16.msra.mxu0 %v5159
    %5338 = vmatprep.subr.bf16.mxu0 %v5168
    %5339 = vmatpush1.bf16.msra.mxu0 %v5167
    %5340 = vmatprep.subr.bf16.mxu0 %v5176
    %5341 = vmatpush1.bf16.msra.mxu0 %v5175
    %5342 = vmatprep.subr.bf16.mxu0 %v5184
    %5343 = vmatpush1.bf16.msra.mxu0 %v5183
    %5344 = vmatprep.mubr.bf16.mxu0 %v2612
    %5345 = vmatmul.mubr.bf16.gmra.mrb[0].mxu0 %v2611
    %v5346 = vpop.f32.mrb[0].mxu0
    %v5347 = vadd.f32 %v5306, %v5346
    %v5348 = vpop.f32.mrb[0].mxu0
    %v5349 = vadd.f32 %v5308, %v5348
    %v5350 = vpop.f32.mrb[0].mxu0
    %v5351 = vpop.f32.mrb[0].mxu0
    %5352 = vdwg.mxu0
    %5353 = vmatprep.subr.bf16.mxu0 %v4938
    %5354 = vmatpush1.bf16.msra.mxu0 %v4937
    %5355 = vmatprep.subr.bf16.mxu0 %v4946
    %5356 = vmatpush1.bf16.msra.mxu0 %v4945
    %5357 = vmatprep.subr.bf16.mxu0 %v4954
    %5358 = vmatpush1.bf16.msra.mxu0 %v4953
    %5359 = vmatprep.subr.bf16.mxu0 %v4962
    %5360 = vmatpush1.bf16.msra.mxu0 %v4961
    %5361 = vmatprep.subr.bf16.mxu0 %v4970
    %5362 = vmatpush1.bf16.msra.mxu0 %v4969
    %5363 = vmatprep.subr.bf16.mxu0 %v4978
    %5364 = vmatpush1.bf16.msra.mxu0 %v4977
    %5365 = vmatprep.subr.bf16.mxu0 %v4986
    %5366 = vmatpush1.bf16.msra.mxu0 %v4985
    %5367 = vmatprep.subr.bf16.mxu0 %v4994
    %5368 = vmatpush1.bf16.msra.mxu0 %v4993
    %5369 = vmatprep.subr.bf16.mxu0 %v5002
    %5370 = vmatpush1.bf16.msra.mxu0 %v5001
    %5371 = vmatprep.subr.bf16.mxu0 %v5010
    %5372 = vmatpush1.bf16.msra.mxu0 %v5009
    %5373 = vmatprep.subr.bf16.mxu0 %v5018
    %5374 = vmatpush1.bf16.msra.mxu0 %v5017
    %5375 = vmatprep.subr.bf16.mxu0 %v5026
    %5376 = vmatpush1.bf16.msra.mxu0 %v5025
    %5377 = vmatprep.subr.bf16.mxu0 %v5034
    %5378 = vmatpush1.bf16.msra.mxu0 %v5033
    %5379 = vmatprep.subr.bf16.mxu0 %v5042
    %5380 = vmatpush1.bf16.msra.mxu0 %v5041
    %5381 = vmatprep.subr.bf16.mxu0 %v5050
    %5382 = vmatpush1.bf16.msra.mxu0 %v5049
    %5383 = vmatprep.subr.bf16.mxu0 %v5058
    %5384 = vmatpush1.bf16.msra.mxu0 %v5057
    %5385 = vmatprep.mubr.bf16.mxu0 %v2610
    %5386 = vmatmul.mubr.bf16.gmra.mrb[0].mxu0 %v2609
    %v5387 = vpop.f32.mrb[0].mxu0
    %v5388 = vadd.f32 0.0, %v5387
    %v5389 = vpop.f32.mrb[0].mxu0
    %v5390 = vadd.f32 0.0, %v5389
    %v5391 = vpop.f32.mrb[0].mxu0
    %v5392 = vpop.f32.mrb[0].mxu0
    %5393 = vdwg.mxu0
    %5394 = vmatprep.subr.bf16.mxu0 %v5066
    %5395 = vmatpush1.bf16.msra.mxu0 %v5065
    %5396 = vmatprep.subr.bf16.mxu0 %v5074
    %5397 = vmatpush1.bf16.msra.mxu0 %v5073
    %5398 = vmatprep.subr.bf16.mxu0 %v5082
    %5399 = vmatpush1.bf16.msra.mxu0 %v5081
    %5400 = vmatprep.subr.bf16.mxu0 %v5090
    %5401 = vmatpush1.bf16.msra.mxu0 %v5089
    %5402 = vmatprep.subr.bf16.mxu0 %v5098
    %5403 = vmatpush1.bf16.msra.mxu0 %v5097
    %5404 = vmatprep.subr.bf16.mxu0 %v5106
    %5405 = vmatpush1.bf16.msra.mxu0 %v5105
    %5406 = vmatprep.subr.bf16.mxu0 %v5114
    %5407 = vmatpush1.bf16.msra.mxu0 %v5113
    %5408 = vmatprep.subr.bf16.mxu0 %v5122
    %5409 = vmatpush1.bf16.msra.mxu0 %v5121
    %5410 = vmatprep.subr.bf16.mxu0 %v5130
    %5411 = vmatpush1.bf16.msra.mxu0 %v5129
    %5412 = vmatprep.subr.bf16.mxu0 %v5138
    %5413 = vmatpush1.bf16.msra.mxu0 %v5137
    %5414 = vmatprep.subr.bf16.mxu0 %v5146
    %5415 = vmatpush1.bf16.msra.mxu0 %v5145
    %5416 = vmatprep.subr.bf16.mxu0 %v5154
    %5417 = vmatpush1.bf16.msra.mxu0 %v5153
    %5418 = vmatprep.subr.bf16.mxu0 %v5162
    %5419 = vmatpush1.bf16.msra.mxu0 %v5161
    %5420 = vmatprep.subr.bf16.mxu0 %v5170
    %5421 = vmatpush1.bf16.msra.mxu0 %v5169
    %5422 = vmatprep.subr.bf16.mxu0 %v5178
    %5423 = vmatpush1.bf16.msra.mxu0 %v5177
    %5424 = vmatprep.subr.bf16.mxu0 %v5186
    %5425 = vmatpush1.bf16.msra.mxu0 %v5185
    %5426 = vmatprep.mubr.bf16.mxu0 %v2612
    %5427 = vmatmul.mubr.bf16.gmra.mrb[0].mxu0 %v2611
    %v5428 = vpop.f32.mrb[0].mxu0
    %v5429 = vadd.f32 %v5388, %v5428
    %v5430 = vpop.f32.mrb[0].mxu0
    %v5431 = vadd.f32 %v5390, %v5430
    %v5432 = vpop.f32.mrb[0].mxu0
    %v5433 = vpop.f32.mrb[0].mxu0
    %5434 = vdwg.mxu0
    %5435 = vmatprep.subr.bf16.mxu0 %v4940
    %5436 = vmatpush1.bf16.msra.mxu0 %v4939
    %5437 = vmatprep.subr.bf16.mxu0 %v4948
    %5438 = vmatpush1.bf16.msra.mxu0 %v4947
    %5439 = vmatprep.subr.bf16.mxu0 %v4956
    %5440 = vmatpush1.bf16.msra.mxu0 %v4955
    %5441 = vmatprep.subr.bf16.mxu0 %v4964
    %5442 = vmatpush1.bf16.msra.mxu0 %v4963
    %5443 = vmatprep.subr.bf16.mxu0 %v4972
    %5444 = vmatpush1.bf16.msra.mxu0 %v4971
    %5445 = vmatprep.subr.bf16.mxu0 %v4980
    %5446 = vmatpush1.bf16.msra.mxu0 %v4979
    %5447 = vmatprep.subr.bf16.mxu0 %v4988
    %5448 = vmatpush1.bf16.msra.mxu0 %v4987
    %5449 = vmatprep.subr.bf16.mxu0 %v4996
    %5450 = vmatpush1.bf16.msra.mxu0 %v4995
    %5451 = vmatprep.subr.bf16.mxu0 %v5004
    %5452 = vmatpush1.bf16.msra.mxu0 %v5003
    %5453 = vmatprep.subr.bf16.mxu0 %v5012
    %5454 = vmatpush1.bf16.msra.mxu0 %v5011
    %5455 = vmatprep.subr.bf16.mxu0 %v5020
    %5456 = vmatpush1.bf16.msra.mxu0 %v5019
    %5457 = vmatprep.subr.bf16.mxu0 %v5028
    %5458 = vmatpush1.bf16.msra.mxu0 %v5027
    %5459 = vmatprep.subr.bf16.mxu0 %v5036
    %5460 = vmatpush1.bf16.msra.mxu0 %v5035
    %5461 = vmatprep.subr.bf16.mxu0 %v5044
    %5462 = vmatpush1.bf16.msra.mxu0 %v5043
    %5463 = vmatprep.subr.bf16.mxu0 %v5052
    %5464 = vmatpush1.bf16.msra.mxu0 %v5051
    %5465 = vmatprep.subr.bf16.mxu0 %v5060
    %5466 = vmatpush1.bf16.msra.mxu0 %v5059
    %5467 = vmatprep.mubr.bf16.mxu0 %v2610
    %5468 = vmatmul.mubr.bf16.gmra.mrb[0].mxu0 %v2609
    %v5469 = vpop.f32.mrb[0].mxu0
    %v5470 = vadd.f32 0.0, %v5469
    %v5471 = vpop.f32.mrb[0].mxu0
    %v5472 = vadd.f32 0.0, %v5471
    %v5473 = vpop.f32.mrb[0].mxu0
    %v5474 = vpop.f32.mrb[0].mxu0
    %5475 = vdwg.mxu0
    %5476 = vmatprep.subr.bf16.mxu0 %v5068
    %5477 = vmatpush1.bf16.msra.mxu0 %v5067
    %5478 = vmatprep.subr.bf16.mxu0 %v5076
    %5479 = vmatpush1.bf16.msra.mxu0 %v5075
    %5480 = vmatprep.subr.bf16.mxu0 %v5084
    %5481 = vmatpush1.bf16.msra.mxu0 %v5083
    %5482 = vmatprep.subr.bf16.mxu0 %v5092
    %5483 = vmatpush1.bf16.msra.mxu0 %v5091
    %5484 = vmatprep.subr.bf16.mxu0 %v5100
    %5485 = vmatpush1.bf16.msra.mxu0 %v5099
    %5486 = vmatprep.subr.bf16.mxu0 %v5108
    %5487 = vmatpush1.bf16.msra.mxu0 %v5107
    %5488 = vmatprep.subr.bf16.mxu0 %v5116
    %5489 = vmatpush1.bf16.msra.mxu0 %v5115
    %5490 = vmatprep.subr.bf16.mxu0 %v5124
    %5491 = vmatpush1.bf16.msra.mxu0 %v5123
    %5492 = vmatprep.subr.bf16.mxu0 %v5132
    %5493 = vmatpush1.bf16.msra.mxu0 %v5131
    %5494 = vmatprep.subr.bf16.mxu0 %v5140
    %5495 = vmatpush1.bf16.msra.mxu0 %v5139
    %5496 = vmatprep.subr.bf16.mxu0 %v5148
    %5497 = vmatpush1.bf16.msra.mxu0 %v5147
    %5498 = vmatprep.subr.bf16.mxu0 %v5156
    %5499 = vmatpush1.bf16.msra.mxu0 %v5155
    %5500 = vmatprep.subr.bf16.mxu0 %v5164
    %5501 = vmatpush1.bf16.msra.mxu0 %v5163
    %5502 = vmatprep.subr.bf16.mxu0 %v5172
    %5503 = vmatpush1.bf16.msra.mxu0 %v5171
    %5504 = vmatprep.subr.bf16.mxu0 %v5180
    %5505 = vmatpush1.bf16.msra.mxu0 %v5179
    %5506 = vmatprep.subr.bf16.mxu0 %v5188
    %5507 = vmatpush1.bf16.msra.mxu0 %v5187
    %5508 = vmatprep.mubr.bf16.mxu0 %v2612
    %5509 = vmatmul.mubr.bf16.gmra.mrb[0].mxu0 %v2611
    %v5510 = vpop.f32.mrb[0].mxu0
    %v5511 = vadd.f32 %v5470, %v5510
    %v5512 = vpop.f32.mrb[0].mxu0
    %v5513 = vadd.f32 %v5472, %v5512
    %v5514 = vpop.f32.mrb[0].mxu0
    %v5515 = vpop.f32.mrb[0].mxu0
    %5516 = vdwg.mxu0
    %v5517 = vadd.f32 %v4795, %v5265
    %v5518 = vadd.f32 %v4796, %v5267
    %v5519 = vadd.f32 %v4797, %v5347
    %v5520 = vadd.f32 %v4798, %v5349
    %v5521 = vadd.f32 %v4799, %v5429
    %v5522 = vadd.f32 %v4800, %v5431
    %v5523 = vadd.f32 %v4801, %v5511
    %v5524 = vadd.f32 %v4802, %v5513
    %v5525 = vld [vmem:[#allocation10] sm:$0xff]
    %v5527 = vlaneseq
    %v5528 = vshrl.u32 %v5527, 7
    %v5529 = vsub.s32 0, %v5528
    %v5530 = vrot.slane %v5525, %v5529
    %v5531 = vlaneseq
    %v5532 = vshrl.u32 %v5531, 7
    %v5533 = vsub.s32 1, %v5532
    %v5534 = vrot.slane %v5525, %v5533
    %v5535 = vlaneseq
    %v5536 = vshrl.u32 %v5535, 7
    %v5537 = vsub.s32 2, %v5536
    %v5538 = vrot.slane %v5525, %v5537
    %v5539 = vlaneseq
    %v5540 = vshrl.u32 %v5539, 7
    %v5541 = vsub.s32 3, %v5540
    %v5542 = vrot.slane %v5525, %v5541
    %v5543 = vlaneseq
    %v5544 = vshrl.u32 %v5543, 7
    %v5545 = vsub.s32 4, %v5544
    %v5546 = vrot.slane %v5525, %v5545
    %v5547 = vlaneseq
    %v5548 = vshrl.u32 %v5547, 7
    %v5549 = vsub.s32 5, %v5548
    %v5550 = vrot.slane %v5525, %v5549
    %v5551 = vlaneseq
    %v5552 = vshrl.u32 %v5551, 7
    %v5553 = vsub.s32 6, %v5552
    %v5554 = vrot.slane %v5525, %v5553
    %v5555 = vlaneseq
    %v5556 = vshrl.u32 %v5555, 7
    %v5557 = vsub.s32 7, %v5556
    %v5558 = vrot.slane %v5525, %v5557
    %v5567 = vmul.f32 %v5517, %v5530
    %v5568 = vmul.f32 %v5518, %v5534
    %v5569 = vmul.f32 %v5519, %v5538
    %v5570 = vmul.f32 %v5520, %v5542
    %v5571 = vmul.f32 %v5521, %v5546
    %v5572 = vmul.f32 %v5522, %v5550
    %v5573 = vmul.f32 %v5523, %v5554
    %v5574 = vmul.f32 %v5524, %v5558
    %v5575 = vld [vmem:[#allocation11] sm:$0xff]
    %v5577 = vlaneseq
    %v5578 = vshrl.u32 %v5577, 7
    %v5579 = vsub.s32 0, %v5578
    %v5580 = vrot.slane %v5575, %v5579
    %v5581 = vlaneseq
    %v5582 = vshrl.u32 %v5581, 7
    %v5583 = vsub.s32 1, %v5582
    %v5584 = vrot.slane %v5575, %v5583
    %v5585 = vlaneseq
    %v5586 = vshrl.u32 %v5585, 7
    %v5587 = vsub.s32 2, %v5586
    %v5588 = vrot.slane %v5575, %v5587
    %v5589 = vlaneseq
    %v5590 = vshrl.u32 %v5589, 7
    %v5591 = vsub.s32 3, %v5590
    %v5592 = vrot.slane %v5575, %v5591
    %v5593 = vlaneseq
    %v5594 = vshrl.u32 %v5593, 7
    %v5595 = vsub.s32 4, %v5594
    %v5596 = vrot.slane %v5575, %v5595
    %v5597 = vlaneseq
    %v5598 = vshrl.u32 %v5597, 7
    %v5599 = vsub.s32 5, %v5598
    %v5600 = vrot.slane %v5575, %v5599
    %v5601 = vlaneseq
    %v5602 = vshrl.u32 %v5601, 7
    %v5603 = vsub.s32 6, %v5602
    %v5604 = vrot.slane %v5575, %v5603
    %v5605 = vlaneseq
    %v5606 = vshrl.u32 %v5605, 7
    %v5607 = vsub.s32 7, %v5606
    %v5608 = vrot.slane %v5575, %v5607
    %v5617 = vadd.f32 %v5567, %v5580
    %v5618 = vadd.f32 %v5568, %v5584
    %v5619 = vadd.f32 %v5569, %v5588
    %v5620 = vadd.f32 %v5570, %v5592
    %v5621 = vadd.f32 %v5571, %v5596
    %v5622 = vadd.f32 %v5572, %v5600
    %v5623 = vadd.f32 %v5573, %v5604
    %v5624 = vadd.f32 %v5574, %v5608
    %v5625 = vmax.f32 %v5617, 0.0
    %v5626 = vmax.f32 %v5618, 0.0
    %v5627 = vmax.f32 %v5619, 0.0
    %v5628 = vmax.f32 %v5620, 0.0
    %v5629 = vmax.f32 %v5621, 0.0
    %v5630 = vmax.f32 %v5622, 0.0
    %v5631 = vmax.f32 %v5623, 0.0
    %v5632 = vmax.f32 %v5624, 0.0
    %v5633 = vpack.c.bf16 %v5625, %v5625
    %v5634 = vpack.c.bf16 %v5626, %v5626
    %v5635 = vpack.c.bf16 %v5627, %v5627
    %v5636 = vpack.c.bf16 %v5628, %v5628
    %v5637 = vpack.c.bf16 %v5629, %v5629
    %v5638 = vpack.c.bf16 %v5630, %v5630
    %v5639 = vpack.c.bf16 %v5631, %v5631
    %v5640 = vpack.c.bf16 %v5632, %v5632
    %v5641 = vld [vmem:[#allocation13] sm:$0xff]
    %v5642 = vld [vmem:[#allocation13 + $0x8] sm:$0xff]
    %v5643 = vld [vmem:[#allocation13 + $0x10] sm:$0xff]
    %v5644 = vld [vmem:[#allocation13 + $0x18] sm:$0xff]
    %v5645 = vld [vmem:[#allocation13 + $0x20] sm:$0xff]
    %v5646 = vld [vmem:[#allocation13 + $0x28] sm:$0xff]
    %v5647 = vld [vmem:[#allocation13 + $0x30] sm:$0xff]
    %v5648 = vld [vmem:[#allocation13 + $0x38] sm:$0xff]
    %v5649 = vld [vmem:[#allocation13 + $0x40] sm:$0xff]
    %v5650 = vld [vmem:[#allocation13 + $0x48] sm:$0xff]
    %v5651 = vld [vmem:[#allocation13 + $0x50] sm:$0xff]
    %v5652 = vld [vmem:[#allocation13 + $0x58] sm:$0xff]
    %v5653 = vld [vmem:[#allocation13 + $0x60] sm:$0xff]
    %v5654 = vld [vmem:[#allocation13 + $0x68] sm:$0xff]
    %v5655 = vld [vmem:[#allocation13 + $0x70] sm:$0xff]
    %v5656 = vld [vmem:[#allocation13 + $0x78] sm:$0xff]
    %v5657 = vld [vmem:[#allocation13 + $0x80] sm:$0xff]
    %v5658 = vld [vmem:[#allocation13 + $0x88] sm:$0xff]
    %v5659 = vld [vmem:[#allocation13 + $0x90] sm:$0xff]
    %v5660 = vld [vmem:[#allocation13 + $0x98] sm:$0xff]
    %v5661 = vld [vmem:[#allocation13 + $0xa0] sm:$0xff]
    %v5662 = vld [vmem:[#allocation13 + $0xa8] sm:$0xff]
    %v5663 = vld [vmem:[#allocation13 + $0xb0] sm:$0xff]
    %v5664 = vld [vmem:[#allocation13 + $0xb8] sm:$0xff]
    %v5665 = vld [vmem:[#allocation13 + $0xc0] sm:$0xff]
    %v5666 = vld [vmem:[#allocation13 + $0xc8] sm:$0xff]
    %v5667 = vld [vmem:[#allocation13 + $0xd0] sm:$0xff]
    %v5668 = vld [vmem:[#allocation13 + $0xd8] sm:$0xff]
    %v5669 = vld [vmem:[#allocation13 + $0xe0] sm:$0xff]
    %v5670 = vld [vmem:[#allocation13 + $0xe8] sm:$0xff]
    %v5671 = vld [vmem:[#allocation13 + $0xf0] sm:$0xff]
    %v5672 = vld [vmem:[#allocation13 + $0xf8] sm:$0xff]
    %v5673 = vld [vmem:[#allocation13 + $0x100] sm:$0xff]
    %v5674 = vld [vmem:[#allocation13 + $0x108] sm:$0xff]
    %v5675 = vld [vmem:[#allocation13 + $0x110] sm:$0xff]
    %v5676 = vld [vmem:[#allocation13 + $0x118] sm:$0xff]
    %v5677 = vld [vmem:[#allocation13 + $0x120] sm:$0xff]
    %v5678 = vld [vmem:[#allocation13 + $0x128] sm:$0xff]
    %v5679 = vld [vmem:[#allocation13 + $0x130] sm:$0xff]
    %v5680 = vld [vmem:[#allocation13 + $0x138] sm:$0xff]
    %v5681 = vld [vmem:[#allocation13 + $0x140] sm:$0xff]
    %v5682 = vld [vmem:[#allocation13 + $0x148] sm:$0xff]
    %v5683 = vld [vmem:[#allocation13 + $0x150] sm:$0xff]
    %v5684 = vld [vmem:[#allocation13 + $0x158] sm:$0xff]
    %v5685 = vld [vmem:[#allocation13 + $0x160] sm:$0xff]
    %v5686 = vld [vmem:[#allocation13 + $0x168] sm:$0xff]
    %v5687 = vld [vmem:[#allocation13 + $0x170] sm:$0xff]
    %v5688 = vld [vmem:[#allocation13 + $0x178] sm:$0xff]
    %v5689 = vld [vmem:[#allocation13 + $0x180] sm:$0xff]
    %v5690 = vld [vmem:[#allocation13 + $0x188] sm:$0xff]
    %v5691 = vld [vmem:[#allocation13 + $0x190] sm:$0xff]
    %v5692 = vld [vmem:[#allocation13 + $0x198] sm:$0xff]
    %v5693 = vld [vmem:[#allocation13 + $0x1a0] sm:$0xff]
    %v5694 = vld [vmem:[#allocation13 + $0x1a8] sm:$0xff]
    %v5695 = vld [vmem:[#allocation13 + $0x1b0] sm:$0xff]
    %v5696 = vld [vmem:[#allocation13 + $0x1b8] sm:$0xff]
    %v5697 = vld [vmem:[#allocation13 + $0x1c0] sm:$0xff]
    %v5698 = vld [vmem:[#allocation13 + $0x1c8] sm:$0xff]
    %v5699 = vld [vmem:[#allocation13 + $0x1d0] sm:$0xff]
    %v5700 = vld [vmem:[#allocation13 + $0x1d8] sm:$0xff]
    %v5701 = vld [vmem:[#allocation13 + $0x1e0] sm:$0xff]
    %v5702 = vld [vmem:[#allocation13 + $0x1e8] sm:$0xff]
    %v5703 = vld [vmem:[#allocation13 + $0x1f0] sm:$0xff]
    %v5704 = vld [vmem:[#allocation13 + $0x1f8] sm:$0xff]
    %v5705 = vunpack.c.l.s8.bf16 %v5641
    %v5706 = vunpack.c.l.s8.bf16 %v5642
    %v5707 = vunpack.c.h.s8.bf16 %v5641
    %v5708 = vunpack.c.h.s8.bf16 %v5642
    %v5709 = vunpack.c.l.s8.bf16 %v5643
    %v5710 = vunpack.c.l.s8.bf16 %v5644
    %v5711 = vunpack.c.h.s8.bf16 %v5643
    %v5712 = vunpack.c.h.s8.bf16 %v5644
    %v5713 = vunpack.c.l.s8.bf16 %v5645
    %v5714 = vunpack.c.l.s8.bf16 %v5646
    %v5715 = vunpack.c.h.s8.bf16 %v5645
    %v5716 = vunpack.c.h.s8.bf16 %v5646
    %v5717 = vunpack.c.l.s8.bf16 %v5647
    %v5718 = vunpack.c.l.s8.bf16 %v5648
    %v5719 = vunpack.c.h.s8.bf16 %v5647
    %v5720 = vunpack.c.h.s8.bf16 %v5648
    %v5721 = vunpack.c.l.s8.bf16 %v5649
    %v5722 = vunpack.c.l.s8.bf16 %v5650
    %v5723 = vunpack.c.h.s8.bf16 %v5649
    %v5724 = vunpack.c.h.s8.bf16 %v5650
    %v5725 = vunpack.c.l.s8.bf16 %v5651
    %v5726 = vunpack.c.l.s8.bf16 %v5652
    %v5727 = vunpack.c.h.s8.bf16 %v5651
    %v5728 = vunpack.c.h.s8.bf16 %v5652
    %v5729 = vunpack.c.l.s8.bf16 %v5653
    %v5730 = vunpack.c.l.s8.bf16 %v5654
    %v5731 = vunpack.c.h.s8.bf16 %v5653
    %v5732 = vunpack.c.h.s8.bf16 %v5654
    %v5733 = vunpack.c.l.s8.bf16 %v5655
    %v5734 = vunpack.c.l.s8.bf16 %v5656
    %v5735 = vunpack.c.h.s8.bf16 %v5655
    %v5736 = vunpack.c.h.s8.bf16 %v5656
    %v5737 = vunpack.c.l.s8.bf16 %v5657
    %v5738 = vunpack.c.l.s8.bf16 %v5658
    %v5739 = vunpack.c.h.s8.bf16 %v5657
    %v5740 = vunpack.c.h.s8.bf16 %v5658
    %v5741 = vunpack.c.l.s8.bf16 %v5659
    %v5742 = vunpack.c.l.s8.bf16 %v5660
    %v5743 = vunpack.c.h.s8.bf16 %v5659
    %v5744 = vunpack.c.h.s8.bf16 %v5660
    %v5745 = vunpack.c.l.s8.bf16 %v5661
    %v5746 = vunpack.c.l.s8.bf16 %v5662
    %v5747 = vunpack.c.h.s8.bf16 %v5661
    %v5748 = vunpack.c.h.s8.bf16 %v5662
    %v5749 = vunpack.c.l.s8.bf16 %v5663
    %v5750 = vunpack.c.l.s8.bf16 %v5664
    %v5751 = vunpack.c.h.s8.bf16 %v5663
    %v5752 = vunpack.c.h.s8.bf16 %v5664
    %v5753 = vunpack.c.l.s8.bf16 %v5665
    %v5754 = vunpack.c.l.s8.bf16 %v5666
    %v5755 = vunpack.c.h.s8.bf16 %v5665
    %v5756 = vunpack.c.h.s8.bf16 %v5666
    %v5757 = vunpack.c.l.s8.bf16 %v5667
    %v5758 = vunpack.c.l.s8.bf16 %v5668
    %v5759 = vunpack.c.h.s8.bf16 %v5667
    %v5760 = vunpack.c.h.s8.bf16 %v5668
    %v5761 = vunpack.c.l.s8.bf16 %v5669
    %v5762 = vunpack.c.l.s8.bf16 %v5670
    %v5763 = vunpack.c.h.s8.bf16 %v5669
    %v5764 = vunpack.c.h.s8.bf16 %v5670
    %v5765 = vunpack.c.l.s8.bf16 %v5671
    %v5766 = vunpack.c.l.s8.bf16 %v5672
    %v5767 = vunpack.c.h.s8.bf16 %v5671
    %v5768 = vunpack.c.h.s8.bf16 %v5672
    %v5769 = vunpack.c.l.s8.bf16 %v5673
    %v5770 = vunpack.c.l.s8.bf16 %v5674
    %v5771 = vunpack.c.h.s8.bf16 %v5673
    %v5772 = vunpack.c.h.s8.bf16 %v5674
    %v5773 = vunpack.c.l.s8.bf16 %v5675
    %v5774 = vunpack.c.l.s8.bf16 %v5676
    %v5775 = vunpack.c.h.s8.bf16 %v5675
    %v5776 = vunpack.c.h.s8.bf16 %v5676
    %v5777 = vunpack.c.l.s8.bf16 %v5677
    %v5778 = vunpack.c.l.s8.bf16 %v5678
    %v5779 = vunpack.c.h.s8.bf16 %v5677
    %v5780 = vunpack.c.h.s8.bf16 %v5678
    %v5781 = vunpack.c.l.s8.bf16 %v5679
    %v5782 = vunpack.c.l.s8.bf16 %v5680
    %v5783 = vunpack.c.h.s8.bf16 %v5679
    %v5784 = vunpack.c.h.s8.bf16 %v5680
    %v5785 = vunpack.c.l.s8.bf16 %v5681
    %v5786 = vunpack.c.l.s8.bf16 %v5682
    %v5787 = vunpack.c.h.s8.bf16 %v5681
    %v5788 = vunpack.c.h.s8.bf16 %v5682
    %v5789 = vunpack.c.l.s8.bf16 %v5683
    %v5790 = vunpack.c.l.s8.bf16 %v5684
    %v5791 = vunpack.c.h.s8.bf16 %v5683
    %v5792 = vunpack.c.h.s8.bf16 %v5684
    %v5793 = vunpack.c.l.s8.bf16 %v5685
    %v5794 = vunpack.c.l.s8.bf16 %v5686
    %v5795 = vunpack.c.h.s8.bf16 %v5685
    %v5796 = vunpack.c.h.s8.bf16 %v5686
    %v5797 = vunpack.c.l.s8.bf16 %v5687
    %v5798 = vunpack.c.l.s8.bf16 %v5688
    %v5799 = vunpack.c.h.s8.bf16 %v5687
    %v5800 = vunpack.c.h.s8.bf16 %v5688
    %v5801 = vunpack.c.l.s8.bf16 %v5689
    %v5802 = vunpack.c.l.s8.bf16 %v5690
    %v5803 = vunpack.c.h.s8.bf16 %v5689
    %v5804 = vunpack.c.h.s8.bf16 %v5690
    %v5805 = vunpack.c.l.s8.bf16 %v5691
    %v5806 = vunpack.c.l.s8.bf16 %v5692
    %v5807 = vunpack.c.h.s8.bf16 %v5691
    %v5808 = vunpack.c.h.s8.bf16 %v5692
    %v5809 = vunpack.c.l.s8.bf16 %v5693
    %v5810 = vunpack.c.l.s8.bf16 %v5694
    %v5811 = vunpack.c.h.s8.bf16 %v5693
    %v5812 = vunpack.c.h.s8.bf16 %v5694
    %v5813 = vunpack.c.l.s8.bf16 %v5695
    %v5814 = vunpack.c.l.s8.bf16 %v5696
    %v5815 = vunpack.c.h.s8.bf16 %v5695
    %v5816 = vunpack.c.h.s8.bf16 %v5696
    %v5817 = vunpack.c.l.s8.bf16 %v5697
    %v5818 = vunpack.c.l.s8.bf16 %v5698
    %v5819 = vunpack.c.h.s8.bf16 %v5697
    %v5820 = vunpack.c.h.s8.bf16 %v5698
    %v5821 = vunpack.c.l.s8.bf16 %v5699
    %v5822 = vunpack.c.l.s8.bf16 %v5700
    %v5823 = vunpack.c.h.s8.bf16 %v5699
    %v5824 = vunpack.c.h.s8.bf16 %v5700
    %v5825 = vunpack.c.l.s8.bf16 %v5701
    %v5826 = vunpack.c.l.s8.bf16 %v5702
    %v5827 = vunpack.c.h.s8.bf16 %v5701
    %v5828 = vunpack.c.h.s8.bf16 %v5702
    %v5829 = vunpack.c.l.s8.bf16 %v5703
    %v5830 = vunpack.c.l.s8.bf16 %v5704
    %v5831 = vunpack.c.h.s8.bf16 %v5703
    %v5832 = vunpack.c.h.s8.bf16 %v5704
    %5833 = vmatprep.subr.bf16.mxu0 %v5706
    %5834 = vmatpush1.bf16.msra.mxu0 %v5705
    %5835 = vmatprep.subr.bf16.mxu0 %v5708
    %5836 = vmatpush1.bf16.msra.mxu0 %v5707
    %5837 = vmatprep.subr.bf16.mxu0 %v5710
    %5838 = vmatpush1.bf16.msra.mxu0 %v5709
    %5839 = vmatprep.subr.bf16.mxu0 %v5712
    %5840 = vmatpush1.bf16.msra.mxu0 %v5711
    %5841 = vmatprep.subr.bf16.mxu0 %v5714
    %5842 = vmatpush1.bf16.msra.mxu0 %v5713
    %5843 = vmatprep.subr.bf16.mxu0 %v5716
    %5844 = vmatpush1.bf16.msra.mxu0 %v5715
    %5845 = vmatprep.subr.bf16.mxu0 %v5718
    %5846 = vmatpush1.bf16.msra.mxu0 %v5717
    %5847 = vmatprep.subr.bf16.mxu0 %v5720
    %5848 = vmatpush1.bf16.msra.mxu0 %v5719
    %5849 = vmatprep.subr.bf16.mxu0 %v5722
    %5850 = vmatpush1.bf16.msra.mxu0 %v5721
    %5851 = vmatprep.subr.bf16.mxu0 %v5724
    %5852 = vmatpush1.bf16.msra.mxu0 %v5723
    %5853 = vmatprep.subr.bf16.mxu0 %v5726
    %5854 = vmatpush1.bf16.msra.mxu0 %v5725
    %5855 = vmatprep.subr.bf16.mxu0 %v5728
    %5856 = vmatpush1.bf16.msra.mxu0 %v5727
    %5857 = vmatprep.subr.bf16.mxu0 %v5730
    %5858 = vmatpush1.bf16.msra.mxu0 %v5729
    %5859 = vmatprep.subr.bf16.mxu0 %v5732
    %5860 = vmatpush1.bf16.msra.mxu0 %v5731
    %5861 = vmatprep.subr.bf16.mxu0 %v5734
    %5862 = vmatpush1.bf16.msra.mxu0 %v5733
    %5863 = vmatprep.subr.bf16.mxu0 %v5736
    %5864 = vmatpush1.bf16.msra.mxu0 %v5735
    %5865 = vmatprep.mubr.bf16.mxu0 %v5634
    %5866 = vmatmul.mubr.bf16.gmra.mrb[0].mxu0 %v5633
    %v5867 = vpop.f32.mrb[0].mxu0
    %v5868 = vadd.f32 0.0, %v5867
    %v5869 = vpop.f32.mrb[0].mxu0
    %v5870 = vadd.f32 0.0, %v5869
    %v5871 = vpop.f32.mrb[0].mxu0
    %v5872 = vpop.f32.mrb[0].mxu0
    %5873 = vdwg.mxu0
    %5874 = vmatprep.subr.bf16.mxu0 %v5738
    %5875 = vmatpush1.bf16.msra.mxu0 %v5737
    %5876 = vmatprep.subr.bf16.mxu0 %v5740
    %5877 = vmatpush1.bf16.msra.mxu0 %v5739
    %5878 = vmatprep.subr.bf16.mxu0 %v5742
    %5879 = vmatpush1.bf16.msra.mxu0 %v5741
    %5880 = vmatprep.subr.bf16.mxu0 %v5744
    %5881 = vmatpush1.bf16.msra.mxu0 %v5743
    %5882 = vmatprep.subr.bf16.mxu0 %v5746
    %5883 = vmatpush1.bf16.msra.mxu0 %v5745
    %5884 = vmatprep.subr.bf16.mxu0 %v5748
    %5885 = vmatpush1.bf16.msra.mxu0 %v5747
    %5886 = vmatprep.subr.bf16.mxu0 %v5750
    %5887 = vmatpush1.bf16.msra.mxu0 %v5749
    %5888 = vmatprep.subr.bf16.mxu0 %v5752
    %5889 = vmatpush1.bf16.msra.mxu0 %v5751
    %5890 = vmatprep.subr.bf16.mxu0 %v5754
    %5891 = vmatpush1.bf16.msra.mxu0 %v5753
    %5892 = vmatprep.subr.bf16.mxu0 %v5756
    %5893 = vmatpush1.bf16.msra.mxu0 %v5755
    %5894 = vmatprep.subr.bf16.mxu0 %v5758
    %5895 = vmatpush1.bf16.msra.mxu0 %v5757
    %5896 = vmatprep.subr.bf16.mxu0 %v5760
    %5897 = vmatpush1.bf16.msra.mxu0 %v5759
    %5898 = vmatprep.subr.bf16.mxu0 %v5762
    %5899 = vmatpush1.bf16.msra.mxu0 %v5761
    %5900 = vmatprep.subr.bf16.mxu0 %v5764
    %5901 = vmatpush1.bf16.msra.mxu0 %v5763
    %5902 = vmatprep.subr.bf16.mxu0 %v5766
    %5903 = vmatpush1.bf16.msra.mxu0 %v5765
    %5904 = vmatprep.subr.bf16.mxu0 %v5768
    %5905 = vmatpush1.bf16.msra.mxu0 %v5767
    %5906 = vmatprep.mubr.bf16.mxu0 %v5636
    %5907 = vmatmul.mubr.bf16.gmra.mrb[0].mxu0 %v5635
    %v5908 = vpop.f32.mrb[0].mxu0
    %v5909 = vadd.f32 %v5868, %v5908
    %v5910 = vpop.f32.mrb[0].mxu0
    %v5911 = vadd.f32 %v5870, %v5910
    %v5912 = vpop.f32.mrb[0].mxu0
    %v5913 = vpop.f32.mrb[0].mxu0
    %5914 = vdwg.mxu0
    %5915 = vmatprep.subr.bf16.mxu0 %v5770
    %5916 = vmatpush1.bf16.msra.mxu0 %v5769
    %5917 = vmatprep.subr.bf16.mxu0 %v5772
    %5918 = vmatpush1.bf16.msra.mxu0 %v5771
    %5919 = vmatprep.subr.bf16.mxu0 %v5774
    %5920 = vmatpush1.bf16.msra.mxu0 %v5773
    %5921 = vmatprep.subr.bf16.mxu0 %v5776
    %5922 = vmatpush1.bf16.msra.mxu0 %v5775
    %5923 = vmatprep.subr.bf16.mxu0 %v5778
    %5924 = vmatpush1.bf16.msra.mxu0 %v5777
    %5925 = vmatprep.subr.bf16.mxu0 %v5780
    %5926 = vmatpush1.bf16.msra.mxu0 %v5779
    %5927 = vmatprep.subr.bf16.mxu0 %v5782
    %5928 = vmatpush1.bf16.msra.mxu0 %v5781
    %5929 = vmatprep.subr.bf16.mxu0 %v5784
    %5930 = vmatpush1.bf16.msra.mxu0 %v5783
    %5931 = vmatprep.subr.bf16.mxu0 %v5786
    %5932 = vmatpush1.bf16.msra.mxu0 %v5785
    %5933 = vmatprep.subr.bf16.mxu0 %v5788
    %5934 = vmatpush1.bf16.msra.mxu0 %v5787
    %5935 = vmatprep.subr.bf16.mxu0 %v5790
    %5936 = vmatpush1.bf16.msra.mxu0 %v5789
    %5937 = vmatprep.subr.bf16.mxu0 %v5792
    %5938 = vmatpush1.bf16.msra.mxu0 %v5791
    %5939 = vmatprep.subr.bf16.mxu0 %v5794
    %5940 = vmatpush1.bf16.msra.mxu0 %v5793
    %5941 = vmatprep.subr.bf16.mxu0 %v5796
    %5942 = vmatpush1.bf16.msra.mxu0 %v5795
    %5943 = vmatprep.subr.bf16.mxu0 %v5798
    %5944 = vmatpush1.bf16.msra.mxu0 %v5797
    %5945 = vmatprep.subr.bf16.mxu0 %v5800
    %5946 = vmatpush1.bf16.msra.mxu0 %v5799
    %5947 = vmatprep.mubr.bf16.mxu0 %v5638
    %5948 = vmatmul.mubr.bf16.gmra.mrb[0].mxu0 %v5637
    %v5949 = vpop.f32.mrb[0].mxu0
    %v5950 = vadd.f32 %v5909, %v5949
    %v5951 = vpop.f32.mrb[0].mxu0
    %v5952 = vadd.f32 %v5911, %v5951
    %v5953 = vpop.f32.mrb[0].mxu0
    %v5954 = vpop.f32.mrb[0].mxu0
    %5955 = vdwg.mxu0
    %5956 = vmatprep.subr.bf16.mxu0 %v5802
    %5957 = vmatpush1.bf16.msra.mxu0 %v5801
    %5958 = vmatprep.subr.bf16.mxu0 %v5804
    %5959 = vmatpush1.bf16.msra.mxu0 %v5803
    %5960 = vmatprep.subr.bf16.mxu0 %v5806
    %5961 = vmatpush1.bf16.msra.mxu0 %v5805
    %5962 = vmatprep.subr.bf16.mxu0 %v5808
    %5963 = vmatpush1.bf16.msra.mxu0 %v5807
    %5964 = vmatprep.subr.bf16.mxu0 %v5810
    %5965 = vmatpush1.bf16.msra.mxu0 %v5809
    %5966 = vmatprep.subr.bf16.mxu0 %v5812
    %5967 = vmatpush1.bf16.msra.mxu0 %v5811
    %5968 = vmatprep.subr.bf16.mxu0 %v5814
    %5969 = vmatpush1.bf16.msra.mxu0 %v5813
    %5970 = vmatprep.subr.bf16.mxu0 %v5816
    %5971 = vmatpush1.bf16.msra.mxu0 %v5815
    %5972 = vmatprep.subr.bf16.mxu0 %v5818
    %5973 = vmatpush1.bf16.msra.mxu0 %v5817
    %5974 = vmatprep.subr.bf16.mxu0 %v5820
    %5975 = vmatpush1.bf16.msra.mxu0 %v5819
    %5976 = vmatprep.subr.bf16.mxu0 %v5822
    %5977 = vmatpush1.bf16.msra.mxu0 %v5821
    %5978 = vmatprep.subr.bf16.mxu0 %v5824
    %5979 = vmatpush1.bf16.msra.mxu0 %v5823
    %5980 = vmatprep.subr.bf16.mxu0 %v5826
    %5981 = vmatpush1.bf16.msra.mxu0 %v5825
    %5982 = vmatprep.subr.bf16.mxu0 %v5828
    %5983 = vmatpush1.bf16.msra.mxu0 %v5827
    %5984 = vmatprep.subr.bf16.mxu0 %v5830
    %5985 = vmatpush1.bf16.msra.mxu0 %v5829
    %5986 = vmatprep.subr.bf16.mxu0 %v5832
    %5987 = vmatpush1.bf16.msra.mxu0 %v5831
    %5988 = vmatprep.mubr.bf16.mxu0 %v5640
    %5989 = vmatmul.mubr.bf16.gmra.mrb[0].mxu0 %v5639
    %v5990 = vpop.f32.mrb[0].mxu0
    %v5991 = vadd.f32 %v5950, %v5990
    %v5992 = vpop.f32.mrb[0].mxu0
    %v5993 = vadd.f32 %v5952, %v5992
    %v5994 = vpop.f32.mrb[0].mxu0
    %v5995 = vpop.f32.mrb[0].mxu0
    %5996 = vdwg.mxu0
    %v5997 = vld [vmem:[#allocation14] sm:$0x3]
    %v5999 = vlaneseq
    %v6000 = vshrl.u32 %v5999, 7
    %v6001 = vsub.s32 0, %v6000
    %v6002 = vrot.slane %v5997, %v6001
    %v6003 = vlaneseq
    %v6004 = vshrl.u32 %v6003, 7
    %v6005 = vsub.s32 1, %v6004
    %v6006 = vrot.slane %v5997, %v6005
    %v6009 = vmul.f32 %v5991, %v6002
    %v6010 = vmul.f32 %v5993, %v6006
    %v6011 = vld [vmem:[#allocation16] sm:$0x3]
    %v6013 = vlaneseq
    %v6014 = vshrl.u32 %v6013, 7
    %v6015 = vsub.s32 0, %v6014
    %v6016 = vrot.slane %v6011, %v6015
    %v6017 = vlaneseq
    %v6018 = vshrl.u32 %v6017, 7
    %v6019 = vsub.s32 1, %v6018
    %v6020 = vrot.slane %v6011, %v6019
    %v6023 = vadd.f32 %v6009, %v6016
    %v6024 = vadd.f32 %v6010, %v6020
    %v6025 = vmax.f32 %v6023, 0.0
    %v6026 = vmax.f32 %v6024, 0.0
    %v6027 = vpack.c.bf16 %v6025, %v6025
    %v6028 = vpack.c.bf16 %v6026, %v6026
    %v6029 = vld [vmem:[#allocation17] sm:$0xff]
    %v6030 = vld [vmem:[#allocation17 + $0x8] sm:$0xff]
    %v6031 = vld [vmem:[#allocation17 + $0x10] sm:$0xff]
    %v6032 = vld [vmem:[#allocation17 + $0x18] sm:$0xff]
    %v6033 = vld [vmem:[#allocation17 + $0x20] sm:$0xff]
    %v6034 = vld [vmem:[#allocation17 + $0x28] sm:$0xff]
    %v6035 = vld [vmem:[#allocation17 + $0x30] sm:$0xff]
    %v6036 = vld [vmem:[#allocation17 + $0x38] sm:$0xff]
    %v6037 = vunpack.c.l.s8.bf16 %v6029
    %v6038 = vunpack.c.h.s8.bf16 %v6029
    %v6039 = vunpack.c.l.s8.bf16 %v6030
    %v6040 = vunpack.c.h.s8.bf16 %v6030
    %v6041 = vunpack.c.l.s8.bf16 %v6031
    %v6042 = vunpack.c.h.s8.bf16 %v6031
    %v6043 = vunpack.c.l.s8.bf16 %v6032
    %v6044 = vunpack.c.h.s8.bf16 %v6032
    %v6045 = vunpack.c.l.s8.bf16 %v6033
    %v6046 = vunpack.c.h.s8.bf16 %v6033
    %v6047 = vunpack.c.l.s8.bf16 %v6034
    %v6048 = vunpack.c.h.s8.bf16 %v6034
    %v6049 = vunpack.c.l.s8.bf16 %v6035
    %v6050 = vunpack.c.h.s8.bf16 %v6035
    %v6051 = vunpack.c.l.s8.bf16 %v6036
    %v6052 = vunpack.c.h.s8.bf16 %v6036
    %6053 = vmatprep.subr.bf16.mxu0 0
    %6054 = vmatpush1.bf16.msra.mxu0 %v6037
    %6055 = vmatprep.subr.bf16.mxu0 0
    %6056 = vmatpush1.bf16.msra.mxu0 %v6038
    %6057 = vmatprep.subr.bf16.mxu0 0
    %6058 = vmatpush1.bf16.msra.mxu0 %v6039
    %6059 = vmatprep.subr.bf16.mxu0 0
    %6060 = vmatpush1.bf16.msra.mxu0 %v6040
    %6061 = vmatprep.subr.bf16.mxu0 0
    %6062 = vmatpush1.bf16.msra.mxu0 %v6041
    %6063 = vmatprep.subr.bf16.mxu0 0
    %6064 = vmatpush1.bf16.msra.mxu0 %v6042
    %6065 = vmatprep.subr.bf16.mxu0 0
    %6066 = vmatpush1.bf16.msra.mxu0 %v6043
    %6067 = vmatprep.subr.bf16.mxu0 0
    %6068 = vmatpush1.bf16.msra.mxu0 %v6044
    %6069 = vmatprep.subr.bf16.mxu0 0
    %6070 = vmatpush1.bf16.msra.mxu0 %v6045
    %6071 = vmatprep.subr.bf16.mxu0 0
    %6072 = vmatpush1.bf16.msra.mxu0 %v6046
    %6073 = vmatprep.subr.bf16.mxu0 0
    %6074 = vmatpush1.bf16.msra.mxu0 %v6047
    %6075 = vmatprep.subr.bf16.mxu0 0
    %6076 = vmatpush1.bf16.msra.mxu0 %v6048
    %6077 = vmatprep.subr.bf16.mxu0 0
    %6078 = vmatpush1.bf16.msra.mxu0 %v6049
    %6079 = vmatprep.subr.bf16.mxu0 0
    %6080 = vmatpush1.bf16.msra.mxu0 %v6050
    %6081 = vmatprep.subr.bf16.mxu0 0
    %6082 = vmatpush1.bf16.msra.mxu0 %v6051
    %6083 = vmatprep.subr.bf16.mxu0 0
    %6084 = vmatpush1.bf16.msra.mxu0 %v6052
    %6085 = vmatprep.mubr.bf16.mxu0 %v6028
    %6086 = vmatmul.mubr.bf16.gmra.mrb[0].mxu0 %v6027
    %v6087 = vpop.f32.mrb[0].mxu0
    %v6088 = vadd.f32 0.0, %v6087
    %v6089 = vpop.f32.mrb[0].mxu0
    %v6090 = vpop.f32.mrb[0].mxu0
    %v6091 = vpop.f32.mrb[0].mxu0
    %6092 = vdwg.mxu0
    %v6093 = vld [vmem:[#allocation19] sm:$0x1]
    %v6095 = vlaneseq
    %v6096 = vshrl.u32 %v6095, 7
    %v6097 = vsub.s32 0, %v6096
    %v6098 = vrot.slane %v6093, %v6097
    %v6100 = vmul.f32 %v6088, %v6098
    %v6101 = vld [vmem:[#allocation20] sm:$0x1]
    %v6103 = vlaneseq
    %v6104 = vshrl.u32 %v6103, 7
    %v6105 = vsub.s32 0, %v6104
    %v6106 = vrot.slane %v6101, %v6105
    %v6108 = vadd.f32 %v6100, %v6106
    %6109 = vst [vmem:[%s13] sm:$0xff] %v6108
    // Predicated region
    $region114: #{net_forward.1} parent=1 // pred_check
      _
    $region115: #{net_forward.1} parent=1 // pred_check_branch
      %6111 = sbr.rel (0) target = $region117
    $region116: #{net_forward.1} parent=1 // pred_region
      _
    $region117: #{net_forward.1} parent=1 // pred_fallthru
      _
    // Predicated region
    $region118: #{net_forward.1} parent=1 // pred_check
      _
    $region119: #{net_forward.1} parent=1 // pred_check_branch
      %6113 = sbr.rel (0) target = $region121
    $region120: #{net_forward.1} parent=1 // pred_region
      _
    $region121: #{net_forward.1} parent=1 // pred_fallthru
      _
    %6114 = vsyncpa [#allocation7], 1
    %6115 = vsyncpa [#allocation9], 1
    %6116 = vsyncpa [#allocation12], 1
    %6117 = vsyncpa [#allocation15], 1
    %6118 = vsyncpa [#allocation18], 1
    %6119 = vsyncpa [#allocation21], 1
  %6120 = vsyncmov [#allocation4]
  %s6121 = vpop.sfrf %6120
  %p6122 = scmp.eq.s32.totalorder %s6121, 0
  %p6123 = pneg %p6122
  %6125 = shalt.err (%p6123)
  %s6126 = scalar_lea.sflag [#allocation4], 1
  %6127 = vsyncmov %s6126
  %s6128 = vpop.sfrf %6127
  %p6129 = scmp.eq.s32.totalorder %s6128, 0
  %p6130 = pneg %p6129
  %6132 = shalt.err (%p6130)
  %6133 = vsyncmov [#allocation5]
  %s6134 = vpop.sfrf %6133
  %p6135 = scmp.eq.s32.totalorder %s6134, 0
  %p6136 = pneg %p6135
  %6138 = shalt.err (%p6136)
  %s6139 = scalar_lea.sflag [#allocation5], 1
  %6140 = vsyncmov %s6139
  %s6141 = vpop.sfrf %6140
  %p6142 = scmp.eq.s32.totalorder %s6141, 0
  %p6143 = pneg %p6142
  %6145 = shalt.err (%p6143)

</llo_original>
